<compile_context>
chip_gen: v5e
topology: v5e:2x2
jax: 0.10.0
libtpu: 0.0.40
codegen_flags: <defaults>
</compile_context>

<pallas_src>
import functools

import jax
import jax.numpy as jnp
from jax.experimental import pallas as pl
from jax.experimental.pallas import tpu as pltpu


# ---------------------------------------------------------------------------
# Helpers
# ---------------------------------------------------------------------------

_SQRT_HALF = 0.7071067811865476


def _gelu_exact(y):
    # PyTorch F.gelu default = exact erf-based GELU.
    return 0.5 * y * (1.0 + jax.lax.erf(y * _SQRT_HALF))


# Lane-block targets (multiples of 128).
_LANE_TARGET = 16384        # fc0 / 1x1-conv kernels (16-channel blocks)
_HEAD_LANE_TARGET = 4096    # head kernel (128-channel intermediate block)


def _lane_tile(p, batch, target):
    """Lane-block size: full extent if small, else a multiple of 128 near
    `target`; keeps >= 2 total grid steps so v7x's 2nd TensorCore has work."""
    tile = p if p <= target else target
    if batch * pl.cdiv(p, tile) < 2 and p > 128:
        tile = min(tile, ((pl.cdiv(p, 2) + 127) // 128) * 128)
    return tile


_CPARAMS = pltpu.CompilerParams(
    dimension_semantics=("parallel", "parallel"),
    vmem_limit_bytes=32 * 1024 * 1024,
)


# ---------------------------------------------------------------------------
# Pallas kernels (activations: channels on sublanes, pixels on lanes)
# ---------------------------------------------------------------------------

def _fc0_kernel(x_ref, gx_ref, gy_ref, msk_ref, w0t_ref, b0_ref, o_ref):
    """Fused get_grid + concat + fc0 + permute(NCHW) + zero-pad.

    x_ref:   (1, 1, TP)  padded single-channel input plane (zeros in pad region)
    gx_ref:  (1, TP)     grid-x plane, zeroed in the pad region
    gy_ref:  (1, TP)     grid-y plane, zeroed in the pad region
    msk_ref: (1, TP)     1.0 inside the original S1 x S2 image, 0.0 in padding
    w0t_ref: (C, 3)      fc0 weight; rows = out channel, cols = [x, gx, gy]
    b0_ref:  (C, 1)      fc0 bias
    o_ref:   (1, C, TP)  padded NCHW output plane
    """
    xv = x_ref[0]                       # (1, TP)
    wx = w0t_ref[:, 0:1]                # (C, 1)
    wgx = w0t_ref[:, 1:2]
    wgy = w0t_ref[:, 2:3]
    y = (xv * wx
         + gx_ref[...] * wgx
         + gy_ref[...] * wgy
         + msk_ref[...] * b0_ref[...])  # (C, TP), lane-dense VPU FMAs
    o_ref[0] = y.astype(o_ref.dtype)


def _conv_res_kernel(h_ref, wct_ref, bc_ref, spec_ref, o_ref, *, gelu):
    """1x1 conv (Wc @ h on the MXU) + bias + spectral residual (+ GELU)."""
    y = jnp.dot(wct_ref[...], h_ref[0], preferred_element_type=jnp.float32)
    y = y + bc_ref[...] + spec_ref[0]
    if gelu:
        y = _gelu_exact(y)
    o_ref[0] = y.astype(o_ref.dtype)


def _head_kernel(x_ref, w1_ref, b1_ref, w2_ref, z_ref, out_ref, stats_ref):
    """Fused fc1 + GELU + fc2 (no bias) + mean / unbiased-var over outputs.

    Transposed layout: all three outputs (z, out, stats) are lane-dense; stats
    are written with one concat store as a (2, TP) block.
    """
    z = jnp.dot(w1_ref[...], x_ref[0], preferred_element_type=jnp.float32)
    z = _gelu_exact(z + b1_ref[...])                                  # (hidden, TP)
    z_ref[0] = z.astype(z_ref.dtype)

    y = jnp.dot(w2_ref[...], z, preferred_element_type=jnp.float32)  # (n_out, TP)
    out_ref[0] = y.astype(out_ref.dtype)

    n = y.shape[0]
    m = jnp.mean(y, axis=0, keepdims=True)                            # (1, TP)
    v = jnp.sum((y - m) ** 2, axis=0, keepdims=True) * jnp.float32(1.0 / max(n - 1, 1))
    stats_ref[0] = jnp.concatenate([m, v], axis=0).astype(stats_ref.dtype)


# ---------------------------------------------------------------------------
# Pallas wrappers (grid = (batch, lane-blocks), both "parallel")
# ---------------------------------------------------------------------------

def pallas_fc0(x_pad, gx, gy, msk, w0t, b0):
    B, _, Pp = x_pad.shape
    width = w0t.shape[0]
    tp = _lane_tile(Pp, B, _LANE_TARGET)
    return pl.pallas_call(
        _fc0_kernel,
        out_shape=jax.ShapeDtypeStruct((B, width, Pp), jnp.float32),
        grid=(B, pl.cdiv(Pp, tp)),
        in_specs=[pl.BlockSpec((1, 1, tp), lambda b, p: (b, 0, p)),
                  pl.BlockSpec((1, tp), lambda b, p: (0, p)),
                  pl.BlockSpec((1, tp), lambda b, p: (0, p)),
                  pl.BlockSpec((1, tp), lambda b, p: (0, p)),
                  pl.BlockSpec((width, 3), lambda b, p: (0, 0)),
                  pl.BlockSpec((width, 1), lambda b, p: (0, 0))],
        out_specs=pl.BlockSpec((1, width, tp), lambda b, p: (b, 0, p)),
        compiler_params=_CPARAMS,
    )(x_pad, gx, gy, msk, w0t, b0)


def pallas_conv_res(h, wct, bc, spec, *, gelu):
    B, C, Pp = h.shape
    tp = _lane_tile(Pp, B, _LANE_TARGET)
    return pl.pallas_call(
        functools.partial(_conv_res_kernel, gelu=gelu),
        out_shape=jax.ShapeDtypeStruct((B, C, Pp), jnp.float32),
        grid=(B, pl.cdiv(Pp, tp)),
        in_specs=[pl.BlockSpec((1, C, tp), lambda b, p: (b, 0, p)),
                  pl.BlockSpec((C, C), lambda b, p: (0, 0)),
                  pl.BlockSpec((C, 1), lambda b, p: (0, 0)),
                  pl.BlockSpec((1, C, tp), lambda b, p: (b, 0, p))],
        out_specs=pl.BlockSpec((1, C, tp), lambda b, p: (b, 0, p)),
        # Reuse the spectral-branch buffer for the output (P8); `spec` must not
        # be read after this call.
        input_output_aliases={3: 0},
        compiler_params=_CPARAMS,
    )(h, wct, bc, spec)


def pallas_head(x, w1, b1, w2):
    B, C, Pc = x.shape
    hidden = w1.shape[0]
    n_out = w2.shape[0]
    tp = _lane_tile(Pc, B, _HEAD_LANE_TARGET)
    return pl.pallas_call(
        _head_kernel,
        out_shape=(jax.ShapeDtypeStruct((B, hidden, Pc), jnp.float32),
                   jax.ShapeDtypeStruct((B, n_out, Pc), jnp.float32),
                   jax.ShapeDtypeStruct((B, 2, Pc), jnp.float32)),
        grid=(B, pl.cdiv(Pc, tp)),
        in_specs=[pl.BlockSpec((1, C, tp), lambda b, p: (b, 0, p)),
                  pl.BlockSpec((hidden, C), lambda b, p: (0, 0)),
                  pl.BlockSpec((hidden, 1), lambda b, p: (0, 0)),
                  pl.BlockSpec((n_out, hidden), lambda b, p: (0, 0))],
        out_specs=(pl.BlockSpec((1, hidden, tp), lambda b, p: (b, 0, p)),
                   pl.BlockSpec((1, n_out, tp), lambda b, p: (b, 0, p)),
                   pl.BlockSpec((1, 2, tp), lambda b, p: (b, 0, p))),
        compiler_params=_CPARAMS,
    )(x, w1, b1, w2)


# ---------------------------------------------------------------------------
# Spectral convolution (FFT + per-mode mixing stay in XLA glue, see TODO)
# ---------------------------------------------------------------------------

def spectral_conv(h, w1r, w1i, w2r, w2i, modes1, modes2):
    # h: (B, C, H, W) float32 (NCHW, like the PyTorch reference)
    B, C, H, W = h.shape
    x_ft = jnp.fft.rfft2(h, axes=(2, 3))                    # (B, C, H, W//2+1)
    w1 = (w1r + 1j * w1i).astype(jnp.complex64)             # (Cin, Cout, m1, m2)
    w2 = (w2r + 1j * w2i).astype(jnp.complex64)
    top = jnp.einsum('bixy,ioxy->boxy', x_ft[:, :, :modes1, :modes2], w1)
    bot = jnp.einsum('bixy,ioxy->boxy', x_ft[:, :, H - modes1:, :modes2], w2)
    mid = jnp.zeros((B, C, H - 2 * modes1, modes2), dtype=jnp.complex64)
    out_low = jnp.concatenate([top, mid, bot], axis=2)      # (B, C, H, m2)
    out_ft = jnp.pad(out_low, ((0, 0), (0, 0), (0, 0), (0, W // 2 + 1 - modes2)))
    return jnp.fft.irfft2(out_ft, s=(H, W), axes=(2, 3)).astype(jnp.float32)


# ---------------------------------------------------------------------------
# Parameter init (deterministic, synthetic; PyTorch-native weight layouts)
# ---------------------------------------------------------------------------

def init_params(key, *, modes1, modes2, width, n_layers, n_outputs):
    keys = jax.random.split(key, 5 + 6 * n_layers)
    ki = iter(range(len(keys)))

    def unif(k, shape, scale):
        return jax.random.uniform(k, shape, jnp.float32, -scale, scale)

    p = {}
    s0 = 3.0 ** -0.5
    p['W0t'] = unif(keys[next(ki)], (width, 3), s0)   # rows=out ch, cols=[x,gx,gy]
    p['b0'] = unif(keys[next(ki)], (width, 1), s0)

    p['layers'] = []
    spec_scale = 1.0 / (width * width)
    sc = float(width) ** -0.5
    for _ in range(n_layers):
        lyr = {
            'w1r': spec_scale * jax.random.uniform(keys[next(ki)], (width, width, modes1, modes2), jnp.float32),
            'w1i': spec_scale * jax.random.uniform(keys[next(ki)], (width, width, modes1, modes2), jnp.float32),
            'w2r': spec_scale * jax.random.uniform(keys[next(ki)], (width, width, modes1, modes2), jnp.float32),
            'w2i': spec_scale * jax.random.uniform(keys[next(ki)], (width, width, modes1, modes2), jnp.float32),
            'Wc': unif(keys[next(ki)], (width, width), sc),   # (Cout, Cin) like Conv2d 1x1
            'bc': unif(keys[next(ki)], (width, 1), sc),
        }
        p['layers'].append(lyr)

    p['W1'] = unif(keys[next(ki)], (128, width), sc)          # fc1 (out, in)
    p['b1'] = unif(keys[next(ki)], (128, 1), sc)
    p['W2'] = unif(keys[next(ki)], (n_outputs, 128), 128.0 ** -0.5)  # bias_last=False
    return p


# ---------------------------------------------------------------------------
# Forward pass
# ---------------------------------------------------------------------------

def _grid_planes(S1, S2, Hp, Wp, lb, ub):
    """Exact gridx / gridy / valid-mask planes for the zero-padded image,
    flattened to (1, Hp*Wp).  Integer-index based (no float floor-division)."""
    sx = (ub - lb) / float(max(S1 - 1, 1))
    sy = (ub - lb) / float(max(S2 - 1, 1))
    ii = jnp.arange(Hp, dtype=jnp.int32)
    jj = jnp.arange(Wp, dtype=jnp.int32)
    gx = (lb + ii.astype(jnp.float32) * sx)[:, None]                    # (Hp, 1)
    gy = (lb + jj.astype(jnp.float32) * sy)[None, :]                    # (1, Wp)
    valid = ((ii[:, None] < S1) & (jj[None, :] < S2)).astype(jnp.float32)
    gx = jnp.broadcast_to(gx, (Hp, Wp)) * valid
    gy = jnp.broadcast_to(gy, (Hp, Wp)) * valid
    return (gx.reshape(1, Hp * Wp), gy.reshape(1, Hp * Wp),
            valid.reshape(1, Hp * Wp))


def diverse_fno2d_forward(x, params, *, modes1, modes2, width, n_layers,
                          n_outputs, padding=9, lb=0.0, ub=1.0):
    B, S1, S2, _ = x.shape
    Hp, Wp = S1 + padding, S2 + padding
    Pp, Pc = Hp * Wp, S1 * S2

    # Tiny XLA glue: zero-pad the single-channel input plane and build the
    # exact grid / mask planes (a few KiB, batch-independent).
    x_pad = jnp.pad(x[..., 0], ((0, 0), (0, padding), (0, padding))).reshape(B, 1, Pp)
    gx, gy, msk = _grid_planes(S1, S2, Hp, Wp, float(lb), float(ub))

    # Fused get_grid + concat + fc0 + permute(NCHW) + pad (one Pallas kernel).
    h = pallas_fc0(x_pad, gx, gy, msk, params['W0t'], params['b0'])   # (B, C, Pp)

    # Fourier blocks: h = gelu(spectral(h) + conv1x1(h)); last block w/o gelu.
    for li, lyr in enumerate(params['layers']):
        spec = spectral_conv(h.reshape(B, width, Hp, Wp),
                             lyr['w1r'], lyr['w1i'], lyr['w2r'], lyr['w2i'],
                             modes1, modes2).reshape(B, width, Pp)
        h = pallas_conv_res(h, lyr['Wc'], lyr['bc'], spec,
                            gelu=(li < n_layers - 1))

    # Crop the padding (small strided copy of the width-channel tensor).
    hc = h.reshape(B, width, Hp, Wp)[:, :, :S1, :S2].reshape(B, width, Pc)

    # Fused fc1 + GELU + fc2 + mean/unbiased-var (lane-dense transposed layout).
    z_t, out_t, stats = pallas_head(hc, params['W1'], params['b1'], params['W2'])

    intermediate = jnp.transpose(z_t.reshape(B, 128, S1, S2), (0, 2, 3, 1))
    out = jnp.transpose(out_t.reshape(B, n_outputs, S1, S2), (0, 2, 3, 1))
    mean = stats[:, 0, :].reshape(B, S1, S2, 1)
    var = stats[:, 1, :].reshape(B, S1, S2, 1)
    return mean, var, out, intermediate


# ---------------------------------------------------------------------------
# Plain-JAX reference (mirrors the PyTorch forward) for validation
# ---------------------------------------------------------------------------

def reference_forward(x, params, *, modes1, modes2, width, n_layers,
                      n_outputs, padding=9, lb=0.0, ub=1.0):
    B, S1, S2, _ = x.shape
    sx = (ub - lb) / float(max(S1 - 1, 1))
    sy = (ub - lb) / float(max(S2 - 1, 1))
    gx = (lb + jnp.arange(S1, dtype=jnp.float32) * sx)[None, :, None, None]
    gy = (lb + jnp.arange(S2, dtype=jnp.float32) * sy)[None, None, :, None]
    gx = jnp.broadcast_to(gx, (B, S1, S2, 1))
    gy = jnp.broadcast_to(gy, (B, S1, S2, 1))
    inp = jnp.concatenate([x, gx, gy], axis=-1)
    h = inp @ params['W0t'].T + params['b0'][:, 0]
    h = jnp.transpose(h, (0, 3, 1, 2))
    h = jnp.pad(h, ((0, 0), (0, 0), (0, padding), (0, padding)))
    for li, lyr in enumerate(params['layers']):
        spec = spectral_conv(h, lyr['w1r'], lyr['w1i'], lyr['w2r'], lyr['w2i'],
                             modes1, modes2)
        conv = jnp.einsum('oi,bixy->boxy', lyr['Wc'], h) + lyr['bc'][:, 0][None, :, None, None]
        h = spec + conv
        if li < n_layers - 1:
            h = _gelu_exact(h)
    h = jnp.transpose(h[:, :, :S1, :S2], (0, 2, 3, 1))
    z = _gelu_exact(h @ params['W1'].T + params['b1'][:, 0])
    out = z @ params['W2'].T
    mean = out.mean(axis=-1, keepdims=True)
    var = out.var(axis=-1, keepdims=True, ddof=1)
    return mean, var, out, z


# ---------------------------------------------------------------------------
# Main
# ---------------------------------------------------------------------------

if __name__ == "__main__":
    # Keep full f32 matmul fidelity in both the XLA reference and the Pallas dots.
    jax.config.update("jax_default_matmul_precision", "highest")

    modes1, modes2 = 4, 4
    width = 16
    n_layers = 4
    n_outputs = 32
    B, S1, S2 = 2, 16, 16

    key = jax.random.PRNGKey(0)
    kx, kp = jax.random.split(key)
    x = jax.random.normal(kx, (B, S1, S2, 1), jnp.float32)
    params = init_params(kp, modes1=modes1, modes2=modes2, width=width,
                         n_layers=n_layers, n_outputs=n_outputs)

    kw = dict(modes1=modes1, modes2=modes2, width=width,
              n_layers=n_layers, n_outputs=n_outputs)
    fwd = jax.jit(functools.partial(diverse_fno2d_forward, **kw))
    ref = jax.jit(functools.partial(reference_forward, **kw))

    mean, var, out, inter = fwd(x, params)
    jax.block_until_ready((mean, var, out, inter))

    assert mean.shape == (B, S1, S2, 1)
    assert var.shape == (B, S1, S2, 1)
    assert out.shape == (B, S1, S2, n_outputs)
    assert inter.shape == (B, S1, S2, 128)
    assert bool(jnp.all(jnp.isfinite(out)))
    assert bool(jnp.all(jnp.isfinite(var)))

    r_mean, r_var, r_out, r_inter = ref(x, params)
    jax.block_until_ready((r_mean, r_var, r_out, r_inter))

    def check_close(name, a, b, tol=1e-2):
        err = float(jnp.max(jnp.abs(a - b)))
        scale = float(jnp.max(jnp.abs(b))) + 1.0
        assert err <= tol * scale, f"{name}: max|err|={err} (scale={scale})"

    check_close("out", out, r_out)
    check_close("intermediate", inter, r_inter)
    check_close("mean", mean, r_mean)
    check_close("var", var, r_var)

    print("KERNEL_OK")
</pallas_src>

<mosaic_0001>
module attributes {stable_mosaic.version = 11 : i64} {
  func.func @_fc0_kernel(%arg0: i32, %arg1: i32, %arg2: memref<1x1x625xf32, #tpu.memory_space<vmem>>, %arg3: memref<1x625xf32, #tpu.memory_space<vmem>>, %arg4: memref<1x625xf32, #tpu.memory_space<vmem>>, %arg5: memref<1x625xf32, #tpu.memory_space<vmem>>, %arg6: memref<16x3xf32, #tpu.memory_space<vmem>>, %arg7: memref<16x1xf32, #tpu.memory_space<vmem>>, %arg8: memref<1x16x625xf32, #tpu.memory_space<vmem>>) attributes {dimension_semantics = [#tpu.dimension_semantics<parallel>, #tpu.dimension_semantics<parallel>], iteration_bounds = array<i64: 2, 1>, scalar_prefetch = 0 : i64, scratch_operands = 0 : i64, tpu.core_type = #tpu.core_type<tc>, window_params = [{transform_indices = @transform_0, window_bounds = array<i64: 1, 1, 625>}, {transform_indices = @transform_1, window_bounds = array<i64: 1, 625>}, {transform_indices = @transform_2, window_bounds = array<i64: 1, 625>}, {transform_indices = @transform_3, window_bounds = array<i64: 1, 625>}, {pipeline_mode = #tpu.pipeline_mode<synchronous>, transform_indices = @transform_4, window_bounds = array<i64: 16, 3>}, {pipeline_mode = #tpu.pipeline_mode<synchronous>, transform_indices = @transform_5, window_bounds = array<i64: 16, 1>}, {transform_indices = @transform_6, window_bounds = array<i64: 1, 16, 625>}]} {
    %c0 = arith.constant 0 : index
    %c0_0 = arith.constant 0 : index
    %c0_1 = arith.constant 0 : index
    %0 = vector.load %arg2[%c0, %c0_0, %c0_1] : memref<1x1x625xf32, #tpu.memory_space<vmem>>, vector<1x1x625xf32>
    %1 = vector.shape_cast %0 : vector<1x1x625xf32> to vector<1x625xf32>
    %c0_2 = arith.constant 0 : index
    %c0_3 = arith.constant 0 : index
    %2 = vector.load %arg6[%c0_2, %c0_3] : memref<16x3xf32, #tpu.memory_space<vmem>>, vector<16x1xf32>
    %c0_4 = arith.constant 0 : index
    %c1 = arith.constant 1 : index
    %3 = vector.load %arg6[%c0_4, %c1] : memref<16x3xf32, #tpu.memory_space<vmem>>, vector<16x1xf32>
    %c0_5 = arith.constant 0 : index
    %c2 = arith.constant 2 : index
    %4 = vector.load %arg6[%c0_5, %c2] : memref<16x3xf32, #tpu.memory_space<vmem>>, vector<16x1xf32>
    %5 = vector.broadcast %1 : vector<1x625xf32> to vector<16x625xf32>
    %6 = vector.broadcast %2 : vector<16x1xf32> to vector<16x625xf32>
    %7 = arith.mulf %5, %6 : vector<16x625xf32>
    %c0_6 = arith.constant 0 : index
    %c0_7 = arith.constant 0 : index
    %8 = vector.load %arg3[%c0_6, %c0_7] : memref<1x625xf32, #tpu.memory_space<vmem>>, vector<1x625xf32>
    %9 = vector.broadcast %8 : vector<1x625xf32> to vector<16x625xf32>
    %10 = vector.broadcast %3 : vector<16x1xf32> to vector<16x625xf32>
    %11 = arith.mulf %9, %10 : vector<16x625xf32>
    %12 = arith.addf %7, %11 : vector<16x625xf32>
    %c0_8 = arith.constant 0 : index
    %c0_9 = arith.constant 0 : index
    %13 = vector.load %arg4[%c0_8, %c0_9] : memref<1x625xf32, #tpu.memory_space<vmem>>, vector<1x625xf32>
    %14 = vector.broadcast %13 : vector<1x625xf32> to vector<16x625xf32>
    %15 = vector.broadcast %4 : vector<16x1xf32> to vector<16x625xf32>
    %16 = arith.mulf %14, %15 : vector<16x625xf32>
    %17 = arith.addf %12, %16 : vector<16x625xf32>
    %c0_10 = arith.constant 0 : index
    %c0_11 = arith.constant 0 : index
    %18 = vector.load %arg5[%c0_10, %c0_11] : memref<1x625xf32, #tpu.memory_space<vmem>>, vector<1x625xf32>
    %c0_12 = arith.constant 0 : index
    %c0_13 = arith.constant 0 : index
    %19 = vector.load %arg7[%c0_12, %c0_13] : memref<16x1xf32, #tpu.memory_space<vmem>>, vector<16x1xf32>
    %20 = vector.broadcast %18 : vector<1x625xf32> to vector<16x625xf32>
    %21 = vector.broadcast %19 : vector<16x1xf32> to vector<16x625xf32>
    %22 = arith.mulf %20, %21 : vector<16x625xf32>
    %23 = arith.addf %17, %22 : vector<16x625xf32>
    %c0_14 = arith.constant 0 : index
    %c0_15 = arith.constant 0 : index
    %c0_16 = arith.constant 0 : index
    %24 = vector.load %arg8[%c0_14, %c0_15, %c0_16] : memref<1x16x625xf32, #tpu.memory_space<vmem>>, vector<1x16x625xf32>
    %25 = vector.shape_cast %24 : vector<1x16x625xf32> to vector<16x625xf32>
    %26 = vector.shape_cast %23 : vector<16x625xf32> to vector<1x16x625xf32>
    tpu.vector_store %arg8[%c0_14, %c0_15, %c0_16], %26 {strides = array<i32>} : memref<1x16x625xf32, #tpu.memory_space<vmem>>, vector<1x16x625xf32>,
    return
  }
  func.func @transform_0(%arg0: i32, %arg1: i32) -> (i32, i32, i32) {
    %c0_i32 = arith.constant 0 : i32
    %c0_i32_0 = arith.constant 0 : i32
    return %arg0, %c0_i32, %arg1 : i32, i32, i32
  }
  func.func @transform_1(%arg0: i32, %arg1: i32) -> (i32, i32) {
    %c0_i32 = arith.constant 0 : i32
    %c0_i32_0 = arith.constant 0 : i32
    return %c0_i32, %arg1 : i32, i32
  }
  func.func @transform_2(%arg0: i32, %arg1: i32) -> (i32, i32) {
    %c0_i32 = arith.constant 0 : i32
    %c0_i32_0 = arith.constant 0 : i32
    return %c0_i32, %arg1 : i32, i32
  }
  func.func @transform_3(%arg0: i32, %arg1: i32) -> (i32, i32) {
    %c0_i32 = arith.constant 0 : i32
    %c0_i32_0 = arith.constant 0 : i32
    return %c0_i32, %arg1 : i32, i32
  }
  func.func @transform_4(%arg0: i32, %arg1: i32) -> (i32, i32) {
    %c0_i32 = arith.constant 0 : i32
    %c0_i32_0 = arith.constant 0 : i32
    %c0_i32_1 = arith.constant 0 : i32
    return %c0_i32, %c0_i32_0 : i32, i32
  }
  func.func @transform_5(%arg0: i32, %arg1: i32) -> (i32, i32) {
    %c0_i32 = arith.constant 0 : i32
    %c0_i32_0 = arith.constant 0 : i32
    %c0_i32_1 = arith.constant 0 : i32
    return %c0_i32, %c0_i32_0 : i32, i32
  }
  func.func @transform_6(%arg0: i32, %arg1: i32) -> (i32, i32, i32) {
    %c0_i32 = arith.constant 0 : i32
    %c0_i32_0 = arith.constant 0 : i32
    return %arg0, %c0_i32, %arg1 : i32, i32, i32
  }
}

module attributes {stable_mosaic.version = 11 : i64} {
  func.func @_conv_res_kernel(%arg0: i32, %arg1: i32, %arg2: memref<1x16x625xf32, #tpu.memory_space<vmem>>, %arg3: memref<16x16xf32, #tpu.memory_space<vmem>>, %arg4: memref<16x1xf32, #tpu.memory_space<vmem>>, %arg5: memref<1x16x625xf32, #tpu.memory_space<vmem>>, %arg6: memref<1x16x625xf32, #tpu.memory_space<vmem>>) attributes {dimension_semantics = [#tpu.dimension_semantics<parallel>, #tpu.dimension_semantics<parallel>], iteration_bounds = array<i64: 2, 1>, scalar_prefetch = 0 : i64, scratch_operands = 0 : i64, tpu.core_type = #tpu.core_type<tc>, window_params = [{transform_indices = @transform_0, window_bounds = array<i64: 1, 16, 625>}, {pipeline_mode = #tpu.pipeline_mode<synchronous>, transform_indices = @transform_1, window_bounds = array<i64: 16, 16>}, {pipeline_mode = #tpu.pipeline_mode<synchronous>, transform_indices = @transform_2, window_bounds = array<i64: 16, 1>}, {transform_indices = @transform_3, window_bounds = array<i64: 1, 16, 625>}, {transform_indices = @transform_4, window_bounds = array<i64: 1, 16, 625>}]} {
    %c0 = arith.constant 0 : index
    %c0_0 = arith.constant 0 : index
    %0 = vector.load %arg3[%c0, %c0_0] : memref<16x16xf32, #tpu.memory_space<vmem>>, vector<16x16xf32>
    %c0_1 = arith.constant 0 : index
    %c0_2 = arith.constant 0 : index
    %c0_3 = arith.constant 0 : index
    %1 = vector.load %arg2[%c0_1, %c0_2, %c0_3] : memref<1x16x625xf32, #tpu.memory_space<vmem>>, vector<1x16x625xf32>
    %2 = vector.shape_cast %1 : vector<1x16x625xf32> to vector<16x625xf32>
    %cst = arith.constant dense<0.000000e+00> : vector<16x625xf32>
    %3 = tpu.matmul %0, %2, %cst {dimension_numbers = #tpu.dot_dimension_numbers<[1], [0], [0], [1], [0, 0, 1, 1], [], []>, precision = #tpu.contract_precision<fp32>} : vector<16x16xf32>, vector<16x625xf32>, vector<16x625xf32> -> vector<16x625xf32>
    %c0_4 = arith.constant 0 : index
    %c0_5 = arith.constant 0 : index
    %4 = vector.load %arg4[%c0_4, %c0_5] : memref<16x1xf32, #tpu.memory_space<vmem>>, vector<16x1xf32>
    %5 = vector.broadcast %4 : vector<16x1xf32> to vector<16x625xf32>
    %6 = arith.addf %3, %5 : vector<16x625xf32>
    %c0_6 = arith.constant 0 : index
    %c0_7 = arith.constant 0 : index
    %c0_8 = arith.constant 0 : index
    %7 = vector.load %arg5[%c0_6, %c0_7, %c0_8] : memref<1x16x625xf32, #tpu.memory_space<vmem>>, vector<1x16x625xf32>
    %8 = vector.shape_cast %7 : vector<1x16x625xf32> to vector<16x625xf32>
    %9 = arith.addf %6, %8 : vector<16x625xf32>
    %cst_9 = arith.constant 5.000000e-01 : f32
    %10 = vector.broadcast %cst_9 : f32 to vector<16x625xf32>
    %11 = arith.mulf %10, %9 : vector<16x625xf32>
    %cst_10 = arith.constant 0.707106769 : f32
    %12 = vector.broadcast %cst_10 : f32 to vector<16x625xf32>
    %13 = arith.mulf %9, %12 : vector<16x625xf32>
    %14 = math.erf %13 : vector<16x625xf32>
    %cst_11 = arith.constant 1.000000e+00 : f32
    %15 = vector.broadcast %cst_11 : f32 to vector<16x625xf32>
    %16 = arith.addf %15, %14 : vector<16x625xf32>
    %17 = arith.mulf %11, %16 : vector<16x625xf32>
    %c0_12 = arith.constant 0 : index
    %c0_13 = arith.constant 0 : index
    %c0_14 = arith.constant 0 : index
    %18 = vector.load %arg6[%c0_12, %c0_13, %c0_14] : memref<1x16x625xf32, #tpu.memory_space<vmem>>, vector<1x16x625xf32>
    %19 = vector.shape_cast %18 : vector<1x16x625xf32> to vector<16x625xf32>
    %20 = vector.shape_cast %17 : vector<16x625xf32> to vector<1x16x625xf32>
    tpu.vector_store %arg6[%c0_12, %c0_13, %c0_14], %20 {strides = array<i32>} : memref<1x16x625xf32, #tpu.memory_space<vmem>>, vector<1x16x625xf32>,
    return
  }
  func.func @transform_0(%arg0: i32, %arg1: i32) -> (i32, i32, i32) {
    %c0_i32 = arith.constant 0 : i32
    %c0_i32_0 = arith.constant 0 : i32
    return %arg0, %c0_i32, %arg1 : i32, i32, i32
  }
  func.func @transform_1(%arg0: i32, %arg1: i32) -> (i32, i32) {
    %c0_i32 = arith.constant 0 : i32
    %c0_i32_0 = arith.constant 0 : i32
    %c0_i32_1 = arith.constant 0 : i32
    return %c0_i32, %c0_i32_0 : i32, i32
  }
  func.func @transform_2(%arg0: i32, %arg1: i32) -> (i32, i32) {
    %c0_i32 = arith.constant 0 : i32
    %c0_i32_0 = arith.constant 0 : i32
    %c0_i32_1 = arith.constant 0 : i32
    return %c0_i32, %c0_i32_0 : i32, i32
  }
  func.func @transform_3(%arg0: i32, %arg1: i32) -> (i32, i32, i32) {
    %c0_i32 = arith.constant 0 : i32
    %c0_i32_0 = arith.constant 0 : i32
    return %arg0, %c0_i32, %arg1 : i32, i32, i32
  }
  func.func @transform_4(%arg0: i32, %arg1: i32) -> (i32, i32, i32) {
    %c0_i32 = arith.constant 0 : i32
    %c0_i32_0 = arith.constant 0 : i32
    return %arg0, %c0_i32, %arg1 : i32, i32, i32
  }
}

module attributes {stable_mosaic.version = 11 : i64} {
  func.func @_conv_res_kernel(%arg0: i32, %arg1: i32, %arg2: memref<1x16x625xf32, #tpu.memory_space<vmem>>, %arg3: memref<16x16xf32, #tpu.memory_space<vmem>>, %arg4: memref<16x1xf32, #tpu.memory_space<vmem>>, %arg5: memref<1x16x625xf32, #tpu.memory_space<vmem>>, %arg6: memref<1x16x625xf32, #tpu.memory_space<vmem>>) attributes {dimension_semantics = [#tpu.dimension_semantics<parallel>, #tpu.dimension_semantics<parallel>], iteration_bounds = array<i64: 2, 1>, scalar_prefetch = 0 : i64, scratch_operands = 0 : i64, tpu.core_type = #tpu.core_type<tc>, window_params = [{transform_indices = @transform_0, window_bounds = array<i64: 1, 16, 625>}, {pipeline_mode = #tpu.pipeline_mode<synchronous>, transform_indices = @transform_1, window_bounds = array<i64: 16, 16>}, {pipeline_mode = #tpu.pipeline_mode<synchronous>, transform_indices = @transform_2, window_bounds = array<i64: 16, 1>}, {transform_indices = @transform_3, window_bounds = array<i64: 1, 16, 625>}, {transform_indices = @transform_4, window_bounds = array<i64: 1, 16, 625>}]} {
    %c0 = arith.constant 0 : index
    %c0_0 = arith.constant 0 : index
    %0 = vector.load %arg3[%c0, %c0_0] : memref<16x16xf32, #tpu.memory_space<vmem>>, vector<16x16xf32>
    %c0_1 = arith.constant 0 : index
    %c0_2 = arith.constant 0 : index
    %c0_3 = arith.constant 0 : index
    %1 = vector.load %arg2[%c0_1, %c0_2, %c0_3] : memref<1x16x625xf32, #tpu.memory_space<vmem>>, vector<1x16x625xf32>
    %2 = vector.shape_cast %1 : vector<1x16x625xf32> to vector<16x625xf32>
    %cst = arith.constant dense<0.000000e+00> : vector<16x625xf32>
    %3 = tpu.matmul %0, %2, %cst {dimension_numbers = #tpu.dot_dimension_numbers<[1], [0], [0], [1], [0, 0, 1, 1], [], []>, precision = #tpu.contract_precision<fp32>} : vector<16x16xf32>, vector<16x625xf32>, vector<16x625xf32> -> vector<16x625xf32>
    %c0_4 = arith.constant 0 : index
    %c0_5 = arith.constant 0 : index
    %4 = vector.load %arg4[%c0_4, %c0_5] : memref<16x1xf32, #tpu.memory_space<vmem>>, vector<16x1xf32>
    %5 = vector.broadcast %4 : vector<16x1xf32> to vector<16x625xf32>
    %6 = arith.addf %3, %5 : vector<16x625xf32>
    %c0_6 = arith.constant 0 : index
    %c0_7 = arith.constant 0 : index
    %c0_8 = arith.constant 0 : index
    %7 = vector.load %arg5[%c0_6, %c0_7, %c0_8] : memref<1x16x625xf32, #tpu.memory_space<vmem>>, vector<1x16x625xf32>
    %8 = vector.shape_cast %7 : vector<1x16x625xf32> to vector<16x625xf32>
    %9 = arith.addf %6, %8 : vector<16x625xf32>
    %c0_9 = arith.constant 0 : index
    %c0_10 = arith.constant 0 : index
    %c0_11 = arith.constant 0 : index
    %10 = vector.load %arg6[%c0_9, %c0_10, %c0_11] : memref<1x16x625xf32, #tpu.memory_space<vmem>>, vector<1x16x625xf32>
    %11 = vector.shape_cast %10 : vector<1x16x625xf32> to vector<16x625xf32>
    %12 = vector.shape_cast %9 : vector<16x625xf32> to vector<1x16x625xf32>
    tpu.vector_store %arg6[%c0_9, %c0_10, %c0_11], %12 {strides = array<i32>} : memref<1x16x625xf32, #tpu.memory_space<vmem>>, vector<1x16x625xf32>,
    return
  }
  func.func @transform_0(%arg0: i32, %arg1: i32) -> (i32, i32, i32) {
    %c0_i32 = arith.constant 0 : i32
    %c0_i32_0 = arith.constant 0 : i32
    return %arg0, %c0_i32, %arg1 : i32, i32, i32
  }
  func.func @transform_1(%arg0: i32, %arg1: i32) -> (i32, i32) {
    %c0_i32 = arith.constant 0 : i32
    %c0_i32_0 = arith.constant 0 : i32
    %c0_i32_1 = arith.constant 0 : i32
    return %c0_i32, %c0_i32_0 : i32, i32
  }
  func.func @transform_2(%arg0: i32, %arg1: i32) -> (i32, i32) {
    %c0_i32 = arith.constant 0 : i32
    %c0_i32_0 = arith.constant 0 : i32
    %c0_i32_1 = arith.constant 0 : i32
    return %c0_i32, %c0_i32_0 : i32, i32
  }
  func.func @transform_3(%arg0: i32, %arg1: i32) -> (i32, i32, i32) {
    %c0_i32 = arith.constant 0 : i32
    %c0_i32_0 = arith.constant 0 : i32
    return %arg0, %c0_i32, %arg1 : i32, i32, i32
  }
  func.func @transform_4(%arg0: i32, %arg1: i32) -> (i32, i32, i32) {
    %c0_i32 = arith.constant 0 : i32
    %c0_i32_0 = arith.constant 0 : i32
    return %arg0, %c0_i32, %arg1 : i32, i32, i32
  }
}

module attributes {stable_mosaic.version = 11 : i64} {
  func.func @_head_kernel(%arg0: i32, %arg1: i32, %arg2: memref<1x16x256xf32, #tpu.memory_space<vmem>>, %arg3: memref<128x16xf32, #tpu.memory_space<vmem>>, %arg4: memref<128x1xf32, #tpu.memory_space<vmem>>, %arg5: memref<32x128xf32, #tpu.memory_space<vmem>>, %arg6: memref<1x128x256xf32, #tpu.memory_space<vmem>>, %arg7: memref<1x32x256xf32, #tpu.memory_space<vmem>>, %arg8: memref<1x2x256xf32, #tpu.memory_space<vmem>>) attributes {dimension_semantics = [#tpu.dimension_semantics<parallel>, #tpu.dimension_semantics<parallel>], iteration_bounds = array<i64: 2, 1>, scalar_prefetch = 0 : i64, scratch_operands = 0 : i64, tpu.core_type = #tpu.core_type<tc>, window_params = [{transform_indices = @transform_0, window_bounds = array<i64: 1, 16, 256>}, {pipeline_mode = #tpu.pipeline_mode<synchronous>, transform_indices = @transform_1, window_bounds = array<i64: 128, 16>}, {pipeline_mode = #tpu.pipeline_mode<synchronous>, transform_indices = @transform_2, window_bounds = array<i64: 128, 1>}, {pipeline_mode = #tpu.pipeline_mode<synchronous>, transform_indices = @transform_3, window_bounds = array<i64: 32, 128>}, {transform_indices = @transform_4, window_bounds = array<i64: 1, 128, 256>}, {transform_indices = @transform_5, window_bounds = array<i64: 1, 32, 256>}, {transform_indices = @transform_6, window_bounds = array<i64: 1, 2, 256>}]} {
    %c0 = arith.constant 0 : index
    %c0_0 = arith.constant 0 : index
    %0 = vector.load %arg3[%c0, %c0_0] : memref<128x16xf32, #tpu.memory_space<vmem>>, vector<128x16xf32>
    %c0_1 = arith.constant 0 : index
    %c0_2 = arith.constant 0 : index
    %c0_3 = arith.constant 0 : index
    %1 = vector.load %arg2[%c0_1, %c0_2, %c0_3] : memref<1x16x256xf32, #tpu.memory_space<vmem>>, vector<1x16x256xf32>
    %2 = vector.shape_cast %1 : vector<1x16x256xf32> to vector<16x256xf32>
    %cst = arith.constant dense<0.000000e+00> : vector<128x256xf32>
    %3 = tpu.matmul %0, %2, %cst {dimension_numbers = #tpu.dot_dimension_numbers<[1], [0], [0], [1], [0, 0, 1, 1], [], []>, precision = #tpu.contract_precision<fp32>} : vector<128x16xf32>, vector<16x256xf32>, vector<128x256xf32> -> vector<128x256xf32>
    %c0_4 = arith.constant 0 : index
    %c0_5 = arith.constant 0 : index
    %4 = vector.load %arg4[%c0_4, %c0_5] : memref<128x1xf32, #tpu.memory_space<vmem>>, vector<128x1xf32>
    %5 = vector.broadcast %4 : vector<128x1xf32> to vector<128x256xf32>
    %6 = arith.addf %3, %5 : vector<128x256xf32>
    %cst_6 = arith.constant 5.000000e-01 : f32
    %7 = vector.broadcast %cst_6 : f32 to vector<128x256xf32>
    %8 = arith.mulf %7, %6 : vector<128x256xf32>
    %cst_7 = arith.constant 0.707106769 : f32
    %9 = vector.broadcast %cst_7 : f32 to vector<128x256xf32>
    %10 = arith.mulf %6, %9 : vector<128x256xf32>
    %11 = math.erf %10 : vector<128x256xf32>
    %cst_8 = arith.constant 1.000000e+00 : f32
    %12 = vector.broadcast %cst_8 : f32 to vector<128x256xf32>
    %13 = arith.addf %12, %11 : vector<128x256xf32>
    %14 = arith.mulf %8, %13 : vector<128x256xf32>
    %c0_9 = arith.constant 0 : index
    %c0_10 = arith.constant 0 : index
    %c0_11 = arith.constant 0 : index
    %15 = vector.load %arg6[%c0_9, %c0_10, %c0_11] : memref<1x128x256xf32, #tpu.memory_space<vmem>>, vector<1x128x256xf32>
    %16 = vector.shape_cast %15 : vector<1x128x256xf32> to vector<128x256xf32>
    %17 = vector.shape_cast %14 : vector<128x256xf32> to vector<1x128x256xf32>
    tpu.vector_store %arg6[%c0_9, %c0_10, %c0_11], %17 {strides = array<i32>} : memref<1x128x256xf32, #tpu.memory_space<vmem>>, vector<1x128x256xf32>,
    %c0_12 = arith.constant 0 : index
    %c0_13 = arith.constant 0 : index
    %18 = vector.load %arg5[%c0_12, %c0_13] : memref<32x128xf32, #tpu.memory_space<vmem>>, vector<32x128xf32>
    %cst_14 = arith.constant dense<0.000000e+00> : vector<32x256xf32>
    %19 = tpu.matmul %18, %14, %cst_14 {dimension_numbers = #tpu.dot_dimension_numbers<[1], [0], [0], [1], [0, 0, 1, 1], [], []>, precision = #tpu.contract_precision<fp32>} : vector<32x128xf32>, vector<128x256xf32>, vector<32x256xf32> -> vector<32x256xf32>
    %c0_15 = arith.constant 0 : index
    %c0_16 = arith.constant 0 : index
    %c0_17 = arith.constant 0 : index
    %20 = vector.load %arg7[%c0_15, %c0_16, %c0_17] : memref<1x32x256xf32, #tpu.memory_space<vmem>>, vector<1x32x256xf32>
    %21 = vector.shape_cast %20 : vector<1x32x256xf32> to vector<32x256xf32>
    %22 = vector.shape_cast %19 : vector<32x256xf32> to vector<1x32x256xf32>
    tpu.vector_store %arg7[%c0_15, %c0_16, %c0_17], %22 {strides = array<i32>} : memref<1x32x256xf32, #tpu.memory_space<vmem>>, vector<1x32x256xf32>,
    %cst_18 = arith.constant dense<0.000000e+00> : vector<256xf32>
    %23 = vector.multi_reduction <add>, %19, %cst_18 [0] : vector<32x256xf32> to vector<256xf32>
    %24 = vector.shape_cast %23 : vector<256xf32> to vector<1x256xf32>
    %cst_19 = arith.constant 3.200000e+01 : f32
    %25 = vector.broadcast %cst_19 : f32 to vector<1x256xf32>
    %26 = arith.divf %24, %25 : vector<1x256xf32>
    %27 = vector.broadcast %26 : vector<1x256xf32> to vector<32x256xf32>
    %28 = arith.subf %19, %27 : vector<32x256xf32>
    %29 = arith.mulf %28, %28 : vector<32x256xf32>
    %cst_20 = arith.constant dense<0.000000e+00> : vector<256xf32>
    %30 = vector.multi_reduction <add>, %29, %cst_20 [0] : vector<32x256xf32> to vector<256xf32>
    %31 = vector.shape_cast %30 : vector<256xf32> to vector<1x256xf32>
    %cst_21 = arith.constant 0.0322580636 : f32
    %32 = vector.broadcast %cst_21 : f32 to vector<1x256xf32>
    %33 = arith.mulf %31, %32 : vector<1x256xf32>
    %34 = tpu.concatenate %26, %33 in 0 : vector<1x256xf32>, vector<1x256xf32> -> vector<2x256xf32>
    %c0_22 = arith.constant 0 : index
    %c0_23 = arith.constant 0 : index
    %c0_24 = arith.constant 0 : index
    %35 = vector.load %arg8[%c0_22, %c0_23, %c0_24] : memref<1x2x256xf32, #tpu.memory_space<vmem>>, vector<1x2x256xf32>
    %36 = vector.shape_cast %35 : vector<1x2x256xf32> to vector<2x256xf32>
    %37 = vector.shape_cast %34 : vector<2x256xf32> to vector<1x2x256xf32>
    tpu.vector_store %arg8[%c0_22, %c0_23, %c0_24], %37 {strides = array<i32>} : memref<1x2x256xf32, #tpu.memory_space<vmem>>, vector<1x2x256xf32>,
    return
  }
  func.func @transform_0(%arg0: i32, %arg1: i32) -> (i32, i32, i32) {
    %c0_i32 = arith.constant 0 : i32
    %c0_i32_0 = arith.constant 0 : i32
    return %arg0, %c0_i32, %arg1 : i32, i32, i32
  }
  func.func @transform_1(%arg0: i32, %arg1: i32) -> (i32, i32) {
    %c0_i32 = arith.constant 0 : i32
    %c0_i32_0 = arith.constant 0 : i32
    %c0_i32_1 = arith.constant 0 : i32
    return %c0_i32, %c0_i32_0 : i32, i32
  }
  func.func @transform_2(%arg0: i32, %arg1: i32) -> (i32, i32) {
    %c0_i32 = arith.constant 0 : i32
    %c0_i32_0 = arith.constant 0 : i32
    %c0_i32_1 = arith.constant 0 : i32
    return %c0_i32, %c0_i32_0 : i32, i32
  }
  func.func @transform_3(%arg0: i32, %arg1: i32) -> (i32, i32) {
    %c0_i32 = arith.constant 0 : i32
    %c0_i32_0 = arith.constant 0 : i32
    %c0_i32_1 = arith.constant 0 : i32
    return %c0_i32, %c0_i32_0 : i32, i32
  }
  func.func @transform_4(%arg0: i32, %arg1: i32) -> (i32, i32, i32) {
    %c0_i32 = arith.constant 0 : i32
    %c0_i32_0 = arith.constant 0 : i32
    return %arg0, %c0_i32, %arg1 : i32, i32, i32
  }
  func.func @transform_5(%arg0: i32, %arg1: i32) -> (i32, i32, i32) {
    %c0_i32 = arith.constant 0 : i32
    %c0_i32_0 = arith.constant 0 : i32
    return %arg0, %c0_i32, %arg1 : i32, i32, i32
  }
  func.func @transform_6(%arg0: i32, %arg1: i32) -> (i32, i32, i32) {
    %c0_i32 = arith.constant 0 : i32
    %c0_i32_0 = arith.constant 0 : i32
    return %arg0, %c0_i32, %arg1 : i32, i32, i32
  }
}

</mosaic_0001>

<llo_original>
// kernel: diverse_fno2d_forward.6
$region0: #{diverse_fno2d_forward.6}
  #allocation0 [shape = 'u32[]', space=smem, size = 0x4, offset = 0x4, fixed_abs, tag = 'smem constant byte address 0x4 - core index']
  #allocation1 [shape = 'u32[72,128]{1,0:T(1,128)}', space=vmem, size = 0x9000, scoped, tag = 'internal scratch']
  %s0 = inlined_call_operand.vmem [shape: f32[2,1,625], index: 0, kind: input, shape index: {}]
  %s1 = inlined_call_operand.vmem [shape: f32[1,625], index: 1, kind: input, shape index: {}]
  %s2 = inlined_call_operand.vmem [shape: f32[1,625], index: 2, kind: input, shape index: {}]
  %s3 = inlined_call_operand.vmem [shape: f32[1,625], index: 3, kind: input, shape index: {}]
  %s4 = inlined_call_operand.vmem [shape: f32[16,3], index: 4, kind: input, shape index: {}]
  %s5 = inlined_call_operand.vmem [shape: f32[16,1], index: 5, kind: input, shape index: {}]
  %s6 = inlined_call_operand.vmem [shape: f32[2,16,625], index: 6, kind: output, shape index: {}]
  %s7 = sld [smem:[#allocation0]]
  $region57: #{diverse_fno2d_forward.6} parent=0
    _
  %s9 = ssub.s32 1, %s7
  %s10 = scalar_select 0, %s9, %s7
  loop: start=0, step=1, limit=4
  $region2: #{diverse_fno2d_forward.6} parent=0 // loop_pre_header
    _
  $region3: #{diverse_fno2d_forward.6} parent=0 // loop_header
    %s12 = sphi 0, %s16
    %p13 = scmp.ge.s32.totalorder %s12, 4
    %s19 = sphi 0, %s31
    %s20 = sphi 0, %s27
    %s21 = sphi 0, %s19
    %s22 = sphi 0, %s20
    %s23 = sphi 0, %s21
    %s24 = sphi 0, %s22
    %s36 = sphi 0, %s38
    %s39 = sphi 0, %s36
    %s40 = sphi 0, %s39
    %s56 = sphi 0, %s40
    %s62 = sphi 0, %s64
    %s65 = sphi 0, %s62
    %s66 = sphi 0, %s65
    %s82 = sphi 0, %s66
    %s88 = sphi 0, %s90
    %s91 = sphi 0, %s88
    %s92 = sphi 0, %s91
    %s108 = sphi 0, %s92
    %s114 = sphi 0, %s116
    %s117 = sphi 0, %s114
    %s118 = sphi 0, %s117
    %s134 = sphi 0, %s118
    %s138 = sphi 0, %s138
    %s140 = sphi 0, %s138
    %s141 = sphi 0, %s140
    %s155 = sphi 0, %s141
    %s159 = sphi 0, %s159
    %s161 = sphi 0, %s159
    %s162 = sphi 0, %s161
    %s176 = sphi 0, %s162
    %s184 = sphi 0, %s186
    %s187 = sphi 0, %s184
    %s188 = sphi 0, %s187
    %s204 = sphi 0, %s188
  $region4: #{diverse_fno2d_forward.6} parent=0 // loop_header_branch
    %15 = sbr.rel (%p13) target = $region8
  $region5: #{diverse_fno2d_forward.6} parent=0 // loop_body
    %s17 = ssub.s32 %s12, 1
    %s18 = ssub.s32 %s12, 2
    %s25 = sadd.s32 1, %s20
    %p26 = scmp.ge.s32.totalorder %s25, 1
    %s27 = scalar_select %p26, 0, %s25
    %s28 = sadd.s32 1, %s19
    %s29 = scalar_select %p26, %s28, %s19
    %p30 = scmp.ge.s32.totalorder %s29, 2
    %s31 = scalar_select %p30, 0, %s29
    %s32 = ssub.s32 %s19, %s31
    %s33 = ssub.s32 %s20, %s27
    %s34 = sor.u32 %s32, %s33
    %p35 = scmp.eq.s32.totalorder %s34, 0
    %s37 = sadd.s32 %s36, 1
    %s38 = scalar_select %p35, %s36, %s37
    %p41 = pneg %p35
    %p42 = scmp.eq.s32.totalorder %s12, 1
    %p43 = por %p41, %p42
    %p44 = scmp.ne.s32.totalorder %s36, %s39
    %p45 = scmp.eq.s32.totalorder %s12, 0
    %p46 = por %p44, %p45
    %p47 = scmp.ne.s32.totalorder %s36, %s39
    %p48 = scmp.eq.s32.totalorder %s17, 1
    %p49 = por %p47, %p48
    %p50 = scmp.ne.s32.totalorder %s39, %s40
    %p51 = scmp.eq.s32.totalorder %s17, 0
    %p52 = por %p50, %p51
    %p53 = scmp.ne.s32.totalorder %s39, %s40
    %p54 = scmp.eq.s32.totalorder %s18, 1
    %p55 = por %p53, %p54
    %p57 = scmp.ne.s32.totalorder %s40, %s56
    %p58 = scmp.eq.s32.totalorder %s18, 0
    %p59 = por %p57, %p58
    %s60 = ssub.s32 %s20, %s27
    %p61 = scmp.eq.s32.totalorder %s60, 0
    %s63 = sadd.s32 %s62, 1
    %s64 = scalar_select %p61, %s62, %s63
    %p67 = pneg %p61
    %p68 = scmp.eq.s32.totalorder %s12, 1
    %p69 = por %p67, %p68
    %p70 = scmp.ne.s32.totalorder %s62, %s65
    %p71 = scmp.eq.s32.totalorder %s12, 0
    %p72 = por %p70, %p71
    %p73 = scmp.ne.s32.totalorder %s62, %s65
    %p74 = scmp.eq.s32.totalorder %s17, 1
    %p75 = por %p73, %p74
    %p76 = scmp.ne.s32.totalorder %s65, %s66
    %p77 = scmp.eq.s32.totalorder %s17, 0
    %p78 = por %p76, %p77
    %p79 = scmp.ne.s32.totalorder %s65, %s66
    %p80 = scmp.eq.s32.totalorder %s18, 1
    %p81 = por %p79, %p80
    %p83 = scmp.ne.s32.totalorder %s66, %s82
    %p84 = scmp.eq.s32.totalorder %s18, 0
    %p85 = por %p83, %p84
    %s86 = ssub.s32 %s20, %s27
    %p87 = scmp.eq.s32.totalorder %s86, 0
    %s89 = sadd.s32 %s88, 1
    %s90 = scalar_select %p87, %s88, %s89
    %p93 = pneg %p87
    %p94 = scmp.eq.s32.totalorder %s12, 1
    %p95 = por %p93, %p94
    %p96 = scmp.ne.s32.totalorder %s88, %s91
    %p97 = scmp.eq.s32.totalorder %s12, 0
    %p98 = por %p96, %p97
    %p99 = scmp.ne.s32.totalorder %s88, %s91
    %p100 = scmp.eq.s32.totalorder %s17, 1
    %p101 = por %p99, %p100
    %p102 = scmp.ne.s32.totalorder %s91, %s92
    %p103 = scmp.eq.s32.totalorder %s17, 0
    %p104 = por %p102, %p103
    %p105 = scmp.ne.s32.totalorder %s91, %s92
    %p106 = scmp.eq.s32.totalorder %s18, 1
    %p107 = por %p105, %p106
    %p109 = scmp.ne.s32.totalorder %s92, %s108
    %p110 = scmp.eq.s32.totalorder %s18, 0
    %p111 = por %p109, %p110
    %s112 = ssub.s32 %s20, %s27
    %p113 = scmp.eq.s32.totalorder %s112, 0
    %s115 = sadd.s32 %s114, 1
    %s116 = scalar_select %p113, %s114, %s115
    %p119 = pneg %p113
    %p120 = scmp.eq.s32.totalorder %s12, 1
    %p121 = por %p119, %p120
    %p122 = scmp.ne.s32.totalorder %s114, %s117
    %p123 = scmp.eq.s32.totalorder %s12, 0
    %p124 = por %p122, %p123
    %p125 = scmp.ne.s32.totalorder %s114, %s117
    %p126 = scmp.eq.s32.totalorder %s17, 1
    %p127 = por %p125, %p126
    %p128 = scmp.ne.s32.totalorder %s117, %s118
    %p129 = scmp.eq.s32.totalorder %s17, 0
    %p130 = por %p128, %p129
    %p131 = scmp.ne.s32.totalorder %s117, %s118
    %p132 = scmp.eq.s32.totalorder %s18, 1
    %p133 = por %p131, %p132
    %p135 = scmp.ne.s32.totalorder %s118, %s134
    %p136 = scmp.eq.s32.totalorder %s18, 0
    %p137 = por %p135, %p136
    %s139 = sadd.s32 %s138, 1
    %p142 = scmp.eq.s32.totalorder %s12, 1
    %p143 = scmp.ne.s32.totalorder %s138, %s140
    %p144 = scmp.eq.s32.totalorder %s12, 0
    %p145 = por %p143, %p144
    %p146 = scmp.ne.s32.totalorder %s138, %s140
    %p147 = scmp.eq.s32.totalorder %s17, 1
    %p148 = por %p146, %p147
    %p149 = scmp.ne.s32.totalorder %s140, %s141
    %p150 = scmp.eq.s32.totalorder %s17, 0
    %p151 = por %p149, %p150
    %p152 = scmp.ne.s32.totalorder %s140, %s141
    %p153 = scmp.eq.s32.totalorder %s18, 1
    %p154 = por %p152, %p153
    %p156 = scmp.ne.s32.totalorder %s141, %s155
    %p157 = scmp.eq.s32.totalorder %s18, 0
    %p158 = por %p156, %p157
    %s160 = sadd.s32 %s159, 1
    %p163 = scmp.eq.s32.totalorder %s12, 1
    %p164 = scmp.ne.s32.totalorder %s159, %s161
    %p165 = scmp.eq.s32.totalorder %s12, 0
    %p166 = por %p164, %p165
    %p167 = scmp.ne.s32.totalorder %s159, %s161
    %p168 = scmp.eq.s32.totalorder %s17, 1
    %p169 = por %p167, %p168
    %p170 = scmp.ne.s32.totalorder %s161, %s162
    %p171 = scmp.eq.s32.totalorder %s17, 0
    %p172 = por %p170, %p171
    %p173 = scmp.ne.s32.totalorder %s161, %s162
    %p174 = scmp.eq.s32.totalorder %s18, 1
    %p175 = por %p173, %p174
    %p177 = scmp.ne.s32.totalorder %s162, %s176
    %p178 = scmp.eq.s32.totalorder %s18, 0
    %p179 = por %p177, %p178
    %s180 = ssub.s32 %s19, %s31
    %s181 = ssub.s32 %s20, %s27
    %s182 = sor.u32 %s180, %s181
    %p183 = scmp.eq.s32.totalorder %s182, 0
    %s185 = sadd.s32 %s184, 1
    %s186 = scalar_select %p183, %s184, %s185
    %p189 = pneg %p183
    %p190 = scmp.eq.s32.totalorder %s12, 1
    %p191 = por %p189, %p190
    %p192 = scmp.ne.s32.totalorder %s184, %s187
    %p193 = scmp.eq.s32.totalorder %s12, 0
    %p194 = por %p192, %p193
    %p195 = scmp.ne.s32.totalorder %s184, %s187
    %p196 = scmp.eq.s32.totalorder %s17, 1
    %p197 = por %p195, %p196
    %p198 = scmp.ne.s32.totalorder %s187, %s188
    %p199 = scmp.eq.s32.totalorder %s17, 0
    %p200 = por %p198, %p199
    %p201 = scmp.ne.s32.totalorder %s187, %s188
    %p202 = scmp.eq.s32.totalorder %s18, 1
    %p203 = por %p201, %p202
    %p205 = scmp.ne.s32.totalorder %s188, %s204
    %p206 = scmp.eq.s32.totalorder %s18, 0
    %p207 = por %p205, %p206
    %p208 = scmp.le.s32.totalorder 1, %s12
    %p209 = scmp.lt.s32.totalorder %s12, 3
    %p210 = pnand %p208, %p209
    %p211 = pneg %p210
    // Predicated region
    $region9: #{diverse_fno2d_forward.6} parent=5 // pred_check
      _
    $region10: #{diverse_fno2d_forward.6} parent=5 // pred_check_branch
      %213 = sbr.rel (%p210) target = $region12
    $region11: #{diverse_fno2d_forward.6} parent=5 // pred_region
      %s214 = ssub.s32 %s12, 1
      // Predicated region
      $region13: #{diverse_fno2d_forward.6} parent=11 // pred_check
        %p215 = pneg %p78
      $region14: #{diverse_fno2d_forward.6} parent=11 // pred_check_branch
        %217 = sbr.rel (%p215) target = $region16
      $region15: #{diverse_fno2d_forward.6} parent=11 // pred_region
        %s218 = smul.u32 5, %s22
        %p219 = scmp.lt.s32.totalorder %s218, 4
        %s220 = scalar_select %p219, %s218, 4
        %s221 = scalar_lea.vmem %s1, %s220
        %s222 = smul.u32 5, %s22
      $region16: #{diverse_fno2d_forward.6} parent=11 // pred_fallthru
        _
      // Predicated region
      $region17: #{diverse_fno2d_forward.6} parent=11 // pred_check
        %p223 = pneg %p104
      $region18: #{diverse_fno2d_forward.6} parent=11 // pred_check_branch
        %225 = sbr.rel (%p223) target = $region20
      $region19: #{diverse_fno2d_forward.6} parent=11 // pred_region
        %s226 = smul.u32 5, %s22
        %p227 = scmp.lt.s32.totalorder %s226, 4
        %s228 = scalar_select %p227, %s226, 4
        %s229 = scalar_lea.vmem %s2, %s228
        %s230 = smul.u32 5, %s22
      $region20: #{diverse_fno2d_forward.6} parent=11 // pred_fallthru
        _
      // Predicated region
      $region21: #{diverse_fno2d_forward.6} parent=11 // pred_check
        %p231 = pneg %p130
      $region22: #{diverse_fno2d_forward.6} parent=11 // pred_check_branch
        %233 = sbr.rel (%p231) target = $region24
      $region23: #{diverse_fno2d_forward.6} parent=11 // pred_region
        %s234 = smul.u32 5, %s22
        %p235 = scmp.lt.s32.totalorder %s234, 4
        %s236 = scalar_select %p235, %s234, 4
        %s237 = scalar_lea.vmem %s3, %s236
        %s238 = smul.u32 5, %s22
      $region24: #{diverse_fno2d_forward.6} parent=11 // pred_fallthru
        _
      // Predicated region
      $region25: #{diverse_fno2d_forward.6} parent=11 // pred_check
        %p239 = pneg %p151
      $region26: #{diverse_fno2d_forward.6} parent=11 // pred_check_branch
        %241 = sbr.rel (%p239) target = $region28
      $region27: #{diverse_fno2d_forward.6} parent=11 // pred_region
        _
      $region28: #{diverse_fno2d_forward.6} parent=11 // pred_fallthru
        _
      // Predicated region
      $region29: #{diverse_fno2d_forward.6} parent=11 // pred_check
        %p242 = pneg %p172
      $region30: #{diverse_fno2d_forward.6} parent=11 // pred_check_branch
        %244 = sbr.rel (%p242) target = $region32
      $region31: #{diverse_fno2d_forward.6} parent=11 // pred_region
        _
      $region32: #{diverse_fno2d_forward.6} parent=11 // pred_fallthru
        _
    $region12: #{diverse_fno2d_forward.6} parent=5 // pred_fallthru
      _
    %p245 = scmp.lt.s32.totalorder %s12, 2
    // Predicated region
    $region33: #{diverse_fno2d_forward.6} parent=5 // pred_check
      %p246 = pneg %p245
    $region34: #{diverse_fno2d_forward.6} parent=5 // pred_check_branch
      %248 = sbr.rel (%p246) target = $region36
    $region35: #{diverse_fno2d_forward.6} parent=5 // pred_region
      // Predicated region
      $region37: #{diverse_fno2d_forward.6} parent=35 // pred_check
        %p249 = pneg %p46
      $region38: #{diverse_fno2d_forward.6} parent=35 // pred_check_branch
        %251 = sbr.rel (%p249) target = $region40
      $region39: #{diverse_fno2d_forward.6} parent=35 // pred_region
        %s252 = smul.u32 5, %s20
        %p253 = scmp.lt.s32.totalorder %s19, 1
        %s254 = scalar_select %p253, %s19, 1
        %p255 = scmp.lt.s32.totalorder %s252, 4
        %s256 = scalar_select %p255, %s252, 4
        %s257 = smul.addr %s254, 5
        %s258 = sadd.s32 %s256, %s257
        %s259 = scalar_lea.vmem %s0, %s258
        %s260 = smul.u32 5, %s20
      $region40: #{diverse_fno2d_forward.6} parent=35 // pred_fallthru
        _
    $region36: #{diverse_fno2d_forward.6} parent=5 // pred_fallthru
      _
    %p261 = scmp.le.s32.totalorder 1, %s12
    %p262 = scmp.lt.s32.totalorder %s12, 3
    %p263 = pnand %p261, %p262
    %p264 = pneg %p263
    // Predicated region
    $region41: #{diverse_fno2d_forward.6} parent=5 // pred_check
      _
    $region42: #{diverse_fno2d_forward.6} parent=5 // pred_check_branch
      %266 = sbr.rel (%p263) target = $region44
    $region43: #{diverse_fno2d_forward.6} parent=5 // pred_region
      %s267 = ssub.s32 %s12, 1
      %s268 = smul.u32 5, %s22
      %p269 = scmp.lt.s32.totalorder %s21, 1
      %s270 = scalar_select %p269, %s21, 1
      %p271 = scmp.lt.s32.totalorder %s268, 4
      %s272 = scalar_select %p271, %s268, 4
      %s273 = smul.addr %s270, 5
      %s274 = sadd.s32 %s272, %s273
      %s275 = scalar_lea.vmem %s0, %s274
      %p276 = pneg %p52
      %p277 = pneg %p49
      %s278 = smul.u32 5, %s22
      %p279 = scmp.lt.s32.totalorder %s278, 4
      %s280 = scalar_select %p279, %s278, 4
      %s281 = scalar_lea.vmem %s1, %s280
      %p282 = pneg %p78
      %p283 = pneg %p75
      %s284 = smul.u32 5, %s22
      %p285 = scmp.lt.s32.totalorder %s284, 4
      %s286 = scalar_select %p285, %s284, 4
      %s287 = scalar_lea.vmem %s2, %s286
      %p288 = pneg %p104
      %p289 = pneg %p101
      %s290 = smul.u32 5, %s22
      %p291 = scmp.lt.s32.totalorder %s290, 4
      %s292 = scalar_select %p291, %s290, 4
      %s293 = scalar_lea.vmem %s3, %s292
      %p294 = pneg %p130
      %p295 = pneg %p127
      %p296 = pneg %p151
      %p297 = pneg %p148
      %p298 = pneg %p172
      %p299 = pneg %p169
      %p300 = pneg %p200
      %p301 = pneg %p197
      %s302 = smul.u32 5, %s22
      %p303 = scmp.lt.s32.totalorder %s21, 1
      %s304 = scalar_select %p303, %s21, 1
      %p305 = scmp.lt.s32.totalorder %s302, 4
      %s306 = scalar_select %p305, %s302, 4
      %s307 = smul.addr %s304, 10
      %s308 = sadd.s32 %s306, %s307
      %s309 = smul.addr %s308, 8
      %s310 = scalar_lea.vmem %s6, %s309
      %s311 = smul.u32 5, %s22
      %p312 = scmp.lt.s32.totalorder %s21, 1
      %s313 = scalar_select %p312, %s21, 1
      %p314 = scmp.lt.s32.totalorder %s311, 4
      %s315 = scalar_select %p314, %s311, 4
      %s316 = smul.addr %s313, 5
      %s317 = sadd.s32 %s315, %s316
      %s318 = scalar_lea.vmem %s0, %s317
      %s319 = smul.u32 5, %s22
      %s320 = smul.u32 5, %s22
      %p321 = scmp.lt.s32.totalorder %s320, 4
      %s322 = scalar_select %p321, %s320, 4
      %s323 = scalar_lea.vmem %s1, %s322
      %s324 = smul.u32 5, %s22
      %s325 = smul.u32 5, %s22
      %p326 = scmp.lt.s32.totalorder %s325, 4
      %s327 = scalar_select %p326, %s325, 4
      %s328 = scalar_lea.vmem %s2, %s327
      %s329 = smul.u32 5, %s22
      %s330 = smul.u32 5, %s22
      %p331 = scmp.lt.s32.totalorder %s330, 4
      %s332 = scalar_select %p331, %s330, 4
      %s333 = scalar_lea.vmem %s3, %s332
      %s334 = smul.u32 5, %s22
      %s335 = smul.u32 5, %s22
      %p336 = scmp.lt.s32.totalorder %s21, 1
      %s337 = scalar_select %p336, %s21, 1
      %p338 = scmp.lt.s32.totalorder %s335, 4
      %s339 = scalar_select %p338, %s335, 4
      %s340 = smul.addr %s337, 10
      %s341 = sadd.s32 %s339, %s340
      %s342 = smul.addr %s341, 8
      %s343 = scalar_lea.vmem %s6, %s342
      %s344 = smul.u32 5, %s22
      %v345 = vld [vmem:[%s318] sm:$0x1f]
      %v346 = vld [vmem:[%s4] sm:$0xff]
      %v347 = vld [vmem:[%s4 + $0x8] sm:$0xff]
      %v349 = vperm.slane %v345, 0
      %v350 = vperm.slane %v345, 1
      %v351 = vperm.slane %v345, 2
      %v352 = vperm.slane %v345, 3
      %v353 = vperm.slane %v345, 4
      %360 = vset.pattern.permute.xlu0 0
      %361 = vperm.xlu0 %360, %v346
      %v362 = vpop.permute.xlu0 %361
      %365 = vset.pattern.permute.xlu0 0
      %366 = vperm.xlu0 %365, %v347
      %v367 = vpop.permute.xlu0 %366
      %v369 = vmul.f32 %v349, %v362
      %v370 = vmul.f32 %v350, %v362
      %v371 = vmul.f32 %v351, %v362
      %v372 = vmul.f32 %v352, %v362
      %v373 = vmul.f32 %v353, %v362
      %v374 = vmul.f32 %v349, %v367
      %v375 = vmul.f32 %v350, %v367
      %v376 = vmul.f32 %v351, %v367
      %v377 = vmul.f32 %v352, %v367
      %v378 = vmul.f32 %v353, %v367
      %v379 = vld [vmem:[%s323] sm:$0x1f]
      %v381 = vperm.slane %v379, 0
      %v382 = vperm.slane %v379, 1
      %v383 = vperm.slane %v379, 2
      %v384 = vperm.slane %v379, 3
      %v385 = vperm.slane %v379, 4
      %391 = vset.pattern.permute.xlu0 1
      %392 = vperm.xlu0 %391, %v346
      %v393 = vpop.permute.xlu0 %392
      %395 = vset.pattern.permute.xlu0 1
      %396 = vperm.xlu0 %395, %v347
      %v397 = vpop.permute.xlu0 %396
      %v399 = vmul.f32 %v381, %v393
      %v400 = vmul.f32 %v382, %v393
      %v401 = vmul.f32 %v383, %v393
      %v402 = vmul.f32 %v384, %v393
      %v403 = vmul.f32 %v385, %v393
      %v404 = vmul.f32 %v381, %v397
      %v405 = vmul.f32 %v382, %v397
      %v406 = vmul.f32 %v383, %v397
      %v407 = vmul.f32 %v384, %v397
      %v408 = vmul.f32 %v385, %v397
      %v409 = vadd.f32 %v369, %v399
      %v410 = vadd.f32 %v370, %v400
      %v411 = vadd.f32 %v371, %v401
      %v412 = vadd.f32 %v372, %v402
      %v413 = vadd.f32 %v373, %v403
      %v414 = vadd.f32 %v374, %v404
      %v415 = vadd.f32 %v375, %v405
      %v416 = vadd.f32 %v376, %v406
      %v417 = vadd.f32 %v377, %v407
      %v418 = vadd.f32 %v378, %v408
      %v419 = vld [vmem:[%s328] sm:$0x1f]
      %v421 = vperm.slane %v419, 0
      %v422 = vperm.slane %v419, 1
      %v423 = vperm.slane %v419, 2
      %v424 = vperm.slane %v419, 3
      %v425 = vperm.slane %v419, 4
      %431 = vset.pattern.permute.xlu0 2
      %432 = vperm.xlu0 %431, %v346
      %v433 = vpop.permute.xlu0 %432
      %435 = vset.pattern.permute.xlu0 2
      %436 = vperm.xlu0 %435, %v347
      %v437 = vpop.permute.xlu0 %436
      %v439 = vmul.f32 %v421, %v433
      %v440 = vmul.f32 %v422, %v433
      %v441 = vmul.f32 %v423, %v433
      %v442 = vmul.f32 %v424, %v433
      %v443 = vmul.f32 %v425, %v433
      %v444 = vmul.f32 %v421, %v437
      %v445 = vmul.f32 %v422, %v437
      %v446 = vmul.f32 %v423, %v437
      %v447 = vmul.f32 %v424, %v437
      %v448 = vmul.f32 %v425, %v437
      %v449 = vadd.f32 %v409, %v439
      %v450 = vadd.f32 %v410, %v440
      %v451 = vadd.f32 %v411, %v441
      %v452 = vadd.f32 %v412, %v442
      %v453 = vadd.f32 %v413, %v443
      %v454 = vadd.f32 %v414, %v444
      %v455 = vadd.f32 %v415, %v445
      %v456 = vadd.f32 %v416, %v446
      %v457 = vadd.f32 %v417, %v447
      %v458 = vadd.f32 %v418, %v448
      %v459 = vld [vmem:[%s333] sm:$0x1f]
      %v460 = vld [vmem:[%s5] sm:$0xff]
      %v461 = vld [vmem:[%s5 + $0x8] sm:$0xff]
      %v463 = vperm.slane %v459, 0
      %v464 = vperm.slane %v459, 1
      %v465 = vperm.slane %v459, 2
      %v466 = vperm.slane %v459, 3
      %v467 = vperm.slane %v459, 4
      %474 = vset.pattern.permute.xlu0 0
      %475 = vperm.xlu0 %474, %v460
      %v476 = vpop.permute.xlu0 %475
      %479 = vset.pattern.permute.xlu0 0
      %480 = vperm.xlu0 %479, %v461
      %v481 = vpop.permute.xlu0 %480
      %v483 = vmul.f32 %v463, %v476
      %v484 = vmul.f32 %v464, %v476
      %v485 = vmul.f32 %v465, %v476
      %v486 = vmul.f32 %v466, %v476
      %v487 = vmul.f32 %v467, %v476
      %v488 = vmul.f32 %v463, %v481
      %v489 = vmul.f32 %v464, %v481
      %v490 = vmul.f32 %v465, %v481
      %v491 = vmul.f32 %v466, %v481
      %v492 = vmul.f32 %v467, %v481
      %v493 = vadd.f32 %v449, %v483
      %v494 = vadd.f32 %v450, %v484
      %v495 = vadd.f32 %v451, %v485
      %v496 = vadd.f32 %v452, %v486
      %v497 = vadd.f32 %v453, %v487
      %v498 = vadd.f32 %v454, %v488
      %v499 = vadd.f32 %v455, %v489
      %v500 = vadd.f32 %v456, %v490
      %v501 = vadd.f32 %v457, %v491
      %v502 = vadd.f32 %v458, %v492
      %503 = vst [vmem:[%s343] sm:$0xff] %v493
      %504 = vst [vmem:[%s343 + $0x8] sm:$0xff] %v494
      %505 = vst [vmem:[%s343 + $0x10] sm:$0xff] %v495
      %506 = vst [vmem:[%s343 + $0x18] sm:$0xff] %v496
      %vm507 = vcmask 924672
      %508 = vst.msk [vmem:[%s343 + $0x20] sm:$0xff] %vm507, %v497
      %509 = vst [vmem:[%s343 + $0x28] sm:$0xff] %v498
      %510 = vst [vmem:[%s343 + $0x30] sm:$0xff] %v499
      %511 = vst [vmem:[%s343 + $0x38] sm:$0xff] %v500
      %512 = vst [vmem:[%s343 + $0x40] sm:$0xff] %v501
      %513 = vst.msk [vmem:[%s343 + $0x48] sm:$0xff] %vm507, %v502
      %s514 = smul.u32 5, %s22
      %p515 = scmp.lt.s32.totalorder %s21, 1
      %s516 = scalar_select %p515, %s21, 1
      %p517 = scmp.lt.s32.totalorder %s514, 4
      %s518 = scalar_select %p517, %s514, 4
      %s519 = smul.addr %s516, 10
      %s520 = sadd.s32 %s518, %s519
      %s521 = smul.addr %s520, 8
      %s522 = scalar_lea.vmem %s6, %s521
      // Predicated region
      $region45: #{diverse_fno2d_forward.6} parent=43 // pred_check
        %p523 = pneg %p197
      $region46: #{diverse_fno2d_forward.6} parent=43 // pred_check_branch
        %525 = sbr.rel (%p523) target = $region48
      $region47: #{diverse_fno2d_forward.6} parent=43 // pred_region
        %s526 = smul.u32 5, %s22
      $region48: #{diverse_fno2d_forward.6} parent=43 // pred_fallthru
        _
    $region44: #{diverse_fno2d_forward.6} parent=5 // pred_fallthru
      _
    %p527 = scmp.le.s32.totalorder 2, %s12
    // Predicated region
    $region49: #{diverse_fno2d_forward.6} parent=5 // pred_check
      %p528 = pneg %p527
    $region50: #{diverse_fno2d_forward.6} parent=5 // pred_check_branch
      %530 = sbr.rel (%p528) target = $region52
    $region51: #{diverse_fno2d_forward.6} parent=5 // pred_region
      %s531 = ssub.s32 %s12, 2
      // Predicated region
      $region53: #{diverse_fno2d_forward.6} parent=51 // pred_check
        %p532 = pneg %p203
      $region54: #{diverse_fno2d_forward.6} parent=51 // pred_check_branch
        %534 = sbr.rel (%p532) target = $region56
      $region55: #{diverse_fno2d_forward.6} parent=51 // pred_region
        %s535 = smul.u32 5, %s24
        %p536 = scmp.lt.s32.totalorder %s23, 1
        %s537 = scalar_select %p536, %s23, 1
        %p538 = scmp.lt.s32.totalorder %s535, 4
        %s539 = scalar_select %p538, %s535, 4
        %s540 = smul.addr %s537, 10
        %s541 = sadd.s32 %s539, %s540
        %s542 = smul.addr %s541, 8
        %s543 = scalar_lea.vmem %s6, %s542
      $region56: #{diverse_fno2d_forward.6} parent=51 // pred_fallthru
        _
    $region52: #{diverse_fno2d_forward.6} parent=5 // pred_fallthru
      _
  $region6: #{diverse_fno2d_forward.6} parent=0 // loop_footer
    %s16 = sadd.s32 1, %s12
  $region7: #{diverse_fno2d_forward.6} parent=0 // loop_footer_branch
    %11 = sbr.rel target = $region3
  $region8: #{diverse_fno2d_forward.6} parent=0 // loop_exit
    _

// kernel: reverse.8
$region0: #{reverse.8}
  #allocation0 [shape = 's32[1]{0}', space=sflag, size = 0x4, scoped, tag = 'scoped memory for reverse.8']
  %s0 = inlined_call_operand.vmem [shape: f32[2,16,25,12], index: 0, kind: input, shape index: {}]
  %s1 = inlined_call_operand.vmem [shape: f32[2,16,25,12], index: 1, kind: output, shape index: {}]
  %s2 = scalar_lea.vmem %s0, 176
  %v3 = vld [vmem:[%s2] sm:$0xff]
  %4 = vst [vmem:[%s1] sm:$0xff] %v3
  %s5 = scalar_lea.vmem %s0, 368
  %v6 = vld [vmem:[%s5] sm:$0xff]
  %s7 = scalar_lea.vmem %s1, 192
  %8 = vst [vmem:[%s7] sm:$0xff] %v6
  %s9 = scalar_lea.vmem %s0, 160
  %v10 = vld [vmem:[%s9] sm:$0xff]
  %s11 = scalar_lea.vmem %s1, 16
  %12 = vst [vmem:[%s11] sm:$0xff] %v10
  %s13 = scalar_lea.vmem %s0, 352
  %v14 = vld [vmem:[%s13] sm:$0xff]
  %s15 = scalar_lea.vmem %s1, 208
  %16 = vst [vmem:[%s15] sm:$0xff] %v14
  %s17 = scalar_lea.vmem %s0, 144
  %v18 = vld [vmem:[%s17] sm:$0xff]
  %s19 = scalar_lea.vmem %s1, 32
  %20 = vst [vmem:[%s19] sm:$0xff] %v18
  %s21 = scalar_lea.vmem %s0, 336
  %v22 = vld [vmem:[%s21] sm:$0xff]
  %s23 = scalar_lea.vmem %s1, 224
  %24 = vst [vmem:[%s23] sm:$0xff] %v22
  %s25 = scalar_lea.vmem %s0, 128
  %v26 = vld [vmem:[%s25] sm:$0xff]
  %s27 = scalar_lea.vmem %s1, 48
  %28 = vst [vmem:[%s27] sm:$0xff] %v26
  %s29 = scalar_lea.vmem %s0, 320
  %v30 = vld [vmem:[%s29] sm:$0xff]
  %s31 = scalar_lea.vmem %s1, 240
  %32 = vst [vmem:[%s31] sm:$0xff] %v30
  %s33 = scalar_lea.vmem %s0, 112
  %v34 = vld [vmem:[%s33] sm:$0xff]
  %s35 = scalar_lea.vmem %s1, 64
  %36 = vst [vmem:[%s35] sm:$0xff] %v34
  %s37 = scalar_lea.vmem %s0, 304
  %v38 = vld [vmem:[%s37] sm:$0xff]
  %s39 = scalar_lea.vmem %s1, 256
  %40 = vst [vmem:[%s39] sm:$0xff] %v38
  %s41 = scalar_lea.vmem %s0, 96
  %v42 = vld [vmem:[%s41] sm:$0xff]
  %s43 = scalar_lea.vmem %s1, 80
  %44 = vst [vmem:[%s43] sm:$0xff] %v42
  %s45 = scalar_lea.vmem %s0, 288
  %v46 = vld [vmem:[%s45] sm:$0xff]
  %s47 = scalar_lea.vmem %s1, 272
  %48 = vst [vmem:[%s47] sm:$0xff] %v46
  %s49 = scalar_lea.vmem %s0, 80
  %v50 = vld [vmem:[%s49] sm:$0xff]
  %s51 = scalar_lea.vmem %s1, 96
  %52 = vst [vmem:[%s51] sm:$0xff] %v50
  %s53 = scalar_lea.vmem %s0, 272
  %v54 = vld [vmem:[%s53] sm:$0xff]
  %s55 = scalar_lea.vmem %s1, 288
  %56 = vst [vmem:[%s55] sm:$0xff] %v54
  %s57 = scalar_lea.vmem %s0, 64
  %v58 = vld [vmem:[%s57] sm:$0xff]
  %s59 = scalar_lea.vmem %s1, 112
  %60 = vst [vmem:[%s59] sm:$0xff] %v58
  %s61 = scalar_lea.vmem %s0, 256
  %v62 = vld [vmem:[%s61] sm:$0xff]
  %s63 = scalar_lea.vmem %s1, 304
  %64 = vst [vmem:[%s63] sm:$0xff] %v62
  %s65 = scalar_lea.vmem %s0, 48
  %v66 = vld [vmem:[%s65] sm:$0xff]
  %s67 = scalar_lea.vmem %s1, 128
  %68 = vst [vmem:[%s67] sm:$0xff] %v66
  %s69 = scalar_lea.vmem %s0, 240
  %v70 = vld [vmem:[%s69] sm:$0xff]
  %s71 = scalar_lea.vmem %s1, 320
  %72 = vst [vmem:[%s71] sm:$0xff] %v70
  %s73 = scalar_lea.vmem %s0, 32
  %v74 = vld [vmem:[%s73] sm:$0xff]
  %s75 = scalar_lea.vmem %s1, 144
  %76 = vst [vmem:[%s75] sm:$0xff] %v74
  %s77 = scalar_lea.vmem %s0, 224
  %v78 = vld [vmem:[%s77] sm:$0xff]
  %s79 = scalar_lea.vmem %s1, 336
  %80 = vst [vmem:[%s79] sm:$0xff] %v78
  %s81 = scalar_lea.vmem %s0, 16
  %v82 = vld [vmem:[%s81] sm:$0xff]
  %s83 = scalar_lea.vmem %s1, 160
  %84 = vst [vmem:[%s83] sm:$0xff] %v82
  %s85 = scalar_lea.vmem %s0, 208
  %v86 = vld [vmem:[%s85] sm:$0xff]
  %s87 = scalar_lea.vmem %s1, 352
  %88 = vst [vmem:[%s87] sm:$0xff] %v86
  %v89 = vld [vmem:[%s0] sm:$0xff]
  %s90 = scalar_lea.vmem %s1, 176
  %91 = vst [vmem:[%s90] sm:$0xff] %v89
  %s92 = scalar_lea.vmem %s0, 192
  %v93 = vld [vmem:[%s92] sm:$0xff]
  %s94 = scalar_lea.vmem %s1, 368
  %95 = vst [vmem:[%s94] sm:$0xff] %v93
  %s96 = scalar_lea.vmem %s0, 184
  %v97 = vld [vmem:[%s96] sm:$0xff]
  %s98 = scalar_lea.vmem %s1, 8
  %99 = vst [vmem:[%s98] sm:$0xff] %v97
  %s100 = scalar_lea.vmem %s0, 376
  %v101 = vld [vmem:[%s100] sm:$0xff]
  %s102 = scalar_lea.vmem %s1, 200
  %103 = vst [vmem:[%s102] sm:$0xff] %v101
  %s104 = scalar_lea.vmem %s0, 168
  %v105 = vld [vmem:[%s104] sm:$0xff]
  %s106 = scalar_lea.vmem %s1, 24
  %107 = vst [vmem:[%s106] sm:$0xff] %v105
  %s108 = scalar_lea.vmem %s0, 360
  %v109 = vld [vmem:[%s108] sm:$0xff]
  %s110 = scalar_lea.vmem %s1, 216
  %111 = vst [vmem:[%s110] sm:$0xff] %v109
  %s112 = scalar_lea.vmem %s0, 152
  %v113 = vld [vmem:[%s112] sm:$0xff]
  %s114 = scalar_lea.vmem %s1, 40
  %115 = vst [vmem:[%s114] sm:$0xff] %v113
  %s116 = scalar_lea.vmem %s0, 344
  %v117 = vld [vmem:[%s116] sm:$0xff]
  %s118 = scalar_lea.vmem %s1, 232
  %119 = vst [vmem:[%s118] sm:$0xff] %v117
  %s120 = scalar_lea.vmem %s0, 136
  %v121 = vld [vmem:[%s120] sm:$0xff]
  %s122 = scalar_lea.vmem %s1, 56
  %123 = vst [vmem:[%s122] sm:$0xff] %v121
  %s124 = scalar_lea.vmem %s0, 328
  %v125 = vld [vmem:[%s124] sm:$0xff]
  %s126 = scalar_lea.vmem %s1, 248
  %127 = vst [vmem:[%s126] sm:$0xff] %v125
  %s128 = scalar_lea.vmem %s0, 120
  %v129 = vld [vmem:[%s128] sm:$0xff]
  %s130 = scalar_lea.vmem %s1, 72
  %131 = vst [vmem:[%s130] sm:$0xff] %v129
  %s132 = scalar_lea.vmem %s0, 312
  %v133 = vld [vmem:[%s132] sm:$0xff]
  %s134 = scalar_lea.vmem %s1, 264
  %135 = vst [vmem:[%s134] sm:$0xff] %v133
  %s136 = scalar_lea.vmem %s0, 104
  %v137 = vld [vmem:[%s136] sm:$0xff]
  %s138 = scalar_lea.vmem %s1, 88
  %139 = vst [vmem:[%s138] sm:$0xff] %v137
  %s140 = scalar_lea.vmem %s0, 296
  %v141 = vld [vmem:[%s140] sm:$0xff]
  %s142 = scalar_lea.vmem %s1, 280
  %143 = vst [vmem:[%s142] sm:$0xff] %v141
  %s144 = scalar_lea.vmem %s0, 88
  %v145 = vld [vmem:[%s144] sm:$0xff]
  %s146 = scalar_lea.vmem %s1, 104
  %147 = vst [vmem:[%s146] sm:$0xff] %v145
  %s148 = scalar_lea.vmem %s0, 280
  %v149 = vld [vmem:[%s148] sm:$0xff]
  %s150 = scalar_lea.vmem %s1, 296
  %151 = vst [vmem:[%s150] sm:$0xff] %v149
  %s152 = scalar_lea.vmem %s0, 72
  %v153 = vld [vmem:[%s152] sm:$0xff]
  %s154 = scalar_lea.vmem %s1, 120
  %155 = vst [vmem:[%s154] sm:$0xff] %v153
  %s156 = scalar_lea.vmem %s0, 264
  %v157 = vld [vmem:[%s156] sm:$0xff]
  %s158 = scalar_lea.vmem %s1, 312
  %159 = vst [vmem:[%s158] sm:$0xff] %v157
  %s160 = scalar_lea.vmem %s0, 56
  %v161 = vld [vmem:[%s160] sm:$0xff]
  %s162 = scalar_lea.vmem %s1, 136
  %163 = vst [vmem:[%s162] sm:$0xff] %v161
  %s164 = scalar_lea.vmem %s0, 248
  %v165 = vld [vmem:[%s164] sm:$0xff]
  %s166 = scalar_lea.vmem %s1, 328
  %167 = vst [vmem:[%s166] sm:$0xff] %v165
  %s168 = scalar_lea.vmem %s0, 40
  %v169 = vld [vmem:[%s168] sm:$0xff]
  %s170 = scalar_lea.vmem %s1, 152
  %171 = vst [vmem:[%s170] sm:$0xff] %v169
  %s172 = scalar_lea.vmem %s0, 232
  %v173 = vld [vmem:[%s172] sm:$0xff]
  %s174 = scalar_lea.vmem %s1, 344
  %175 = vst [vmem:[%s174] sm:$0xff] %v173
  %s176 = scalar_lea.vmem %s0, 24
  %v177 = vld [vmem:[%s176] sm:$0xff]
  %s178 = scalar_lea.vmem %s1, 168
  %179 = vst [vmem:[%s178] sm:$0xff] %v177
  %s180 = scalar_lea.vmem %s0, 216
  %v181 = vld [vmem:[%s180] sm:$0xff]
  %s182 = scalar_lea.vmem %s1, 360
  %183 = vst [vmem:[%s182] sm:$0xff] %v181
  %s184 = scalar_lea.vmem %s0, 8
  %v185 = vld [vmem:[%s184] sm:$0xff]
  %s186 = scalar_lea.vmem %s1, 184
  %187 = vst [vmem:[%s186] sm:$0xff] %v185
  %s188 = scalar_lea.vmem %s0, 200
  %v189 = vld [vmem:[%s188] sm:$0xff]
  %s190 = scalar_lea.vmem %s1, 376
  %191 = vst [vmem:[%s190] sm:$0xff] %v189

// kernel: diverse_fno2d_forward.7
$region0: #{diverse_fno2d_forward.7}
  #allocation0 [shape = 'u32[]', space=smem, size = 0x4, offset = 0x4, fixed_abs, tag = 'smem constant byte address 0x4 - core index']
  #allocation1 [shape = 'u32[72,128]{1,0:T(1,128)}', space=vmem, size = 0x9000, scoped, tag = 'internal scratch']
  %s0 = inlined_call_operand.vmem [shape: f32[2,16,625], index: 0, kind: input, shape index: {}]
  %s1 = inlined_call_operand.vmem [shape: f32[16,16], index: 1, kind: input, shape index: {}]
  %s2 = inlined_call_operand.vmem [shape: f32[16,1], index: 2, kind: input, shape index: {}]
  %s3 = inlined_call_operand.vmem [shape: f32[2,16,625], index: 3, kind: input, shape index: {}, may-alias: {3,4}]
  %s4 = inlined_call_operand.vmem [shape: f32[2,16,625], index: 4, kind: output, shape index: {}, may-alias: {3,4}]
  %s5 = sld [smem:[#allocation0]]
  $region49: #{diverse_fno2d_forward.7} parent=0
    _
  %s7 = ssub.s32 1, %s5
  %s8 = scalar_select 0, %s7, %s5
  loop: start=0, step=1, limit=4
  $region2: #{diverse_fno2d_forward.7} parent=0 // loop_pre_header
    _
  $region3: #{diverse_fno2d_forward.7} parent=0 // loop_header
    %s10 = sphi 0, %s14
    %p11 = scmp.ge.s32.totalorder %s10, 4
    %s17 = sphi 0, %s29
    %s18 = sphi 0, %s25
    %s19 = sphi 0, %s17
    %s20 = sphi 0, %s18
    %s21 = sphi 0, %s19
    %s22 = sphi 0, %s20
    %s34 = sphi 0, %s36
    %s37 = sphi 0, %s34
    %s38 = sphi 0, %s37
    %s54 = sphi 0, %s38
    %s58 = sphi 0, %s58
    %s60 = sphi 0, %s58
    %s61 = sphi 0, %s60
    %s75 = sphi 0, %s61
    %s79 = sphi 0, %s79
    %s81 = sphi 0, %s79
    %s82 = sphi 0, %s81
    %s96 = sphi 0, %s82
    %s104 = sphi 0, %s106
    %s107 = sphi 0, %s104
    %s108 = sphi 0, %s107
    %s124 = sphi 0, %s108
    %s132 = sphi 0, %s134
    %s135 = sphi 0, %s132
    %s136 = sphi 0, %s135
    %s152 = sphi 0, %s136
  $region4: #{diverse_fno2d_forward.7} parent=0 // loop_header_branch
    %13 = sbr.rel (%p11) target = $region8
  $region5: #{diverse_fno2d_forward.7} parent=0 // loop_body
    %s15 = ssub.s32 %s10, 1
    %s16 = ssub.s32 %s10, 2
    %s23 = sadd.s32 1, %s18
    %p24 = scmp.ge.s32.totalorder %s23, 1
    %s25 = scalar_select %p24, 0, %s23
    %s26 = sadd.s32 1, %s17
    %s27 = scalar_select %p24, %s26, %s17
    %p28 = scmp.ge.s32.totalorder %s27, 2
    %s29 = scalar_select %p28, 0, %s27
    %s30 = ssub.s32 %s17, %s29
    %s31 = ssub.s32 %s18, %s25
    %s32 = sor.u32 %s30, %s31
    %p33 = scmp.eq.s32.totalorder %s32, 0
    %s35 = sadd.s32 %s34, 1
    %s36 = scalar_select %p33, %s34, %s35
    %p39 = pneg %p33
    %p40 = scmp.eq.s32.totalorder %s10, 1
    %p41 = por %p39, %p40
    %p42 = scmp.ne.s32.totalorder %s34, %s37
    %p43 = scmp.eq.s32.totalorder %s10, 0
    %p44 = por %p42, %p43
    %p45 = scmp.ne.s32.totalorder %s34, %s37
    %p46 = scmp.eq.s32.totalorder %s15, 1
    %p47 = por %p45, %p46
    %p48 = scmp.ne.s32.totalorder %s37, %s38
    %p49 = scmp.eq.s32.totalorder %s15, 0
    %p50 = por %p48, %p49
    %p51 = scmp.ne.s32.totalorder %s37, %s38
    %p52 = scmp.eq.s32.totalorder %s16, 1
    %p53 = por %p51, %p52
    %p55 = scmp.ne.s32.totalorder %s38, %s54
    %p56 = scmp.eq.s32.totalorder %s16, 0
    %p57 = por %p55, %p56
    %s59 = sadd.s32 %s58, 1
    %p62 = scmp.eq.s32.totalorder %s10, 1
    %p63 = scmp.ne.s32.totalorder %s58, %s60
    %p64 = scmp.eq.s32.totalorder %s10, 0
    %p65 = por %p63, %p64
    %p66 = scmp.ne.s32.totalorder %s58, %s60
    %p67 = scmp.eq.s32.totalorder %s15, 1
    %p68 = por %p66, %p67
    %p69 = scmp.ne.s32.totalorder %s60, %s61
    %p70 = scmp.eq.s32.totalorder %s15, 0
    %p71 = por %p69, %p70
    %p72 = scmp.ne.s32.totalorder %s60, %s61
    %p73 = scmp.eq.s32.totalorder %s16, 1
    %p74 = por %p72, %p73
    %p76 = scmp.ne.s32.totalorder %s61, %s75
    %p77 = scmp.eq.s32.totalorder %s16, 0
    %p78 = por %p76, %p77
    %s80 = sadd.s32 %s79, 1
    %p83 = scmp.eq.s32.totalorder %s10, 1
    %p84 = scmp.ne.s32.totalorder %s79, %s81
    %p85 = scmp.eq.s32.totalorder %s10, 0
    %p86 = por %p84, %p85
    %p87 = scmp.ne.s32.totalorder %s79, %s81
    %p88 = scmp.eq.s32.totalorder %s15, 1
    %p89 = por %p87, %p88
    %p90 = scmp.ne.s32.totalorder %s81, %s82
    %p91 = scmp.eq.s32.totalorder %s15, 0
    %p92 = por %p90, %p91
    %p93 = scmp.ne.s32.totalorder %s81, %s82
    %p94 = scmp.eq.s32.totalorder %s16, 1
    %p95 = por %p93, %p94
    %p97 = scmp.ne.s32.totalorder %s82, %s96
    %p98 = scmp.eq.s32.totalorder %s16, 0
    %p99 = por %p97, %p98
    %s100 = ssub.s32 %s17, %s29
    %s101 = ssub.s32 %s18, %s25
    %s102 = sor.u32 %s100, %s101
    %p103 = scmp.eq.s32.totalorder %s102, 0
    %s105 = sadd.s32 %s104, 1
    %s106 = scalar_select %p103, %s104, %s105
    %p109 = pneg %p103
    %p110 = scmp.eq.s32.totalorder %s10, 1
    %p111 = por %p109, %p110
    %p112 = scmp.ne.s32.totalorder %s104, %s107
    %p113 = scmp.eq.s32.totalorder %s10, 0
    %p114 = por %p112, %p113
    %p115 = scmp.ne.s32.totalorder %s104, %s107
    %p116 = scmp.eq.s32.totalorder %s15, 1
    %p117 = por %p115, %p116
    %p118 = scmp.ne.s32.totalorder %s107, %s108
    %p119 = scmp.eq.s32.totalorder %s15, 0
    %p120 = por %p118, %p119
    %p121 = scmp.ne.s32.totalorder %s107, %s108
    %p122 = scmp.eq.s32.totalorder %s16, 1
    %p123 = por %p121, %p122
    %p125 = scmp.ne.s32.totalorder %s108, %s124
    %p126 = scmp.eq.s32.totalorder %s16, 0
    %p127 = por %p125, %p126
    %s128 = ssub.s32 %s17, %s29
    %s129 = ssub.s32 %s18, %s25
    %s130 = sor.u32 %s128, %s129
    %p131 = scmp.eq.s32.totalorder %s130, 0
    %s133 = sadd.s32 %s132, 1
    %s134 = scalar_select %p131, %s132, %s133
    %p137 = pneg %p131
    %p138 = scmp.eq.s32.totalorder %s10, 1
    %p139 = por %p137, %p138
    %p140 = scmp.ne.s32.totalorder %s132, %s135
    %p141 = scmp.eq.s32.totalorder %s10, 0
    %p142 = por %p140, %p141
    %p143 = scmp.ne.s32.totalorder %s132, %s135
    %p144 = scmp.eq.s32.totalorder %s15, 1
    %p145 = por %p143, %p144
    %p146 = scmp.ne.s32.totalorder %s135, %s136
    %p147 = scmp.eq.s32.totalorder %s15, 0
    %p148 = por %p146, %p147
    %p149 = scmp.ne.s32.totalorder %s135, %s136
    %p150 = scmp.eq.s32.totalorder %s16, 1
    %p151 = por %p149, %p150
    %p153 = scmp.ne.s32.totalorder %s136, %s152
    %p154 = scmp.eq.s32.totalorder %s16, 0
    %p155 = por %p153, %p154
    %p156 = scmp.le.s32.totalorder 1, %s10
    %p157 = scmp.lt.s32.totalorder %s10, 3
    %p158 = pnand %p156, %p157
    %p159 = pneg %p158
    // Predicated region
    $region9: #{diverse_fno2d_forward.7} parent=5 // pred_check
      _
    $region10: #{diverse_fno2d_forward.7} parent=5 // pred_check_branch
      %161 = sbr.rel (%p158) target = $region12
    $region11: #{diverse_fno2d_forward.7} parent=5 // pred_region
      %s162 = ssub.s32 %s10, 1
      // Predicated region
      $region13: #{diverse_fno2d_forward.7} parent=11 // pred_check
        %p163 = pneg %p71
      $region14: #{diverse_fno2d_forward.7} parent=11 // pred_check_branch
        %165 = sbr.rel (%p163) target = $region16
      $region15: #{diverse_fno2d_forward.7} parent=11 // pred_region
        _
      $region16: #{diverse_fno2d_forward.7} parent=11 // pred_fallthru
        _
      // Predicated region
      $region17: #{diverse_fno2d_forward.7} parent=11 // pred_check
        %p166 = pneg %p92
      $region18: #{diverse_fno2d_forward.7} parent=11 // pred_check_branch
        %168 = sbr.rel (%p166) target = $region20
      $region19: #{diverse_fno2d_forward.7} parent=11 // pred_region
        _
      $region20: #{diverse_fno2d_forward.7} parent=11 // pred_fallthru
        _
    $region12: #{diverse_fno2d_forward.7} parent=5 // pred_fallthru
      _
    %p169 = scmp.lt.s32.totalorder %s10, 2
    // Predicated region
    $region21: #{diverse_fno2d_forward.7} parent=5 // pred_check
      %p170 = pneg %p169
    $region22: #{diverse_fno2d_forward.7} parent=5 // pred_check_branch
      %172 = sbr.rel (%p170) target = $region24
    $region23: #{diverse_fno2d_forward.7} parent=5 // pred_region
      // Predicated region
      $region25: #{diverse_fno2d_forward.7} parent=23 // pred_check
        %p173 = pneg %p44
      $region26: #{diverse_fno2d_forward.7} parent=23 // pred_check_branch
        %175 = sbr.rel (%p173) target = $region28
      $region27: #{diverse_fno2d_forward.7} parent=23 // pred_region
        %s176 = smul.u32 5, %s18
        %p177 = scmp.lt.s32.totalorder %s17, 1
        %s178 = scalar_select %p177, %s17, 1
        %p179 = scmp.lt.s32.totalorder %s176, 4
        %s180 = scalar_select %p179, %s176, 4
        %s181 = smul.addr %s178, 10
        %s182 = sadd.s32 %s180, %s181
        %s183 = smul.addr %s182, 8
        %s184 = scalar_lea.vmem %s0, %s183
        %s185 = smul.u32 5, %s18
      $region28: #{diverse_fno2d_forward.7} parent=23 // pred_fallthru
        _
      // Predicated region
      $region29: #{diverse_fno2d_forward.7} parent=23 // pred_check
        %p186 = pneg %p114
      $region30: #{diverse_fno2d_forward.7} parent=23 // pred_check_branch
        %188 = sbr.rel (%p186) target = $region32
      $region31: #{diverse_fno2d_forward.7} parent=23 // pred_region
        %s189 = smul.u32 5, %s18
        %p190 = scmp.lt.s32.totalorder %s17, 1
        %s191 = scalar_select %p190, %s17, 1
        %p192 = scmp.lt.s32.totalorder %s189, 4
        %s193 = scalar_select %p192, %s189, 4
        %s194 = smul.addr %s191, 10
        %s195 = sadd.s32 %s193, %s194
        %s196 = smul.addr %s195, 8
        %s197 = scalar_lea.vmem %s3, %s196
        %s198 = smul.u32 5, %s18
      $region32: #{diverse_fno2d_forward.7} parent=23 // pred_fallthru
        _
    $region24: #{diverse_fno2d_forward.7} parent=5 // pred_fallthru
      _
    %p199 = scmp.le.s32.totalorder 1, %s10
    %p200 = scmp.lt.s32.totalorder %s10, 3
    %p201 = pnand %p199, %p200
    %p202 = pneg %p201
    // Predicated region
    $region33: #{diverse_fno2d_forward.7} parent=5 // pred_check
      _
    $region34: #{diverse_fno2d_forward.7} parent=5 // pred_check_branch
      %204 = sbr.rel (%p201) target = $region36
    $region35: #{diverse_fno2d_forward.7} parent=5 // pred_region
      %s205 = ssub.s32 %s10, 1
      %s206 = smul.u32 5, %s20
      %p207 = scmp.lt.s32.totalorder %s19, 1
      %s208 = scalar_select %p207, %s19, 1
      %p209 = scmp.lt.s32.totalorder %s206, 4
      %s210 = scalar_select %p209, %s206, 4
      %s211 = smul.addr %s208, 10
      %s212 = sadd.s32 %s210, %s211
      %s213 = smul.addr %s212, 8
      %s214 = scalar_lea.vmem %s0, %s213
      %p215 = pneg %p50
      %p216 = pneg %p47
      %p217 = pneg %p71
      %p218 = pneg %p68
      %p219 = pneg %p92
      %p220 = pneg %p89
      %s221 = smul.u32 5, %s20
      %p222 = scmp.lt.s32.totalorder %s19, 1
      %s223 = scalar_select %p222, %s19, 1
      %p224 = scmp.lt.s32.totalorder %s221, 4
      %s225 = scalar_select %p224, %s221, 4
      %s226 = smul.addr %s223, 10
      %s227 = sadd.s32 %s225, %s226
      %s228 = smul.addr %s227, 8
      %s229 = scalar_lea.vmem %s3, %s228
      %p230 = pneg %p120
      %p231 = pneg %p117
      %p232 = pneg %p148
      %p233 = pneg %p145
      %s234 = smul.u32 5, %s20
      %p235 = scmp.lt.s32.totalorder %s19, 1
      %s236 = scalar_select %p235, %s19, 1
      %p237 = scmp.lt.s32.totalorder %s234, 4
      %s238 = scalar_select %p237, %s234, 4
      %s239 = smul.addr %s236, 10
      %s240 = sadd.s32 %s238, %s239
      %s241 = smul.addr %s240, 8
      %s242 = scalar_lea.vmem %s4, %s241
      %s243 = smul.u32 5, %s20
      %p244 = scmp.lt.s32.totalorder %s19, 1
      %s245 = scalar_select %p244, %s19, 1
      %p246 = scmp.lt.s32.totalorder %s243, 4
      %s247 = scalar_select %p246, %s243, 4
      %s248 = smul.addr %s245, 10
      %s249 = sadd.s32 %s247, %s248
      %s250 = smul.addr %s249, 8
      %s251 = scalar_lea.vmem %s0, %s250
      %s252 = smul.u32 5, %s20
      %s253 = smul.u32 5, %s20
      %p254 = scmp.lt.s32.totalorder %s19, 1
      %s255 = scalar_select %p254, %s19, 1
      %p256 = scmp.lt.s32.totalorder %s253, 4
      %s257 = scalar_select %p256, %s253, 4
      %s258 = smul.addr %s255, 10
      %s259 = sadd.s32 %s257, %s258
      %s260 = smul.addr %s259, 8
      %s261 = scalar_lea.vmem %s3, %s260
      %s262 = smul.u32 5, %s20
      %s263 = smul.u32 5, %s20
      %p264 = scmp.lt.s32.totalorder %s19, 1
      %s265 = scalar_select %p264, %s19, 1
      %p266 = scmp.lt.s32.totalorder %s263, 4
      %s267 = scalar_select %p266, %s263, 4
      %s268 = smul.addr %s265, 10
      %s269 = sadd.s32 %s267, %s268
      %s270 = smul.addr %s269, 8
      %s271 = scalar_lea.vmem %s4, %s270
      %s272 = smul.u32 5, %s20
      %v273 = vld [vmem:[%s1] sm:$0xff]
      %v274 = vld [vmem:[%s1 + $0x8] sm:$0xff]
      %v275 = vld [vmem:[%s251] sm:$0xff]
      %v276 = vld [vmem:[%s251 + $0x8] sm:$0xff]
      %v277 = vld [vmem:[%s251 + $0x10] sm:$0xff]
      %v278 = vld [vmem:[%s251 + $0x18] sm:$0xff]
      %v279 = vld [vmem:[%s251 + $0x20] sm:$0xff]
      %v280 = vld [vmem:[%s251 + $0x28] sm:$0xff]
      %v281 = vld [vmem:[%s251 + $0x30] sm:$0xff]
      %v282 = vld [vmem:[%s251 + $0x38] sm:$0xff]
      %v283 = vld [vmem:[%s251 + $0x40] sm:$0xff]
      %v284 = vld [vmem:[%s251 + $0x48] sm:$0xff]
      %v285 = vld [vmem:[%s2] sm:$0xff]
      %v286 = vld [vmem:[%s2 + $0x8] sm:$0xff]
      %288 = vset.pattern.permute.xlu0 0
      %289 = vperm.xlu0 %288, %v285
      %v290 = vpop.permute.xlu0 %289
      %293 = vset.pattern.permute.xlu0 0
      %294 = vperm.xlu0 %293, %v286
      %v295 = vpop.permute.xlu0 %294
      %vm297 = vcmask 130048
      %v299 = vsel %vm297, %v273, 0
      %v302 = vsel %vm297, %v274, 0
      %304 = vmatpush.msra.mxu0 0.0
      %305 = vmatpush.msra.mxu0 0.0
      %306 = vmatpush.msra.mxu0 0.0
      %307 = vmatpush.msra.mxu0 0.0
      %308 = vmatpush.msra.mxu0 0.0
      %309 = vmatpush.msra.mxu0 0.0
      %310 = vmatpush.msra.mxu0 0.0
      %311 = vmatpush.msra.mxu0 0.0
      %312 = vmatpush.msra.mxu0 0.0
      %313 = vmatpush.msra.mxu0 0.0
      %314 = vmatpush.msra.mxu0 0.0
      %315 = vmatpush.msra.mxu0 0.0
      %316 = vmatpush.msra.mxu0 0.0
      %317 = vmatpush.msra.mxu0 0.0
      %v318 = vand.u32 %v280, 4294901760
      %319 = vmatpush.msra.mxu0 %v318
      %v320 = vand.u32 %v275, 4294901760
      %321 = vmatpush.msra.mxu0 %v320
      %v322 = vand.u32 %v299, 4294901760
      %v323 = vsub.f32 %v299, %v322
      %v324 = vand.u32 %v323, 4294901760
      %v325 = vsub.f32 %v323, %v324
      %v326 = vand.u32 %v325, 4294901760
      %327 = vmatmul.f32.gmra.mxu0 %v326
      %v328 = vpop.f32.mrf.mxu0
      %v329 = vadd.f32 %v290, %v328
      %v330 = vand.u32 %v302, 4294901760
      %v331 = vsub.f32 %v302, %v330
      %v332 = vand.u32 %v331, 4294901760
      %v333 = vsub.f32 %v331, %v332
      %v334 = vand.u32 %v333, 4294901760
      %335 = vmatmul.f32.gmra.mxu0 %v334
      %v336 = vpop.f32.mrf.mxu0
      %v337 = vadd.f32 %v295, %v336
      %338 = vdwg.mxu0
      %339 = vmatpush.msra.mxu0 0.0
      %340 = vmatpush.msra.mxu0 0.0
      %341 = vmatpush.msra.mxu0 0.0
      %342 = vmatpush.msra.mxu0 0.0
      %343 = vmatpush.msra.mxu0 0.0
      %344 = vmatpush.msra.mxu0 0.0
      %345 = vmatpush.msra.mxu0 0.0
      %346 = vmatpush.msra.mxu0 0.0
      %347 = vmatpush.msra.mxu0 0.0
      %348 = vmatpush.msra.mxu0 0.0
      %349 = vmatpush.msra.mxu0 0.0
      %350 = vmatpush.msra.mxu0 0.0
      %351 = vmatpush.msra.mxu0 0.0
      %352 = vmatpush.msra.mxu0 0.0
      %v353 = vand.u32 %v280, 4294901760
      %v354 = vsub.f32 %v280, %v353
      %v355 = vand.u32 %v354, 4294901760
      %v356 = vsub.f32 %v354, %v355
      %v357 = vand.u32 %v356, 4294901760
      %358 = vmatpush.msra.mxu0 %v357
      %v359 = vand.u32 %v275, 4294901760
      %v360 = vsub.f32 %v275, %v359
      %v361 = vand.u32 %v360, 4294901760
      %v362 = vsub.f32 %v360, %v361
      %v363 = vand.u32 %v362, 4294901760
      %364 = vmatpush.msra.mxu0 %v363
      %v365 = vand.u32 %v299, 4294901760
      %366 = vmatmul.f32.gmra.mxu0 %v365
      %v367 = vpop.f32.mrf.mxu0
      %v368 = vadd.f32 %v329, %v367
      %v369 = vand.u32 %v302, 4294901760
      %370 = vmatmul.f32.gmra.mxu0 %v369
      %v371 = vpop.f32.mrf.mxu0
      %v372 = vadd.f32 %v337, %v371
      %373 = vdwg.mxu0
      %374 = vmatpush.msra.mxu0 0.0
      %375 = vmatpush.msra.mxu0 0.0
      %376 = vmatpush.msra.mxu0 0.0
      %377 = vmatpush.msra.mxu0 0.0
      %378 = vmatpush.msra.mxu0 0.0
      %379 = vmatpush.msra.mxu0 0.0
      %380 = vmatpush.msra.mxu0 0.0
      %381 = vmatpush.msra.mxu0 0.0
      %382 = vmatpush.msra.mxu0 0.0
      %383 = vmatpush.msra.mxu0 0.0
      %384 = vmatpush.msra.mxu0 0.0
      %385 = vmatpush.msra.mxu0 0.0
      %386 = vmatpush.msra.mxu0 0.0
      %387 = vmatpush.msra.mxu0 0.0
      %v388 = vand.u32 %v280, 4294901760
      %v389 = vsub.f32 %v280, %v388
      %390 = vmatpush.msra.mxu0 %v389
      %v391 = vand.u32 %v275, 4294901760
      %v392 = vsub.f32 %v275, %v391
      %393 = vmatpush.msra.mxu0 %v392
      %v394 = vand.u32 %v299, 4294901760
      %v395 = vsub.f32 %v299, %v394
      %396 = vmatmul.f32.gmra.mxu0 %v395
      %v397 = vpop.f32.mrf.mxu0
      %v398 = vadd.f32 %v368, %v397
      %v399 = vand.u32 %v302, 4294901760
      %v400 = vsub.f32 %v302, %v399
      %401 = vmatmul.f32.gmra.mxu0 %v400
      %v402 = vpop.f32.mrf.mxu0
      %v403 = vadd.f32 %v372, %v402
      %404 = vdwg.mxu0
      %405 = vmatpush.msra.mxu0 0.0
      %406 = vmatpush.msra.mxu0 0.0
      %407 = vmatpush.msra.mxu0 0.0
      %408 = vmatpush.msra.mxu0 0.0
      %409 = vmatpush.msra.mxu0 0.0
      %410 = vmatpush.msra.mxu0 0.0
      %411 = vmatpush.msra.mxu0 0.0
      %412 = vmatpush.msra.mxu0 0.0
      %413 = vmatpush.msra.mxu0 0.0
      %414 = vmatpush.msra.mxu0 0.0
      %415 = vmatpush.msra.mxu0 0.0
      %416 = vmatpush.msra.mxu0 0.0
      %417 = vmatpush.msra.mxu0 0.0
      %418 = vmatpush.msra.mxu0 0.0
      %v419 = vand.u32 %v280, 4294901760
      %420 = vmatpush.msra.mxu0 %v419
      %v421 = vand.u32 %v275, 4294901760
      %422 = vmatpush.msra.mxu0 %v421
      %v423 = vand.u32 %v299, 4294901760
      %v424 = vsub.f32 %v299, %v423
      %v425 = vand.u32 %v424, 4294901760
      %426 = vmatmul.f32.gmra.mxu0 %v425
      %v427 = vpop.f32.mrf.mxu0
      %v428 = vadd.f32 %v398, %v427
      %v429 = vand.u32 %v302, 4294901760
      %v430 = vsub.f32 %v302, %v429
      %v431 = vand.u32 %v430, 4294901760
      %432 = vmatmul.f32.gmra.mxu0 %v431
      %v433 = vpop.f32.mrf.mxu0
      %v434 = vadd.f32 %v403, %v433
      %435 = vdwg.mxu0
      %436 = vmatpush.msra.mxu0 0.0
      %437 = vmatpush.msra.mxu0 0.0
      %438 = vmatpush.msra.mxu0 0.0
      %439 = vmatpush.msra.mxu0 0.0
      %440 = vmatpush.msra.mxu0 0.0
      %441 = vmatpush.msra.mxu0 0.0
      %442 = vmatpush.msra.mxu0 0.0
      %443 = vmatpush.msra.mxu0 0.0
      %444 = vmatpush.msra.mxu0 0.0
      %445 = vmatpush.msra.mxu0 0.0
      %446 = vmatpush.msra.mxu0 0.0
      %447 = vmatpush.msra.mxu0 0.0
      %448 = vmatpush.msra.mxu0 0.0
      %449 = vmatpush.msra.mxu0 0.0
      %v450 = vand.u32 %v280, 4294901760
      %v451 = vsub.f32 %v280, %v450
      %v452 = vand.u32 %v451, 4294901760
      %453 = vmatpush.msra.mxu0 %v452
      %v454 = vand.u32 %v275, 4294901760
      %v455 = vsub.f32 %v275, %v454
      %v456 = vand.u32 %v455, 4294901760
      %457 = vmatpush.msra.mxu0 %v456
      %v458 = vand.u32 %v299, 4294901760
      %459 = vmatmul.f32.gmra.mxu0 %v458
      %v460 = vpop.f32.mrf.mxu0
      %v461 = vadd.f32 %v428, %v460
      %v462 = vand.u32 %v302, 4294901760
      %463 = vmatmul.f32.gmra.mxu0 %v462
      %v464 = vpop.f32.mrf.mxu0
      %v465 = vadd.f32 %v434, %v464
      %466 = vdwg.mxu0
      %467 = vmatpush.msra.mxu0 0.0
      %468 = vmatpush.msra.mxu0 0.0
      %469 = vmatpush.msra.mxu0 0.0
      %470 = vmatpush.msra.mxu0 0.0
      %471 = vmatpush.msra.mxu0 0.0
      %472 = vmatpush.msra.mxu0 0.0
      %473 = vmatpush.msra.mxu0 0.0
      %474 = vmatpush.msra.mxu0 0.0
      %475 = vmatpush.msra.mxu0 0.0
      %476 = vmatpush.msra.mxu0 0.0
      %477 = vmatpush.msra.mxu0 0.0
      %478 = vmatpush.msra.mxu0 0.0
      %479 = vmatpush.msra.mxu0 0.0
      %480 = vmatpush.msra.mxu0 0.0
      %v481 = vand.u32 %v280, 4294901760
      %482 = vmatpush.msra.mxu0 %v481
      %v483 = vand.u32 %v275, 4294901760
      %484 = vmatpush.msra.mxu0 %v483
      %v485 = vand.u32 %v299, 4294901760
      %486 = vmatmul.f32.gmra.mxu0 %v485
      %v487 = vpop.f32.mrf.mxu0
      %v488 = vadd.f32 %v461, %v487
      %v489 = vand.u32 %v302, 4294901760
      %490 = vmatmul.f32.gmra.mxu0 %v489
      %v491 = vpop.f32.mrf.mxu0
      %v492 = vadd.f32 %v465, %v491
      %493 = vdwg.mxu0
      %494 = vmatpush.msra.mxu0 0.0
      %495 = vmatpush.msra.mxu0 0.0
      %496 = vmatpush.msra.mxu0 0.0
      %497 = vmatpush.msra.mxu0 0.0
      %498 = vmatpush.msra.mxu0 0.0
      %499 = vmatpush.msra.mxu0 0.0
      %500 = vmatpush.msra.mxu0 0.0
      %501 = vmatpush.msra.mxu0 0.0
      %502 = vmatpush.msra.mxu0 0.0
      %503 = vmatpush.msra.mxu0 0.0
      %504 = vmatpush.msra.mxu0 0.0
      %505 = vmatpush.msra.mxu0 0.0
      %506 = vmatpush.msra.mxu0 0.0
      %507 = vmatpush.msra.mxu0 0.0
      %v508 = vand.u32 %v281, 4294901760
      %509 = vmatpush.msra.mxu0 %v508
      %v510 = vand.u32 %v276, 4294901760
      %511 = vmatpush.msra.mxu0 %v510
      %v512 = vand.u32 %v299, 4294901760
      %v513 = vsub.f32 %v299, %v512
      %v514 = vand.u32 %v513, 4294901760
      %v515 = vsub.f32 %v513, %v514
      %v516 = vand.u32 %v515, 4294901760
      %517 = vmatmul.f32.gmra.mxu0 %v516
      %v518 = vpop.f32.mrf.mxu0
      %v519 = vadd.f32 %v290, %v518
      %v520 = vand.u32 %v302, 4294901760
      %v521 = vsub.f32 %v302, %v520
      %v522 = vand.u32 %v521, 4294901760
      %v523 = vsub.f32 %v521, %v522
      %v524 = vand.u32 %v523, 4294901760
      %525 = vmatmul.f32.gmra.mxu0 %v524
      %v526 = vpop.f32.mrf.mxu0
      %v527 = vadd.f32 %v295, %v526
      %528 = vdwg.mxu0
      %529 = vmatpush.msra.mxu0 0.0
      %530 = vmatpush.msra.mxu0 0.0
      %531 = vmatpush.msra.mxu0 0.0
      %532 = vmatpush.msra.mxu0 0.0
      %533 = vmatpush.msra.mxu0 0.0
      %534 = vmatpush.msra.mxu0 0.0
      %535 = vmatpush.msra.mxu0 0.0
      %536 = vmatpush.msra.mxu0 0.0
      %537 = vmatpush.msra.mxu0 0.0
      %538 = vmatpush.msra.mxu0 0.0
      %539 = vmatpush.msra.mxu0 0.0
      %540 = vmatpush.msra.mxu0 0.0
      %541 = vmatpush.msra.mxu0 0.0
      %542 = vmatpush.msra.mxu0 0.0
      %v543 = vand.u32 %v281, 4294901760
      %v544 = vsub.f32 %v281, %v543
      %v545 = vand.u32 %v544, 4294901760
      %v546 = vsub.f32 %v544, %v545
      %v547 = vand.u32 %v546, 4294901760
      %548 = vmatpush.msra.mxu0 %v547
      %v549 = vand.u32 %v276, 4294901760
      %v550 = vsub.f32 %v276, %v549
      %v551 = vand.u32 %v550, 4294901760
      %v552 = vsub.f32 %v550, %v551
      %v553 = vand.u32 %v552, 4294901760
      %554 = vmatpush.msra.mxu0 %v553
      %v555 = vand.u32 %v299, 4294901760
      %556 = vmatmul.f32.gmra.mxu0 %v555
      %v557 = vpop.f32.mrf.mxu0
      %v558 = vadd.f32 %v519, %v557
      %v559 = vand.u32 %v302, 4294901760
      %560 = vmatmul.f32.gmra.mxu0 %v559
      %v561 = vpop.f32.mrf.mxu0
      %v562 = vadd.f32 %v527, %v561
      %563 = vdwg.mxu0
      %564 = vmatpush.msra.mxu0 0.0
      %565 = vmatpush.msra.mxu0 0.0
      %566 = vmatpush.msra.mxu0 0.0
      %567 = vmatpush.msra.mxu0 0.0
      %568 = vmatpush.msra.mxu0 0.0
      %569 = vmatpush.msra.mxu0 0.0
      %570 = vmatpush.msra.mxu0 0.0
      %571 = vmatpush.msra.mxu0 0.0
      %572 = vmatpush.msra.mxu0 0.0
      %573 = vmatpush.msra.mxu0 0.0
      %574 = vmatpush.msra.mxu0 0.0
      %575 = vmatpush.msra.mxu0 0.0
      %576 = vmatpush.msra.mxu0 0.0
      %577 = vmatpush.msra.mxu0 0.0
      %v578 = vand.u32 %v281, 4294901760
      %v579 = vsub.f32 %v281, %v578
      %580 = vmatpush.msra.mxu0 %v579
      %v581 = vand.u32 %v276, 4294901760
      %v582 = vsub.f32 %v276, %v581
      %583 = vmatpush.msra.mxu0 %v582
      %v584 = vand.u32 %v299, 4294901760
      %v585 = vsub.f32 %v299, %v584
      %586 = vmatmul.f32.gmra.mxu0 %v585
      %v587 = vpop.f32.mrf.mxu0
      %v588 = vadd.f32 %v558, %v587
      %v589 = vand.u32 %v302, 4294901760
      %v590 = vsub.f32 %v302, %v589
      %591 = vmatmul.f32.gmra.mxu0 %v590
      %v592 = vpop.f32.mrf.mxu0
      %v593 = vadd.f32 %v562, %v592
      %594 = vdwg.mxu0
      %595 = vmatpush.msra.mxu0 0.0
      %596 = vmatpush.msra.mxu0 0.0
      %597 = vmatpush.msra.mxu0 0.0
      %598 = vmatpush.msra.mxu0 0.0
      %599 = vmatpush.msra.mxu0 0.0
      %600 = vmatpush.msra.mxu0 0.0
      %601 = vmatpush.msra.mxu0 0.0
      %602 = vmatpush.msra.mxu0 0.0
      %603 = vmatpush.msra.mxu0 0.0
      %604 = vmatpush.msra.mxu0 0.0
      %605 = vmatpush.msra.mxu0 0.0
      %606 = vmatpush.msra.mxu0 0.0
      %607 = vmatpush.msra.mxu0 0.0
      %608 = vmatpush.msra.mxu0 0.0
      %v609 = vand.u32 %v281, 4294901760
      %610 = vmatpush.msra.mxu0 %v609
      %v611 = vand.u32 %v276, 4294901760
      %612 = vmatpush.msra.mxu0 %v611
      %v613 = vand.u32 %v299, 4294901760
      %v614 = vsub.f32 %v299, %v613
      %v615 = vand.u32 %v614, 4294901760
      %616 = vmatmul.f32.gmra.mxu0 %v615
      %v617 = vpop.f32.mrf.mxu0
      %v618 = vadd.f32 %v588, %v617
      %v619 = vand.u32 %v302, 4294901760
      %v620 = vsub.f32 %v302, %v619
      %v621 = vand.u32 %v620, 4294901760
      %622 = vmatmul.f32.gmra.mxu0 %v621
      %v623 = vpop.f32.mrf.mxu0
      %v624 = vadd.f32 %v593, %v623
      %625 = vdwg.mxu0
      %626 = vmatpush.msra.mxu0 0.0
      %627 = vmatpush.msra.mxu0 0.0
      %628 = vmatpush.msra.mxu0 0.0
      %629 = vmatpush.msra.mxu0 0.0
      %630 = vmatpush.msra.mxu0 0.0
      %631 = vmatpush.msra.mxu0 0.0
      %632 = vmatpush.msra.mxu0 0.0
      %633 = vmatpush.msra.mxu0 0.0
      %634 = vmatpush.msra.mxu0 0.0
      %635 = vmatpush.msra.mxu0 0.0
      %636 = vmatpush.msra.mxu0 0.0
      %637 = vmatpush.msra.mxu0 0.0
      %638 = vmatpush.msra.mxu0 0.0
      %639 = vmatpush.msra.mxu0 0.0
      %v640 = vand.u32 %v281, 4294901760
      %v641 = vsub.f32 %v281, %v640
      %v642 = vand.u32 %v641, 4294901760
      %643 = vmatpush.msra.mxu0 %v642
      %v644 = vand.u32 %v276, 4294901760
      %v645 = vsub.f32 %v276, %v644
      %v646 = vand.u32 %v645, 4294901760
      %647 = vmatpush.msra.mxu0 %v646
      %v648 = vand.u32 %v299, 4294901760
      %649 = vmatmul.f32.gmra.mxu0 %v648
      %v650 = vpop.f32.mrf.mxu0
      %v651 = vadd.f32 %v618, %v650
      %v652 = vand.u32 %v302, 4294901760
      %653 = vmatmul.f32.gmra.mxu0 %v652
      %v654 = vpop.f32.mrf.mxu0
      %v655 = vadd.f32 %v624, %v654
      %656 = vdwg.mxu0
      %657 = vmatpush.msra.mxu0 0.0
      %658 = vmatpush.msra.mxu0 0.0
      %659 = vmatpush.msra.mxu0 0.0
      %660 = vmatpush.msra.mxu0 0.0
      %661 = vmatpush.msra.mxu0 0.0
      %662 = vmatpush.msra.mxu0 0.0
      %663 = vmatpush.msra.mxu0 0.0
      %664 = vmatpush.msra.mxu0 0.0
      %665 = vmatpush.msra.mxu0 0.0
      %666 = vmatpush.msra.mxu0 0.0
      %667 = vmatpush.msra.mxu0 0.0
      %668 = vmatpush.msra.mxu0 0.0
      %669 = vmatpush.msra.mxu0 0.0
      %670 = vmatpush.msra.mxu0 0.0
      %v671 = vand.u32 %v281, 4294901760
      %672 = vmatpush.msra.mxu0 %v671
      %v673 = vand.u32 %v276, 4294901760
      %674 = vmatpush.msra.mxu0 %v673
      %v675 = vand.u32 %v299, 4294901760
      %676 = vmatmul.f32.gmra.mxu0 %v675
      %v677 = vpop.f32.mrf.mxu0
      %v678 = vadd.f32 %v651, %v677
      %v679 = vand.u32 %v302, 4294901760
      %680 = vmatmul.f32.gmra.mxu0 %v679
      %v681 = vpop.f32.mrf.mxu0
      %v682 = vadd.f32 %v655, %v681
      %683 = vdwg.mxu0
      %684 = vmatpush.msra.mxu0 0.0
      %685 = vmatpush.msra.mxu0 0.0
      %686 = vmatpush.msra.mxu0 0.0
      %687 = vmatpush.msra.mxu0 0.0
      %688 = vmatpush.msra.mxu0 0.0
      %689 = vmatpush.msra.mxu0 0.0
      %690 = vmatpush.msra.mxu0 0.0
      %691 = vmatpush.msra.mxu0 0.0
      %692 = vmatpush.msra.mxu0 0.0
      %693 = vmatpush.msra.mxu0 0.0
      %694 = vmatpush.msra.mxu0 0.0
      %695 = vmatpush.msra.mxu0 0.0
      %696 = vmatpush.msra.mxu0 0.0
      %697 = vmatpush.msra.mxu0 0.0
      %v698 = vand.u32 %v282, 4294901760
      %699 = vmatpush.msra.mxu0 %v698
      %v700 = vand.u32 %v277, 4294901760
      %701 = vmatpush.msra.mxu0 %v700
      %v702 = vand.u32 %v299, 4294901760
      %v703 = vsub.f32 %v299, %v702
      %v704 = vand.u32 %v703, 4294901760
      %v705 = vsub.f32 %v703, %v704
      %v706 = vand.u32 %v705, 4294901760
      %707 = vmatmul.f32.gmra.mxu0 %v706
      %v708 = vpop.f32.mrf.mxu0
      %v709 = vadd.f32 %v290, %v708
      %v710 = vand.u32 %v302, 4294901760
      %v711 = vsub.f32 %v302, %v710
      %v712 = vand.u32 %v711, 4294901760
      %v713 = vsub.f32 %v711, %v712
      %v714 = vand.u32 %v713, 4294901760
      %715 = vmatmul.f32.gmra.mxu0 %v714
      %v716 = vpop.f32.mrf.mxu0
      %v717 = vadd.f32 %v295, %v716
      %718 = vdwg.mxu0
      %719 = vmatpush.msra.mxu0 0.0
      %720 = vmatpush.msra.mxu0 0.0
      %721 = vmatpush.msra.mxu0 0.0
      %722 = vmatpush.msra.mxu0 0.0
      %723 = vmatpush.msra.mxu0 0.0
      %724 = vmatpush.msra.mxu0 0.0
      %725 = vmatpush.msra.mxu0 0.0
      %726 = vmatpush.msra.mxu0 0.0
      %727 = vmatpush.msra.mxu0 0.0
      %728 = vmatpush.msra.mxu0 0.0
      %729 = vmatpush.msra.mxu0 0.0
      %730 = vmatpush.msra.mxu0 0.0
      %731 = vmatpush.msra.mxu0 0.0
      %732 = vmatpush.msra.mxu0 0.0
      %v733 = vand.u32 %v282, 4294901760
      %v734 = vsub.f32 %v282, %v733
      %v735 = vand.u32 %v734, 4294901760
      %v736 = vsub.f32 %v734, %v735
      %v737 = vand.u32 %v736, 4294901760
      %738 = vmatpush.msra.mxu0 %v737
      %v739 = vand.u32 %v277, 4294901760
      %v740 = vsub.f32 %v277, %v739
      %v741 = vand.u32 %v740, 4294901760
      %v742 = vsub.f32 %v740, %v741
      %v743 = vand.u32 %v742, 4294901760
      %744 = vmatpush.msra.mxu0 %v743
      %v745 = vand.u32 %v299, 4294901760
      %746 = vmatmul.f32.gmra.mxu0 %v745
      %v747 = vpop.f32.mrf.mxu0
      %v748 = vadd.f32 %v709, %v747
      %v749 = vand.u32 %v302, 4294901760
      %750 = vmatmul.f32.gmra.mxu0 %v749
      %v751 = vpop.f32.mrf.mxu0
      %v752 = vadd.f32 %v717, %v751
      %753 = vdwg.mxu0
      %754 = vmatpush.msra.mxu0 0.0
      %755 = vmatpush.msra.mxu0 0.0
      %756 = vmatpush.msra.mxu0 0.0
      %757 = vmatpush.msra.mxu0 0.0
      %758 = vmatpush.msra.mxu0 0.0
      %759 = vmatpush.msra.mxu0 0.0
      %760 = vmatpush.msra.mxu0 0.0
      %761 = vmatpush.msra.mxu0 0.0
      %762 = vmatpush.msra.mxu0 0.0
      %763 = vmatpush.msra.mxu0 0.0
      %764 = vmatpush.msra.mxu0 0.0
      %765 = vmatpush.msra.mxu0 0.0
      %766 = vmatpush.msra.mxu0 0.0
      %767 = vmatpush.msra.mxu0 0.0
      %v768 = vand.u32 %v282, 4294901760
      %v769 = vsub.f32 %v282, %v768
      %770 = vmatpush.msra.mxu0 %v769
      %v771 = vand.u32 %v277, 4294901760
      %v772 = vsub.f32 %v277, %v771
      %773 = vmatpush.msra.mxu0 %v772
      %v774 = vand.u32 %v299, 4294901760
      %v775 = vsub.f32 %v299, %v774
      %776 = vmatmul.f32.gmra.mxu0 %v775
      %v777 = vpop.f32.mrf.mxu0
      %v778 = vadd.f32 %v748, %v777
      %v779 = vand.u32 %v302, 4294901760
      %v780 = vsub.f32 %v302, %v779
      %781 = vmatmul.f32.gmra.mxu0 %v780
      %v782 = vpop.f32.mrf.mxu0
      %v783 = vadd.f32 %v752, %v782
      %784 = vdwg.mxu0
      %785 = vmatpush.msra.mxu0 0.0
      %786 = vmatpush.msra.mxu0 0.0
      %787 = vmatpush.msra.mxu0 0.0
      %788 = vmatpush.msra.mxu0 0.0
      %789 = vmatpush.msra.mxu0 0.0
      %790 = vmatpush.msra.mxu0 0.0
      %791 = vmatpush.msra.mxu0 0.0
      %792 = vmatpush.msra.mxu0 0.0
      %793 = vmatpush.msra.mxu0 0.0
      %794 = vmatpush.msra.mxu0 0.0
      %795 = vmatpush.msra.mxu0 0.0
      %796 = vmatpush.msra.mxu0 0.0
      %797 = vmatpush.msra.mxu0 0.0
      %798 = vmatpush.msra.mxu0 0.0
      %v799 = vand.u32 %v282, 4294901760
      %800 = vmatpush.msra.mxu0 %v799
      %v801 = vand.u32 %v277, 4294901760
      %802 = vmatpush.msra.mxu0 %v801
      %v803 = vand.u32 %v299, 4294901760
      %v804 = vsub.f32 %v299, %v803
      %v805 = vand.u32 %v804, 4294901760
      %806 = vmatmul.f32.gmra.mxu0 %v805
      %v807 = vpop.f32.mrf.mxu0
      %v808 = vadd.f32 %v778, %v807
      %v809 = vand.u32 %v302, 4294901760
      %v810 = vsub.f32 %v302, %v809
      %v811 = vand.u32 %v810, 4294901760
      %812 = vmatmul.f32.gmra.mxu0 %v811
      %v813 = vpop.f32.mrf.mxu0
      %v814 = vadd.f32 %v783, %v813
      %815 = vdwg.mxu0
      %816 = vmatpush.msra.mxu0 0.0
      %817 = vmatpush.msra.mxu0 0.0
      %818 = vmatpush.msra.mxu0 0.0
      %819 = vmatpush.msra.mxu0 0.0
      %820 = vmatpush.msra.mxu0 0.0
      %821 = vmatpush.msra.mxu0 0.0
      %822 = vmatpush.msra.mxu0 0.0
      %823 = vmatpush.msra.mxu0 0.0
      %824 = vmatpush.msra.mxu0 0.0
      %825 = vmatpush.msra.mxu0 0.0
      %826 = vmatpush.msra.mxu0 0.0
      %827 = vmatpush.msra.mxu0 0.0
      %828 = vmatpush.msra.mxu0 0.0
      %829 = vmatpush.msra.mxu0 0.0
      %v830 = vand.u32 %v282, 4294901760
      %v831 = vsub.f32 %v282, %v830
      %v832 = vand.u32 %v831, 4294901760
      %833 = vmatpush.msra.mxu0 %v832
      %v834 = vand.u32 %v277, 4294901760
      %v835 = vsub.f32 %v277, %v834
      %v836 = vand.u32 %v835, 4294901760
      %837 = vmatpush.msra.mxu0 %v836
      %v838 = vand.u32 %v299, 4294901760
      %839 = vmatmul.f32.gmra.mxu0 %v838
      %v840 = vpop.f32.mrf.mxu0
      %v841 = vadd.f32 %v808, %v840
      %v842 = vand.u32 %v302, 4294901760
      %843 = vmatmul.f32.gmra.mxu0 %v842
      %v844 = vpop.f32.mrf.mxu0
      %v845 = vadd.f32 %v814, %v844
      %846 = vdwg.mxu0
      %847 = vmatpush.msra.mxu0 0.0
      %848 = vmatpush.msra.mxu0 0.0
      %849 = vmatpush.msra.mxu0 0.0
      %850 = vmatpush.msra.mxu0 0.0
      %851 = vmatpush.msra.mxu0 0.0
      %852 = vmatpush.msra.mxu0 0.0
      %853 = vmatpush.msra.mxu0 0.0
      %854 = vmatpush.msra.mxu0 0.0
      %855 = vmatpush.msra.mxu0 0.0
      %856 = vmatpush.msra.mxu0 0.0
      %857 = vmatpush.msra.mxu0 0.0
      %858 = vmatpush.msra.mxu0 0.0
      %859 = vmatpush.msra.mxu0 0.0
      %860 = vmatpush.msra.mxu0 0.0
      %v861 = vand.u32 %v282, 4294901760
      %862 = vmatpush.msra.mxu0 %v861
      %v863 = vand.u32 %v277, 4294901760
      %864 = vmatpush.msra.mxu0 %v863
      %v865 = vand.u32 %v299, 4294901760
      %866 = vmatmul.f32.gmra.mxu0 %v865
      %v867 = vpop.f32.mrf.mxu0
      %v868 = vadd.f32 %v841, %v867
      %v869 = vand.u32 %v302, 4294901760
      %870 = vmatmul.f32.gmra.mxu0 %v869
      %v871 = vpop.f32.mrf.mxu0
      %v872 = vadd.f32 %v845, %v871
      %873 = vdwg.mxu0
      %874 = vmatpush.msra.mxu0 0.0
      %875 = vmatpush.msra.mxu0 0.0
      %876 = vmatpush.msra.mxu0 0.0
      %877 = vmatpush.msra.mxu0 0.0
      %878 = vmatpush.msra.mxu0 0.0
      %879 = vmatpush.msra.mxu0 0.0
      %880 = vmatpush.msra.mxu0 0.0
      %881 = vmatpush.msra.mxu0 0.0
      %882 = vmatpush.msra.mxu0 0.0
      %883 = vmatpush.msra.mxu0 0.0
      %884 = vmatpush.msra.mxu0 0.0
      %885 = vmatpush.msra.mxu0 0.0
      %886 = vmatpush.msra.mxu0 0.0
      %887 = vmatpush.msra.mxu0 0.0
      %v888 = vand.u32 %v283, 4294901760
      %889 = vmatpush.msra.mxu0 %v888
      %v890 = vand.u32 %v278, 4294901760
      %891 = vmatpush.msra.mxu0 %v890
      %v892 = vand.u32 %v299, 4294901760
      %v893 = vsub.f32 %v299, %v892
      %v894 = vand.u32 %v893, 4294901760
      %v895 = vsub.f32 %v893, %v894
      %v896 = vand.u32 %v895, 4294901760
      %897 = vmatmul.f32.gmra.mxu0 %v896
      %v898 = vpop.f32.mrf.mxu0
      %v899 = vadd.f32 %v290, %v898
      %v900 = vand.u32 %v302, 4294901760
      %v901 = vsub.f32 %v302, %v900
      %v902 = vand.u32 %v901, 4294901760
      %v903 = vsub.f32 %v901, %v902
      %v904 = vand.u32 %v903, 4294901760
      %905 = vmatmul.f32.gmra.mxu0 %v904
      %v906 = vpop.f32.mrf.mxu0
      %v907 = vadd.f32 %v295, %v906
      %908 = vdwg.mxu0
      %909 = vmatpush.msra.mxu0 0.0
      %910 = vmatpush.msra.mxu0 0.0
      %911 = vmatpush.msra.mxu0 0.0
      %912 = vmatpush.msra.mxu0 0.0
      %913 = vmatpush.msra.mxu0 0.0
      %914 = vmatpush.msra.mxu0 0.0
      %915 = vmatpush.msra.mxu0 0.0
      %916 = vmatpush.msra.mxu0 0.0
      %917 = vmatpush.msra.mxu0 0.0
      %918 = vmatpush.msra.mxu0 0.0
      %919 = vmatpush.msra.mxu0 0.0
      %920 = vmatpush.msra.mxu0 0.0
      %921 = vmatpush.msra.mxu0 0.0
      %922 = vmatpush.msra.mxu0 0.0
      %v923 = vand.u32 %v283, 4294901760
      %v924 = vsub.f32 %v283, %v923
      %v925 = vand.u32 %v924, 4294901760
      %v926 = vsub.f32 %v924, %v925
      %v927 = vand.u32 %v926, 4294901760
      %928 = vmatpush.msra.mxu0 %v927
      %v929 = vand.u32 %v278, 4294901760
      %v930 = vsub.f32 %v278, %v929
      %v931 = vand.u32 %v930, 4294901760
      %v932 = vsub.f32 %v930, %v931
      %v933 = vand.u32 %v932, 4294901760
      %934 = vmatpush.msra.mxu0 %v933
      %v935 = vand.u32 %v299, 4294901760
      %936 = vmatmul.f32.gmra.mxu0 %v935
      %v937 = vpop.f32.mrf.mxu0
      %v938 = vadd.f32 %v899, %v937
      %v939 = vand.u32 %v302, 4294901760
      %940 = vmatmul.f32.gmra.mxu0 %v939
      %v941 = vpop.f32.mrf.mxu0
      %v942 = vadd.f32 %v907, %v941
      %943 = vdwg.mxu0
      %944 = vmatpush.msra.mxu0 0.0
      %945 = vmatpush.msra.mxu0 0.0
      %946 = vmatpush.msra.mxu0 0.0
      %947 = vmatpush.msra.mxu0 0.0
      %948 = vmatpush.msra.mxu0 0.0
      %949 = vmatpush.msra.mxu0 0.0
      %950 = vmatpush.msra.mxu0 0.0
      %951 = vmatpush.msra.mxu0 0.0
      %952 = vmatpush.msra.mxu0 0.0
      %953 = vmatpush.msra.mxu0 0.0
      %954 = vmatpush.msra.mxu0 0.0
      %955 = vmatpush.msra.mxu0 0.0
      %956 = vmatpush.msra.mxu0 0.0
      %957 = vmatpush.msra.mxu0 0.0
      %v958 = vand.u32 %v283, 4294901760
      %v959 = vsub.f32 %v283, %v958
      %960 = vmatpush.msra.mxu0 %v959
      %v961 = vand.u32 %v278, 4294901760
      %v962 = vsub.f32 %v278, %v961
      %963 = vmatpush.msra.mxu0 %v962
      %v964 = vand.u32 %v299, 4294901760
      %v965 = vsub.f32 %v299, %v964
      %966 = vmatmul.f32.gmra.mxu0 %v965
      %v967 = vpop.f32.mrf.mxu0
      %v968 = vadd.f32 %v938, %v967
      %v969 = vand.u32 %v302, 4294901760
      %v970 = vsub.f32 %v302, %v969
      %971 = vmatmul.f32.gmra.mxu0 %v970
      %v972 = vpop.f32.mrf.mxu0
      %v973 = vadd.f32 %v942, %v972
      %974 = vdwg.mxu0
      %975 = vmatpush.msra.mxu0 0.0
      %976 = vmatpush.msra.mxu0 0.0
      %977 = vmatpush.msra.mxu0 0.0
      %978 = vmatpush.msra.mxu0 0.0
      %979 = vmatpush.msra.mxu0 0.0
      %980 = vmatpush.msra.mxu0 0.0
      %981 = vmatpush.msra.mxu0 0.0
      %982 = vmatpush.msra.mxu0 0.0
      %983 = vmatpush.msra.mxu0 0.0
      %984 = vmatpush.msra.mxu0 0.0
      %985 = vmatpush.msra.mxu0 0.0
      %986 = vmatpush.msra.mxu0 0.0
      %987 = vmatpush.msra.mxu0 0.0
      %988 = vmatpush.msra.mxu0 0.0
      %v989 = vand.u32 %v283, 4294901760
      %990 = vmatpush.msra.mxu0 %v989
      %v991 = vand.u32 %v278, 4294901760
      %992 = vmatpush.msra.mxu0 %v991
      %v993 = vand.u32 %v299, 4294901760
      %v994 = vsub.f32 %v299, %v993
      %v995 = vand.u32 %v994, 4294901760
      %996 = vmatmul.f32.gmra.mxu0 %v995
      %v997 = vpop.f32.mrf.mxu0
      %v998 = vadd.f32 %v968, %v997
      %v999 = vand.u32 %v302, 4294901760
      %v1000 = vsub.f32 %v302, %v999
      %v1001 = vand.u32 %v1000, 4294901760
      %1002 = vmatmul.f32.gmra.mxu0 %v1001
      %v1003 = vpop.f32.mrf.mxu0
      %v1004 = vadd.f32 %v973, %v1003
      %1005 = vdwg.mxu0
      %1006 = vmatpush.msra.mxu0 0.0
      %1007 = vmatpush.msra.mxu0 0.0
      %1008 = vmatpush.msra.mxu0 0.0
      %1009 = vmatpush.msra.mxu0 0.0
      %1010 = vmatpush.msra.mxu0 0.0
      %1011 = vmatpush.msra.mxu0 0.0
      %1012 = vmatpush.msra.mxu0 0.0
      %1013 = vmatpush.msra.mxu0 0.0
      %1014 = vmatpush.msra.mxu0 0.0
      %1015 = vmatpush.msra.mxu0 0.0
      %1016 = vmatpush.msra.mxu0 0.0
      %1017 = vmatpush.msra.mxu0 0.0
      %1018 = vmatpush.msra.mxu0 0.0
      %1019 = vmatpush.msra.mxu0 0.0
      %v1020 = vand.u32 %v283, 4294901760
      %v1021 = vsub.f32 %v283, %v1020
      %v1022 = vand.u32 %v1021, 4294901760
      %1023 = vmatpush.msra.mxu0 %v1022
      %v1024 = vand.u32 %v278, 4294901760
      %v1025 = vsub.f32 %v278, %v1024
      %v1026 = vand.u32 %v1025, 4294901760
      %1027 = vmatpush.msra.mxu0 %v1026
      %v1028 = vand.u32 %v299, 4294901760
      %1029 = vmatmul.f32.gmra.mxu0 %v1028
      %v1030 = vpop.f32.mrf.mxu0
      %v1031 = vadd.f32 %v998, %v1030
      %v1032 = vand.u32 %v302, 4294901760
      %1033 = vmatmul.f32.gmra.mxu0 %v1032
      %v1034 = vpop.f32.mrf.mxu0
      %v1035 = vadd.f32 %v1004, %v1034
      %1036 = vdwg.mxu0
      %1037 = vmatpush.msra.mxu0 0.0
      %1038 = vmatpush.msra.mxu0 0.0
      %1039 = vmatpush.msra.mxu0 0.0
      %1040 = vmatpush.msra.mxu0 0.0
      %1041 = vmatpush.msra.mxu0 0.0
      %1042 = vmatpush.msra.mxu0 0.0
      %1043 = vmatpush.msra.mxu0 0.0
      %1044 = vmatpush.msra.mxu0 0.0
      %1045 = vmatpush.msra.mxu0 0.0
      %1046 = vmatpush.msra.mxu0 0.0
      %1047 = vmatpush.msra.mxu0 0.0
      %1048 = vmatpush.msra.mxu0 0.0
      %1049 = vmatpush.msra.mxu0 0.0
      %1050 = vmatpush.msra.mxu0 0.0
      %v1051 = vand.u32 %v283, 4294901760
      %1052 = vmatpush.msra.mxu0 %v1051
      %v1053 = vand.u32 %v278, 4294901760
      %1054 = vmatpush.msra.mxu0 %v1053
      %v1055 = vand.u32 %v299, 4294901760
      %1056 = vmatmul.f32.gmra.mxu0 %v1055
      %v1057 = vpop.f32.mrf.mxu0
      %v1058 = vadd.f32 %v1031, %v1057
      %v1059 = vand.u32 %v302, 4294901760
      %1060 = vmatmul.f32.gmra.mxu0 %v1059
      %v1061 = vpop.f32.mrf.mxu0
      %v1062 = vadd.f32 %v1035, %v1061
      %1063 = vdwg.mxu0
      %1064 = vmatpush.msra.mxu0 0.0
      %1065 = vmatpush.msra.mxu0 0.0
      %1066 = vmatpush.msra.mxu0 0.0
      %1067 = vmatpush.msra.mxu0 0.0
      %1068 = vmatpush.msra.mxu0 0.0
      %1069 = vmatpush.msra.mxu0 0.0
      %1070 = vmatpush.msra.mxu0 0.0
      %1071 = vmatpush.msra.mxu0 0.0
      %1072 = vmatpush.msra.mxu0 0.0
      %1073 = vmatpush.msra.mxu0 0.0
      %1074 = vmatpush.msra.mxu0 0.0
      %1075 = vmatpush.msra.mxu0 0.0
      %1076 = vmatpush.msra.mxu0 0.0
      %1077 = vmatpush.msra.mxu0 0.0
      %v1078 = vand.u32 %v284, 4294901760
      %1079 = vmatpush.msra.mxu0 %v1078
      %v1080 = vand.u32 %v279, 4294901760
      %1081 = vmatpush.msra.mxu0 %v1080
      %v1082 = vand.u32 %v299, 4294901760
      %v1083 = vsub.f32 %v299, %v1082
      %v1084 = vand.u32 %v1083, 4294901760
      %v1085 = vsub.f32 %v1083, %v1084
      %v1086 = vand.u32 %v1085, 4294901760
      %1087 = vmatmul.f32.gmra.mxu0 %v1086
      %v1088 = vpop.f32.mrf.mxu0
      %v1089 = vadd.f32 %v290, %v1088
      %v1090 = vand.u32 %v302, 4294901760
      %v1091 = vsub.f32 %v302, %v1090
      %v1092 = vand.u32 %v1091, 4294901760
      %v1093 = vsub.f32 %v1091, %v1092
      %v1094 = vand.u32 %v1093, 4294901760
      %1095 = vmatmul.f32.gmra.mxu0 %v1094
      %v1096 = vpop.f32.mrf.mxu0
      %v1097 = vadd.f32 %v295, %v1096
      %1098 = vdwg.mxu0
      %1099 = vmatpush.msra.mxu0 0.0
      %1100 = vmatpush.msra.mxu0 0.0
      %1101 = vmatpush.msra.mxu0 0.0
      %1102 = vmatpush.msra.mxu0 0.0
      %1103 = vmatpush.msra.mxu0 0.0
      %1104 = vmatpush.msra.mxu0 0.0
      %1105 = vmatpush.msra.mxu0 0.0
      %1106 = vmatpush.msra.mxu0 0.0
      %1107 = vmatpush.msra.mxu0 0.0
      %1108 = vmatpush.msra.mxu0 0.0
      %1109 = vmatpush.msra.mxu0 0.0
      %1110 = vmatpush.msra.mxu0 0.0
      %1111 = vmatpush.msra.mxu0 0.0
      %1112 = vmatpush.msra.mxu0 0.0
      %v1113 = vand.u32 %v284, 4294901760
      %v1114 = vsub.f32 %v284, %v1113
      %v1115 = vand.u32 %v1114, 4294901760
      %v1116 = vsub.f32 %v1114, %v1115
      %v1117 = vand.u32 %v1116, 4294901760
      %1118 = vmatpush.msra.mxu0 %v1117
      %v1119 = vand.u32 %v279, 4294901760
      %v1120 = vsub.f32 %v279, %v1119
      %v1121 = vand.u32 %v1120, 4294901760
      %v1122 = vsub.f32 %v1120, %v1121
      %v1123 = vand.u32 %v1122, 4294901760
      %1124 = vmatpush.msra.mxu0 %v1123
      %v1125 = vand.u32 %v299, 4294901760
      %1126 = vmatmul.f32.gmra.mxu0 %v1125
      %v1127 = vpop.f32.mrf.mxu0
      %v1128 = vadd.f32 %v1089, %v1127
      %v1129 = vand.u32 %v302, 4294901760
      %1130 = vmatmul.f32.gmra.mxu0 %v1129
      %v1131 = vpop.f32.mrf.mxu0
      %v1132 = vadd.f32 %v1097, %v1131
      %1133 = vdwg.mxu0
      %1134 = vmatpush.msra.mxu0 0.0
      %1135 = vmatpush.msra.mxu0 0.0
      %1136 = vmatpush.msra.mxu0 0.0
      %1137 = vmatpush.msra.mxu0 0.0
      %1138 = vmatpush.msra.mxu0 0.0
      %1139 = vmatpush.msra.mxu0 0.0
      %1140 = vmatpush.msra.mxu0 0.0
      %1141 = vmatpush.msra.mxu0 0.0
      %1142 = vmatpush.msra.mxu0 0.0
      %1143 = vmatpush.msra.mxu0 0.0
      %1144 = vmatpush.msra.mxu0 0.0
      %1145 = vmatpush.msra.mxu0 0.0
      %1146 = vmatpush.msra.mxu0 0.0
      %1147 = vmatpush.msra.mxu0 0.0
      %v1148 = vand.u32 %v284, 4294901760
      %v1149 = vsub.f32 %v284, %v1148
      %1150 = vmatpush.msra.mxu0 %v1149
      %v1151 = vand.u32 %v279, 4294901760
      %v1152 = vsub.f32 %v279, %v1151
      %1153 = vmatpush.msra.mxu0 %v1152
      %v1154 = vand.u32 %v299, 4294901760
      %v1155 = vsub.f32 %v299, %v1154
      %1156 = vmatmul.f32.gmra.mxu0 %v1155
      %v1157 = vpop.f32.mrf.mxu0
      %v1158 = vadd.f32 %v1128, %v1157
      %v1159 = vand.u32 %v302, 4294901760
      %v1160 = vsub.f32 %v302, %v1159
      %1161 = vmatmul.f32.gmra.mxu0 %v1160
      %v1162 = vpop.f32.mrf.mxu0
      %v1163 = vadd.f32 %v1132, %v1162
      %1164 = vdwg.mxu0
      %1165 = vmatpush.msra.mxu0 0.0
      %1166 = vmatpush.msra.mxu0 0.0
      %1167 = vmatpush.msra.mxu0 0.0
      %1168 = vmatpush.msra.mxu0 0.0
      %1169 = vmatpush.msra.mxu0 0.0
      %1170 = vmatpush.msra.mxu0 0.0
      %1171 = vmatpush.msra.mxu0 0.0
      %1172 = vmatpush.msra.mxu0 0.0
      %1173 = vmatpush.msra.mxu0 0.0
      %1174 = vmatpush.msra.mxu0 0.0
      %1175 = vmatpush.msra.mxu0 0.0
      %1176 = vmatpush.msra.mxu0 0.0
      %1177 = vmatpush.msra.mxu0 0.0
      %1178 = vmatpush.msra.mxu0 0.0
      %v1179 = vand.u32 %v284, 4294901760
      %1180 = vmatpush.msra.mxu0 %v1179
      %v1181 = vand.u32 %v279, 4294901760
      %1182 = vmatpush.msra.mxu0 %v1181
      %v1183 = vand.u32 %v299, 4294901760
      %v1184 = vsub.f32 %v299, %v1183
      %v1185 = vand.u32 %v1184, 4294901760
      %1186 = vmatmul.f32.gmra.mxu0 %v1185
      %v1187 = vpop.f32.mrf.mxu0
      %v1188 = vadd.f32 %v1158, %v1187
      %v1189 = vand.u32 %v302, 4294901760
      %v1190 = vsub.f32 %v302, %v1189
      %v1191 = vand.u32 %v1190, 4294901760
      %1192 = vmatmul.f32.gmra.mxu0 %v1191
      %v1193 = vpop.f32.mrf.mxu0
      %v1194 = vadd.f32 %v1163, %v1193
      %1195 = vdwg.mxu0
      %1196 = vmatpush.msra.mxu0 0.0
      %1197 = vmatpush.msra.mxu0 0.0
      %1198 = vmatpush.msra.mxu0 0.0
      %1199 = vmatpush.msra.mxu0 0.0
      %1200 = vmatpush.msra.mxu0 0.0
      %1201 = vmatpush.msra.mxu0 0.0
      %1202 = vmatpush.msra.mxu0 0.0
      %1203 = vmatpush.msra.mxu0 0.0
      %1204 = vmatpush.msra.mxu0 0.0
      %1205 = vmatpush.msra.mxu0 0.0
      %1206 = vmatpush.msra.mxu0 0.0
      %1207 = vmatpush.msra.mxu0 0.0
      %1208 = vmatpush.msra.mxu0 0.0
      %1209 = vmatpush.msra.mxu0 0.0
      %v1210 = vand.u32 %v284, 4294901760
      %v1211 = vsub.f32 %v284, %v1210
      %v1212 = vand.u32 %v1211, 4294901760
      %1213 = vmatpush.msra.mxu0 %v1212
      %v1214 = vand.u32 %v279, 4294901760
      %v1215 = vsub.f32 %v279, %v1214
      %v1216 = vand.u32 %v1215, 4294901760
      %1217 = vmatpush.msra.mxu0 %v1216
      %v1218 = vand.u32 %v299, 4294901760
      %1219 = vmatmul.f32.gmra.mxu0 %v1218
      %v1220 = vpop.f32.mrf.mxu0
      %v1221 = vadd.f32 %v1188, %v1220
      %v1222 = vand.u32 %v302, 4294901760
      %1223 = vmatmul.f32.gmra.mxu0 %v1222
      %v1224 = vpop.f32.mrf.mxu0
      %v1225 = vadd.f32 %v1194, %v1224
      %1226 = vdwg.mxu0
      %1227 = vmatpush.msra.mxu0 0.0
      %1228 = vmatpush.msra.mxu0 0.0
      %1229 = vmatpush.msra.mxu0 0.0
      %1230 = vmatpush.msra.mxu0 0.0
      %1231 = vmatpush.msra.mxu0 0.0
      %1232 = vmatpush.msra.mxu0 0.0
      %1233 = vmatpush.msra.mxu0 0.0
      %1234 = vmatpush.msra.mxu0 0.0
      %1235 = vmatpush.msra.mxu0 0.0
      %1236 = vmatpush.msra.mxu0 0.0
      %1237 = vmatpush.msra.mxu0 0.0
      %1238 = vmatpush.msra.mxu0 0.0
      %1239 = vmatpush.msra.mxu0 0.0
      %1240 = vmatpush.msra.mxu0 0.0
      %v1241 = vand.u32 %v284, 4294901760
      %1242 = vmatpush.msra.mxu0 %v1241
      %v1243 = vand.u32 %v279, 4294901760
      %1244 = vmatpush.msra.mxu0 %v1243
      %v1245 = vand.u32 %v299, 4294901760
      %1246 = vmatmul.f32.gmra.mxu0 %v1245
      %v1247 = vpop.f32.mrf.mxu0
      %v1248 = vadd.f32 %v1221, %v1247
      %v1249 = vand.u32 %v302, 4294901760
      %1250 = vmatmul.f32.gmra.mxu0 %v1249
      %v1251 = vpop.f32.mrf.mxu0
      %v1252 = vadd.f32 %v1225, %v1251
      %1253 = vdwg.mxu0
      %v1254 = vld [vmem:[%s261] sm:$0xff]
      %v1255 = vld [vmem:[%s261 + $0x8] sm:$0xff]
      %v1256 = vld [vmem:[%s261 + $0x10] sm:$0xff]
      %v1257 = vld [vmem:[%s261 + $0x18] sm:$0xff]
      %v1258 = vld [vmem:[%s261 + $0x20] sm:$0xff]
      %v1259 = vld [vmem:[%s261 + $0x28] sm:$0xff]
      %v1260 = vld [vmem:[%s261 + $0x30] sm:$0xff]
      %v1261 = vld [vmem:[%s261 + $0x38] sm:$0xff]
      %v1262 = vld [vmem:[%s261 + $0x40] sm:$0xff]
      %v1263 = vld [vmem:[%s261 + $0x48] sm:$0xff]
      %v1264 = vadd.f32 %v488, %v1254
      %v1265 = vadd.f32 %v678, %v1255
      %v1266 = vadd.f32 %v868, %v1256
      %v1267 = vadd.f32 %v1058, %v1257
      %v1268 = vadd.f32 %v1248, %v1258
      %v1269 = vadd.f32 %v492, %v1259
      %v1270 = vadd.f32 %v682, %v1260
      %v1271 = vadd.f32 %v872, %v1261
      %v1272 = vadd.f32 %v1062, %v1262
      %v1273 = vadd.f32 %v1252, %v1263
      %v1274 = vmul.f32 %v1264, 0.5
      %v1275 = vmul.f32 %v1265, 0.5
      %v1276 = vmul.f32 %v1266, 0.5
      %v1277 = vmul.f32 %v1267, 0.5
      %v1278 = vmul.f32 %v1268, 0.5
      %v1279 = vmul.f32 %v1269, 0.5
      %v1280 = vmul.f32 %v1270, 0.5
      %v1281 = vmul.f32 %v1271, 0.5
      %v1282 = vmul.f32 %v1272, 0.5
      %v1283 = vmul.f32 %v1273, 0.5
      %v1284 = vmul.f32 %v1264, 0.70710677
      %v1285 = vmul.f32 %v1265, 0.70710677
      %v1286 = vmul.f32 %v1266, 0.70710677
      %v1287 = vmul.f32 %v1267, 0.70710677
      %v1288 = vmul.f32 %v1268, 0.70710677
      %v1289 = vmul.f32 %v1269, 0.70710677
      %v1290 = vmul.f32 %v1270, 0.70710677
      %v1291 = vmul.f32 %v1271, 0.70710677
      %v1292 = vmul.f32 %v1272, 0.70710677
      %v1293 = vmul.f32 %v1273, 0.70710677
      %v1294 = vmul.f32 %v1284, %v1284
      %v1295 = vmin.f32 16.0, %v1294
      %v1296 = vmul.f32 %v1295, 2.1237322e-06
      %v1297 = vadd.f32 %v1296, 0.00028619796
      %v1298 = vmul.f32 %v1295, %v1297
      %v1299 = vadd.f32 %v1298, 0.0036580483
      %v1300 = vmul.f32 %v1295, %v1299
      %v1301 = vadd.f32 %v1300, 0.05243302
      %v1302 = vmul.f32 %v1295, %v1301
      %v1303 = vadd.f32 %v1302, 0.18741608
      %v1304 = vmul.f32 %v1295, %v1303
      %v1305 = vadd.f32 %v1304, 1.1283791
      %v1306 = vmul.f32 %v1284, %v1305
      %v1307 = vmul.f32 %v1295, 3.8918573e-05
      %v1308 = vadd.f32 %v1307, 0.001143296
      %v1309 = vmul.f32 %v1295, %v1308
      %v1310 = vadd.f32 %v1309, 0.014752088
      %v1311 = vmul.f32 %v1295, %v1310
      %v1312 = vadd.f32 %v1311, 0.112945676
      %v1313 = vmul.f32 %v1295, %v1312
      %v1314 = vadd.f32 %v1313, 0.4994258
      %v1315 = vmul.f32 %v1295, %v1314
      %v1316 = vadd.f32 %v1315, 1.0
      %v1317 = vrcp.pop %v1316
      %v1318 = vmul.f32 %v1316, %v1317
      %v1319 = vsub.f32 1.0, %v1318
      %v1320 = vmul.f32 %v1317, %v1319
      %v1321 = vadd.f32 %v1317, %v1320
      %vm1322 = vweird.f32 %v1316
      %vm1323 = vweird.f32 %v1317
      %vm1324 = vmor %vm1322, %vm1323
      %v1325 = vsel %vm1324, %v1317, %v1321
      %v1326 = vand.u32 2147483647, %v1316
      %vm1327 = vcmp.eq.f32.partialorder %v1326, 8.507059e+37
      %v1328 = vand.u32 %v1316, 2147483648
      %v1329 = vor.u32 1.1754944e-38, %v1328
      %v1330 = vsel %vm1327, %v1329, %v1325
      %v1331 = vmul.f32 %v1306, %v1330
      %v1332 = vmin.f32 %v1331, 1.0
      %v1333 = vmax.f32 %v1332, -1.0
      %v1334 = vmul.f32 %v1285, %v1285
      %v1335 = vmin.f32 16.0, %v1334
      %v1336 = vmul.f32 %v1335, 2.1237322e-06
      %v1337 = vadd.f32 %v1336, 0.00028619796
      %v1338 = vmul.f32 %v1335, %v1337
      %v1339 = vadd.f32 %v1338, 0.0036580483
      %v1340 = vmul.f32 %v1335, %v1339
      %v1341 = vadd.f32 %v1340, 0.05243302
      %v1342 = vmul.f32 %v1335, %v1341
      %v1343 = vadd.f32 %v1342, 0.18741608
      %v1344 = vmul.f32 %v1335, %v1343
      %v1345 = vadd.f32 %v1344, 1.1283791
      %v1346 = vmul.f32 %v1285, %v1345
      %v1347 = vmul.f32 %v1335, 3.8918573e-05
      %v1348 = vadd.f32 %v1347, 0.001143296
      %v1349 = vmul.f32 %v1335, %v1348
      %v1350 = vadd.f32 %v1349, 0.014752088
      %v1351 = vmul.f32 %v1335, %v1350
      %v1352 = vadd.f32 %v1351, 0.112945676
      %v1353 = vmul.f32 %v1335, %v1352
      %v1354 = vadd.f32 %v1353, 0.4994258
      %v1355 = vmul.f32 %v1335, %v1354
      %v1356 = vadd.f32 %v1355, 1.0
      %v1357 = vrcp.pop %v1356
      %v1358 = vmul.f32 %v1356, %v1357
      %v1359 = vsub.f32 1.0, %v1358
      %v1360 = vmul.f32 %v1357, %v1359
      %v1361 = vadd.f32 %v1357, %v1360
      %vm1362 = vweird.f32 %v1356
      %vm1363 = vweird.f32 %v1357
      %vm1364 = vmor %vm1362, %vm1363
      %v1365 = vsel %vm1364, %v1357, %v1361
      %v1366 = vand.u32 2147483647, %v1356
      %vm1367 = vcmp.eq.f32.partialorder %v1366, 8.507059e+37
      %v1368 = vand.u32 %v1356, 2147483648
      %v1369 = vor.u32 1.1754944e-38, %v1368
      %v1370 = vsel %vm1367, %v1369, %v1365
      %v1371 = vmul.f32 %v1346, %v1370
      %v1372 = vmin.f32 %v1371, 1.0
      %v1373 = vmax.f32 %v1372, -1.0
      %v1374 = vmul.f32 %v1286, %v1286
      %v1375 = vmin.f32 16.0, %v1374
      %v1376 = vmul.f32 %v1375, 2.1237322e-06
      %v1377 = vadd.f32 %v1376, 0.00028619796
      %v1378 = vmul.f32 %v1375, %v1377
      %v1379 = vadd.f32 %v1378, 0.0036580483
      %v1380 = vmul.f32 %v1375, %v1379
      %v1381 = vadd.f32 %v1380, 0.05243302
      %v1382 = vmul.f32 %v1375, %v1381
      %v1383 = vadd.f32 %v1382, 0.18741608
      %v1384 = vmul.f32 %v1375, %v1383
      %v1385 = vadd.f32 %v1384, 1.1283791
      %v1386 = vmul.f32 %v1286, %v1385
      %v1387 = vmul.f32 %v1375, 3.8918573e-05
      %v1388 = vadd.f32 %v1387, 0.001143296
      %v1389 = vmul.f32 %v1375, %v1388
      %v1390 = vadd.f32 %v1389, 0.014752088
      %v1391 = vmul.f32 %v1375, %v1390
      %v1392 = vadd.f32 %v1391, 0.112945676
      %v1393 = vmul.f32 %v1375, %v1392
      %v1394 = vadd.f32 %v1393, 0.4994258
      %v1395 = vmul.f32 %v1375, %v1394
      %v1396 = vadd.f32 %v1395, 1.0
      %v1397 = vrcp.pop %v1396
      %v1398 = vmul.f32 %v1396, %v1397
      %v1399 = vsub.f32 1.0, %v1398
      %v1400 = vmul.f32 %v1397, %v1399
      %v1401 = vadd.f32 %v1397, %v1400
      %vm1402 = vweird.f32 %v1396
      %vm1403 = vweird.f32 %v1397
      %vm1404 = vmor %vm1402, %vm1403
      %v1405 = vsel %vm1404, %v1397, %v1401
      %v1406 = vand.u32 2147483647, %v1396
      %vm1407 = vcmp.eq.f32.partialorder %v1406, 8.507059e+37
      %v1408 = vand.u32 %v1396, 2147483648
      %v1409 = vor.u32 1.1754944e-38, %v1408
      %v1410 = vsel %vm1407, %v1409, %v1405
      %v1411 = vmul.f32 %v1386, %v1410
      %v1412 = vmin.f32 %v1411, 1.0
      %v1413 = vmax.f32 %v1412, -1.0
      %v1414 = vmul.f32 %v1287, %v1287
      %v1415 = vmin.f32 16.0, %v1414
      %v1416 = vmul.f32 %v1415, 2.1237322e-06
      %v1417 = vadd.f32 %v1416, 0.00028619796
      %v1418 = vmul.f32 %v1415, %v1417
      %v1419 = vadd.f32 %v1418, 0.0036580483
      %v1420 = vmul.f32 %v1415, %v1419
      %v1421 = vadd.f32 %v1420, 0.05243302
      %v1422 = vmul.f32 %v1415, %v1421
      %v1423 = vadd.f32 %v1422, 0.18741608
      %v1424 = vmul.f32 %v1415, %v1423
      %v1425 = vadd.f32 %v1424, 1.1283791
      %v1426 = vmul.f32 %v1287, %v1425
      %v1427 = vmul.f32 %v1415, 3.8918573e-05
      %v1428 = vadd.f32 %v1427, 0.001143296
      %v1429 = vmul.f32 %v1415, %v1428
      %v1430 = vadd.f32 %v1429, 0.014752088
      %v1431 = vmul.f32 %v1415, %v1430
      %v1432 = vadd.f32 %v1431, 0.112945676
      %v1433 = vmul.f32 %v1415, %v1432
      %v1434 = vadd.f32 %v1433, 0.4994258
      %v1435 = vmul.f32 %v1415, %v1434
      %v1436 = vadd.f32 %v1435, 1.0
      %v1437 = vrcp.pop %v1436
      %v1438 = vmul.f32 %v1436, %v1437
      %v1439 = vsub.f32 1.0, %v1438
      %v1440 = vmul.f32 %v1437, %v1439
      %v1441 = vadd.f32 %v1437, %v1440
      %vm1442 = vweird.f32 %v1436
      %vm1443 = vweird.f32 %v1437
      %vm1444 = vmor %vm1442, %vm1443
      %v1445 = vsel %vm1444, %v1437, %v1441
      %v1446 = vand.u32 2147483647, %v1436
      %vm1447 = vcmp.eq.f32.partialorder %v1446, 8.507059e+37
      %v1448 = vand.u32 %v1436, 2147483648
      %v1449 = vor.u32 1.1754944e-38, %v1448
      %v1450 = vsel %vm1447, %v1449, %v1445
      %v1451 = vmul.f32 %v1426, %v1450
      %v1452 = vmin.f32 %v1451, 1.0
      %v1453 = vmax.f32 %v1452, -1.0
      %v1454 = vmul.f32 %v1288, %v1288
      %v1455 = vmin.f32 16.0, %v1454
      %v1456 = vmul.f32 %v1455, 2.1237322e-06
      %v1457 = vadd.f32 %v1456, 0.00028619796
      %v1458 = vmul.f32 %v1455, %v1457
      %v1459 = vadd.f32 %v1458, 0.0036580483
      %v1460 = vmul.f32 %v1455, %v1459
      %v1461 = vadd.f32 %v1460, 0.05243302
      %v1462 = vmul.f32 %v1455, %v1461
      %v1463 = vadd.f32 %v1462, 0.18741608
      %v1464 = vmul.f32 %v1455, %v1463
      %v1465 = vadd.f32 %v1464, 1.1283791
      %v1466 = vmul.f32 %v1288, %v1465
      %v1467 = vmul.f32 %v1455, 3.8918573e-05
      %v1468 = vadd.f32 %v1467, 0.001143296
      %v1469 = vmul.f32 %v1455, %v1468
      %v1470 = vadd.f32 %v1469, 0.014752088
      %v1471 = vmul.f32 %v1455, %v1470
      %v1472 = vadd.f32 %v1471, 0.112945676
      %v1473 = vmul.f32 %v1455, %v1472
      %v1474 = vadd.f32 %v1473, 0.4994258
      %v1475 = vmul.f32 %v1455, %v1474
      %v1476 = vadd.f32 %v1475, 1.0
      %v1477 = vrcp.pop %v1476
      %v1478 = vmul.f32 %v1476, %v1477
      %v1479 = vsub.f32 1.0, %v1478
      %v1480 = vmul.f32 %v1477, %v1479
      %v1481 = vadd.f32 %v1477, %v1480
      %vm1482 = vweird.f32 %v1476
      %vm1483 = vweird.f32 %v1477
      %vm1484 = vmor %vm1482, %vm1483
      %v1485 = vsel %vm1484, %v1477, %v1481
      %v1486 = vand.u32 2147483647, %v1476
      %vm1487 = vcmp.eq.f32.partialorder %v1486, 8.507059e+37
      %v1488 = vand.u32 %v1476, 2147483648
      %v1489 = vor.u32 1.1754944e-38, %v1488
      %v1490 = vsel %vm1487, %v1489, %v1485
      %v1491 = vmul.f32 %v1466, %v1490
      %v1492 = vmin.f32 %v1491, 1.0
      %v1493 = vmax.f32 %v1492, -1.0
      %v1494 = vmul.f32 %v1289, %v1289
      %v1495 = vmin.f32 16.0, %v1494
      %v1496 = vmul.f32 %v1495, 2.1237322e-06
      %v1497 = vadd.f32 %v1496, 0.00028619796
      %v1498 = vmul.f32 %v1495, %v1497
      %v1499 = vadd.f32 %v1498, 0.0036580483
      %v1500 = vmul.f32 %v1495, %v1499
      %v1501 = vadd.f32 %v1500, 0.05243302
      %v1502 = vmul.f32 %v1495, %v1501
      %v1503 = vadd.f32 %v1502, 0.18741608
      %v1504 = vmul.f32 %v1495, %v1503
      %v1505 = vadd.f32 %v1504, 1.1283791
      %v1506 = vmul.f32 %v1289, %v1505
      %v1507 = vmul.f32 %v1495, 3.8918573e-05
      %v1508 = vadd.f32 %v1507, 0.001143296
      %v1509 = vmul.f32 %v1495, %v1508
      %v1510 = vadd.f32 %v1509, 0.014752088
      %v1511 = vmul.f32 %v1495, %v1510
      %v1512 = vadd.f32 %v1511, 0.112945676
      %v1513 = vmul.f32 %v1495, %v1512
      %v1514 = vadd.f32 %v1513, 0.4994258
      %v1515 = vmul.f32 %v1495, %v1514
      %v1516 = vadd.f32 %v1515, 1.0
      %v1517 = vrcp.pop %v1516
      %v1518 = vmul.f32 %v1516, %v1517
      %v1519 = vsub.f32 1.0, %v1518
      %v1520 = vmul.f32 %v1517, %v1519
      %v1521 = vadd.f32 %v1517, %v1520
      %vm1522 = vweird.f32 %v1516
      %vm1523 = vweird.f32 %v1517
      %vm1524 = vmor %vm1522, %vm1523
      %v1525 = vsel %vm1524, %v1517, %v1521
      %v1526 = vand.u32 2147483647, %v1516
      %vm1527 = vcmp.eq.f32.partialorder %v1526, 8.507059e+37
      %v1528 = vand.u32 %v1516, 2147483648
      %v1529 = vor.u32 1.1754944e-38, %v1528
      %v1530 = vsel %vm1527, %v1529, %v1525
      %v1531 = vmul.f32 %v1506, %v1530
      %v1532 = vmin.f32 %v1531, 1.0
      %v1533 = vmax.f32 %v1532, -1.0
      %v1534 = vmul.f32 %v1290, %v1290
      %v1535 = vmin.f32 16.0, %v1534
      %v1536 = vmul.f32 %v1535, 2.1237322e-06
      %v1537 = vadd.f32 %v1536, 0.00028619796
      %v1538 = vmul.f32 %v1535, %v1537
      %v1539 = vadd.f32 %v1538, 0.0036580483
      %v1540 = vmul.f32 %v1535, %v1539
      %v1541 = vadd.f32 %v1540, 0.05243302
      %v1542 = vmul.f32 %v1535, %v1541
      %v1543 = vadd.f32 %v1542, 0.18741608
      %v1544 = vmul.f32 %v1535, %v1543
      %v1545 = vadd.f32 %v1544, 1.1283791
      %v1546 = vmul.f32 %v1290, %v1545
      %v1547 = vmul.f32 %v1535, 3.8918573e-05
      %v1548 = vadd.f32 %v1547, 0.001143296
      %v1549 = vmul.f32 %v1535, %v1548
      %v1550 = vadd.f32 %v1549, 0.014752088
      %v1551 = vmul.f32 %v1535, %v1550
      %v1552 = vadd.f32 %v1551, 0.112945676
      %v1553 = vmul.f32 %v1535, %v1552
      %v1554 = vadd.f32 %v1553, 0.4994258
      %v1555 = vmul.f32 %v1535, %v1554
      %v1556 = vadd.f32 %v1555, 1.0
      %v1557 = vrcp.pop %v1556
      %v1558 = vmul.f32 %v1556, %v1557
      %v1559 = vsub.f32 1.0, %v1558
      %v1560 = vmul.f32 %v1557, %v1559
      %v1561 = vadd.f32 %v1557, %v1560
      %vm1562 = vweird.f32 %v1556
      %vm1563 = vweird.f32 %v1557
      %vm1564 = vmor %vm1562, %vm1563
      %v1565 = vsel %vm1564, %v1557, %v1561
      %v1566 = vand.u32 2147483647, %v1556
      %vm1567 = vcmp.eq.f32.partialorder %v1566, 8.507059e+37
      %v1568 = vand.u32 %v1556, 2147483648
      %v1569 = vor.u32 1.1754944e-38, %v1568
      %v1570 = vsel %vm1567, %v1569, %v1565
      %v1571 = vmul.f32 %v1546, %v1570
      %v1572 = vmin.f32 %v1571, 1.0
      %v1573 = vmax.f32 %v1572, -1.0
      %v1574 = vmul.f32 %v1291, %v1291
      %v1575 = vmin.f32 16.0, %v1574
      %v1576 = vmul.f32 %v1575, 2.1237322e-06
      %v1577 = vadd.f32 %v1576, 0.00028619796
      %v1578 = vmul.f32 %v1575, %v1577
      %v1579 = vadd.f32 %v1578, 0.0036580483
      %v1580 = vmul.f32 %v1575, %v1579
      %v1581 = vadd.f32 %v1580, 0.05243302
      %v1582 = vmul.f32 %v1575, %v1581
      %v1583 = vadd.f32 %v1582, 0.18741608
      %v1584 = vmul.f32 %v1575, %v1583
      %v1585 = vadd.f32 %v1584, 1.1283791
      %v1586 = vmul.f32 %v1291, %v1585
      %v1587 = vmul.f32 %v1575, 3.8918573e-05
      %v1588 = vadd.f32 %v1587, 0.001143296
      %v1589 = vmul.f32 %v1575, %v1588
      %v1590 = vadd.f32 %v1589, 0.014752088
      %v1591 = vmul.f32 %v1575, %v1590
      %v1592 = vadd.f32 %v1591, 0.112945676
      %v1593 = vmul.f32 %v1575, %v1592
      %v1594 = vadd.f32 %v1593, 0.4994258
      %v1595 = vmul.f32 %v1575, %v1594
      %v1596 = vadd.f32 %v1595, 1.0
      %v1597 = vrcp.pop %v1596
      %v1598 = vmul.f32 %v1596, %v1597
      %v1599 = vsub.f32 1.0, %v1598
      %v1600 = vmul.f32 %v1597, %v1599
      %v1601 = vadd.f32 %v1597, %v1600
      %vm1602 = vweird.f32 %v1596
      %vm1603 = vweird.f32 %v1597
      %vm1604 = vmor %vm1602, %vm1603
      %v1605 = vsel %vm1604, %v1597, %v1601
      %v1606 = vand.u32 2147483647, %v1596
      %vm1607 = vcmp.eq.f32.partialorder %v1606, 8.507059e+37
      %v1608 = vand.u32 %v1596, 2147483648
      %v1609 = vor.u32 1.1754944e-38, %v1608
      %v1610 = vsel %vm1607, %v1609, %v1605
      %v1611 = vmul.f32 %v1586, %v1610
      %v1612 = vmin.f32 %v1611, 1.0
      %v1613 = vmax.f32 %v1612, -1.0
      %v1614 = vmul.f32 %v1292, %v1292
      %v1615 = vmin.f32 16.0, %v1614
      %v1616 = vmul.f32 %v1615, 2.1237322e-06
      %v1617 = vadd.f32 %v1616, 0.00028619796
      %v1618 = vmul.f32 %v1615, %v1617
      %v1619 = vadd.f32 %v1618, 0.0036580483
      %v1620 = vmul.f32 %v1615, %v1619
      %v1621 = vadd.f32 %v1620, 0.05243302
      %v1622 = vmul.f32 %v1615, %v1621
      %v1623 = vadd.f32 %v1622, 0.18741608
      %v1624 = vmul.f32 %v1615, %v1623
      %v1625 = vadd.f32 %v1624, 1.1283791
      %v1626 = vmul.f32 %v1292, %v1625
      %v1627 = vmul.f32 %v1615, 3.8918573e-05
      %v1628 = vadd.f32 %v1627, 0.001143296
      %v1629 = vmul.f32 %v1615, %v1628
      %v1630 = vadd.f32 %v1629, 0.014752088
      %v1631 = vmul.f32 %v1615, %v1630
      %v1632 = vadd.f32 %v1631, 0.112945676
      %v1633 = vmul.f32 %v1615, %v1632
      %v1634 = vadd.f32 %v1633, 0.4994258
      %v1635 = vmul.f32 %v1615, %v1634
      %v1636 = vadd.f32 %v1635, 1.0
      %v1637 = vrcp.pop %v1636
      %v1638 = vmul.f32 %v1636, %v1637
      %v1639 = vsub.f32 1.0, %v1638
      %v1640 = vmul.f32 %v1637, %v1639
      %v1641 = vadd.f32 %v1637, %v1640
      %vm1642 = vweird.f32 %v1636
      %vm1643 = vweird.f32 %v1637
      %vm1644 = vmor %vm1642, %vm1643
      %v1645 = vsel %vm1644, %v1637, %v1641
      %v1646 = vand.u32 2147483647, %v1636
      %vm1647 = vcmp.eq.f32.partialorder %v1646, 8.507059e+37
      %v1648 = vand.u32 %v1636, 2147483648
      %v1649 = vor.u32 1.1754944e-38, %v1648
      %v1650 = vsel %vm1647, %v1649, %v1645
      %v1651 = vmul.f32 %v1626, %v1650
      %v1652 = vmin.f32 %v1651, 1.0
      %v1653 = vmax.f32 %v1652, -1.0
      %v1654 = vmul.f32 %v1293, %v1293
      %v1655 = vmin.f32 16.0, %v1654
      %v1656 = vmul.f32 %v1655, 2.1237322e-06
      %v1657 = vadd.f32 %v1656, 0.00028619796
      %v1658 = vmul.f32 %v1655, %v1657
      %v1659 = vadd.f32 %v1658, 0.0036580483
      %v1660 = vmul.f32 %v1655, %v1659
      %v1661 = vadd.f32 %v1660, 0.05243302
      %v1662 = vmul.f32 %v1655, %v1661
      %v1663 = vadd.f32 %v1662, 0.18741608
      %v1664 = vmul.f32 %v1655, %v1663
      %v1665 = vadd.f32 %v1664, 1.1283791
      %v1666 = vmul.f32 %v1293, %v1665
      %v1667 = vmul.f32 %v1655, 3.8918573e-05
      %v1668 = vadd.f32 %v1667, 0.001143296
      %v1669 = vmul.f32 %v1655, %v1668
      %v1670 = vadd.f32 %v1669, 0.014752088
      %v1671 = vmul.f32 %v1655, %v1670
      %v1672 = vadd.f32 %v1671, 0.112945676
      %v1673 = vmul.f32 %v1655, %v1672
      %v1674 = vadd.f32 %v1673, 0.4994258
      %v1675 = vmul.f32 %v1655, %v1674
      %v1676 = vadd.f32 %v1675, 1.0
      %v1677 = vrcp.pop %v1676
      %v1678 = vmul.f32 %v1676, %v1677
      %v1679 = vsub.f32 1.0, %v1678
      %v1680 = vmul.f32 %v1677, %v1679
      %v1681 = vadd.f32 %v1677, %v1680
      %vm1682 = vweird.f32 %v1676
      %vm1683 = vweird.f32 %v1677
      %vm1684 = vmor %vm1682, %vm1683
      %v1685 = vsel %vm1684, %v1677, %v1681
      %v1686 = vand.u32 2147483647, %v1676
      %vm1687 = vcmp.eq.f32.partialorder %v1686, 8.507059e+37
      %v1688 = vand.u32 %v1676, 2147483648
      %v1689 = vor.u32 1.1754944e-38, %v1688
      %v1690 = vsel %vm1687, %v1689, %v1685
      %v1691 = vmul.f32 %v1666, %v1690
      %v1692 = vmin.f32 %v1691, 1.0
      %v1693 = vmax.f32 %v1692, -1.0
      %v1694 = vadd.f32 %v1333, 1.0
      %v1695 = vadd.f32 %v1373, 1.0
      %v1696 = vadd.f32 %v1413, 1.0
      %v1697 = vadd.f32 %v1453, 1.0
      %v1698 = vadd.f32 %v1493, 1.0
      %v1699 = vadd.f32 %v1533, 1.0
      %v1700 = vadd.f32 %v1573, 1.0
      %v1701 = vadd.f32 %v1613, 1.0
      %v1702 = vadd.f32 %v1653, 1.0
      %v1703 = vadd.f32 %v1693, 1.0
      %v1704 = vmul.f32 %v1274, %v1694
      %v1705 = vmul.f32 %v1275, %v1695
      %v1706 = vmul.f32 %v1276, %v1696
      %v1707 = vmul.f32 %v1277, %v1697
      %v1708 = vmul.f32 %v1278, %v1698
      %v1709 = vmul.f32 %v1279, %v1699
      %v1710 = vmul.f32 %v1280, %v1700
      %v1711 = vmul.f32 %v1281, %v1701
      %v1712 = vmul.f32 %v1282, %v1702
      %v1713 = vmul.f32 %v1283, %v1703
      %1714 = vst [vmem:[%s271] sm:$0xff] %v1704
      %1715 = vst [vmem:[%s271 + $0x8] sm:$0xff] %v1705
      %1716 = vst [vmem:[%s271 + $0x10] sm:$0xff] %v1706
      %1717 = vst [vmem:[%s271 + $0x18] sm:$0xff] %v1707
      %vm1718 = vcmask 924672
      %1719 = vst.msk [vmem:[%s271 + $0x20] sm:$0xff] %vm1718, %v1708
      %1720 = vst [vmem:[%s271 + $0x28] sm:$0xff] %v1709
      %1721 = vst [vmem:[%s271 + $0x30] sm:$0xff] %v1710
      %1722 = vst [vmem:[%s271 + $0x38] sm:$0xff] %v1711
      %1723 = vst [vmem:[%s271 + $0x40] sm:$0xff] %v1712
      %1724 = vst.msk [vmem:[%s271 + $0x48] sm:$0xff] %vm1718, %v1713
      %s1725 = smul.u32 5, %s20
      %p1726 = scmp.lt.s32.totalorder %s19, 1
      %s1727 = scalar_select %p1726, %s19, 1
      %p1728 = scmp.lt.s32.totalorder %s1725, 4
      %s1729 = scalar_select %p1728, %s1725, 4
      %s1730 = smul.addr %s1727, 10
      %s1731 = sadd.s32 %s1729, %s1730
      %s1732 = smul.addr %s1731, 8
      %s1733 = scalar_lea.vmem %s4, %s1732
      // Predicated region
      $region37: #{diverse_fno2d_forward.7} parent=35 // pred_check
        %p1734 = pneg %p145
      $region38: #{diverse_fno2d_forward.7} parent=35 // pred_check_branch
        %1736 = sbr.rel (%p1734) target = $region40
      $region39: #{diverse_fno2d_forward.7} parent=35 // pred_region
        %s1737 = smul.u32 5, %s20
      $region40: #{diverse_fno2d_forward.7} parent=35 // pred_fallthru
        _
    $region36: #{diverse_fno2d_forward.7} parent=5 // pred_fallthru
      _
    %p1738 = scmp.le.s32.totalorder 2, %s10
    // Predicated region
    $region41: #{diverse_fno2d_forward.7} parent=5 // pred_check
      %p1739 = pneg %p1738
    $region42: #{diverse_fno2d_forward.7} parent=5 // pred_check_branch
      %1741 = sbr.rel (%p1739) target = $region44
    $region43: #{diverse_fno2d_forward.7} parent=5 // pred_region
      %s1742 = ssub.s32 %s10, 2
      // Predicated region
      $region45: #{diverse_fno2d_forward.7} parent=43 // pred_check
        %p1743 = pneg %p151
      $region46: #{diverse_fno2d_forward.7} parent=43 // pred_check_branch
        %1745 = sbr.rel (%p1743) target = $region48
      $region47: #{diverse_fno2d_forward.7} parent=43 // pred_region
        %s1746 = smul.u32 5, %s22
        %p1747 = scmp.lt.s32.totalorder %s21, 1
        %s1748 = scalar_select %p1747, %s21, 1
        %p1749 = scmp.lt.s32.totalorder %s1746, 4
        %s1750 = scalar_select %p1749, %s1746, 4
        %s1751 = smul.addr %s1748, 10
        %s1752 = sadd.s32 %s1750, %s1751
        %s1753 = smul.addr %s1752, 8
        %s1754 = scalar_lea.vmem %s4, %s1753
      $region48: #{diverse_fno2d_forward.7} parent=43 // pred_fallthru
        _
    $region44: #{diverse_fno2d_forward.7} parent=5 // pred_fallthru
      _
  $region6: #{diverse_fno2d_forward.7} parent=0 // loop_footer
    %s14 = sadd.s32 1, %s10
  $region7: #{diverse_fno2d_forward.7} parent=0 // loop_footer_branch
    %9 = sbr.rel target = $region3
  $region8: #{diverse_fno2d_forward.7} parent=0 // loop_exit
    _

// kernel: diverse_fno2d_forward.10
$region0: #{diverse_fno2d_forward.10}
  #allocation0 [shape = 'u32[]', space=smem, size = 0x4, offset = 0x4, fixed_abs, tag = 'smem constant byte address 0x4 - core index']
  #allocation1 [shape = 'u32[72,128]{1,0:T(1,128)}', space=vmem, size = 0x9000, scoped, tag = 'internal scratch']
  %s0 = inlined_call_operand.vmem [shape: f32[2,16,625], index: 0, kind: input, shape index: {}]
  %s1 = inlined_call_operand.vmem [shape: f32[16,16], index: 1, kind: input, shape index: {}]
  %s2 = inlined_call_operand.vmem [shape: f32[16,1], index: 2, kind: input, shape index: {}]
  %s3 = inlined_call_operand.vmem [shape: f32[2,16,625], index: 3, kind: input, shape index: {}, may-alias: {3,4}]
  %s4 = inlined_call_operand.vmem [shape: f32[2,16,625], index: 4, kind: output, shape index: {}, may-alias: {3,4}]
  %s5 = sld [smem:[#allocation0]]
  $region49: #{diverse_fno2d_forward.10} parent=0
    _
  %s7 = ssub.s32 1, %s5
  %s8 = scalar_select 0, %s7, %s5
  loop: start=0, step=1, limit=4
  $region2: #{diverse_fno2d_forward.10} parent=0 // loop_pre_header
    _
  $region3: #{diverse_fno2d_forward.10} parent=0 // loop_header
    %s10 = sphi 0, %s14
    %p11 = scmp.ge.s32.totalorder %s10, 4
    %s17 = sphi 0, %s29
    %s18 = sphi 0, %s25
    %s19 = sphi 0, %s17
    %s20 = sphi 0, %s18
    %s21 = sphi 0, %s19
    %s22 = sphi 0, %s20
    %s34 = sphi 0, %s36
    %s37 = sphi 0, %s34
    %s38 = sphi 0, %s37
    %s54 = sphi 0, %s38
    %s58 = sphi 0, %s58
    %s60 = sphi 0, %s58
    %s61 = sphi 0, %s60
    %s75 = sphi 0, %s61
    %s79 = sphi 0, %s79
    %s81 = sphi 0, %s79
    %s82 = sphi 0, %s81
    %s96 = sphi 0, %s82
    %s104 = sphi 0, %s106
    %s107 = sphi 0, %s104
    %s108 = sphi 0, %s107
    %s124 = sphi 0, %s108
    %s132 = sphi 0, %s134
    %s135 = sphi 0, %s132
    %s136 = sphi 0, %s135
    %s152 = sphi 0, %s136
  $region4: #{diverse_fno2d_forward.10} parent=0 // loop_header_branch
    %13 = sbr.rel (%p11) target = $region8
  $region5: #{diverse_fno2d_forward.10} parent=0 // loop_body
    %s15 = ssub.s32 %s10, 1
    %s16 = ssub.s32 %s10, 2
    %s23 = sadd.s32 1, %s18
    %p24 = scmp.ge.s32.totalorder %s23, 1
    %s25 = scalar_select %p24, 0, %s23
    %s26 = sadd.s32 1, %s17
    %s27 = scalar_select %p24, %s26, %s17
    %p28 = scmp.ge.s32.totalorder %s27, 2
    %s29 = scalar_select %p28, 0, %s27
    %s30 = ssub.s32 %s17, %s29
    %s31 = ssub.s32 %s18, %s25
    %s32 = sor.u32 %s30, %s31
    %p33 = scmp.eq.s32.totalorder %s32, 0
    %s35 = sadd.s32 %s34, 1
    %s36 = scalar_select %p33, %s34, %s35
    %p39 = pneg %p33
    %p40 = scmp.eq.s32.totalorder %s10, 1
    %p41 = por %p39, %p40
    %p42 = scmp.ne.s32.totalorder %s34, %s37
    %p43 = scmp.eq.s32.totalorder %s10, 0
    %p44 = por %p42, %p43
    %p45 = scmp.ne.s32.totalorder %s34, %s37
    %p46 = scmp.eq.s32.totalorder %s15, 1
    %p47 = por %p45, %p46
    %p48 = scmp.ne.s32.totalorder %s37, %s38
    %p49 = scmp.eq.s32.totalorder %s15, 0
    %p50 = por %p48, %p49
    %p51 = scmp.ne.s32.totalorder %s37, %s38
    %p52 = scmp.eq.s32.totalorder %s16, 1
    %p53 = por %p51, %p52
    %p55 = scmp.ne.s32.totalorder %s38, %s54
    %p56 = scmp.eq.s32.totalorder %s16, 0
    %p57 = por %p55, %p56
    %s59 = sadd.s32 %s58, 1
    %p62 = scmp.eq.s32.totalorder %s10, 1
    %p63 = scmp.ne.s32.totalorder %s58, %s60
    %p64 = scmp.eq.s32.totalorder %s10, 0
    %p65 = por %p63, %p64
    %p66 = scmp.ne.s32.totalorder %s58, %s60
    %p67 = scmp.eq.s32.totalorder %s15, 1
    %p68 = por %p66, %p67
    %p69 = scmp.ne.s32.totalorder %s60, %s61
    %p70 = scmp.eq.s32.totalorder %s15, 0
    %p71 = por %p69, %p70
    %p72 = scmp.ne.s32.totalorder %s60, %s61
    %p73 = scmp.eq.s32.totalorder %s16, 1
    %p74 = por %p72, %p73
    %p76 = scmp.ne.s32.totalorder %s61, %s75
    %p77 = scmp.eq.s32.totalorder %s16, 0
    %p78 = por %p76, %p77
    %s80 = sadd.s32 %s79, 1
    %p83 = scmp.eq.s32.totalorder %s10, 1
    %p84 = scmp.ne.s32.totalorder %s79, %s81
    %p85 = scmp.eq.s32.totalorder %s10, 0
    %p86 = por %p84, %p85
    %p87 = scmp.ne.s32.totalorder %s79, %s81
    %p88 = scmp.eq.s32.totalorder %s15, 1
    %p89 = por %p87, %p88
    %p90 = scmp.ne.s32.totalorder %s81, %s82
    %p91 = scmp.eq.s32.totalorder %s15, 0
    %p92 = por %p90, %p91
    %p93 = scmp.ne.s32.totalorder %s81, %s82
    %p94 = scmp.eq.s32.totalorder %s16, 1
    %p95 = por %p93, %p94
    %p97 = scmp.ne.s32.totalorder %s82, %s96
    %p98 = scmp.eq.s32.totalorder %s16, 0
    %p99 = por %p97, %p98
    %s100 = ssub.s32 %s17, %s29
    %s101 = ssub.s32 %s18, %s25
    %s102 = sor.u32 %s100, %s101
    %p103 = scmp.eq.s32.totalorder %s102, 0
    %s105 = sadd.s32 %s104, 1
    %s106 = scalar_select %p103, %s104, %s105
    %p109 = pneg %p103
    %p110 = scmp.eq.s32.totalorder %s10, 1
    %p111 = por %p109, %p110
    %p112 = scmp.ne.s32.totalorder %s104, %s107
    %p113 = scmp.eq.s32.totalorder %s10, 0
    %p114 = por %p112, %p113
    %p115 = scmp.ne.s32.totalorder %s104, %s107
    %p116 = scmp.eq.s32.totalorder %s15, 1
    %p117 = por %p115, %p116
    %p118 = scmp.ne.s32.totalorder %s107, %s108
    %p119 = scmp.eq.s32.totalorder %s15, 0
    %p120 = por %p118, %p119
    %p121 = scmp.ne.s32.totalorder %s107, %s108
    %p122 = scmp.eq.s32.totalorder %s16, 1
    %p123 = por %p121, %p122
    %p125 = scmp.ne.s32.totalorder %s108, %s124
    %p126 = scmp.eq.s32.totalorder %s16, 0
    %p127 = por %p125, %p126
    %s128 = ssub.s32 %s17, %s29
    %s129 = ssub.s32 %s18, %s25
    %s130 = sor.u32 %s128, %s129
    %p131 = scmp.eq.s32.totalorder %s130, 0
    %s133 = sadd.s32 %s132, 1
    %s134 = scalar_select %p131, %s132, %s133
    %p137 = pneg %p131
    %p138 = scmp.eq.s32.totalorder %s10, 1
    %p139 = por %p137, %p138
    %p140 = scmp.ne.s32.totalorder %s132, %s135
    %p141 = scmp.eq.s32.totalorder %s10, 0
    %p142 = por %p140, %p141
    %p143 = scmp.ne.s32.totalorder %s132, %s135
    %p144 = scmp.eq.s32.totalorder %s15, 1
    %p145 = por %p143, %p144
    %p146 = scmp.ne.s32.totalorder %s135, %s136
    %p147 = scmp.eq.s32.totalorder %s15, 0
    %p148 = por %p146, %p147
    %p149 = scmp.ne.s32.totalorder %s135, %s136
    %p150 = scmp.eq.s32.totalorder %s16, 1
    %p151 = por %p149, %p150
    %p153 = scmp.ne.s32.totalorder %s136, %s152
    %p154 = scmp.eq.s32.totalorder %s16, 0
    %p155 = por %p153, %p154
    %p156 = scmp.le.s32.totalorder 1, %s10
    %p157 = scmp.lt.s32.totalorder %s10, 3
    %p158 = pnand %p156, %p157
    %p159 = pneg %p158
    // Predicated region
    $region9: #{diverse_fno2d_forward.10} parent=5 // pred_check
      _
    $region10: #{diverse_fno2d_forward.10} parent=5 // pred_check_branch
      %161 = sbr.rel (%p158) target = $region12
    $region11: #{diverse_fno2d_forward.10} parent=5 // pred_region
      %s162 = ssub.s32 %s10, 1
      // Predicated region
      $region13: #{diverse_fno2d_forward.10} parent=11 // pred_check
        %p163 = pneg %p71
      $region14: #{diverse_fno2d_forward.10} parent=11 // pred_check_branch
        %165 = sbr.rel (%p163) target = $region16
      $region15: #{diverse_fno2d_forward.10} parent=11 // pred_region
        _
      $region16: #{diverse_fno2d_forward.10} parent=11 // pred_fallthru
        _
      // Predicated region
      $region17: #{diverse_fno2d_forward.10} parent=11 // pred_check
        %p166 = pneg %p92
      $region18: #{diverse_fno2d_forward.10} parent=11 // pred_check_branch
        %168 = sbr.rel (%p166) target = $region20
      $region19: #{diverse_fno2d_forward.10} parent=11 // pred_region
        _
      $region20: #{diverse_fno2d_forward.10} parent=11 // pred_fallthru
        _
    $region12: #{diverse_fno2d_forward.10} parent=5 // pred_fallthru
      _
    %p169 = scmp.lt.s32.totalorder %s10, 2
    // Predicated region
    $region21: #{diverse_fno2d_forward.10} parent=5 // pred_check
      %p170 = pneg %p169
    $region22: #{diverse_fno2d_forward.10} parent=5 // pred_check_branch
      %172 = sbr.rel (%p170) target = $region24
    $region23: #{diverse_fno2d_forward.10} parent=5 // pred_region
      // Predicated region
      $region25: #{diverse_fno2d_forward.10} parent=23 // pred_check
        %p173 = pneg %p44
      $region26: #{diverse_fno2d_forward.10} parent=23 // pred_check_branch
        %175 = sbr.rel (%p173) target = $region28
      $region27: #{diverse_fno2d_forward.10} parent=23 // pred_region
        %s176 = smul.u32 5, %s18
        %p177 = scmp.lt.s32.totalorder %s17, 1
        %s178 = scalar_select %p177, %s17, 1
        %p179 = scmp.lt.s32.totalorder %s176, 4
        %s180 = scalar_select %p179, %s176, 4
        %s181 = smul.addr %s178, 10
        %s182 = sadd.s32 %s180, %s181
        %s183 = smul.addr %s182, 8
        %s184 = scalar_lea.vmem %s0, %s183
        %s185 = smul.u32 5, %s18
      $region28: #{diverse_fno2d_forward.10} parent=23 // pred_fallthru
        _
      // Predicated region
      $region29: #{diverse_fno2d_forward.10} parent=23 // pred_check
        %p186 = pneg %p114
      $region30: #{diverse_fno2d_forward.10} parent=23 // pred_check_branch
        %188 = sbr.rel (%p186) target = $region32
      $region31: #{diverse_fno2d_forward.10} parent=23 // pred_region
        %s189 = smul.u32 5, %s18
        %p190 = scmp.lt.s32.totalorder %s17, 1
        %s191 = scalar_select %p190, %s17, 1
        %p192 = scmp.lt.s32.totalorder %s189, 4
        %s193 = scalar_select %p192, %s189, 4
        %s194 = smul.addr %s191, 10
        %s195 = sadd.s32 %s193, %s194
        %s196 = smul.addr %s195, 8
        %s197 = scalar_lea.vmem %s3, %s196
        %s198 = smul.u32 5, %s18
      $region32: #{diverse_fno2d_forward.10} parent=23 // pred_fallthru
        _
    $region24: #{diverse_fno2d_forward.10} parent=5 // pred_fallthru
      _
    %p199 = scmp.le.s32.totalorder 1, %s10
    %p200 = scmp.lt.s32.totalorder %s10, 3
    %p201 = pnand %p199, %p200
    %p202 = pneg %p201
    // Predicated region
    $region33: #{diverse_fno2d_forward.10} parent=5 // pred_check
      _
    $region34: #{diverse_fno2d_forward.10} parent=5 // pred_check_branch
      %204 = sbr.rel (%p201) target = $region36
    $region35: #{diverse_fno2d_forward.10} parent=5 // pred_region
      %s205 = ssub.s32 %s10, 1
      %s206 = smul.u32 5, %s20
      %p207 = scmp.lt.s32.totalorder %s19, 1
      %s208 = scalar_select %p207, %s19, 1
      %p209 = scmp.lt.s32.totalorder %s206, 4
      %s210 = scalar_select %p209, %s206, 4
      %s211 = smul.addr %s208, 10
      %s212 = sadd.s32 %s210, %s211
      %s213 = smul.addr %s212, 8
      %s214 = scalar_lea.vmem %s0, %s213
      %p215 = pneg %p50
      %p216 = pneg %p47
      %p217 = pneg %p71
      %p218 = pneg %p68
      %p219 = pneg %p92
      %p220 = pneg %p89
      %s221 = smul.u32 5, %s20
      %p222 = scmp.lt.s32.totalorder %s19, 1
      %s223 = scalar_select %p222, %s19, 1
      %p224 = scmp.lt.s32.totalorder %s221, 4
      %s225 = scalar_select %p224, %s221, 4
      %s226 = smul.addr %s223, 10
      %s227 = sadd.s32 %s225, %s226
      %s228 = smul.addr %s227, 8
      %s229 = scalar_lea.vmem %s3, %s228
      %p230 = pneg %p120
      %p231 = pneg %p117
      %p232 = pneg %p148
      %p233 = pneg %p145
      %s234 = smul.u32 5, %s20
      %p235 = scmp.lt.s32.totalorder %s19, 1
      %s236 = scalar_select %p235, %s19, 1
      %p237 = scmp.lt.s32.totalorder %s234, 4
      %s238 = scalar_select %p237, %s234, 4
      %s239 = smul.addr %s236, 10
      %s240 = sadd.s32 %s238, %s239
      %s241 = smul.addr %s240, 8
      %s242 = scalar_lea.vmem %s4, %s241
      %s243 = smul.u32 5, %s20
      %p244 = scmp.lt.s32.totalorder %s19, 1
      %s245 = scalar_select %p244, %s19, 1
      %p246 = scmp.lt.s32.totalorder %s243, 4
      %s247 = scalar_select %p246, %s243, 4
      %s248 = smul.addr %s245, 10
      %s249 = sadd.s32 %s247, %s248
      %s250 = smul.addr %s249, 8
      %s251 = scalar_lea.vmem %s0, %s250
      %s252 = smul.u32 5, %s20
      %s253 = smul.u32 5, %s20
      %p254 = scmp.lt.s32.totalorder %s19, 1
      %s255 = scalar_select %p254, %s19, 1
      %p256 = scmp.lt.s32.totalorder %s253, 4
      %s257 = scalar_select %p256, %s253, 4
      %s258 = smul.addr %s255, 10
      %s259 = sadd.s32 %s257, %s258
      %s260 = smul.addr %s259, 8
      %s261 = scalar_lea.vmem %s3, %s260
      %s262 = smul.u32 5, %s20
      %s263 = smul.u32 5, %s20
      %p264 = scmp.lt.s32.totalorder %s19, 1
      %s265 = scalar_select %p264, %s19, 1
      %p266 = scmp.lt.s32.totalorder %s263, 4
      %s267 = scalar_select %p266, %s263, 4
      %s268 = smul.addr %s265, 10
      %s269 = sadd.s32 %s267, %s268
      %s270 = smul.addr %s269, 8
      %s271 = scalar_lea.vmem %s4, %s270
      %s272 = smul.u32 5, %s20
      %v273 = vld [vmem:[%s1] sm:$0xff]
      %v274 = vld [vmem:[%s1 + $0x8] sm:$0xff]
      %v275 = vld [vmem:[%s251] sm:$0xff]
      %v276 = vld [vmem:[%s251 + $0x8] sm:$0xff]
      %v277 = vld [vmem:[%s251 + $0x10] sm:$0xff]
      %v278 = vld [vmem:[%s251 + $0x18] sm:$0xff]
      %v279 = vld [vmem:[%s251 + $0x20] sm:$0xff]
      %v280 = vld [vmem:[%s251 + $0x28] sm:$0xff]
      %v281 = vld [vmem:[%s251 + $0x30] sm:$0xff]
      %v282 = vld [vmem:[%s251 + $0x38] sm:$0xff]
      %v283 = vld [vmem:[%s251 + $0x40] sm:$0xff]
      %v284 = vld [vmem:[%s251 + $0x48] sm:$0xff]
      %v285 = vld [vmem:[%s2] sm:$0xff]
      %v286 = vld [vmem:[%s2 + $0x8] sm:$0xff]
      %288 = vset.pattern.permute.xlu0 0
      %289 = vperm.xlu0 %288, %v285
      %v290 = vpop.permute.xlu0 %289
      %293 = vset.pattern.permute.xlu0 0
      %294 = vperm.xlu0 %293, %v286
      %v295 = vpop.permute.xlu0 %294
      %vm297 = vcmask 130048
      %v299 = vsel %vm297, %v273, 0
      %v302 = vsel %vm297, %v274, 0
      %304 = vmatpush.msra.mxu0 0.0
      %305 = vmatpush.msra.mxu0 0.0
      %306 = vmatpush.msra.mxu0 0.0
      %307 = vmatpush.msra.mxu0 0.0
      %308 = vmatpush.msra.mxu0 0.0
      %309 = vmatpush.msra.mxu0 0.0
      %310 = vmatpush.msra.mxu0 0.0
      %311 = vmatpush.msra.mxu0 0.0
      %312 = vmatpush.msra.mxu0 0.0
      %313 = vmatpush.msra.mxu0 0.0
      %314 = vmatpush.msra.mxu0 0.0
      %315 = vmatpush.msra.mxu0 0.0
      %316 = vmatpush.msra.mxu0 0.0
      %317 = vmatpush.msra.mxu0 0.0
      %v318 = vand.u32 %v280, 4294901760
      %319 = vmatpush.msra.mxu0 %v318
      %v320 = vand.u32 %v275, 4294901760
      %321 = vmatpush.msra.mxu0 %v320
      %v322 = vand.u32 %v299, 4294901760
      %v323 = vsub.f32 %v299, %v322
      %v324 = vand.u32 %v323, 4294901760
      %v325 = vsub.f32 %v323, %v324
      %v326 = vand.u32 %v325, 4294901760
      %327 = vmatmul.f32.gmra.mxu0 %v326
      %v328 = vpop.f32.mrf.mxu0
      %v329 = vadd.f32 %v290, %v328
      %v330 = vand.u32 %v302, 4294901760
      %v331 = vsub.f32 %v302, %v330
      %v332 = vand.u32 %v331, 4294901760
      %v333 = vsub.f32 %v331, %v332
      %v334 = vand.u32 %v333, 4294901760
      %335 = vmatmul.f32.gmra.mxu0 %v334
      %v336 = vpop.f32.mrf.mxu0
      %v337 = vadd.f32 %v295, %v336
      %338 = vdwg.mxu0
      %339 = vmatpush.msra.mxu0 0.0
      %340 = vmatpush.msra.mxu0 0.0
      %341 = vmatpush.msra.mxu0 0.0
      %342 = vmatpush.msra.mxu0 0.0
      %343 = vmatpush.msra.mxu0 0.0
      %344 = vmatpush.msra.mxu0 0.0
      %345 = vmatpush.msra.mxu0 0.0
      %346 = vmatpush.msra.mxu0 0.0
      %347 = vmatpush.msra.mxu0 0.0
      %348 = vmatpush.msra.mxu0 0.0
      %349 = vmatpush.msra.mxu0 0.0
      %350 = vmatpush.msra.mxu0 0.0
      %351 = vmatpush.msra.mxu0 0.0
      %352 = vmatpush.msra.mxu0 0.0
      %v353 = vand.u32 %v280, 4294901760
      %v354 = vsub.f32 %v280, %v353
      %v355 = vand.u32 %v354, 4294901760
      %v356 = vsub.f32 %v354, %v355
      %v357 = vand.u32 %v356, 4294901760
      %358 = vmatpush.msra.mxu0 %v357
      %v359 = vand.u32 %v275, 4294901760
      %v360 = vsub.f32 %v275, %v359
      %v361 = vand.u32 %v360, 4294901760
      %v362 = vsub.f32 %v360, %v361
      %v363 = vand.u32 %v362, 4294901760
      %364 = vmatpush.msra.mxu0 %v363
      %v365 = vand.u32 %v299, 4294901760
      %366 = vmatmul.f32.gmra.mxu0 %v365
      %v367 = vpop.f32.mrf.mxu0
      %v368 = vadd.f32 %v329, %v367
      %v369 = vand.u32 %v302, 4294901760
      %370 = vmatmul.f32.gmra.mxu0 %v369
      %v371 = vpop.f32.mrf.mxu0
      %v372 = vadd.f32 %v337, %v371
      %373 = vdwg.mxu0
      %374 = vmatpush.msra.mxu0 0.0
      %375 = vmatpush.msra.mxu0 0.0
      %376 = vmatpush.msra.mxu0 0.0
      %377 = vmatpush.msra.mxu0 0.0
      %378 = vmatpush.msra.mxu0 0.0
      %379 = vmatpush.msra.mxu0 0.0
      %380 = vmatpush.msra.mxu0 0.0
      %381 = vmatpush.msra.mxu0 0.0
      %382 = vmatpush.msra.mxu0 0.0
      %383 = vmatpush.msra.mxu0 0.0
      %384 = vmatpush.msra.mxu0 0.0
      %385 = vmatpush.msra.mxu0 0.0
      %386 = vmatpush.msra.mxu0 0.0
      %387 = vmatpush.msra.mxu0 0.0
      %v388 = vand.u32 %v280, 4294901760
      %v389 = vsub.f32 %v280, %v388
      %390 = vmatpush.msra.mxu0 %v389
      %v391 = vand.u32 %v275, 4294901760
      %v392 = vsub.f32 %v275, %v391
      %393 = vmatpush.msra.mxu0 %v392
      %v394 = vand.u32 %v299, 4294901760
      %v395 = vsub.f32 %v299, %v394
      %396 = vmatmul.f32.gmra.mxu0 %v395
      %v397 = vpop.f32.mrf.mxu0
      %v398 = vadd.f32 %v368, %v397
      %v399 = vand.u32 %v302, 4294901760
      %v400 = vsub.f32 %v302, %v399
      %401 = vmatmul.f32.gmra.mxu0 %v400
      %v402 = vpop.f32.mrf.mxu0
      %v403 = vadd.f32 %v372, %v402
      %404 = vdwg.mxu0
      %405 = vmatpush.msra.mxu0 0.0
      %406 = vmatpush.msra.mxu0 0.0
      %407 = vmatpush.msra.mxu0 0.0
      %408 = vmatpush.msra.mxu0 0.0
      %409 = vmatpush.msra.mxu0 0.0
      %410 = vmatpush.msra.mxu0 0.0
      %411 = vmatpush.msra.mxu0 0.0
      %412 = vmatpush.msra.mxu0 0.0
      %413 = vmatpush.msra.mxu0 0.0
      %414 = vmatpush.msra.mxu0 0.0
      %415 = vmatpush.msra.mxu0 0.0
      %416 = vmatpush.msra.mxu0 0.0
      %417 = vmatpush.msra.mxu0 0.0
      %418 = vmatpush.msra.mxu0 0.0
      %v419 = vand.u32 %v280, 4294901760
      %420 = vmatpush.msra.mxu0 %v419
      %v421 = vand.u32 %v275, 4294901760
      %422 = vmatpush.msra.mxu0 %v421
      %v423 = vand.u32 %v299, 4294901760
      %v424 = vsub.f32 %v299, %v423
      %v425 = vand.u32 %v424, 4294901760
      %426 = vmatmul.f32.gmra.mxu0 %v425
      %v427 = vpop.f32.mrf.mxu0
      %v428 = vadd.f32 %v398, %v427
      %v429 = vand.u32 %v302, 4294901760
      %v430 = vsub.f32 %v302, %v429
      %v431 = vand.u32 %v430, 4294901760
      %432 = vmatmul.f32.gmra.mxu0 %v431
      %v433 = vpop.f32.mrf.mxu0
      %v434 = vadd.f32 %v403, %v433
      %435 = vdwg.mxu0
      %436 = vmatpush.msra.mxu0 0.0
      %437 = vmatpush.msra.mxu0 0.0
      %438 = vmatpush.msra.mxu0 0.0
      %439 = vmatpush.msra.mxu0 0.0
      %440 = vmatpush.msra.mxu0 0.0
      %441 = vmatpush.msra.mxu0 0.0
      %442 = vmatpush.msra.mxu0 0.0
      %443 = vmatpush.msra.mxu0 0.0
      %444 = vmatpush.msra.mxu0 0.0
      %445 = vmatpush.msra.mxu0 0.0
      %446 = vmatpush.msra.mxu0 0.0
      %447 = vmatpush.msra.mxu0 0.0
      %448 = vmatpush.msra.mxu0 0.0
      %449 = vmatpush.msra.mxu0 0.0
      %v450 = vand.u32 %v280, 4294901760
      %v451 = vsub.f32 %v280, %v450
      %v452 = vand.u32 %v451, 4294901760
      %453 = vmatpush.msra.mxu0 %v452
      %v454 = vand.u32 %v275, 4294901760
      %v455 = vsub.f32 %v275, %v454
      %v456 = vand.u32 %v455, 4294901760
      %457 = vmatpush.msra.mxu0 %v456
      %v458 = vand.u32 %v299, 4294901760
      %459 = vmatmul.f32.gmra.mxu0 %v458
      %v460 = vpop.f32.mrf.mxu0
      %v461 = vadd.f32 %v428, %v460
      %v462 = vand.u32 %v302, 4294901760
      %463 = vmatmul.f32.gmra.mxu0 %v462
      %v464 = vpop.f32.mrf.mxu0
      %v465 = vadd.f32 %v434, %v464
      %466 = vdwg.mxu0
      %467 = vmatpush.msra.mxu0 0.0
      %468 = vmatpush.msra.mxu0 0.0
      %469 = vmatpush.msra.mxu0 0.0
      %470 = vmatpush.msra.mxu0 0.0
      %471 = vmatpush.msra.mxu0 0.0
      %472 = vmatpush.msra.mxu0 0.0
      %473 = vmatpush.msra.mxu0 0.0
      %474 = vmatpush.msra.mxu0 0.0
      %475 = vmatpush.msra.mxu0 0.0
      %476 = vmatpush.msra.mxu0 0.0
      %477 = vmatpush.msra.mxu0 0.0
      %478 = vmatpush.msra.mxu0 0.0
      %479 = vmatpush.msra.mxu0 0.0
      %480 = vmatpush.msra.mxu0 0.0
      %v481 = vand.u32 %v280, 4294901760
      %482 = vmatpush.msra.mxu0 %v481
      %v483 = vand.u32 %v275, 4294901760
      %484 = vmatpush.msra.mxu0 %v483
      %v485 = vand.u32 %v299, 4294901760
      %486 = vmatmul.f32.gmra.mxu0 %v485
      %v487 = vpop.f32.mrf.mxu0
      %v488 = vadd.f32 %v461, %v487
      %v489 = vand.u32 %v302, 4294901760
      %490 = vmatmul.f32.gmra.mxu0 %v489
      %v491 = vpop.f32.mrf.mxu0
      %v492 = vadd.f32 %v465, %v491
      %493 = vdwg.mxu0
      %494 = vmatpush.msra.mxu0 0.0
      %495 = vmatpush.msra.mxu0 0.0
      %496 = vmatpush.msra.mxu0 0.0
      %497 = vmatpush.msra.mxu0 0.0
      %498 = vmatpush.msra.mxu0 0.0
      %499 = vmatpush.msra.mxu0 0.0
      %500 = vmatpush.msra.mxu0 0.0
      %501 = vmatpush.msra.mxu0 0.0
      %502 = vmatpush.msra.mxu0 0.0
      %503 = vmatpush.msra.mxu0 0.0
      %504 = vmatpush.msra.mxu0 0.0
      %505 = vmatpush.msra.mxu0 0.0
      %506 = vmatpush.msra.mxu0 0.0
      %507 = vmatpush.msra.mxu0 0.0
      %v508 = vand.u32 %v281, 4294901760
      %509 = vmatpush.msra.mxu0 %v508
      %v510 = vand.u32 %v276, 4294901760
      %511 = vmatpush.msra.mxu0 %v510
      %v512 = vand.u32 %v299, 4294901760
      %v513 = vsub.f32 %v299, %v512
      %v514 = vand.u32 %v513, 4294901760
      %v515 = vsub.f32 %v513, %v514
      %v516 = vand.u32 %v515, 4294901760
      %517 = vmatmul.f32.gmra.mxu0 %v516
      %v518 = vpop.f32.mrf.mxu0
      %v519 = vadd.f32 %v290, %v518
      %v520 = vand.u32 %v302, 4294901760
      %v521 = vsub.f32 %v302, %v520
      %v522 = vand.u32 %v521, 4294901760
      %v523 = vsub.f32 %v521, %v522
      %v524 = vand.u32 %v523, 4294901760
      %525 = vmatmul.f32.gmra.mxu0 %v524
      %v526 = vpop.f32.mrf.mxu0
      %v527 = vadd.f32 %v295, %v526
      %528 = vdwg.mxu0
      %529 = vmatpush.msra.mxu0 0.0
      %530 = vmatpush.msra.mxu0 0.0
      %531 = vmatpush.msra.mxu0 0.0
      %532 = vmatpush.msra.mxu0 0.0
      %533 = vmatpush.msra.mxu0 0.0
      %534 = vmatpush.msra.mxu0 0.0
      %535 = vmatpush.msra.mxu0 0.0
      %536 = vmatpush.msra.mxu0 0.0
      %537 = vmatpush.msra.mxu0 0.0
      %538 = vmatpush.msra.mxu0 0.0
      %539 = vmatpush.msra.mxu0 0.0
      %540 = vmatpush.msra.mxu0 0.0
      %541 = vmatpush.msra.mxu0 0.0
      %542 = vmatpush.msra.mxu0 0.0
      %v543 = vand.u32 %v281, 4294901760
      %v544 = vsub.f32 %v281, %v543
      %v545 = vand.u32 %v544, 4294901760
      %v546 = vsub.f32 %v544, %v545
      %v547 = vand.u32 %v546, 4294901760
      %548 = vmatpush.msra.mxu0 %v547
      %v549 = vand.u32 %v276, 4294901760
      %v550 = vsub.f32 %v276, %v549
      %v551 = vand.u32 %v550, 4294901760
      %v552 = vsub.f32 %v550, %v551
      %v553 = vand.u32 %v552, 4294901760
      %554 = vmatpush.msra.mxu0 %v553
      %v555 = vand.u32 %v299, 4294901760
      %556 = vmatmul.f32.gmra.mxu0 %v555
      %v557 = vpop.f32.mrf.mxu0
      %v558 = vadd.f32 %v519, %v557
      %v559 = vand.u32 %v302, 4294901760
      %560 = vmatmul.f32.gmra.mxu0 %v559
      %v561 = vpop.f32.mrf.mxu0
      %v562 = vadd.f32 %v527, %v561
      %563 = vdwg.mxu0
      %564 = vmatpush.msra.mxu0 0.0
      %565 = vmatpush.msra.mxu0 0.0
      %566 = vmatpush.msra.mxu0 0.0
      %567 = vmatpush.msra.mxu0 0.0
      %568 = vmatpush.msra.mxu0 0.0
      %569 = vmatpush.msra.mxu0 0.0
      %570 = vmatpush.msra.mxu0 0.0
      %571 = vmatpush.msra.mxu0 0.0
      %572 = vmatpush.msra.mxu0 0.0
      %573 = vmatpush.msra.mxu0 0.0
      %574 = vmatpush.msra.mxu0 0.0
      %575 = vmatpush.msra.mxu0 0.0
      %576 = vmatpush.msra.mxu0 0.0
      %577 = vmatpush.msra.mxu0 0.0
      %v578 = vand.u32 %v281, 4294901760
      %v579 = vsub.f32 %v281, %v578
      %580 = vmatpush.msra.mxu0 %v579
      %v581 = vand.u32 %v276, 4294901760
      %v582 = vsub.f32 %v276, %v581
      %583 = vmatpush.msra.mxu0 %v582
      %v584 = vand.u32 %v299, 4294901760
      %v585 = vsub.f32 %v299, %v584
      %586 = vmatmul.f32.gmra.mxu0 %v585
      %v587 = vpop.f32.mrf.mxu0
      %v588 = vadd.f32 %v558, %v587
      %v589 = vand.u32 %v302, 4294901760
      %v590 = vsub.f32 %v302, %v589
      %591 = vmatmul.f32.gmra.mxu0 %v590
      %v592 = vpop.f32.mrf.mxu0
      %v593 = vadd.f32 %v562, %v592
      %594 = vdwg.mxu0
      %595 = vmatpush.msra.mxu0 0.0
      %596 = vmatpush.msra.mxu0 0.0
      %597 = vmatpush.msra.mxu0 0.0
      %598 = vmatpush.msra.mxu0 0.0
      %599 = vmatpush.msra.mxu0 0.0
      %600 = vmatpush.msra.mxu0 0.0
      %601 = vmatpush.msra.mxu0 0.0
      %602 = vmatpush.msra.mxu0 0.0
      %603 = vmatpush.msra.mxu0 0.0
      %604 = vmatpush.msra.mxu0 0.0
      %605 = vmatpush.msra.mxu0 0.0
      %606 = vmatpush.msra.mxu0 0.0
      %607 = vmatpush.msra.mxu0 0.0
      %608 = vmatpush.msra.mxu0 0.0
      %v609 = vand.u32 %v281, 4294901760
      %610 = vmatpush.msra.mxu0 %v609
      %v611 = vand.u32 %v276, 4294901760
      %612 = vmatpush.msra.mxu0 %v611
      %v613 = vand.u32 %v299, 4294901760
      %v614 = vsub.f32 %v299, %v613
      %v615 = vand.u32 %v614, 4294901760
      %616 = vmatmul.f32.gmra.mxu0 %v615
      %v617 = vpop.f32.mrf.mxu0
      %v618 = vadd.f32 %v588, %v617
      %v619 = vand.u32 %v302, 4294901760
      %v620 = vsub.f32 %v302, %v619
      %v621 = vand.u32 %v620, 4294901760
      %622 = vmatmul.f32.gmra.mxu0 %v621
      %v623 = vpop.f32.mrf.mxu0
      %v624 = vadd.f32 %v593, %v623
      %625 = vdwg.mxu0
      %626 = vmatpush.msra.mxu0 0.0
      %627 = vmatpush.msra.mxu0 0.0
      %628 = vmatpush.msra.mxu0 0.0
      %629 = vmatpush.msra.mxu0 0.0
      %630 = vmatpush.msra.mxu0 0.0
      %631 = vmatpush.msra.mxu0 0.0
      %632 = vmatpush.msra.mxu0 0.0
      %633 = vmatpush.msra.mxu0 0.0
      %634 = vmatpush.msra.mxu0 0.0
      %635 = vmatpush.msra.mxu0 0.0
      %636 = vmatpush.msra.mxu0 0.0
      %637 = vmatpush.msra.mxu0 0.0
      %638 = vmatpush.msra.mxu0 0.0
      %639 = vmatpush.msra.mxu0 0.0
      %v640 = vand.u32 %v281, 4294901760
      %v641 = vsub.f32 %v281, %v640
      %v642 = vand.u32 %v641, 4294901760
      %643 = vmatpush.msra.mxu0 %v642
      %v644 = vand.u32 %v276, 4294901760
      %v645 = vsub.f32 %v276, %v644
      %v646 = vand.u32 %v645, 4294901760
      %647 = vmatpush.msra.mxu0 %v646
      %v648 = vand.u32 %v299, 4294901760
      %649 = vmatmul.f32.gmra.mxu0 %v648
      %v650 = vpop.f32.mrf.mxu0
      %v651 = vadd.f32 %v618, %v650
      %v652 = vand.u32 %v302, 4294901760
      %653 = vmatmul.f32.gmra.mxu0 %v652
      %v654 = vpop.f32.mrf.mxu0
      %v655 = vadd.f32 %v624, %v654
      %656 = vdwg.mxu0
      %657 = vmatpush.msra.mxu0 0.0
      %658 = vmatpush.msra.mxu0 0.0
      %659 = vmatpush.msra.mxu0 0.0
      %660 = vmatpush.msra.mxu0 0.0
      %661 = vmatpush.msra.mxu0 0.0
      %662 = vmatpush.msra.mxu0 0.0
      %663 = vmatpush.msra.mxu0 0.0
      %664 = vmatpush.msra.mxu0 0.0
      %665 = vmatpush.msra.mxu0 0.0
      %666 = vmatpush.msra.mxu0 0.0
      %667 = vmatpush.msra.mxu0 0.0
      %668 = vmatpush.msra.mxu0 0.0
      %669 = vmatpush.msra.mxu0 0.0
      %670 = vmatpush.msra.mxu0 0.0
      %v671 = vand.u32 %v281, 4294901760
      %672 = vmatpush.msra.mxu0 %v671
      %v673 = vand.u32 %v276, 4294901760
      %674 = vmatpush.msra.mxu0 %v673
      %v675 = vand.u32 %v299, 4294901760
      %676 = vmatmul.f32.gmra.mxu0 %v675
      %v677 = vpop.f32.mrf.mxu0
      %v678 = vadd.f32 %v651, %v677
      %v679 = vand.u32 %v302, 4294901760
      %680 = vmatmul.f32.gmra.mxu0 %v679
      %v681 = vpop.f32.mrf.mxu0
      %v682 = vadd.f32 %v655, %v681
      %683 = vdwg.mxu0
      %684 = vmatpush.msra.mxu0 0.0
      %685 = vmatpush.msra.mxu0 0.0
      %686 = vmatpush.msra.mxu0 0.0
      %687 = vmatpush.msra.mxu0 0.0
      %688 = vmatpush.msra.mxu0 0.0
      %689 = vmatpush.msra.mxu0 0.0
      %690 = vmatpush.msra.mxu0 0.0
      %691 = vmatpush.msra.mxu0 0.0
      %692 = vmatpush.msra.mxu0 0.0
      %693 = vmatpush.msra.mxu0 0.0
      %694 = vmatpush.msra.mxu0 0.0
      %695 = vmatpush.msra.mxu0 0.0
      %696 = vmatpush.msra.mxu0 0.0
      %697 = vmatpush.msra.mxu0 0.0
      %v698 = vand.u32 %v282, 4294901760
      %699 = vmatpush.msra.mxu0 %v698
      %v700 = vand.u32 %v277, 4294901760
      %701 = vmatpush.msra.mxu0 %v700
      %v702 = vand.u32 %v299, 4294901760
      %v703 = vsub.f32 %v299, %v702
      %v704 = vand.u32 %v703, 4294901760
      %v705 = vsub.f32 %v703, %v704
      %v706 = vand.u32 %v705, 4294901760
      %707 = vmatmul.f32.gmra.mxu0 %v706
      %v708 = vpop.f32.mrf.mxu0
      %v709 = vadd.f32 %v290, %v708
      %v710 = vand.u32 %v302, 4294901760
      %v711 = vsub.f32 %v302, %v710
      %v712 = vand.u32 %v711, 4294901760
      %v713 = vsub.f32 %v711, %v712
      %v714 = vand.u32 %v713, 4294901760
      %715 = vmatmul.f32.gmra.mxu0 %v714
      %v716 = vpop.f32.mrf.mxu0
      %v717 = vadd.f32 %v295, %v716
      %718 = vdwg.mxu0
      %719 = vmatpush.msra.mxu0 0.0
      %720 = vmatpush.msra.mxu0 0.0
      %721 = vmatpush.msra.mxu0 0.0
      %722 = vmatpush.msra.mxu0 0.0
      %723 = vmatpush.msra.mxu0 0.0
      %724 = vmatpush.msra.mxu0 0.0
      %725 = vmatpush.msra.mxu0 0.0
      %726 = vmatpush.msra.mxu0 0.0
      %727 = vmatpush.msra.mxu0 0.0
      %728 = vmatpush.msra.mxu0 0.0
      %729 = vmatpush.msra.mxu0 0.0
      %730 = vmatpush.msra.mxu0 0.0
      %731 = vmatpush.msra.mxu0 0.0
      %732 = vmatpush.msra.mxu0 0.0
      %v733 = vand.u32 %v282, 4294901760
      %v734 = vsub.f32 %v282, %v733
      %v735 = vand.u32 %v734, 4294901760
      %v736 = vsub.f32 %v734, %v735
      %v737 = vand.u32 %v736, 4294901760
      %738 = vmatpush.msra.mxu0 %v737
      %v739 = vand.u32 %v277, 4294901760
      %v740 = vsub.f32 %v277, %v739
      %v741 = vand.u32 %v740, 4294901760
      %v742 = vsub.f32 %v740, %v741
      %v743 = vand.u32 %v742, 4294901760
      %744 = vmatpush.msra.mxu0 %v743
      %v745 = vand.u32 %v299, 4294901760
      %746 = vmatmul.f32.gmra.mxu0 %v745
      %v747 = vpop.f32.mrf.mxu0
      %v748 = vadd.f32 %v709, %v747
      %v749 = vand.u32 %v302, 4294901760
      %750 = vmatmul.f32.gmra.mxu0 %v749
      %v751 = vpop.f32.mrf.mxu0
      %v752 = vadd.f32 %v717, %v751
      %753 = vdwg.mxu0
      %754 = vmatpush.msra.mxu0 0.0
      %755 = vmatpush.msra.mxu0 0.0
      %756 = vmatpush.msra.mxu0 0.0
      %757 = vmatpush.msra.mxu0 0.0
      %758 = vmatpush.msra.mxu0 0.0
      %759 = vmatpush.msra.mxu0 0.0
      %760 = vmatpush.msra.mxu0 0.0
      %761 = vmatpush.msra.mxu0 0.0
      %762 = vmatpush.msra.mxu0 0.0
      %763 = vmatpush.msra.mxu0 0.0
      %764 = vmatpush.msra.mxu0 0.0
      %765 = vmatpush.msra.mxu0 0.0
      %766 = vmatpush.msra.mxu0 0.0
      %767 = vmatpush.msra.mxu0 0.0
      %v768 = vand.u32 %v282, 4294901760
      %v769 = vsub.f32 %v282, %v768
      %770 = vmatpush.msra.mxu0 %v769
      %v771 = vand.u32 %v277, 4294901760
      %v772 = vsub.f32 %v277, %v771
      %773 = vmatpush.msra.mxu0 %v772
      %v774 = vand.u32 %v299, 4294901760
      %v775 = vsub.f32 %v299, %v774
      %776 = vmatmul.f32.gmra.mxu0 %v775
      %v777 = vpop.f32.mrf.mxu0
      %v778 = vadd.f32 %v748, %v777
      %v779 = vand.u32 %v302, 4294901760
      %v780 = vsub.f32 %v302, %v779
      %781 = vmatmul.f32.gmra.mxu0 %v780
      %v782 = vpop.f32.mrf.mxu0
      %v783 = vadd.f32 %v752, %v782
      %784 = vdwg.mxu0
      %785 = vmatpush.msra.mxu0 0.0
      %786 = vmatpush.msra.mxu0 0.0
      %787 = vmatpush.msra.mxu0 0.0
      %788 = vmatpush.msra.mxu0 0.0
      %789 = vmatpush.msra.mxu0 0.0
      %790 = vmatpush.msra.mxu0 0.0
      %791 = vmatpush.msra.mxu0 0.0
      %792 = vmatpush.msra.mxu0 0.0
      %793 = vmatpush.msra.mxu0 0.0
      %794 = vmatpush.msra.mxu0 0.0
      %795 = vmatpush.msra.mxu0 0.0
      %796 = vmatpush.msra.mxu0 0.0
      %797 = vmatpush.msra.mxu0 0.0
      %798 = vmatpush.msra.mxu0 0.0
      %v799 = vand.u32 %v282, 4294901760
      %800 = vmatpush.msra.mxu0 %v799
      %v801 = vand.u32 %v277, 4294901760
      %802 = vmatpush.msra.mxu0 %v801
      %v803 = vand.u32 %v299, 4294901760
      %v804 = vsub.f32 %v299, %v803
      %v805 = vand.u32 %v804, 4294901760
      %806 = vmatmul.f32.gmra.mxu0 %v805
      %v807 = vpop.f32.mrf.mxu0
      %v808 = vadd.f32 %v778, %v807
      %v809 = vand.u32 %v302, 4294901760
      %v810 = vsub.f32 %v302, %v809
      %v811 = vand.u32 %v810, 4294901760
      %812 = vmatmul.f32.gmra.mxu0 %v811
      %v813 = vpop.f32.mrf.mxu0
      %v814 = vadd.f32 %v783, %v813
      %815 = vdwg.mxu0
      %816 = vmatpush.msra.mxu0 0.0
      %817 = vmatpush.msra.mxu0 0.0
      %818 = vmatpush.msra.mxu0 0.0
      %819 = vmatpush.msra.mxu0 0.0
      %820 = vmatpush.msra.mxu0 0.0
      %821 = vmatpush.msra.mxu0 0.0
      %822 = vmatpush.msra.mxu0 0.0
      %823 = vmatpush.msra.mxu0 0.0
      %824 = vmatpush.msra.mxu0 0.0
      %825 = vmatpush.msra.mxu0 0.0
      %826 = vmatpush.msra.mxu0 0.0
      %827 = vmatpush.msra.mxu0 0.0
      %828 = vmatpush.msra.mxu0 0.0
      %829 = vmatpush.msra.mxu0 0.0
      %v830 = vand.u32 %v282, 4294901760
      %v831 = vsub.f32 %v282, %v830
      %v832 = vand.u32 %v831, 4294901760
      %833 = vmatpush.msra.mxu0 %v832
      %v834 = vand.u32 %v277, 4294901760
      %v835 = vsub.f32 %v277, %v834
      %v836 = vand.u32 %v835, 4294901760
      %837 = vmatpush.msra.mxu0 %v836
      %v838 = vand.u32 %v299, 4294901760
      %839 = vmatmul.f32.gmra.mxu0 %v838
      %v840 = vpop.f32.mrf.mxu0
      %v841 = vadd.f32 %v808, %v840
      %v842 = vand.u32 %v302, 4294901760
      %843 = vmatmul.f32.gmra.mxu0 %v842
      %v844 = vpop.f32.mrf.mxu0
      %v845 = vadd.f32 %v814, %v844
      %846 = vdwg.mxu0
      %847 = vmatpush.msra.mxu0 0.0
      %848 = vmatpush.msra.mxu0 0.0
      %849 = vmatpush.msra.mxu0 0.0
      %850 = vmatpush.msra.mxu0 0.0
      %851 = vmatpush.msra.mxu0 0.0
      %852 = vmatpush.msra.mxu0 0.0
      %853 = vmatpush.msra.mxu0 0.0
      %854 = vmatpush.msra.mxu0 0.0
      %855 = vmatpush.msra.mxu0 0.0
      %856 = vmatpush.msra.mxu0 0.0
      %857 = vmatpush.msra.mxu0 0.0
      %858 = vmatpush.msra.mxu0 0.0
      %859 = vmatpush.msra.mxu0 0.0
      %860 = vmatpush.msra.mxu0 0.0
      %v861 = vand.u32 %v282, 4294901760
      %862 = vmatpush.msra.mxu0 %v861
      %v863 = vand.u32 %v277, 4294901760
      %864 = vmatpush.msra.mxu0 %v863
      %v865 = vand.u32 %v299, 4294901760
      %866 = vmatmul.f32.gmra.mxu0 %v865
      %v867 = vpop.f32.mrf.mxu0
      %v868 = vadd.f32 %v841, %v867
      %v869 = vand.u32 %v302, 4294901760
      %870 = vmatmul.f32.gmra.mxu0 %v869
      %v871 = vpop.f32.mrf.mxu0
      %v872 = vadd.f32 %v845, %v871
      %873 = vdwg.mxu0
      %874 = vmatpush.msra.mxu0 0.0
      %875 = vmatpush.msra.mxu0 0.0
      %876 = vmatpush.msra.mxu0 0.0
      %877 = vmatpush.msra.mxu0 0.0
      %878 = vmatpush.msra.mxu0 0.0
      %879 = vmatpush.msra.mxu0 0.0
      %880 = vmatpush.msra.mxu0 0.0
      %881 = vmatpush.msra.mxu0 0.0
      %882 = vmatpush.msra.mxu0 0.0
      %883 = vmatpush.msra.mxu0 0.0
      %884 = vmatpush.msra.mxu0 0.0
      %885 = vmatpush.msra.mxu0 0.0
      %886 = vmatpush.msra.mxu0 0.0
      %887 = vmatpush.msra.mxu0 0.0
      %v888 = vand.u32 %v283, 4294901760
      %889 = vmatpush.msra.mxu0 %v888
      %v890 = vand.u32 %v278, 4294901760
      %891 = vmatpush.msra.mxu0 %v890
      %v892 = vand.u32 %v299, 4294901760
      %v893 = vsub.f32 %v299, %v892
      %v894 = vand.u32 %v893, 4294901760
      %v895 = vsub.f32 %v893, %v894
      %v896 = vand.u32 %v895, 4294901760
      %897 = vmatmul.f32.gmra.mxu0 %v896
      %v898 = vpop.f32.mrf.mxu0
      %v899 = vadd.f32 %v290, %v898
      %v900 = vand.u32 %v302, 4294901760
      %v901 = vsub.f32 %v302, %v900
      %v902 = vand.u32 %v901, 4294901760
      %v903 = vsub.f32 %v901, %v902
      %v904 = vand.u32 %v903, 4294901760
      %905 = vmatmul.f32.gmra.mxu0 %v904
      %v906 = vpop.f32.mrf.mxu0
      %v907 = vadd.f32 %v295, %v906
      %908 = vdwg.mxu0
      %909 = vmatpush.msra.mxu0 0.0
      %910 = vmatpush.msra.mxu0 0.0
      %911 = vmatpush.msra.mxu0 0.0
      %912 = vmatpush.msra.mxu0 0.0
      %913 = vmatpush.msra.mxu0 0.0
      %914 = vmatpush.msra.mxu0 0.0
      %915 = vmatpush.msra.mxu0 0.0
      %916 = vmatpush.msra.mxu0 0.0
      %917 = vmatpush.msra.mxu0 0.0
      %918 = vmatpush.msra.mxu0 0.0
      %919 = vmatpush.msra.mxu0 0.0
      %920 = vmatpush.msra.mxu0 0.0
      %921 = vmatpush.msra.mxu0 0.0
      %922 = vmatpush.msra.mxu0 0.0
      %v923 = vand.u32 %v283, 4294901760
      %v924 = vsub.f32 %v283, %v923
      %v925 = vand.u32 %v924, 4294901760
      %v926 = vsub.f32 %v924, %v925
      %v927 = vand.u32 %v926, 4294901760
      %928 = vmatpush.msra.mxu0 %v927
      %v929 = vand.u32 %v278, 4294901760
      %v930 = vsub.f32 %v278, %v929
      %v931 = vand.u32 %v930, 4294901760
      %v932 = vsub.f32 %v930, %v931
      %v933 = vand.u32 %v932, 4294901760
      %934 = vmatpush.msra.mxu0 %v933
      %v935 = vand.u32 %v299, 4294901760
      %936 = vmatmul.f32.gmra.mxu0 %v935
      %v937 = vpop.f32.mrf.mxu0
      %v938 = vadd.f32 %v899, %v937
      %v939 = vand.u32 %v302, 4294901760
      %940 = vmatmul.f32.gmra.mxu0 %v939
      %v941 = vpop.f32.mrf.mxu0
      %v942 = vadd.f32 %v907, %v941
      %943 = vdwg.mxu0
      %944 = vmatpush.msra.mxu0 0.0
      %945 = vmatpush.msra.mxu0 0.0
      %946 = vmatpush.msra.mxu0 0.0
      %947 = vmatpush.msra.mxu0 0.0
      %948 = vmatpush.msra.mxu0 0.0
      %949 = vmatpush.msra.mxu0 0.0
      %950 = vmatpush.msra.mxu0 0.0
      %951 = vmatpush.msra.mxu0 0.0
      %952 = vmatpush.msra.mxu0 0.0
      %953 = vmatpush.msra.mxu0 0.0
      %954 = vmatpush.msra.mxu0 0.0
      %955 = vmatpush.msra.mxu0 0.0
      %956 = vmatpush.msra.mxu0 0.0
      %957 = vmatpush.msra.mxu0 0.0
      %v958 = vand.u32 %v283, 4294901760
      %v959 = vsub.f32 %v283, %v958
      %960 = vmatpush.msra.mxu0 %v959
      %v961 = vand.u32 %v278, 4294901760
      %v962 = vsub.f32 %v278, %v961
      %963 = vmatpush.msra.mxu0 %v962
      %v964 = vand.u32 %v299, 4294901760
      %v965 = vsub.f32 %v299, %v964
      %966 = vmatmul.f32.gmra.mxu0 %v965
      %v967 = vpop.f32.mrf.mxu0
      %v968 = vadd.f32 %v938, %v967
      %v969 = vand.u32 %v302, 4294901760
      %v970 = vsub.f32 %v302, %v969
      %971 = vmatmul.f32.gmra.mxu0 %v970
      %v972 = vpop.f32.mrf.mxu0
      %v973 = vadd.f32 %v942, %v972
      %974 = vdwg.mxu0
      %975 = vmatpush.msra.mxu0 0.0
      %976 = vmatpush.msra.mxu0 0.0
      %977 = vmatpush.msra.mxu0 0.0
      %978 = vmatpush.msra.mxu0 0.0
      %979 = vmatpush.msra.mxu0 0.0
      %980 = vmatpush.msra.mxu0 0.0
      %981 = vmatpush.msra.mxu0 0.0
      %982 = vmatpush.msra.mxu0 0.0
      %983 = vmatpush.msra.mxu0 0.0
      %984 = vmatpush.msra.mxu0 0.0
      %985 = vmatpush.msra.mxu0 0.0
      %986 = vmatpush.msra.mxu0 0.0
      %987 = vmatpush.msra.mxu0 0.0
      %988 = vmatpush.msra.mxu0 0.0
      %v989 = vand.u32 %v283, 4294901760
      %990 = vmatpush.msra.mxu0 %v989
      %v991 = vand.u32 %v278, 4294901760
      %992 = vmatpush.msra.mxu0 %v991
      %v993 = vand.u32 %v299, 4294901760
      %v994 = vsub.f32 %v299, %v993
      %v995 = vand.u32 %v994, 4294901760
      %996 = vmatmul.f32.gmra.mxu0 %v995
      %v997 = vpop.f32.mrf.mxu0
      %v998 = vadd.f32 %v968, %v997
      %v999 = vand.u32 %v302, 4294901760
      %v1000 = vsub.f32 %v302, %v999
      %v1001 = vand.u32 %v1000, 4294901760
      %1002 = vmatmul.f32.gmra.mxu0 %v1001
      %v1003 = vpop.f32.mrf.mxu0
      %v1004 = vadd.f32 %v973, %v1003
      %1005 = vdwg.mxu0
      %1006 = vmatpush.msra.mxu0 0.0
      %1007 = vmatpush.msra.mxu0 0.0
      %1008 = vmatpush.msra.mxu0 0.0
      %1009 = vmatpush.msra.mxu0 0.0
      %1010 = vmatpush.msra.mxu0 0.0
      %1011 = vmatpush.msra.mxu0 0.0
      %1012 = vmatpush.msra.mxu0 0.0
      %1013 = vmatpush.msra.mxu0 0.0
      %1014 = vmatpush.msra.mxu0 0.0
      %1015 = vmatpush.msra.mxu0 0.0
      %1016 = vmatpush.msra.mxu0 0.0
      %1017 = vmatpush.msra.mxu0 0.0
      %1018 = vmatpush.msra.mxu0 0.0
      %1019 = vmatpush.msra.mxu0 0.0
      %v1020 = vand.u32 %v283, 4294901760
      %v1021 = vsub.f32 %v283, %v1020
      %v1022 = vand.u32 %v1021, 4294901760
      %1023 = vmatpush.msra.mxu0 %v1022
      %v1024 = vand.u32 %v278, 4294901760
      %v1025 = vsub.f32 %v278, %v1024
      %v1026 = vand.u32 %v1025, 4294901760
      %1027 = vmatpush.msra.mxu0 %v1026
      %v1028 = vand.u32 %v299, 4294901760
      %1029 = vmatmul.f32.gmra.mxu0 %v1028
      %v1030 = vpop.f32.mrf.mxu0
      %v1031 = vadd.f32 %v998, %v1030
      %v1032 = vand.u32 %v302, 4294901760
      %1033 = vmatmul.f32.gmra.mxu0 %v1032
      %v1034 = vpop.f32.mrf.mxu0
      %v1035 = vadd.f32 %v1004, %v1034
      %1036 = vdwg.mxu0
      %1037 = vmatpush.msra.mxu0 0.0
      %1038 = vmatpush.msra.mxu0 0.0
      %1039 = vmatpush.msra.mxu0 0.0
      %1040 = vmatpush.msra.mxu0 0.0
      %1041 = vmatpush.msra.mxu0 0.0
      %1042 = vmatpush.msra.mxu0 0.0
      %1043 = vmatpush.msra.mxu0 0.0
      %1044 = vmatpush.msra.mxu0 0.0
      %1045 = vmatpush.msra.mxu0 0.0
      %1046 = vmatpush.msra.mxu0 0.0
      %1047 = vmatpush.msra.mxu0 0.0
      %1048 = vmatpush.msra.mxu0 0.0
      %1049 = vmatpush.msra.mxu0 0.0
      %1050 = vmatpush.msra.mxu0 0.0
      %v1051 = vand.u32 %v283, 4294901760
      %1052 = vmatpush.msra.mxu0 %v1051
      %v1053 = vand.u32 %v278, 4294901760
      %1054 = vmatpush.msra.mxu0 %v1053
      %v1055 = vand.u32 %v299, 4294901760
      %1056 = vmatmul.f32.gmra.mxu0 %v1055
      %v1057 = vpop.f32.mrf.mxu0
      %v1058 = vadd.f32 %v1031, %v1057
      %v1059 = vand.u32 %v302, 4294901760
      %1060 = vmatmul.f32.gmra.mxu0 %v1059
      %v1061 = vpop.f32.mrf.mxu0
      %v1062 = vadd.f32 %v1035, %v1061
      %1063 = vdwg.mxu0
      %1064 = vmatpush.msra.mxu0 0.0
      %1065 = vmatpush.msra.mxu0 0.0
      %1066 = vmatpush.msra.mxu0 0.0
      %1067 = vmatpush.msra.mxu0 0.0
      %1068 = vmatpush.msra.mxu0 0.0
      %1069 = vmatpush.msra.mxu0 0.0
      %1070 = vmatpush.msra.mxu0 0.0
      %1071 = vmatpush.msra.mxu0 0.0
      %1072 = vmatpush.msra.mxu0 0.0
      %1073 = vmatpush.msra.mxu0 0.0
      %1074 = vmatpush.msra.mxu0 0.0
      %1075 = vmatpush.msra.mxu0 0.0
      %1076 = vmatpush.msra.mxu0 0.0
      %1077 = vmatpush.msra.mxu0 0.0
      %v1078 = vand.u32 %v284, 4294901760
      %1079 = vmatpush.msra.mxu0 %v1078
      %v1080 = vand.u32 %v279, 4294901760
      %1081 = vmatpush.msra.mxu0 %v1080
      %v1082 = vand.u32 %v299, 4294901760
      %v1083 = vsub.f32 %v299, %v1082
      %v1084 = vand.u32 %v1083, 4294901760
      %v1085 = vsub.f32 %v1083, %v1084
      %v1086 = vand.u32 %v1085, 4294901760
      %1087 = vmatmul.f32.gmra.mxu0 %v1086
      %v1088 = vpop.f32.mrf.mxu0
      %v1089 = vadd.f32 %v290, %v1088
      %v1090 = vand.u32 %v302, 4294901760
      %v1091 = vsub.f32 %v302, %v1090
      %v1092 = vand.u32 %v1091, 4294901760
      %v1093 = vsub.f32 %v1091, %v1092
      %v1094 = vand.u32 %v1093, 4294901760
      %1095 = vmatmul.f32.gmra.mxu0 %v1094
      %v1096 = vpop.f32.mrf.mxu0
      %v1097 = vadd.f32 %v295, %v1096
      %1098 = vdwg.mxu0
      %1099 = vmatpush.msra.mxu0 0.0
      %1100 = vmatpush.msra.mxu0 0.0
      %1101 = vmatpush.msra.mxu0 0.0
      %1102 = vmatpush.msra.mxu0 0.0
      %1103 = vmatpush.msra.mxu0 0.0
      %1104 = vmatpush.msra.mxu0 0.0
      %1105 = vmatpush.msra.mxu0 0.0
      %1106 = vmatpush.msra.mxu0 0.0
      %1107 = vmatpush.msra.mxu0 0.0
      %1108 = vmatpush.msra.mxu0 0.0
      %1109 = vmatpush.msra.mxu0 0.0
      %1110 = vmatpush.msra.mxu0 0.0
      %1111 = vmatpush.msra.mxu0 0.0
      %1112 = vmatpush.msra.mxu0 0.0
      %v1113 = vand.u32 %v284, 4294901760
      %v1114 = vsub.f32 %v284, %v1113
      %v1115 = vand.u32 %v1114, 4294901760
      %v1116 = vsub.f32 %v1114, %v1115
      %v1117 = vand.u32 %v1116, 4294901760
      %1118 = vmatpush.msra.mxu0 %v1117
      %v1119 = vand.u32 %v279, 4294901760
      %v1120 = vsub.f32 %v279, %v1119
      %v1121 = vand.u32 %v1120, 4294901760
      %v1122 = vsub.f32 %v1120, %v1121
      %v1123 = vand.u32 %v1122, 4294901760
      %1124 = vmatpush.msra.mxu0 %v1123
      %v1125 = vand.u32 %v299, 4294901760
      %1126 = vmatmul.f32.gmra.mxu0 %v1125
      %v1127 = vpop.f32.mrf.mxu0
      %v1128 = vadd.f32 %v1089, %v1127
      %v1129 = vand.u32 %v302, 4294901760
      %1130 = vmatmul.f32.gmra.mxu0 %v1129
      %v1131 = vpop.f32.mrf.mxu0
      %v1132 = vadd.f32 %v1097, %v1131
      %1133 = vdwg.mxu0
      %1134 = vmatpush.msra.mxu0 0.0
      %1135 = vmatpush.msra.mxu0 0.0
      %1136 = vmatpush.msra.mxu0 0.0
      %1137 = vmatpush.msra.mxu0 0.0
      %1138 = vmatpush.msra.mxu0 0.0
      %1139 = vmatpush.msra.mxu0 0.0
      %1140 = vmatpush.msra.mxu0 0.0
      %1141 = vmatpush.msra.mxu0 0.0
      %1142 = vmatpush.msra.mxu0 0.0
      %1143 = vmatpush.msra.mxu0 0.0
      %1144 = vmatpush.msra.mxu0 0.0
      %1145 = vmatpush.msra.mxu0 0.0
      %1146 = vmatpush.msra.mxu0 0.0
      %1147 = vmatpush.msra.mxu0 0.0
      %v1148 = vand.u32 %v284, 4294901760
      %v1149 = vsub.f32 %v284, %v1148
      %1150 = vmatpush.msra.mxu0 %v1149
      %v1151 = vand.u32 %v279, 4294901760
      %v1152 = vsub.f32 %v279, %v1151
      %1153 = vmatpush.msra.mxu0 %v1152
      %v1154 = vand.u32 %v299, 4294901760
      %v1155 = vsub.f32 %v299, %v1154
      %1156 = vmatmul.f32.gmra.mxu0 %v1155
      %v1157 = vpop.f32.mrf.mxu0
      %v1158 = vadd.f32 %v1128, %v1157
      %v1159 = vand.u32 %v302, 4294901760
      %v1160 = vsub.f32 %v302, %v1159
      %1161 = vmatmul.f32.gmra.mxu0 %v1160
      %v1162 = vpop.f32.mrf.mxu0
      %v1163 = vadd.f32 %v1132, %v1162
      %1164 = vdwg.mxu0
      %1165 = vmatpush.msra.mxu0 0.0
      %1166 = vmatpush.msra.mxu0 0.0
      %1167 = vmatpush.msra.mxu0 0.0
      %1168 = vmatpush.msra.mxu0 0.0
      %1169 = vmatpush.msra.mxu0 0.0
      %1170 = vmatpush.msra.mxu0 0.0
      %1171 = vmatpush.msra.mxu0 0.0
      %1172 = vmatpush.msra.mxu0 0.0
      %1173 = vmatpush.msra.mxu0 0.0
      %1174 = vmatpush.msra.mxu0 0.0
      %1175 = vmatpush.msra.mxu0 0.0
      %1176 = vmatpush.msra.mxu0 0.0
      %1177 = vmatpush.msra.mxu0 0.0
      %1178 = vmatpush.msra.mxu0 0.0
      %v1179 = vand.u32 %v284, 4294901760
      %1180 = vmatpush.msra.mxu0 %v1179
      %v1181 = vand.u32 %v279, 4294901760
      %1182 = vmatpush.msra.mxu0 %v1181
      %v1183 = vand.u32 %v299, 4294901760
      %v1184 = vsub.f32 %v299, %v1183
      %v1185 = vand.u32 %v1184, 4294901760
      %1186 = vmatmul.f32.gmra.mxu0 %v1185
      %v1187 = vpop.f32.mrf.mxu0
      %v1188 = vadd.f32 %v1158, %v1187
      %v1189 = vand.u32 %v302, 4294901760
      %v1190 = vsub.f32 %v302, %v1189
      %v1191 = vand.u32 %v1190, 4294901760
      %1192 = vmatmul.f32.gmra.mxu0 %v1191
      %v1193 = vpop.f32.mrf.mxu0
      %v1194 = vadd.f32 %v1163, %v1193
      %1195 = vdwg.mxu0
      %1196 = vmatpush.msra.mxu0 0.0
      %1197 = vmatpush.msra.mxu0 0.0
      %1198 = vmatpush.msra.mxu0 0.0
      %1199 = vmatpush.msra.mxu0 0.0
      %1200 = vmatpush.msra.mxu0 0.0
      %1201 = vmatpush.msra.mxu0 0.0
      %1202 = vmatpush.msra.mxu0 0.0
      %1203 = vmatpush.msra.mxu0 0.0
      %1204 = vmatpush.msra.mxu0 0.0
      %1205 = vmatpush.msra.mxu0 0.0
      %1206 = vmatpush.msra.mxu0 0.0
      %1207 = vmatpush.msra.mxu0 0.0
      %1208 = vmatpush.msra.mxu0 0.0
      %1209 = vmatpush.msra.mxu0 0.0
      %v1210 = vand.u32 %v284, 4294901760
      %v1211 = vsub.f32 %v284, %v1210
      %v1212 = vand.u32 %v1211, 4294901760
      %1213 = vmatpush.msra.mxu0 %v1212
      %v1214 = vand.u32 %v279, 4294901760
      %v1215 = vsub.f32 %v279, %v1214
      %v1216 = vand.u32 %v1215, 4294901760
      %1217 = vmatpush.msra.mxu0 %v1216
      %v1218 = vand.u32 %v299, 4294901760
      %1219 = vmatmul.f32.gmra.mxu0 %v1218
      %v1220 = vpop.f32.mrf.mxu0
      %v1221 = vadd.f32 %v1188, %v1220
      %v1222 = vand.u32 %v302, 4294901760
      %1223 = vmatmul.f32.gmra.mxu0 %v1222
      %v1224 = vpop.f32.mrf.mxu0
      %v1225 = vadd.f32 %v1194, %v1224
      %1226 = vdwg.mxu0
      %1227 = vmatpush.msra.mxu0 0.0
      %1228 = vmatpush.msra.mxu0 0.0
      %1229 = vmatpush.msra.mxu0 0.0
      %1230 = vmatpush.msra.mxu0 0.0
      %1231 = vmatpush.msra.mxu0 0.0
      %1232 = vmatpush.msra.mxu0 0.0
      %1233 = vmatpush.msra.mxu0 0.0
      %1234 = vmatpush.msra.mxu0 0.0
      %1235 = vmatpush.msra.mxu0 0.0
      %1236 = vmatpush.msra.mxu0 0.0
      %1237 = vmatpush.msra.mxu0 0.0
      %1238 = vmatpush.msra.mxu0 0.0
      %1239 = vmatpush.msra.mxu0 0.0
      %1240 = vmatpush.msra.mxu0 0.0
      %v1241 = vand.u32 %v284, 4294901760
      %1242 = vmatpush.msra.mxu0 %v1241
      %v1243 = vand.u32 %v279, 4294901760
      %1244 = vmatpush.msra.mxu0 %v1243
      %v1245 = vand.u32 %v299, 4294901760
      %1246 = vmatmul.f32.gmra.mxu0 %v1245
      %v1247 = vpop.f32.mrf.mxu0
      %v1248 = vadd.f32 %v1221, %v1247
      %v1249 = vand.u32 %v302, 4294901760
      %1250 = vmatmul.f32.gmra.mxu0 %v1249
      %v1251 = vpop.f32.mrf.mxu0
      %v1252 = vadd.f32 %v1225, %v1251
      %1253 = vdwg.mxu0
      %v1254 = vld [vmem:[%s261] sm:$0xff]
      %v1255 = vld [vmem:[%s261 + $0x8] sm:$0xff]
      %v1256 = vld [vmem:[%s261 + $0x10] sm:$0xff]
      %v1257 = vld [vmem:[%s261 + $0x18] sm:$0xff]
      %v1258 = vld [vmem:[%s261 + $0x20] sm:$0xff]
      %v1259 = vld [vmem:[%s261 + $0x28] sm:$0xff]
      %v1260 = vld [vmem:[%s261 + $0x30] sm:$0xff]
      %v1261 = vld [vmem:[%s261 + $0x38] sm:$0xff]
      %v1262 = vld [vmem:[%s261 + $0x40] sm:$0xff]
      %v1263 = vld [vmem:[%s261 + $0x48] sm:$0xff]
      %v1264 = vadd.f32 %v488, %v1254
      %v1265 = vadd.f32 %v678, %v1255
      %v1266 = vadd.f32 %v868, %v1256
      %v1267 = vadd.f32 %v1058, %v1257
      %v1268 = vadd.f32 %v1248, %v1258
      %v1269 = vadd.f32 %v492, %v1259
      %v1270 = vadd.f32 %v682, %v1260
      %v1271 = vadd.f32 %v872, %v1261
      %v1272 = vadd.f32 %v1062, %v1262
      %v1273 = vadd.f32 %v1252, %v1263
      %1274 = vst [vmem:[%s271] sm:$0xff] %v1264
      %1275 = vst [vmem:[%s271 + $0x8] sm:$0xff] %v1265
      %1276 = vst [vmem:[%s271 + $0x10] sm:$0xff] %v1266
      %1277 = vst [vmem:[%s271 + $0x18] sm:$0xff] %v1267
      %vm1278 = vcmask 924672
      %1279 = vst.msk [vmem:[%s271 + $0x20] sm:$0xff] %vm1278, %v1268
      %1280 = vst [vmem:[%s271 + $0x28] sm:$0xff] %v1269
      %1281 = vst [vmem:[%s271 + $0x30] sm:$0xff] %v1270
      %1282 = vst [vmem:[%s271 + $0x38] sm:$0xff] %v1271
      %1283 = vst [vmem:[%s271 + $0x40] sm:$0xff] %v1272
      %1284 = vst.msk [vmem:[%s271 + $0x48] sm:$0xff] %vm1278, %v1273
      %s1285 = smul.u32 5, %s20
      %p1286 = scmp.lt.s32.totalorder %s19, 1
      %s1287 = scalar_select %p1286, %s19, 1
      %p1288 = scmp.lt.s32.totalorder %s1285, 4
      %s1289 = scalar_select %p1288, %s1285, 4
      %s1290 = smul.addr %s1287, 10
      %s1291 = sadd.s32 %s1289, %s1290
      %s1292 = smul.addr %s1291, 8
      %s1293 = scalar_lea.vmem %s4, %s1292
      // Predicated region
      $region37: #{diverse_fno2d_forward.10} parent=35 // pred_check
        %p1294 = pneg %p145
      $region38: #{diverse_fno2d_forward.10} parent=35 // pred_check_branch
        %1296 = sbr.rel (%p1294) target = $region40
      $region39: #{diverse_fno2d_forward.10} parent=35 // pred_region
        %s1297 = smul.u32 5, %s20
      $region40: #{diverse_fno2d_forward.10} parent=35 // pred_fallthru
        _
    $region36: #{diverse_fno2d_forward.10} parent=5 // pred_fallthru
      _
    %p1298 = scmp.le.s32.totalorder 2, %s10
    // Predicated region
    $region41: #{diverse_fno2d_forward.10} parent=5 // pred_check
      %p1299 = pneg %p1298
    $region42: #{diverse_fno2d_forward.10} parent=5 // pred_check_branch
      %1301 = sbr.rel (%p1299) target = $region44
    $region43: #{diverse_fno2d_forward.10} parent=5 // pred_region
      %s1302 = ssub.s32 %s10, 2
      // Predicated region
      $region45: #{diverse_fno2d_forward.10} parent=43 // pred_check
        %p1303 = pneg %p151
      $region46: #{diverse_fno2d_forward.10} parent=43 // pred_check_branch
        %1305 = sbr.rel (%p1303) target = $region48
      $region47: #{diverse_fno2d_forward.10} parent=43 // pred_region
        %s1306 = smul.u32 5, %s22
        %p1307 = scmp.lt.s32.totalorder %s21, 1
        %s1308 = scalar_select %p1307, %s21, 1
        %p1309 = scmp.lt.s32.totalorder %s1306, 4
        %s1310 = scalar_select %p1309, %s1306, 4
        %s1311 = smul.addr %s1308, 10
        %s1312 = sadd.s32 %s1310, %s1311
        %s1313 = smul.addr %s1312, 8
        %s1314 = scalar_lea.vmem %s4, %s1313
      $region48: #{diverse_fno2d_forward.10} parent=43 // pred_fallthru
        _
    $region44: #{diverse_fno2d_forward.10} parent=5 // pred_fallthru
      _
  $region6: #{diverse_fno2d_forward.10} parent=0 // loop_footer
    %s14 = sadd.s32 1, %s10
  $region7: #{diverse_fno2d_forward.10} parent=0 // loop_footer_branch
    %9 = sbr.rel target = $region3
  $region8: #{diverse_fno2d_forward.10} parent=0 // loop_exit
    _

// kernel: squeeze.4
$region0: #{squeeze.4}
  %s0 = inlined_call_operand.vmem [shape: f32[2,256], index: 0, kind: input, shape index: {}]
  %s1 = inlined_call_operand.hbm [shape: f32[2,16,16,1], index: 1, kind: output, shape index: {}]
  $region1: #{squeeze.4} parent=0
    #allocation0 [shape = 'u8[16384]{0}', space=vmem, size = 0x4000, scoped, tag = 'operand span for operand 1']
    #allocation1 [shape = 's32[1]{0}', space=sflag, size = 0x4, scoped, tag = 'scoped memory for squeeze.4']
    #allocation2 [shape = 'u8[8192]{0}', space=vmem, size = 0x2000, scoped, tag = 'scoped mem for input reshape']
    %2 = vsyncpa [#allocation1], 0
    %s4 = ssub.s32 4, 1
    %s5 = scalar_lea.vmem %s0, 2
    %v6 = vld [vmem:[%s5] sm:%s4]
    %s7 = scalar_lea.vmem [#allocation2], 8
    %8 = vst [vmem:[%s7] sm:%s4] %v6
    %v9 = vld [vmem:[%s0] sm:%s4]
    %10 = vst [vmem:[#allocation2] sm:%s4] %v9
    %v11 = vld [vmem:[#allocation2] sm:$0x3]
    %vm12 = vcmask 130048
    %13 = vst.msk [vmem:[#allocation0] ss:$16 sm:$0x3] %vm12, %v11
    %s14 = scalar_lea.vmem [#allocation2], 8
    %v15 = vld [vmem:[%s14] sm:$0x3]
    %vm16 = vcmask 130048
    %s17 = scalar_lea.vmem [#allocation0], 8
    %18 = vst.msk [vmem:[%s17] ss:$16 sm:$0x3] %vm16, %v15
    %v19 = vld.sshfl [vmem:[#allocation2] sm:$0xff pattern:$0x99999180]
    %20 = vrot.lane.b32.xlu0 %v19, 112
    %v21 = vpop.permute.xlu0 %20
    %vm22 = vcmask 130048
    %s23 = scalar_lea.vmem [#allocation0], 1
    %24 = vst.msk [vmem:[%s23] ss:$8 sm:$0xf] %vm22, %v21
    %v25 = vld.sshfl [vmem:[#allocation2] sm:$0xff pattern:$0x99999180]
    %26 = vrot.lane.b32.xlu0 %v25, 96
    %v27 = vpop.permute.xlu0 %26
    %vm28 = vcmask 130048
    %s29 = scalar_lea.vmem [#allocation0], 2
    %30 = vst.msk [vmem:[%s29] ss:$8 sm:$0xf] %vm28, %v27
    %v31 = vld.sshfl [vmem:[#allocation2] sm:$0xff pattern:$0x99999180]
    %32 = vrot.lane.b32.xlu0 %v31, 80
    %v33 = vpop.permute.xlu0 %32
    %vm34 = vcmask 130048
    %s35 = scalar_lea.vmem [#allocation0], 3
    %36 = vst.msk [vmem:[%s35] ss:$8 sm:$0xf] %vm34, %v33
    %v37 = vld.sshfl [vmem:[#allocation2] sm:$0xff pattern:$0x99999180]
    %38 = vrot.lane.b32.xlu0 %v37, 64
    %v39 = vpop.permute.xlu0 %38
    %vm40 = vcmask 130048
    %s41 = scalar_lea.vmem [#allocation0], 4
    %42 = vst.msk [vmem:[%s41] ss:$8 sm:$0xf] %vm40, %v39
    %v43 = vld.sshfl [vmem:[#allocation2] sm:$0xff pattern:$0x99999180]
    %44 = vrot.lane.b32.xlu0 %v43, 48
    %v45 = vpop.permute.xlu0 %44
    %vm46 = vcmask 130048
    %s47 = scalar_lea.vmem [#allocation0], 5
    %48 = vst.msk [vmem:[%s47] ss:$8 sm:$0xf] %vm46, %v45
    %v49 = vld.sshfl [vmem:[#allocation2] sm:$0xff pattern:$0x99999180]
    %50 = vrot.lane.b32.xlu0 %v49, 32
    %v51 = vpop.permute.xlu0 %50
    %vm52 = vcmask 130048
    %s53 = scalar_lea.vmem [#allocation0], 6
    %54 = vst.msk [vmem:[%s53] ss:$8 sm:$0xf] %vm52, %v51
    %v55 = vld.sshfl [vmem:[#allocation2] sm:$0xff pattern:$0x99999180]
    %56 = vrot.lane.b32.xlu0 %v55, 16
    %v57 = vpop.permute.xlu0 %56
    %vm58 = vcmask 130048
    %s59 = scalar_lea.vmem [#allocation0], 7
    %60 = vst.msk [vmem:[%s59] ss:$8 sm:$0xf] %vm58, %v57
    %62 = vsyncadd [#allocation1], 0
    %s64 = sshll.u32 [#allocation0], 4
    %s65 = int_to_ptr.vmem [resolvable:$true] %s64
    %s66 = sshll.u32 %s1, 4
    %s67 = int_to_ptr.hbm [resolvable:$true] %s66
    %69 = dma.vmem_to_hbm [thread:$0]  %s65, 512, %s67, [#allocation1]
    %71 = dma.done [#allocation1], 512
    %72 = vsyncpa [#allocation1], 1

// kernel: diverse_fno2d_forward.11
$region0: #{diverse_fno2d_forward.11}
  #allocation0 [shape = 'u32[]', space=smem, size = 0x4, offset = 0x4, fixed_abs, tag = 'smem constant byte address 0x4 - core index']
  #allocation1 [shape = 'u32[72,128]{1,0:T(1,128)}', space=vmem, size = 0x9000, scoped, tag = 'internal scratch']
  %s0 = inlined_call_operand.vmem [shape: f32[2,16,256], index: 0, kind: input, shape index: {}]
  %s1 = inlined_call_operand.vmem [shape: f32[128,16], index: 1, kind: input, shape index: {}]
  %s2 = inlined_call_operand.vmem [shape: f32[128,1], index: 2, kind: input, shape index: {}]
  %s3 = inlined_call_operand.vmem [shape: f32[32,128], index: 3, kind: input, shape index: {}]
  %s4 = inlined_call_operand.vmem [shape: f32[2,128,256], index: 4, kind: output, shape index: {0}]
  %s5 = inlined_call_operand.vmem [shape: f32[2,32,256], index: 5, kind: output, shape index: {1}]
  %s6 = inlined_call_operand.vmem [shape: f32[2,2,256], index: 6, kind: output, shape index: {2}]
  %7 = xla_tuple %s4, %s5, %s6
  %s8 = sld [smem:[#allocation0]]
  $region65: #{diverse_fno2d_forward.11} parent=0
    _
  %s10 = ssub.s32 1, %s8
  %s11 = scalar_select 0, %s10, %s8
  loop: start=0, step=1, limit=4
  $region2: #{diverse_fno2d_forward.11} parent=0 // loop_pre_header
    _
  $region3: #{diverse_fno2d_forward.11} parent=0 // loop_header
    %s13 = sphi 0, %s17
    %p14 = scmp.ge.s32.totalorder %s13, 4
    %s20 = sphi 0, %s32
    %s21 = sphi 0, %s28
    %s22 = sphi 0, %s20
    %s23 = sphi 0, %s21
    %s24 = sphi 0, %s22
    %s25 = sphi 0, %s23
    %s37 = sphi 0, %s39
    %s40 = sphi 0, %s37
    %s41 = sphi 0, %s40
    %s57 = sphi 0, %s41
    %s61 = sphi 0, %s61
    %s63 = sphi 0, %s61
    %s64 = sphi 0, %s63
    %s78 = sphi 0, %s64
    %s82 = sphi 0, %s82
    %s84 = sphi 0, %s82
    %s85 = sphi 0, %s84
    %s99 = sphi 0, %s85
    %s103 = sphi 0, %s103
    %s105 = sphi 0, %s103
    %s106 = sphi 0, %s105
    %s120 = sphi 0, %s106
    %s128 = sphi 0, %s130
    %s131 = sphi 0, %s128
    %s132 = sphi 0, %s131
    %s148 = sphi 0, %s132
    %s156 = sphi 0, %s158
    %s159 = sphi 0, %s156
    %s160 = sphi 0, %s159
    %s176 = sphi 0, %s160
    %s184 = sphi 0, %s186
    %s187 = sphi 0, %s184
    %s188 = sphi 0, %s187
    %s204 = sphi 0, %s188
  $region4: #{diverse_fno2d_forward.11} parent=0 // loop_header_branch
    %16 = sbr.rel (%p14) target = $region8
  $region5: #{diverse_fno2d_forward.11} parent=0 // loop_body
    %s18 = ssub.s32 %s13, 1
    %s19 = ssub.s32 %s13, 2
    %s26 = sadd.s32 1, %s21
    %p27 = scmp.ge.s32.totalorder %s26, 1
    %s28 = scalar_select %p27, 0, %s26
    %s29 = sadd.s32 1, %s20
    %s30 = scalar_select %p27, %s29, %s20
    %p31 = scmp.ge.s32.totalorder %s30, 2
    %s32 = scalar_select %p31, 0, %s30
    %s33 = ssub.s32 %s20, %s32
    %s34 = ssub.s32 %s21, %s28
    %s35 = sor.u32 %s33, %s34
    %p36 = scmp.eq.s32.totalorder %s35, 0
    %s38 = sadd.s32 %s37, 1
    %s39 = scalar_select %p36, %s37, %s38
    %p42 = pneg %p36
    %p43 = scmp.eq.s32.totalorder %s13, 1
    %p44 = por %p42, %p43
    %p45 = scmp.ne.s32.totalorder %s37, %s40
    %p46 = scmp.eq.s32.totalorder %s13, 0
    %p47 = por %p45, %p46
    %p48 = scmp.ne.s32.totalorder %s37, %s40
    %p49 = scmp.eq.s32.totalorder %s18, 1
    %p50 = por %p48, %p49
    %p51 = scmp.ne.s32.totalorder %s40, %s41
    %p52 = scmp.eq.s32.totalorder %s18, 0
    %p53 = por %p51, %p52
    %p54 = scmp.ne.s32.totalorder %s40, %s41
    %p55 = scmp.eq.s32.totalorder %s19, 1
    %p56 = por %p54, %p55
    %p58 = scmp.ne.s32.totalorder %s41, %s57
    %p59 = scmp.eq.s32.totalorder %s19, 0
    %p60 = por %p58, %p59
    %s62 = sadd.s32 %s61, 1
    %p65 = scmp.eq.s32.totalorder %s13, 1
    %p66 = scmp.ne.s32.totalorder %s61, %s63
    %p67 = scmp.eq.s32.totalorder %s13, 0
    %p68 = por %p66, %p67
    %p69 = scmp.ne.s32.totalorder %s61, %s63
    %p70 = scmp.eq.s32.totalorder %s18, 1
    %p71 = por %p69, %p70
    %p72 = scmp.ne.s32.totalorder %s63, %s64
    %p73 = scmp.eq.s32.totalorder %s18, 0
    %p74 = por %p72, %p73
    %p75 = scmp.ne.s32.totalorder %s63, %s64
    %p76 = scmp.eq.s32.totalorder %s19, 1
    %p77 = por %p75, %p76
    %p79 = scmp.ne.s32.totalorder %s64, %s78
    %p80 = scmp.eq.s32.totalorder %s19, 0
    %p81 = por %p79, %p80
    %s83 = sadd.s32 %s82, 1
    %p86 = scmp.eq.s32.totalorder %s13, 1
    %p87 = scmp.ne.s32.totalorder %s82, %s84
    %p88 = scmp.eq.s32.totalorder %s13, 0
    %p89 = por %p87, %p88
    %p90 = scmp.ne.s32.totalorder %s82, %s84
    %p91 = scmp.eq.s32.totalorder %s18, 1
    %p92 = por %p90, %p91
    %p93 = scmp.ne.s32.totalorder %s84, %s85
    %p94 = scmp.eq.s32.totalorder %s18, 0
    %p95 = por %p93, %p94
    %p96 = scmp.ne.s32.totalorder %s84, %s85
    %p97 = scmp.eq.s32.totalorder %s19, 1
    %p98 = por %p96, %p97
    %p100 = scmp.ne.s32.totalorder %s85, %s99
    %p101 = scmp.eq.s32.totalorder %s19, 0
    %p102 = por %p100, %p101
    %s104 = sadd.s32 %s103, 1
    %p107 = scmp.eq.s32.totalorder %s13, 1
    %p108 = scmp.ne.s32.totalorder %s103, %s105
    %p109 = scmp.eq.s32.totalorder %s13, 0
    %p110 = por %p108, %p109
    %p111 = scmp.ne.s32.totalorder %s103, %s105
    %p112 = scmp.eq.s32.totalorder %s18, 1
    %p113 = por %p111, %p112
    %p114 = scmp.ne.s32.totalorder %s105, %s106
    %p115 = scmp.eq.s32.totalorder %s18, 0
    %p116 = por %p114, %p115
    %p117 = scmp.ne.s32.totalorder %s105, %s106
    %p118 = scmp.eq.s32.totalorder %s19, 1
    %p119 = por %p117, %p118
    %p121 = scmp.ne.s32.totalorder %s106, %s120
    %p122 = scmp.eq.s32.totalorder %s19, 0
    %p123 = por %p121, %p122
    %s124 = ssub.s32 %s20, %s32
    %s125 = ssub.s32 %s21, %s28
    %s126 = sor.u32 %s124, %s125
    %p127 = scmp.eq.s32.totalorder %s126, 0
    %s129 = sadd.s32 %s128, 1
    %s130 = scalar_select %p127, %s128, %s129
    %p133 = pneg %p127
    %p134 = scmp.eq.s32.totalorder %s13, 1
    %p135 = por %p133, %p134
    %p136 = scmp.ne.s32.totalorder %s128, %s131
    %p137 = scmp.eq.s32.totalorder %s13, 0
    %p138 = por %p136, %p137
    %p139 = scmp.ne.s32.totalorder %s128, %s131
    %p140 = scmp.eq.s32.totalorder %s18, 1
    %p141 = por %p139, %p140
    %p142 = scmp.ne.s32.totalorder %s131, %s132
    %p143 = scmp.eq.s32.totalorder %s18, 0
    %p144 = por %p142, %p143
    %p145 = scmp.ne.s32.totalorder %s131, %s132
    %p146 = scmp.eq.s32.totalorder %s19, 1
    %p147 = por %p145, %p146
    %p149 = scmp.ne.s32.totalorder %s132, %s148
    %p150 = scmp.eq.s32.totalorder %s19, 0
    %p151 = por %p149, %p150
    %s152 = ssub.s32 %s20, %s32
    %s153 = ssub.s32 %s21, %s28
    %s154 = sor.u32 %s152, %s153
    %p155 = scmp.eq.s32.totalorder %s154, 0
    %s157 = sadd.s32 %s156, 1
    %s158 = scalar_select %p155, %s156, %s157
    %p161 = pneg %p155
    %p162 = scmp.eq.s32.totalorder %s13, 1
    %p163 = por %p161, %p162
    %p164 = scmp.ne.s32.totalorder %s156, %s159
    %p165 = scmp.eq.s32.totalorder %s13, 0
    %p166 = por %p164, %p165
    %p167 = scmp.ne.s32.totalorder %s156, %s159
    %p168 = scmp.eq.s32.totalorder %s18, 1
    %p169 = por %p167, %p168
    %p170 = scmp.ne.s32.totalorder %s159, %s160
    %p171 = scmp.eq.s32.totalorder %s18, 0
    %p172 = por %p170, %p171
    %p173 = scmp.ne.s32.totalorder %s159, %s160
    %p174 = scmp.eq.s32.totalorder %s19, 1
    %p175 = por %p173, %p174
    %p177 = scmp.ne.s32.totalorder %s160, %s176
    %p178 = scmp.eq.s32.totalorder %s19, 0
    %p179 = por %p177, %p178
    %s180 = ssub.s32 %s20, %s32
    %s181 = ssub.s32 %s21, %s28
    %s182 = sor.u32 %s180, %s181
    %p183 = scmp.eq.s32.totalorder %s182, 0
    %s185 = sadd.s32 %s184, 1
    %s186 = scalar_select %p183, %s184, %s185
    %p189 = pneg %p183
    %p190 = scmp.eq.s32.totalorder %s13, 1
    %p191 = por %p189, %p190
    %p192 = scmp.ne.s32.totalorder %s184, %s187
    %p193 = scmp.eq.s32.totalorder %s13, 0
    %p194 = por %p192, %p193
    %p195 = scmp.ne.s32.totalorder %s184, %s187
    %p196 = scmp.eq.s32.totalorder %s18, 1
    %p197 = por %p195, %p196
    %p198 = scmp.ne.s32.totalorder %s187, %s188
    %p199 = scmp.eq.s32.totalorder %s18, 0
    %p200 = por %p198, %p199
    %p201 = scmp.ne.s32.totalorder %s187, %s188
    %p202 = scmp.eq.s32.totalorder %s19, 1
    %p203 = por %p201, %p202
    %p205 = scmp.ne.s32.totalorder %s188, %s204
    %p206 = scmp.eq.s32.totalorder %s19, 0
    %p207 = por %p205, %p206
    %p208 = scmp.le.s32.totalorder 1, %s13
    %p209 = scmp.lt.s32.totalorder %s13, 3
    %p210 = pnand %p208, %p209
    %p211 = pneg %p210
    // Predicated region
    $region9: #{diverse_fno2d_forward.11} parent=5 // pred_check
      _
    $region10: #{diverse_fno2d_forward.11} parent=5 // pred_check_branch
      %213 = sbr.rel (%p210) target = $region12
    $region11: #{diverse_fno2d_forward.11} parent=5 // pred_region
      %s214 = ssub.s32 %s13, 1
      // Predicated region
      $region13: #{diverse_fno2d_forward.11} parent=11 // pred_check
        %p215 = pneg %p74
      $region14: #{diverse_fno2d_forward.11} parent=11 // pred_check_branch
        %217 = sbr.rel (%p215) target = $region16
      $region15: #{diverse_fno2d_forward.11} parent=11 // pred_region
        _
      $region16: #{diverse_fno2d_forward.11} parent=11 // pred_fallthru
        _
      // Predicated region
      $region17: #{diverse_fno2d_forward.11} parent=11 // pred_check
        %p218 = pneg %p95
      $region18: #{diverse_fno2d_forward.11} parent=11 // pred_check_branch
        %220 = sbr.rel (%p218) target = $region20
      $region19: #{diverse_fno2d_forward.11} parent=11 // pred_region
        _
      $region20: #{diverse_fno2d_forward.11} parent=11 // pred_fallthru
        _
      // Predicated region
      $region21: #{diverse_fno2d_forward.11} parent=11 // pred_check
        %p221 = pneg %p116
      $region22: #{diverse_fno2d_forward.11} parent=11 // pred_check_branch
        %223 = sbr.rel (%p221) target = $region24
      $region23: #{diverse_fno2d_forward.11} parent=11 // pred_region
        _
      $region24: #{diverse_fno2d_forward.11} parent=11 // pred_fallthru
        _
    $region12: #{diverse_fno2d_forward.11} parent=5 // pred_fallthru
      _
    %p224 = scmp.lt.s32.totalorder %s13, 2
    // Predicated region
    $region25: #{diverse_fno2d_forward.11} parent=5 // pred_check
      %p225 = pneg %p224
    $region26: #{diverse_fno2d_forward.11} parent=5 // pred_check_branch
      %227 = sbr.rel (%p225) target = $region28
    $region27: #{diverse_fno2d_forward.11} parent=5 // pred_region
      // Predicated region
      $region29: #{diverse_fno2d_forward.11} parent=27 // pred_check
        %p228 = pneg %p47
      $region30: #{diverse_fno2d_forward.11} parent=27 // pred_check_branch
        %230 = sbr.rel (%p228) target = $region32
      $region31: #{diverse_fno2d_forward.11} parent=27 // pred_region
        %s231 = smul.u32 2, %s21
        %p232 = scmp.lt.s32.totalorder %s20, 1
        %s233 = scalar_select %p232, %s20, 1
        %p234 = scmp.lt.s32.totalorder %s231, 1
        %s235 = scalar_select %p234, %s231, 1
        %s236 = smul.addr %s233, 4
        %s237 = sadd.s32 %s235, %s236
        %s238 = smul.addr %s237, 8
        %s239 = scalar_lea.vmem %s0, %s238
        %s240 = smul.u32 2, %s21
      $region32: #{diverse_fno2d_forward.11} parent=27 // pred_fallthru
        _
    $region28: #{diverse_fno2d_forward.11} parent=5 // pred_fallthru
      _
    %p241 = scmp.le.s32.totalorder 1, %s13
    %p242 = scmp.lt.s32.totalorder %s13, 3
    %p243 = pnand %p241, %p242
    %p244 = pneg %p243
    // Predicated region
    $region33: #{diverse_fno2d_forward.11} parent=5 // pred_check
      _
    $region34: #{diverse_fno2d_forward.11} parent=5 // pred_check_branch
      %246 = sbr.rel (%p243) target = $region36
    $region35: #{diverse_fno2d_forward.11} parent=5 // pred_region
      %s247 = ssub.s32 %s13, 1
      %s248 = smul.u32 2, %s23
      %p249 = scmp.lt.s32.totalorder %s22, 1
      %s250 = scalar_select %p249, %s22, 1
      %p251 = scmp.lt.s32.totalorder %s248, 1
      %s252 = scalar_select %p251, %s248, 1
      %s253 = smul.addr %s250, 4
      %s254 = sadd.s32 %s252, %s253
      %s255 = smul.addr %s254, 8
      %s256 = scalar_lea.vmem %s0, %s255
      %p257 = pneg %p53
      %p258 = pneg %p50
      %p259 = pneg %p74
      %p260 = pneg %p71
      %p261 = pneg %p95
      %p262 = pneg %p92
      %p263 = pneg %p116
      %p264 = pneg %p113
      %p265 = pneg %p144
      %p266 = pneg %p141
      %s267 = smul.u32 2, %s23
      %p268 = scmp.lt.s32.totalorder %s22, 1
      %s269 = scalar_select %p268, %s22, 1
      %p270 = scmp.lt.s32.totalorder %s267, 1
      %s271 = scalar_select %p270, %s267, 1
      %s272 = smul.addr %s269, 32
      %s273 = sadd.s32 %s271, %s272
      %s274 = smul.addr %s273, 8
      %s275 = scalar_lea.vmem %s4, %s274
      %p276 = pneg %p172
      %p277 = pneg %p169
      %s278 = smul.u32 2, %s23
      %p279 = scmp.lt.s32.totalorder %s22, 1
      %s280 = scalar_select %p279, %s22, 1
      %p281 = scmp.lt.s32.totalorder %s278, 1
      %s282 = scalar_select %p281, %s278, 1
      %s283 = smul.addr %s280, 8
      %s284 = sadd.s32 %s282, %s283
      %s285 = smul.addr %s284, 8
      %s286 = scalar_lea.vmem %s5, %s285
      %p287 = pneg %p200
      %p288 = pneg %p197
      %s289 = smul.u32 2, %s23
      %p290 = scmp.lt.s32.totalorder %s22, 1
      %s291 = scalar_select %p290, %s22, 1
      %p292 = scmp.lt.s32.totalorder %s289, 1
      %s293 = scalar_select %p292, %s289, 1
      %s294 = smul.addr %s291, 2
      %s295 = sadd.s32 %s293, %s294
      %s296 = smul.addr %s295, 2
      %s297 = scalar_lea.vmem %s6, %s296
      %s298 = smul.u32 2, %s23
      %p299 = scmp.lt.s32.totalorder %s22, 1
      %s300 = scalar_select %p299, %s22, 1
      %p301 = scmp.lt.s32.totalorder %s298, 1
      %s302 = scalar_select %p301, %s298, 1
      %s303 = smul.addr %s300, 4
      %s304 = sadd.s32 %s302, %s303
      %s305 = smul.addr %s304, 8
      %s306 = scalar_lea.vmem %s0, %s305
      %s307 = smul.u32 2, %s23
      %s308 = smul.u32 2, %s23
      %p309 = scmp.lt.s32.totalorder %s22, 1
      %s310 = scalar_select %p309, %s22, 1
      %p311 = scmp.lt.s32.totalorder %s308, 1
      %s312 = scalar_select %p311, %s308, 1
      %s313 = smul.addr %s310, 32
      %s314 = sadd.s32 %s312, %s313
      %s315 = smul.addr %s314, 8
      %s316 = scalar_lea.vmem %s4, %s315
      %s317 = smul.u32 2, %s23
      %s318 = smul.u32 2, %s23
      %p319 = scmp.lt.s32.totalorder %s22, 1
      %s320 = scalar_select %p319, %s22, 1
      %p321 = scmp.lt.s32.totalorder %s318, 1
      %s322 = scalar_select %p321, %s318, 1
      %s323 = smul.addr %s320, 8
      %s324 = sadd.s32 %s322, %s323
      %s325 = smul.addr %s324, 8
      %s326 = scalar_lea.vmem %s5, %s325
      %s327 = smul.u32 2, %s23
      %s328 = smul.u32 2, %s23
      %p329 = scmp.lt.s32.totalorder %s22, 1
      %s330 = scalar_select %p329, %s22, 1
      %p331 = scmp.lt.s32.totalorder %s328, 1
      %s332 = scalar_select %p331, %s328, 1
      %s333 = smul.addr %s330, 2
      %s334 = sadd.s32 %s332, %s333
      %s335 = smul.addr %s334, 2
      %s336 = scalar_lea.vmem %s6, %s335
      %s337 = smul.u32 2, %s23
      %v338 = vld [vmem:[%s1] sm:$0xff]
      %v339 = vld [vmem:[%s1 + $0x8] sm:$0xff]
      %v340 = vld [vmem:[%s1 + $0x10] sm:$0xff]
      %v341 = vld [vmem:[%s1 + $0x18] sm:$0xff]
      %v342 = vld [vmem:[%s1 + $0x20] sm:$0xff]
      %v343 = vld [vmem:[%s1 + $0x28] sm:$0xff]
      %v344 = vld [vmem:[%s1 + $0x30] sm:$0xff]
      %v345 = vld [vmem:[%s1 + $0x38] sm:$0xff]
      %v346 = vld [vmem:[%s1 + $0x40] sm:$0xff]
      %v347 = vld [vmem:[%s1 + $0x48] sm:$0xff]
      %v348 = vld [vmem:[%s1 + $0x50] sm:$0xff]
      %v349 = vld [vmem:[%s1 + $0x58] sm:$0xff]
      %v350 = vld [vmem:[%s1 + $0x60] sm:$0xff]
      %v351 = vld [vmem:[%s1 + $0x68] sm:$0xff]
      %v352 = vld [vmem:[%s1 + $0x70] sm:$0xff]
      %v353 = vld [vmem:[%s1 + $0x78] sm:$0xff]
      %v354 = vld [vmem:[%s306] sm:$0xff]
      %v355 = vld [vmem:[%s306 + $0x8] sm:$0xff]
      %v356 = vld [vmem:[%s306 + $0x10] sm:$0xff]
      %v357 = vld [vmem:[%s306 + $0x18] sm:$0xff]
      %v358 = vld [vmem:[%s2] sm:$0xff]
      %v359 = vld [vmem:[%s2 + $0x8] sm:$0xff]
      %v360 = vld [vmem:[%s2 + $0x10] sm:$0xff]
      %v361 = vld [vmem:[%s2 + $0x18] sm:$0xff]
      %v362 = vld [vmem:[%s2 + $0x20] sm:$0xff]
      %v363 = vld [vmem:[%s2 + $0x28] sm:$0xff]
      %v364 = vld [vmem:[%s2 + $0x30] sm:$0xff]
      %v365 = vld [vmem:[%s2 + $0x38] sm:$0xff]
      %v366 = vld [vmem:[%s2 + $0x40] sm:$0xff]
      %v367 = vld [vmem:[%s2 + $0x48] sm:$0xff]
      %v368 = vld [vmem:[%s2 + $0x50] sm:$0xff]
      %v369 = vld [vmem:[%s2 + $0x58] sm:$0xff]
      %v370 = vld [vmem:[%s2 + $0x60] sm:$0xff]
      %v371 = vld [vmem:[%s2 + $0x68] sm:$0xff]
      %v372 = vld [vmem:[%s2 + $0x70] sm:$0xff]
      %v373 = vld [vmem:[%s2 + $0x78] sm:$0xff]
      %375 = vset.pattern.permute.xlu0 0
      %376 = vperm.xlu0 %375, %v358
      %v377 = vpop.permute.xlu0 %376
      %380 = vset.pattern.permute.xlu0 0
      %381 = vperm.xlu0 %380, %v359
      %v382 = vpop.permute.xlu0 %381
      %385 = vset.pattern.permute.xlu0 0
      %386 = vperm.xlu0 %385, %v360
      %v387 = vpop.permute.xlu0 %386
      %390 = vset.pattern.permute.xlu0 0
      %391 = vperm.xlu0 %390, %v361
      %v392 = vpop.permute.xlu0 %391
      %395 = vset.pattern.permute.xlu0 0
      %396 = vperm.xlu0 %395, %v362
      %v397 = vpop.permute.xlu0 %396
      %400 = vset.pattern.permute.xlu0 0
      %401 = vperm.xlu0 %400, %v363
      %v402 = vpop.permute.xlu0 %401
      %405 = vset.pattern.permute.xlu0 0
      %406 = vperm.xlu0 %405, %v364
      %v407 = vpop.permute.xlu0 %406
      %410 = vset.pattern.permute.xlu0 0
      %411 = vperm.xlu0 %410, %v365
      %v412 = vpop.permute.xlu0 %411
      %415 = vset.pattern.permute.xlu0 0
      %416 = vperm.xlu0 %415, %v366
      %v417 = vpop.permute.xlu0 %416
      %420 = vset.pattern.permute.xlu0 0
      %421 = vperm.xlu0 %420, %v367
      %v422 = vpop.permute.xlu0 %421
      %425 = vset.pattern.permute.xlu0 0
      %426 = vperm.xlu0 %425, %v368
      %v427 = vpop.permute.xlu0 %426
      %430 = vset.pattern.permute.xlu0 0
      %431 = vperm.xlu0 %430, %v369
      %v432 = vpop.permute.xlu0 %431
      %435 = vset.pattern.permute.xlu0 0
      %436 = vperm.xlu0 %435, %v370
      %v437 = vpop.permute.xlu0 %436
      %440 = vset.pattern.permute.xlu0 0
      %441 = vperm.xlu0 %440, %v371
      %v442 = vpop.permute.xlu0 %441
      %445 = vset.pattern.permute.xlu0 0
      %446 = vperm.xlu0 %445, %v372
      %v447 = vpop.permute.xlu0 %446
      %450 = vset.pattern.permute.xlu0 0
      %451 = vperm.xlu0 %450, %v373
      %v452 = vpop.permute.xlu0 %451
      %vm454 = vcmask 130048
      %v456 = vsel %vm454, %v338, 0
      %v459 = vsel %vm454, %v339, 0
      %v462 = vsel %vm454, %v340, 0
      %v465 = vsel %vm454, %v341, 0
      %v468 = vsel %vm454, %v342, 0
      %v471 = vsel %vm454, %v343, 0
      %v474 = vsel %vm454, %v344, 0
      %v477 = vsel %vm454, %v345, 0
      %v480 = vsel %vm454, %v346, 0
      %v483 = vsel %vm454, %v347, 0
      %v486 = vsel %vm454, %v348, 0
      %v489 = vsel %vm454, %v349, 0
      %v492 = vsel %vm454, %v350, 0
      %v495 = vsel %vm454, %v351, 0
      %v498 = vsel %vm454, %v352, 0
      %v501 = vsel %vm454, %v353, 0
      %503 = vmatpush.msra.mxu0 0.0
      %504 = vmatpush.msra.mxu0 0.0
      %505 = vmatpush.msra.mxu0 0.0
      %506 = vmatpush.msra.mxu0 0.0
      %507 = vmatpush.msra.mxu0 0.0
      %508 = vmatpush.msra.mxu0 0.0
      %509 = vmatpush.msra.mxu0 0.0
      %510 = vmatpush.msra.mxu0 0.0
      %511 = vmatpush.msra.mxu0 0.0
      %512 = vmatpush.msra.mxu0 0.0
      %513 = vmatpush.msra.mxu0 0.0
      %514 = vmatpush.msra.mxu0 0.0
      %515 = vmatpush.msra.mxu0 0.0
      %516 = vmatpush.msra.mxu0 0.0
      %v517 = vand.u32 %v356, 4294901760
      %518 = vmatpush.msra.mxu0 %v517
      %v519 = vand.u32 %v354, 4294901760
      %520 = vmatpush.msra.mxu0 %v519
      %v521 = vand.u32 %v456, 4294901760
      %v522 = vsub.f32 %v456, %v521
      %v523 = vand.u32 %v522, 4294901760
      %v524 = vsub.f32 %v522, %v523
      %v525 = vand.u32 %v524, 4294901760
      %526 = vmatmul.f32.gmra.mxu0 %v525
      %v527 = vpop.f32.mrf.mxu0
      %v528 = vadd.f32 %v377, %v527
      %v529 = vand.u32 %v459, 4294901760
      %v530 = vsub.f32 %v459, %v529
      %v531 = vand.u32 %v530, 4294901760
      %v532 = vsub.f32 %v530, %v531
      %v533 = vand.u32 %v532, 4294901760
      %534 = vmatmul.f32.gmra.mxu0 %v533
      %v535 = vpop.f32.mrf.mxu0
      %v536 = vadd.f32 %v382, %v535
      %v537 = vand.u32 %v462, 4294901760
      %v538 = vsub.f32 %v462, %v537
      %v539 = vand.u32 %v538, 4294901760
      %v540 = vsub.f32 %v538, %v539
      %v541 = vand.u32 %v540, 4294901760
      %542 = vmatmul.f32.gmra.mxu0 %v541
      %v543 = vpop.f32.mrf.mxu0
      %v544 = vadd.f32 %v387, %v543
      %v545 = vand.u32 %v465, 4294901760
      %v546 = vsub.f32 %v465, %v545
      %v547 = vand.u32 %v546, 4294901760
      %v548 = vsub.f32 %v546, %v547
      %v549 = vand.u32 %v548, 4294901760
      %550 = vmatmul.f32.gmra.mxu0 %v549
      %v551 = vpop.f32.mrf.mxu0
      %v552 = vadd.f32 %v392, %v551
      %v553 = vand.u32 %v468, 4294901760
      %v554 = vsub.f32 %v468, %v553
      %v555 = vand.u32 %v554, 4294901760
      %v556 = vsub.f32 %v554, %v555
      %v557 = vand.u32 %v556, 4294901760
      %558 = vmatmul.f32.gmra.mxu0 %v557
      %v559 = vpop.f32.mrf.mxu0
      %v560 = vadd.f32 %v397, %v559
      %v561 = vand.u32 %v471, 4294901760
      %v562 = vsub.f32 %v471, %v561
      %v563 = vand.u32 %v562, 4294901760
      %v564 = vsub.f32 %v562, %v563
      %v565 = vand.u32 %v564, 4294901760
      %566 = vmatmul.f32.gmra.mxu0 %v565
      %v567 = vpop.f32.mrf.mxu0
      %v568 = vadd.f32 %v402, %v567
      %v569 = vand.u32 %v474, 4294901760
      %v570 = vsub.f32 %v474, %v569
      %v571 = vand.u32 %v570, 4294901760
      %v572 = vsub.f32 %v570, %v571
      %v573 = vand.u32 %v572, 4294901760
      %574 = vmatmul.f32.gmra.mxu0 %v573
      %v575 = vpop.f32.mrf.mxu0
      %v576 = vadd.f32 %v407, %v575
      %v577 = vand.u32 %v477, 4294901760
      %v578 = vsub.f32 %v477, %v577
      %v579 = vand.u32 %v578, 4294901760
      %v580 = vsub.f32 %v578, %v579
      %v581 = vand.u32 %v580, 4294901760
      %582 = vmatmul.f32.gmra.mxu0 %v581
      %v583 = vpop.f32.mrf.mxu0
      %v584 = vadd.f32 %v412, %v583
      %v585 = vand.u32 %v480, 4294901760
      %v586 = vsub.f32 %v480, %v585
      %v587 = vand.u32 %v586, 4294901760
      %v588 = vsub.f32 %v586, %v587
      %v589 = vand.u32 %v588, 4294901760
      %590 = vmatmul.f32.gmra.mxu0 %v589
      %v591 = vpop.f32.mrf.mxu0
      %v592 = vadd.f32 %v417, %v591
      %v593 = vand.u32 %v483, 4294901760
      %v594 = vsub.f32 %v483, %v593
      %v595 = vand.u32 %v594, 4294901760
      %v596 = vsub.f32 %v594, %v595
      %v597 = vand.u32 %v596, 4294901760
      %598 = vmatmul.f32.gmra.mxu0 %v597
      %v599 = vpop.f32.mrf.mxu0
      %v600 = vadd.f32 %v422, %v599
      %v601 = vand.u32 %v486, 4294901760
      %v602 = vsub.f32 %v486, %v601
      %v603 = vand.u32 %v602, 4294901760
      %v604 = vsub.f32 %v602, %v603
      %v605 = vand.u32 %v604, 4294901760
      %606 = vmatmul.f32.gmra.mxu0 %v605
      %v607 = vpop.f32.mrf.mxu0
      %v608 = vadd.f32 %v427, %v607
      %v609 = vand.u32 %v489, 4294901760
      %v610 = vsub.f32 %v489, %v609
      %v611 = vand.u32 %v610, 4294901760
      %v612 = vsub.f32 %v610, %v611
      %v613 = vand.u32 %v612, 4294901760
      %614 = vmatmul.f32.gmra.mxu0 %v613
      %v615 = vpop.f32.mrf.mxu0
      %v616 = vadd.f32 %v432, %v615
      %v617 = vand.u32 %v492, 4294901760
      %v618 = vsub.f32 %v492, %v617
      %v619 = vand.u32 %v618, 4294901760
      %v620 = vsub.f32 %v618, %v619
      %v621 = vand.u32 %v620, 4294901760
      %622 = vmatmul.f32.gmra.mxu0 %v621
      %v623 = vpop.f32.mrf.mxu0
      %v624 = vadd.f32 %v437, %v623
      %v625 = vand.u32 %v495, 4294901760
      %v626 = vsub.f32 %v495, %v625
      %v627 = vand.u32 %v626, 4294901760
      %v628 = vsub.f32 %v626, %v627
      %v629 = vand.u32 %v628, 4294901760
      %630 = vmatmul.f32.gmra.mxu0 %v629
      %v631 = vpop.f32.mrf.mxu0
      %v632 = vadd.f32 %v442, %v631
      %v633 = vand.u32 %v498, 4294901760
      %v634 = vsub.f32 %v498, %v633
      %v635 = vand.u32 %v634, 4294901760
      %v636 = vsub.f32 %v634, %v635
      %v637 = vand.u32 %v636, 4294901760
      %638 = vmatmul.f32.gmra.mxu0 %v637
      %v639 = vpop.f32.mrf.mxu0
      %v640 = vadd.f32 %v447, %v639
      %v641 = vand.u32 %v501, 4294901760
      %v642 = vsub.f32 %v501, %v641
      %v643 = vand.u32 %v642, 4294901760
      %v644 = vsub.f32 %v642, %v643
      %v645 = vand.u32 %v644, 4294901760
      %646 = vmatmul.f32.gmra.mxu0 %v645
      %v647 = vpop.f32.mrf.mxu0
      %v648 = vadd.f32 %v452, %v647
      %649 = vdwg.mxu0
      %650 = vmatpush.msra.mxu0 0.0
      %651 = vmatpush.msra.mxu0 0.0
      %652 = vmatpush.msra.mxu0 0.0
      %653 = vmatpush.msra.mxu0 0.0
      %654 = vmatpush.msra.mxu0 0.0
      %655 = vmatpush.msra.mxu0 0.0
      %656 = vmatpush.msra.mxu0 0.0
      %657 = vmatpush.msra.mxu0 0.0
      %658 = vmatpush.msra.mxu0 0.0
      %659 = vmatpush.msra.mxu0 0.0
      %660 = vmatpush.msra.mxu0 0.0
      %661 = vmatpush.msra.mxu0 0.0
      %662 = vmatpush.msra.mxu0 0.0
      %663 = vmatpush.msra.mxu0 0.0
      %v664 = vand.u32 %v356, 4294901760
      %v665 = vsub.f32 %v356, %v664
      %v666 = vand.u32 %v665, 4294901760
      %v667 = vsub.f32 %v665, %v666
      %v668 = vand.u32 %v667, 4294901760
      %669 = vmatpush.msra.mxu0 %v668
      %v670 = vand.u32 %v354, 4294901760
      %v671 = vsub.f32 %v354, %v670
      %v672 = vand.u32 %v671, 4294901760
      %v673 = vsub.f32 %v671, %v672
      %v674 = vand.u32 %v673, 4294901760
      %675 = vmatpush.msra.mxu0 %v674
      %v676 = vand.u32 %v456, 4294901760
      %677 = vmatmul.f32.gmra.mxu0 %v676
      %v678 = vpop.f32.mrf.mxu0
      %v679 = vadd.f32 %v528, %v678
      %v680 = vand.u32 %v459, 4294901760
      %681 = vmatmul.f32.gmra.mxu0 %v680
      %v682 = vpop.f32.mrf.mxu0
      %v683 = vadd.f32 %v536, %v682
      %v684 = vand.u32 %v462, 4294901760
      %685 = vmatmul.f32.gmra.mxu0 %v684
      %v686 = vpop.f32.mrf.mxu0
      %v687 = vadd.f32 %v544, %v686
      %v688 = vand.u32 %v465, 4294901760
      %689 = vmatmul.f32.gmra.mxu0 %v688
      %v690 = vpop.f32.mrf.mxu0
      %v691 = vadd.f32 %v552, %v690
      %v692 = vand.u32 %v468, 4294901760
      %693 = vmatmul.f32.gmra.mxu0 %v692
      %v694 = vpop.f32.mrf.mxu0
      %v695 = vadd.f32 %v560, %v694
      %v696 = vand.u32 %v471, 4294901760
      %697 = vmatmul.f32.gmra.mxu0 %v696
      %v698 = vpop.f32.mrf.mxu0
      %v699 = vadd.f32 %v568, %v698
      %v700 = vand.u32 %v474, 4294901760
      %701 = vmatmul.f32.gmra.mxu0 %v700
      %v702 = vpop.f32.mrf.mxu0
      %v703 = vadd.f32 %v576, %v702
      %v704 = vand.u32 %v477, 4294901760
      %705 = vmatmul.f32.gmra.mxu0 %v704
      %v706 = vpop.f32.mrf.mxu0
      %v707 = vadd.f32 %v584, %v706
      %v708 = vand.u32 %v480, 4294901760
      %709 = vmatmul.f32.gmra.mxu0 %v708
      %v710 = vpop.f32.mrf.mxu0
      %v711 = vadd.f32 %v592, %v710
      %v712 = vand.u32 %v483, 4294901760
      %713 = vmatmul.f32.gmra.mxu0 %v712
      %v714 = vpop.f32.mrf.mxu0
      %v715 = vadd.f32 %v600, %v714
      %v716 = vand.u32 %v486, 4294901760
      %717 = vmatmul.f32.gmra.mxu0 %v716
      %v718 = vpop.f32.mrf.mxu0
      %v719 = vadd.f32 %v608, %v718
      %v720 = vand.u32 %v489, 4294901760
      %721 = vmatmul.f32.gmra.mxu0 %v720
      %v722 = vpop.f32.mrf.mxu0
      %v723 = vadd.f32 %v616, %v722
      %v724 = vand.u32 %v492, 4294901760
      %725 = vmatmul.f32.gmra.mxu0 %v724
      %v726 = vpop.f32.mrf.mxu0
      %v727 = vadd.f32 %v624, %v726
      %v728 = vand.u32 %v495, 4294901760
      %729 = vmatmul.f32.gmra.mxu0 %v728
      %v730 = vpop.f32.mrf.mxu0
      %v731 = vadd.f32 %v632, %v730
      %v732 = vand.u32 %v498, 4294901760
      %733 = vmatmul.f32.gmra.mxu0 %v732
      %v734 = vpop.f32.mrf.mxu0
      %v735 = vadd.f32 %v640, %v734
      %v736 = vand.u32 %v501, 4294901760
      %737 = vmatmul.f32.gmra.mxu0 %v736
      %v738 = vpop.f32.mrf.mxu0
      %v739 = vadd.f32 %v648, %v738
      %740 = vdwg.mxu0
      %741 = vmatpush.msra.mxu0 0.0
      %742 = vmatpush.msra.mxu0 0.0
      %743 = vmatpush.msra.mxu0 0.0
      %744 = vmatpush.msra.mxu0 0.0
      %745 = vmatpush.msra.mxu0 0.0
      %746 = vmatpush.msra.mxu0 0.0
      %747 = vmatpush.msra.mxu0 0.0
      %748 = vmatpush.msra.mxu0 0.0
      %749 = vmatpush.msra.mxu0 0.0
      %750 = vmatpush.msra.mxu0 0.0
      %751 = vmatpush.msra.mxu0 0.0
      %752 = vmatpush.msra.mxu0 0.0
      %753 = vmatpush.msra.mxu0 0.0
      %754 = vmatpush.msra.mxu0 0.0
      %v755 = vand.u32 %v356, 4294901760
      %v756 = vsub.f32 %v356, %v755
      %757 = vmatpush.msra.mxu0 %v756
      %v758 = vand.u32 %v354, 4294901760
      %v759 = vsub.f32 %v354, %v758
      %760 = vmatpush.msra.mxu0 %v759
      %v761 = vand.u32 %v456, 4294901760
      %v762 = vsub.f32 %v456, %v761
      %763 = vmatmul.f32.gmra.mxu0 %v762
      %v764 = vpop.f32.mrf.mxu0
      %v765 = vadd.f32 %v679, %v764
      %v766 = vand.u32 %v459, 4294901760
      %v767 = vsub.f32 %v459, %v766
      %768 = vmatmul.f32.gmra.mxu0 %v767
      %v769 = vpop.f32.mrf.mxu0
      %v770 = vadd.f32 %v683, %v769
      %v771 = vand.u32 %v462, 4294901760
      %v772 = vsub.f32 %v462, %v771
      %773 = vmatmul.f32.gmra.mxu0 %v772
      %v774 = vpop.f32.mrf.mxu0
      %v775 = vadd.f32 %v687, %v774
      %v776 = vand.u32 %v465, 4294901760
      %v777 = vsub.f32 %v465, %v776
      %778 = vmatmul.f32.gmra.mxu0 %v777
      %v779 = vpop.f32.mrf.mxu0
      %v780 = vadd.f32 %v691, %v779
      %v781 = vand.u32 %v468, 4294901760
      %v782 = vsub.f32 %v468, %v781
      %783 = vmatmul.f32.gmra.mxu0 %v782
      %v784 = vpop.f32.mrf.mxu0
      %v785 = vadd.f32 %v695, %v784
      %v786 = vand.u32 %v471, 4294901760
      %v787 = vsub.f32 %v471, %v786
      %788 = vmatmul.f32.gmra.mxu0 %v787
      %v789 = vpop.f32.mrf.mxu0
      %v790 = vadd.f32 %v699, %v789
      %v791 = vand.u32 %v474, 4294901760
      %v792 = vsub.f32 %v474, %v791
      %793 = vmatmul.f32.gmra.mxu0 %v792
      %v794 = vpop.f32.mrf.mxu0
      %v795 = vadd.f32 %v703, %v794
      %v796 = vand.u32 %v477, 4294901760
      %v797 = vsub.f32 %v477, %v796
      %798 = vmatmul.f32.gmra.mxu0 %v797
      %v799 = vpop.f32.mrf.mxu0
      %v800 = vadd.f32 %v707, %v799
      %v801 = vand.u32 %v480, 4294901760
      %v802 = vsub.f32 %v480, %v801
      %803 = vmatmul.f32.gmra.mxu0 %v802
      %v804 = vpop.f32.mrf.mxu0
      %v805 = vadd.f32 %v711, %v804
      %v806 = vand.u32 %v483, 4294901760
      %v807 = vsub.f32 %v483, %v806
      %808 = vmatmul.f32.gmra.mxu0 %v807
      %v809 = vpop.f32.mrf.mxu0
      %v810 = vadd.f32 %v715, %v809
      %v811 = vand.u32 %v486, 4294901760
      %v812 = vsub.f32 %v486, %v811
      %813 = vmatmul.f32.gmra.mxu0 %v812
      %v814 = vpop.f32.mrf.mxu0
      %v815 = vadd.f32 %v719, %v814
      %v816 = vand.u32 %v489, 4294901760
      %v817 = vsub.f32 %v489, %v816
      %818 = vmatmul.f32.gmra.mxu0 %v817
      %v819 = vpop.f32.mrf.mxu0
      %v820 = vadd.f32 %v723, %v819
      %v821 = vand.u32 %v492, 4294901760
      %v822 = vsub.f32 %v492, %v821
      %823 = vmatmul.f32.gmra.mxu0 %v822
      %v824 = vpop.f32.mrf.mxu0
      %v825 = vadd.f32 %v727, %v824
      %v826 = vand.u32 %v495, 4294901760
      %v827 = vsub.f32 %v495, %v826
      %828 = vmatmul.f32.gmra.mxu0 %v827
      %v829 = vpop.f32.mrf.mxu0
      %v830 = vadd.f32 %v731, %v829
      %v831 = vand.u32 %v498, 4294901760
      %v832 = vsub.f32 %v498, %v831
      %833 = vmatmul.f32.gmra.mxu0 %v832
      %v834 = vpop.f32.mrf.mxu0
      %v835 = vadd.f32 %v735, %v834
      %v836 = vand.u32 %v501, 4294901760
      %v837 = vsub.f32 %v501, %v836
      %838 = vmatmul.f32.gmra.mxu0 %v837
      %v839 = vpop.f32.mrf.mxu0
      %v840 = vadd.f32 %v739, %v839
      %841 = vdwg.mxu0
      %842 = vmatpush.msra.mxu0 0.0
      %843 = vmatpush.msra.mxu0 0.0
      %844 = vmatpush.msra.mxu0 0.0
      %845 = vmatpush.msra.mxu0 0.0
      %846 = vmatpush.msra.mxu0 0.0
      %847 = vmatpush.msra.mxu0 0.0
      %848 = vmatpush.msra.mxu0 0.0
      %849 = vmatpush.msra.mxu0 0.0
      %850 = vmatpush.msra.mxu0 0.0
      %851 = vmatpush.msra.mxu0 0.0
      %852 = vmatpush.msra.mxu0 0.0
      %853 = vmatpush.msra.mxu0 0.0
      %854 = vmatpush.msra.mxu0 0.0
      %855 = vmatpush.msra.mxu0 0.0
      %v856 = vand.u32 %v356, 4294901760
      %857 = vmatpush.msra.mxu0 %v856
      %v858 = vand.u32 %v354, 4294901760
      %859 = vmatpush.msra.mxu0 %v858
      %v860 = vand.u32 %v456, 4294901760
      %v861 = vsub.f32 %v456, %v860
      %v862 = vand.u32 %v861, 4294901760
      %863 = vmatmul.f32.gmra.mxu0 %v862
      %v864 = vpop.f32.mrf.mxu0
      %v865 = vadd.f32 %v765, %v864
      %v866 = vand.u32 %v459, 4294901760
      %v867 = vsub.f32 %v459, %v866
      %v868 = vand.u32 %v867, 4294901760
      %869 = vmatmul.f32.gmra.mxu0 %v868
      %v870 = vpop.f32.mrf.mxu0
      %v871 = vadd.f32 %v770, %v870
      %v872 = vand.u32 %v462, 4294901760
      %v873 = vsub.f32 %v462, %v872
      %v874 = vand.u32 %v873, 4294901760
      %875 = vmatmul.f32.gmra.mxu0 %v874
      %v876 = vpop.f32.mrf.mxu0
      %v877 = vadd.f32 %v775, %v876
      %v878 = vand.u32 %v465, 4294901760
      %v879 = vsub.f32 %v465, %v878
      %v880 = vand.u32 %v879, 4294901760
      %881 = vmatmul.f32.gmra.mxu0 %v880
      %v882 = vpop.f32.mrf.mxu0
      %v883 = vadd.f32 %v780, %v882
      %v884 = vand.u32 %v468, 4294901760
      %v885 = vsub.f32 %v468, %v884
      %v886 = vand.u32 %v885, 4294901760
      %887 = vmatmul.f32.gmra.mxu0 %v886
      %v888 = vpop.f32.mrf.mxu0
      %v889 = vadd.f32 %v785, %v888
      %v890 = vand.u32 %v471, 4294901760
      %v891 = vsub.f32 %v471, %v890
      %v892 = vand.u32 %v891, 4294901760
      %893 = vmatmul.f32.gmra.mxu0 %v892
      %v894 = vpop.f32.mrf.mxu0
      %v895 = vadd.f32 %v790, %v894
      %v896 = vand.u32 %v474, 4294901760
      %v897 = vsub.f32 %v474, %v896
      %v898 = vand.u32 %v897, 4294901760
      %899 = vmatmul.f32.gmra.mxu0 %v898
      %v900 = vpop.f32.mrf.mxu0
      %v901 = vadd.f32 %v795, %v900
      %v902 = vand.u32 %v477, 4294901760
      %v903 = vsub.f32 %v477, %v902
      %v904 = vand.u32 %v903, 4294901760
      %905 = vmatmul.f32.gmra.mxu0 %v904
      %v906 = vpop.f32.mrf.mxu0
      %v907 = vadd.f32 %v800, %v906
      %v908 = vand.u32 %v480, 4294901760
      %v909 = vsub.f32 %v480, %v908
      %v910 = vand.u32 %v909, 4294901760
      %911 = vmatmul.f32.gmra.mxu0 %v910
      %v912 = vpop.f32.mrf.mxu0
      %v913 = vadd.f32 %v805, %v912
      %v914 = vand.u32 %v483, 4294901760
      %v915 = vsub.f32 %v483, %v914
      %v916 = vand.u32 %v915, 4294901760
      %917 = vmatmul.f32.gmra.mxu0 %v916
      %v918 = vpop.f32.mrf.mxu0
      %v919 = vadd.f32 %v810, %v918
      %v920 = vand.u32 %v486, 4294901760
      %v921 = vsub.f32 %v486, %v920
      %v922 = vand.u32 %v921, 4294901760
      %923 = vmatmul.f32.gmra.mxu0 %v922
      %v924 = vpop.f32.mrf.mxu0
      %v925 = vadd.f32 %v815, %v924
      %v926 = vand.u32 %v489, 4294901760
      %v927 = vsub.f32 %v489, %v926
      %v928 = vand.u32 %v927, 4294901760
      %929 = vmatmul.f32.gmra.mxu0 %v928
      %v930 = vpop.f32.mrf.mxu0
      %v931 = vadd.f32 %v820, %v930
      %v932 = vand.u32 %v492, 4294901760
      %v933 = vsub.f32 %v492, %v932
      %v934 = vand.u32 %v933, 4294901760
      %935 = vmatmul.f32.gmra.mxu0 %v934
      %v936 = vpop.f32.mrf.mxu0
      %v937 = vadd.f32 %v825, %v936
      %v938 = vand.u32 %v495, 4294901760
      %v939 = vsub.f32 %v495, %v938
      %v940 = vand.u32 %v939, 4294901760
      %941 = vmatmul.f32.gmra.mxu0 %v940
      %v942 = vpop.f32.mrf.mxu0
      %v943 = vadd.f32 %v830, %v942
      %v944 = vand.u32 %v498, 4294901760
      %v945 = vsub.f32 %v498, %v944
      %v946 = vand.u32 %v945, 4294901760
      %947 = vmatmul.f32.gmra.mxu0 %v946
      %v948 = vpop.f32.mrf.mxu0
      %v949 = vadd.f32 %v835, %v948
      %v950 = vand.u32 %v501, 4294901760
      %v951 = vsub.f32 %v501, %v950
      %v952 = vand.u32 %v951, 4294901760
      %953 = vmatmul.f32.gmra.mxu0 %v952
      %v954 = vpop.f32.mrf.mxu0
      %v955 = vadd.f32 %v840, %v954
      %956 = vdwg.mxu0
      %957 = vmatpush.msra.mxu0 0.0
      %958 = vmatpush.msra.mxu0 0.0
      %959 = vmatpush.msra.mxu0 0.0
      %960 = vmatpush.msra.mxu0 0.0
      %961 = vmatpush.msra.mxu0 0.0
      %962 = vmatpush.msra.mxu0 0.0
      %963 = vmatpush.msra.mxu0 0.0
      %964 = vmatpush.msra.mxu0 0.0
      %965 = vmatpush.msra.mxu0 0.0
      %966 = vmatpush.msra.mxu0 0.0
      %967 = vmatpush.msra.mxu0 0.0
      %968 = vmatpush.msra.mxu0 0.0
      %969 = vmatpush.msra.mxu0 0.0
      %970 = vmatpush.msra.mxu0 0.0
      %v971 = vand.u32 %v356, 4294901760
      %v972 = vsub.f32 %v356, %v971
      %v973 = vand.u32 %v972, 4294901760
      %974 = vmatpush.msra.mxu0 %v973
      %v975 = vand.u32 %v354, 4294901760
      %v976 = vsub.f32 %v354, %v975
      %v977 = vand.u32 %v976, 4294901760
      %978 = vmatpush.msra.mxu0 %v977
      %v979 = vand.u32 %v456, 4294901760
      %980 = vmatmul.f32.gmra.mxu0 %v979
      %v981 = vpop.f32.mrf.mxu0
      %v982 = vadd.f32 %v865, %v981
      %v983 = vand.u32 %v459, 4294901760
      %984 = vmatmul.f32.gmra.mxu0 %v983
      %v985 = vpop.f32.mrf.mxu0
      %v986 = vadd.f32 %v871, %v985
      %v987 = vand.u32 %v462, 4294901760
      %988 = vmatmul.f32.gmra.mxu0 %v987
      %v989 = vpop.f32.mrf.mxu0
      %v990 = vadd.f32 %v877, %v989
      %v991 = vand.u32 %v465, 4294901760
      %992 = vmatmul.f32.gmra.mxu0 %v991
      %v993 = vpop.f32.mrf.mxu0
      %v994 = vadd.f32 %v883, %v993
      %v995 = vand.u32 %v468, 4294901760
      %996 = vmatmul.f32.gmra.mxu0 %v995
      %v997 = vpop.f32.mrf.mxu0
      %v998 = vadd.f32 %v889, %v997
      %v999 = vand.u32 %v471, 4294901760
      %1000 = vmatmul.f32.gmra.mxu0 %v999
      %v1001 = vpop.f32.mrf.mxu0
      %v1002 = vadd.f32 %v895, %v1001
      %v1003 = vand.u32 %v474, 4294901760
      %1004 = vmatmul.f32.gmra.mxu0 %v1003
      %v1005 = vpop.f32.mrf.mxu0
      %v1006 = vadd.f32 %v901, %v1005
      %v1007 = vand.u32 %v477, 4294901760
      %1008 = vmatmul.f32.gmra.mxu0 %v1007
      %v1009 = vpop.f32.mrf.mxu0
      %v1010 = vadd.f32 %v907, %v1009
      %v1011 = vand.u32 %v480, 4294901760
      %1012 = vmatmul.f32.gmra.mxu0 %v1011
      %v1013 = vpop.f32.mrf.mxu0
      %v1014 = vadd.f32 %v913, %v1013
      %v1015 = vand.u32 %v483, 4294901760
      %1016 = vmatmul.f32.gmra.mxu0 %v1015
      %v1017 = vpop.f32.mrf.mxu0
      %v1018 = vadd.f32 %v919, %v1017
      %v1019 = vand.u32 %v486, 4294901760
      %1020 = vmatmul.f32.gmra.mxu0 %v1019
      %v1021 = vpop.f32.mrf.mxu0
      %v1022 = vadd.f32 %v925, %v1021
      %v1023 = vand.u32 %v489, 4294901760
      %1024 = vmatmul.f32.gmra.mxu0 %v1023
      %v1025 = vpop.f32.mrf.mxu0
      %v1026 = vadd.f32 %v931, %v1025
      %v1027 = vand.u32 %v492, 4294901760
      %1028 = vmatmul.f32.gmra.mxu0 %v1027
      %v1029 = vpop.f32.mrf.mxu0
      %v1030 = vadd.f32 %v937, %v1029
      %v1031 = vand.u32 %v495, 4294901760
      %1032 = vmatmul.f32.gmra.mxu0 %v1031
      %v1033 = vpop.f32.mrf.mxu0
      %v1034 = vadd.f32 %v943, %v1033
      %v1035 = vand.u32 %v498, 4294901760
      %1036 = vmatmul.f32.gmra.mxu0 %v1035
      %v1037 = vpop.f32.mrf.mxu0
      %v1038 = vadd.f32 %v949, %v1037
      %v1039 = vand.u32 %v501, 4294901760
      %1040 = vmatmul.f32.gmra.mxu0 %v1039
      %v1041 = vpop.f32.mrf.mxu0
      %v1042 = vadd.f32 %v955, %v1041
      %1043 = vdwg.mxu0
      %1044 = vmatpush.msra.mxu0 0.0
      %1045 = vmatpush.msra.mxu0 0.0
      %1046 = vmatpush.msra.mxu0 0.0
      %1047 = vmatpush.msra.mxu0 0.0
      %1048 = vmatpush.msra.mxu0 0.0
      %1049 = vmatpush.msra.mxu0 0.0
      %1050 = vmatpush.msra.mxu0 0.0
      %1051 = vmatpush.msra.mxu0 0.0
      %1052 = vmatpush.msra.mxu0 0.0
      %1053 = vmatpush.msra.mxu0 0.0
      %1054 = vmatpush.msra.mxu0 0.0
      %1055 = vmatpush.msra.mxu0 0.0
      %1056 = vmatpush.msra.mxu0 0.0
      %1057 = vmatpush.msra.mxu0 0.0
      %v1058 = vand.u32 %v356, 4294901760
      %1059 = vmatpush.msra.mxu0 %v1058
      %v1060 = vand.u32 %v354, 4294901760
      %1061 = vmatpush.msra.mxu0 %v1060
      %v1062 = vand.u32 %v456, 4294901760
      %1063 = vmatmul.f32.gmra.mxu0 %v1062
      %v1064 = vpop.f32.mrf.mxu0
      %v1065 = vadd.f32 %v982, %v1064
      %v1066 = vand.u32 %v459, 4294901760
      %1067 = vmatmul.f32.gmra.mxu0 %v1066
      %v1068 = vpop.f32.mrf.mxu0
      %v1069 = vadd.f32 %v986, %v1068
      %v1070 = vand.u32 %v462, 4294901760
      %1071 = vmatmul.f32.gmra.mxu0 %v1070
      %v1072 = vpop.f32.mrf.mxu0
      %v1073 = vadd.f32 %v990, %v1072
      %v1074 = vand.u32 %v465, 4294901760
      %1075 = vmatmul.f32.gmra.mxu0 %v1074
      %v1076 = vpop.f32.mrf.mxu0
      %v1077 = vadd.f32 %v994, %v1076
      %v1078 = vand.u32 %v468, 4294901760
      %1079 = vmatmul.f32.gmra.mxu0 %v1078
      %v1080 = vpop.f32.mrf.mxu0
      %v1081 = vadd.f32 %v998, %v1080
      %v1082 = vand.u32 %v471, 4294901760
      %1083 = vmatmul.f32.gmra.mxu0 %v1082
      %v1084 = vpop.f32.mrf.mxu0
      %v1085 = vadd.f32 %v1002, %v1084
      %v1086 = vand.u32 %v474, 4294901760
      %1087 = vmatmul.f32.gmra.mxu0 %v1086
      %v1088 = vpop.f32.mrf.mxu0
      %v1089 = vadd.f32 %v1006, %v1088
      %v1090 = vand.u32 %v477, 4294901760
      %1091 = vmatmul.f32.gmra.mxu0 %v1090
      %v1092 = vpop.f32.mrf.mxu0
      %v1093 = vadd.f32 %v1010, %v1092
      %v1094 = vand.u32 %v480, 4294901760
      %1095 = vmatmul.f32.gmra.mxu0 %v1094
      %v1096 = vpop.f32.mrf.mxu0
      %v1097 = vadd.f32 %v1014, %v1096
      %v1098 = vand.u32 %v483, 4294901760
      %1099 = vmatmul.f32.gmra.mxu0 %v1098
      %v1100 = vpop.f32.mrf.mxu0
      %v1101 = vadd.f32 %v1018, %v1100
      %v1102 = vand.u32 %v486, 4294901760
      %1103 = vmatmul.f32.gmra.mxu0 %v1102
      %v1104 = vpop.f32.mrf.mxu0
      %v1105 = vadd.f32 %v1022, %v1104
      %v1106 = vand.u32 %v489, 4294901760
      %1107 = vmatmul.f32.gmra.mxu0 %v1106
      %v1108 = vpop.f32.mrf.mxu0
      %v1109 = vadd.f32 %v1026, %v1108
      %v1110 = vand.u32 %v492, 4294901760
      %1111 = vmatmul.f32.gmra.mxu0 %v1110
      %v1112 = vpop.f32.mrf.mxu0
      %v1113 = vadd.f32 %v1030, %v1112
      %v1114 = vand.u32 %v495, 4294901760
      %1115 = vmatmul.f32.gmra.mxu0 %v1114
      %v1116 = vpop.f32.mrf.mxu0
      %v1117 = vadd.f32 %v1034, %v1116
      %v1118 = vand.u32 %v498, 4294901760
      %1119 = vmatmul.f32.gmra.mxu0 %v1118
      %v1120 = vpop.f32.mrf.mxu0
      %v1121 = vadd.f32 %v1038, %v1120
      %v1122 = vand.u32 %v501, 4294901760
      %1123 = vmatmul.f32.gmra.mxu0 %v1122
      %v1124 = vpop.f32.mrf.mxu0
      %v1125 = vadd.f32 %v1042, %v1124
      %1126 = vdwg.mxu0
      %1127 = vmatpush.msra.mxu0 0.0
      %1128 = vmatpush.msra.mxu0 0.0
      %1129 = vmatpush.msra.mxu0 0.0
      %1130 = vmatpush.msra.mxu0 0.0
      %1131 = vmatpush.msra.mxu0 0.0
      %1132 = vmatpush.msra.mxu0 0.0
      %1133 = vmatpush.msra.mxu0 0.0
      %1134 = vmatpush.msra.mxu0 0.0
      %1135 = vmatpush.msra.mxu0 0.0
      %1136 = vmatpush.msra.mxu0 0.0
      %1137 = vmatpush.msra.mxu0 0.0
      %1138 = vmatpush.msra.mxu0 0.0
      %1139 = vmatpush.msra.mxu0 0.0
      %1140 = vmatpush.msra.mxu0 0.0
      %v1141 = vand.u32 %v357, 4294901760
      %1142 = vmatpush.msra.mxu0 %v1141
      %v1143 = vand.u32 %v355, 4294901760
      %1144 = vmatpush.msra.mxu0 %v1143
      %v1145 = vand.u32 %v456, 4294901760
      %v1146 = vsub.f32 %v456, %v1145
      %v1147 = vand.u32 %v1146, 4294901760
      %v1148 = vsub.f32 %v1146, %v1147
      %v1149 = vand.u32 %v1148, 4294901760
      %1150 = vmatmul.f32.gmra.mxu0 %v1149
      %v1151 = vpop.f32.mrf.mxu0
      %v1152 = vadd.f32 %v377, %v1151
      %v1153 = vand.u32 %v459, 4294901760
      %v1154 = vsub.f32 %v459, %v1153
      %v1155 = vand.u32 %v1154, 4294901760
      %v1156 = vsub.f32 %v1154, %v1155
      %v1157 = vand.u32 %v1156, 4294901760
      %1158 = vmatmul.f32.gmra.mxu0 %v1157
      %v1159 = vpop.f32.mrf.mxu0
      %v1160 = vadd.f32 %v382, %v1159
      %v1161 = vand.u32 %v462, 4294901760
      %v1162 = vsub.f32 %v462, %v1161
      %v1163 = vand.u32 %v1162, 4294901760
      %v1164 = vsub.f32 %v1162, %v1163
      %v1165 = vand.u32 %v1164, 4294901760
      %1166 = vmatmul.f32.gmra.mxu0 %v1165
      %v1167 = vpop.f32.mrf.mxu0
      %v1168 = vadd.f32 %v387, %v1167
      %v1169 = vand.u32 %v465, 4294901760
      %v1170 = vsub.f32 %v465, %v1169
      %v1171 = vand.u32 %v1170, 4294901760
      %v1172 = vsub.f32 %v1170, %v1171
      %v1173 = vand.u32 %v1172, 4294901760
      %1174 = vmatmul.f32.gmra.mxu0 %v1173
      %v1175 = vpop.f32.mrf.mxu0
      %v1176 = vadd.f32 %v392, %v1175
      %v1177 = vand.u32 %v468, 4294901760
      %v1178 = vsub.f32 %v468, %v1177
      %v1179 = vand.u32 %v1178, 4294901760
      %v1180 = vsub.f32 %v1178, %v1179
      %v1181 = vand.u32 %v1180, 4294901760
      %1182 = vmatmul.f32.gmra.mxu0 %v1181
      %v1183 = vpop.f32.mrf.mxu0
      %v1184 = vadd.f32 %v397, %v1183
      %v1185 = vand.u32 %v471, 4294901760
      %v1186 = vsub.f32 %v471, %v1185
      %v1187 = vand.u32 %v1186, 4294901760
      %v1188 = vsub.f32 %v1186, %v1187
      %v1189 = vand.u32 %v1188, 4294901760
      %1190 = vmatmul.f32.gmra.mxu0 %v1189
      %v1191 = vpop.f32.mrf.mxu0
      %v1192 = vadd.f32 %v402, %v1191
      %v1193 = vand.u32 %v474, 4294901760
      %v1194 = vsub.f32 %v474, %v1193
      %v1195 = vand.u32 %v1194, 4294901760
      %v1196 = vsub.f32 %v1194, %v1195
      %v1197 = vand.u32 %v1196, 4294901760
      %1198 = vmatmul.f32.gmra.mxu0 %v1197
      %v1199 = vpop.f32.mrf.mxu0
      %v1200 = vadd.f32 %v407, %v1199
      %v1201 = vand.u32 %v477, 4294901760
      %v1202 = vsub.f32 %v477, %v1201
      %v1203 = vand.u32 %v1202, 4294901760
      %v1204 = vsub.f32 %v1202, %v1203
      %v1205 = vand.u32 %v1204, 4294901760
      %1206 = vmatmul.f32.gmra.mxu0 %v1205
      %v1207 = vpop.f32.mrf.mxu0
      %v1208 = vadd.f32 %v412, %v1207
      %v1209 = vand.u32 %v480, 4294901760
      %v1210 = vsub.f32 %v480, %v1209
      %v1211 = vand.u32 %v1210, 4294901760
      %v1212 = vsub.f32 %v1210, %v1211
      %v1213 = vand.u32 %v1212, 4294901760
      %1214 = vmatmul.f32.gmra.mxu0 %v1213
      %v1215 = vpop.f32.mrf.mxu0
      %v1216 = vadd.f32 %v417, %v1215
      %v1217 = vand.u32 %v483, 4294901760
      %v1218 = vsub.f32 %v483, %v1217
      %v1219 = vand.u32 %v1218, 4294901760
      %v1220 = vsub.f32 %v1218, %v1219
      %v1221 = vand.u32 %v1220, 4294901760
      %1222 = vmatmul.f32.gmra.mxu0 %v1221
      %v1223 = vpop.f32.mrf.mxu0
      %v1224 = vadd.f32 %v422, %v1223
      %v1225 = vand.u32 %v486, 4294901760
      %v1226 = vsub.f32 %v486, %v1225
      %v1227 = vand.u32 %v1226, 4294901760
      %v1228 = vsub.f32 %v1226, %v1227
      %v1229 = vand.u32 %v1228, 4294901760
      %1230 = vmatmul.f32.gmra.mxu0 %v1229
      %v1231 = vpop.f32.mrf.mxu0
      %v1232 = vadd.f32 %v427, %v1231
      %v1233 = vand.u32 %v489, 4294901760
      %v1234 = vsub.f32 %v489, %v1233
      %v1235 = vand.u32 %v1234, 4294901760
      %v1236 = vsub.f32 %v1234, %v1235
      %v1237 = vand.u32 %v1236, 4294901760
      %1238 = vmatmul.f32.gmra.mxu0 %v1237
      %v1239 = vpop.f32.mrf.mxu0
      %v1240 = vadd.f32 %v432, %v1239
      %v1241 = vand.u32 %v492, 4294901760
      %v1242 = vsub.f32 %v492, %v1241
      %v1243 = vand.u32 %v1242, 4294901760
      %v1244 = vsub.f32 %v1242, %v1243
      %v1245 = vand.u32 %v1244, 4294901760
      %1246 = vmatmul.f32.gmra.mxu0 %v1245
      %v1247 = vpop.f32.mrf.mxu0
      %v1248 = vadd.f32 %v437, %v1247
      %v1249 = vand.u32 %v495, 4294901760
      %v1250 = vsub.f32 %v495, %v1249
      %v1251 = vand.u32 %v1250, 4294901760
      %v1252 = vsub.f32 %v1250, %v1251
      %v1253 = vand.u32 %v1252, 4294901760
      %1254 = vmatmul.f32.gmra.mxu0 %v1253
      %v1255 = vpop.f32.mrf.mxu0
      %v1256 = vadd.f32 %v442, %v1255
      %v1257 = vand.u32 %v498, 4294901760
      %v1258 = vsub.f32 %v498, %v1257
      %v1259 = vand.u32 %v1258, 4294901760
      %v1260 = vsub.f32 %v1258, %v1259
      %v1261 = vand.u32 %v1260, 4294901760
      %1262 = vmatmul.f32.gmra.mxu0 %v1261
      %v1263 = vpop.f32.mrf.mxu0
      %v1264 = vadd.f32 %v447, %v1263
      %v1265 = vand.u32 %v501, 4294901760
      %v1266 = vsub.f32 %v501, %v1265
      %v1267 = vand.u32 %v1266, 4294901760
      %v1268 = vsub.f32 %v1266, %v1267
      %v1269 = vand.u32 %v1268, 4294901760
      %1270 = vmatmul.f32.gmra.mxu0 %v1269
      %v1271 = vpop.f32.mrf.mxu0
      %v1272 = vadd.f32 %v452, %v1271
      %1273 = vdwg.mxu0
      %1274 = vmatpush.msra.mxu0 0.0
      %1275 = vmatpush.msra.mxu0 0.0
      %1276 = vmatpush.msra.mxu0 0.0
      %1277 = vmatpush.msra.mxu0 0.0
      %1278 = vmatpush.msra.mxu0 0.0
      %1279 = vmatpush.msra.mxu0 0.0
      %1280 = vmatpush.msra.mxu0 0.0
      %1281 = vmatpush.msra.mxu0 0.0
      %1282 = vmatpush.msra.mxu0 0.0
      %1283 = vmatpush.msra.mxu0 0.0
      %1284 = vmatpush.msra.mxu0 0.0
      %1285 = vmatpush.msra.mxu0 0.0
      %1286 = vmatpush.msra.mxu0 0.0
      %1287 = vmatpush.msra.mxu0 0.0
      %v1288 = vand.u32 %v357, 4294901760
      %v1289 = vsub.f32 %v357, %v1288
      %v1290 = vand.u32 %v1289, 4294901760
      %v1291 = vsub.f32 %v1289, %v1290
      %v1292 = vand.u32 %v1291, 4294901760
      %1293 = vmatpush.msra.mxu0 %v1292
      %v1294 = vand.u32 %v355, 4294901760
      %v1295 = vsub.f32 %v355, %v1294
      %v1296 = vand.u32 %v1295, 4294901760
      %v1297 = vsub.f32 %v1295, %v1296
      %v1298 = vand.u32 %v1297, 4294901760
      %1299 = vmatpush.msra.mxu0 %v1298
      %v1300 = vand.u32 %v456, 4294901760
      %1301 = vmatmul.f32.gmra.mxu0 %v1300
      %v1302 = vpop.f32.mrf.mxu0
      %v1303 = vadd.f32 %v1152, %v1302
      %v1304 = vand.u32 %v459, 4294901760
      %1305 = vmatmul.f32.gmra.mxu0 %v1304
      %v1306 = vpop.f32.mrf.mxu0
      %v1307 = vadd.f32 %v1160, %v1306
      %v1308 = vand.u32 %v462, 4294901760
      %1309 = vmatmul.f32.gmra.mxu0 %v1308
      %v1310 = vpop.f32.mrf.mxu0
      %v1311 = vadd.f32 %v1168, %v1310
      %v1312 = vand.u32 %v465, 4294901760
      %1313 = vmatmul.f32.gmra.mxu0 %v1312
      %v1314 = vpop.f32.mrf.mxu0
      %v1315 = vadd.f32 %v1176, %v1314
      %v1316 = vand.u32 %v468, 4294901760
      %1317 = vmatmul.f32.gmra.mxu0 %v1316
      %v1318 = vpop.f32.mrf.mxu0
      %v1319 = vadd.f32 %v1184, %v1318
      %v1320 = vand.u32 %v471, 4294901760
      %1321 = vmatmul.f32.gmra.mxu0 %v1320
      %v1322 = vpop.f32.mrf.mxu0
      %v1323 = vadd.f32 %v1192, %v1322
      %v1324 = vand.u32 %v474, 4294901760
      %1325 = vmatmul.f32.gmra.mxu0 %v1324
      %v1326 = vpop.f32.mrf.mxu0
      %v1327 = vadd.f32 %v1200, %v1326
      %v1328 = vand.u32 %v477, 4294901760
      %1329 = vmatmul.f32.gmra.mxu0 %v1328
      %v1330 = vpop.f32.mrf.mxu0
      %v1331 = vadd.f32 %v1208, %v1330
      %v1332 = vand.u32 %v480, 4294901760
      %1333 = vmatmul.f32.gmra.mxu0 %v1332
      %v1334 = vpop.f32.mrf.mxu0
      %v1335 = vadd.f32 %v1216, %v1334
      %v1336 = vand.u32 %v483, 4294901760
      %1337 = vmatmul.f32.gmra.mxu0 %v1336
      %v1338 = vpop.f32.mrf.mxu0
      %v1339 = vadd.f32 %v1224, %v1338
      %v1340 = vand.u32 %v486, 4294901760
      %1341 = vmatmul.f32.gmra.mxu0 %v1340
      %v1342 = vpop.f32.mrf.mxu0
      %v1343 = vadd.f32 %v1232, %v1342
      %v1344 = vand.u32 %v489, 4294901760
      %1345 = vmatmul.f32.gmra.mxu0 %v1344
      %v1346 = vpop.f32.mrf.mxu0
      %v1347 = vadd.f32 %v1240, %v1346
      %v1348 = vand.u32 %v492, 4294901760
      %1349 = vmatmul.f32.gmra.mxu0 %v1348
      %v1350 = vpop.f32.mrf.mxu0
      %v1351 = vadd.f32 %v1248, %v1350
      %v1352 = vand.u32 %v495, 4294901760
      %1353 = vmatmul.f32.gmra.mxu0 %v1352
      %v1354 = vpop.f32.mrf.mxu0
      %v1355 = vadd.f32 %v1256, %v1354
      %v1356 = vand.u32 %v498, 4294901760
      %1357 = vmatmul.f32.gmra.mxu0 %v1356
      %v1358 = vpop.f32.mrf.mxu0
      %v1359 = vadd.f32 %v1264, %v1358
      %v1360 = vand.u32 %v501, 4294901760
      %1361 = vmatmul.f32.gmra.mxu0 %v1360
      %v1362 = vpop.f32.mrf.mxu0
      %v1363 = vadd.f32 %v1272, %v1362
      %1364 = vdwg.mxu0
      %1365 = vmatpush.msra.mxu0 0.0
      %1366 = vmatpush.msra.mxu0 0.0
      %1367 = vmatpush.msra.mxu0 0.0
      %1368 = vmatpush.msra.mxu0 0.0
      %1369 = vmatpush.msra.mxu0 0.0
      %1370 = vmatpush.msra.mxu0 0.0
      %1371 = vmatpush.msra.mxu0 0.0
      %1372 = vmatpush.msra.mxu0 0.0
      %1373 = vmatpush.msra.mxu0 0.0
      %1374 = vmatpush.msra.mxu0 0.0
      %1375 = vmatpush.msra.mxu0 0.0
      %1376 = vmatpush.msra.mxu0 0.0
      %1377 = vmatpush.msra.mxu0 0.0
      %1378 = vmatpush.msra.mxu0 0.0
      %v1379 = vand.u32 %v357, 4294901760
      %v1380 = vsub.f32 %v357, %v1379
      %1381 = vmatpush.msra.mxu0 %v1380
      %v1382 = vand.u32 %v355, 4294901760
      %v1383 = vsub.f32 %v355, %v1382
      %1384 = vmatpush.msra.mxu0 %v1383
      %v1385 = vand.u32 %v456, 4294901760
      %v1386 = vsub.f32 %v456, %v1385
      %1387 = vmatmul.f32.gmra.mxu0 %v1386
      %v1388 = vpop.f32.mrf.mxu0
      %v1389 = vadd.f32 %v1303, %v1388
      %v1390 = vand.u32 %v459, 4294901760
      %v1391 = vsub.f32 %v459, %v1390
      %1392 = vmatmul.f32.gmra.mxu0 %v1391
      %v1393 = vpop.f32.mrf.mxu0
      %v1394 = vadd.f32 %v1307, %v1393
      %v1395 = vand.u32 %v462, 4294901760
      %v1396 = vsub.f32 %v462, %v1395
      %1397 = vmatmul.f32.gmra.mxu0 %v1396
      %v1398 = vpop.f32.mrf.mxu0
      %v1399 = vadd.f32 %v1311, %v1398
      %v1400 = vand.u32 %v465, 4294901760
      %v1401 = vsub.f32 %v465, %v1400
      %1402 = vmatmul.f32.gmra.mxu0 %v1401
      %v1403 = vpop.f32.mrf.mxu0
      %v1404 = vadd.f32 %v1315, %v1403
      %v1405 = vand.u32 %v468, 4294901760
      %v1406 = vsub.f32 %v468, %v1405
      %1407 = vmatmul.f32.gmra.mxu0 %v1406
      %v1408 = vpop.f32.mrf.mxu0
      %v1409 = vadd.f32 %v1319, %v1408
      %v1410 = vand.u32 %v471, 4294901760
      %v1411 = vsub.f32 %v471, %v1410
      %1412 = vmatmul.f32.gmra.mxu0 %v1411
      %v1413 = vpop.f32.mrf.mxu0
      %v1414 = vadd.f32 %v1323, %v1413
      %v1415 = vand.u32 %v474, 4294901760
      %v1416 = vsub.f32 %v474, %v1415
      %1417 = vmatmul.f32.gmra.mxu0 %v1416
      %v1418 = vpop.f32.mrf.mxu0
      %v1419 = vadd.f32 %v1327, %v1418
      %v1420 = vand.u32 %v477, 4294901760
      %v1421 = vsub.f32 %v477, %v1420
      %1422 = vmatmul.f32.gmra.mxu0 %v1421
      %v1423 = vpop.f32.mrf.mxu0
      %v1424 = vadd.f32 %v1331, %v1423
      %v1425 = vand.u32 %v480, 4294901760
      %v1426 = vsub.f32 %v480, %v1425
      %1427 = vmatmul.f32.gmra.mxu0 %v1426
      %v1428 = vpop.f32.mrf.mxu0
      %v1429 = vadd.f32 %v1335, %v1428
      %v1430 = vand.u32 %v483, 4294901760
      %v1431 = vsub.f32 %v483, %v1430
      %1432 = vmatmul.f32.gmra.mxu0 %v1431
      %v1433 = vpop.f32.mrf.mxu0
      %v1434 = vadd.f32 %v1339, %v1433
      %v1435 = vand.u32 %v486, 4294901760
      %v1436 = vsub.f32 %v486, %v1435
      %1437 = vmatmul.f32.gmra.mxu0 %v1436
      %v1438 = vpop.f32.mrf.mxu0
      %v1439 = vadd.f32 %v1343, %v1438
      %v1440 = vand.u32 %v489, 4294901760
      %v1441 = vsub.f32 %v489, %v1440
      %1442 = vmatmul.f32.gmra.mxu0 %v1441
      %v1443 = vpop.f32.mrf.mxu0
      %v1444 = vadd.f32 %v1347, %v1443
      %v1445 = vand.u32 %v492, 4294901760
      %v1446 = vsub.f32 %v492, %v1445
      %1447 = vmatmul.f32.gmra.mxu0 %v1446
      %v1448 = vpop.f32.mrf.mxu0
      %v1449 = vadd.f32 %v1351, %v1448
      %v1450 = vand.u32 %v495, 4294901760
      %v1451 = vsub.f32 %v495, %v1450
      %1452 = vmatmul.f32.gmra.mxu0 %v1451
      %v1453 = vpop.f32.mrf.mxu0
      %v1454 = vadd.f32 %v1355, %v1453
      %v1455 = vand.u32 %v498, 4294901760
      %v1456 = vsub.f32 %v498, %v1455
      %1457 = vmatmul.f32.gmra.mxu0 %v1456
      %v1458 = vpop.f32.mrf.mxu0
      %v1459 = vadd.f32 %v1359, %v1458
      %v1460 = vand.u32 %v501, 4294901760
      %v1461 = vsub.f32 %v501, %v1460
      %1462 = vmatmul.f32.gmra.mxu0 %v1461
      %v1463 = vpop.f32.mrf.mxu0
      %v1464 = vadd.f32 %v1363, %v1463
      %1465 = vdwg.mxu0
      %1466 = vmatpush.msra.mxu0 0.0
      %1467 = vmatpush.msra.mxu0 0.0
      %1468 = vmatpush.msra.mxu0 0.0
      %1469 = vmatpush.msra.mxu0 0.0
      %1470 = vmatpush.msra.mxu0 0.0
      %1471 = vmatpush.msra.mxu0 0.0
      %1472 = vmatpush.msra.mxu0 0.0
      %1473 = vmatpush.msra.mxu0 0.0
      %1474 = vmatpush.msra.mxu0 0.0
      %1475 = vmatpush.msra.mxu0 0.0
      %1476 = vmatpush.msra.mxu0 0.0
      %1477 = vmatpush.msra.mxu0 0.0
      %1478 = vmatpush.msra.mxu0 0.0
      %1479 = vmatpush.msra.mxu0 0.0
      %v1480 = vand.u32 %v357, 4294901760
      %1481 = vmatpush.msra.mxu0 %v1480
      %v1482 = vand.u32 %v355, 4294901760
      %1483 = vmatpush.msra.mxu0 %v1482
      %v1484 = vand.u32 %v456, 4294901760
      %v1485 = vsub.f32 %v456, %v1484
      %v1486 = vand.u32 %v1485, 4294901760
      %1487 = vmatmul.f32.gmra.mxu0 %v1486
      %v1488 = vpop.f32.mrf.mxu0
      %v1489 = vadd.f32 %v1389, %v1488
      %v1490 = vand.u32 %v459, 4294901760
      %v1491 = vsub.f32 %v459, %v1490
      %v1492 = vand.u32 %v1491, 4294901760
      %1493 = vmatmul.f32.gmra.mxu0 %v1492
      %v1494 = vpop.f32.mrf.mxu0
      %v1495 = vadd.f32 %v1394, %v1494
      %v1496 = vand.u32 %v462, 4294901760
      %v1497 = vsub.f32 %v462, %v1496
      %v1498 = vand.u32 %v1497, 4294901760
      %1499 = vmatmul.f32.gmra.mxu0 %v1498
      %v1500 = vpop.f32.mrf.mxu0
      %v1501 = vadd.f32 %v1399, %v1500
      %v1502 = vand.u32 %v465, 4294901760
      %v1503 = vsub.f32 %v465, %v1502
      %v1504 = vand.u32 %v1503, 4294901760
      %1505 = vmatmul.f32.gmra.mxu0 %v1504
      %v1506 = vpop.f32.mrf.mxu0
      %v1507 = vadd.f32 %v1404, %v1506
      %v1508 = vand.u32 %v468, 4294901760
      %v1509 = vsub.f32 %v468, %v1508
      %v1510 = vand.u32 %v1509, 4294901760
      %1511 = vmatmul.f32.gmra.mxu0 %v1510
      %v1512 = vpop.f32.mrf.mxu0
      %v1513 = vadd.f32 %v1409, %v1512
      %v1514 = vand.u32 %v471, 4294901760
      %v1515 = vsub.f32 %v471, %v1514
      %v1516 = vand.u32 %v1515, 4294901760
      %1517 = vmatmul.f32.gmra.mxu0 %v1516
      %v1518 = vpop.f32.mrf.mxu0
      %v1519 = vadd.f32 %v1414, %v1518
      %v1520 = vand.u32 %v474, 4294901760
      %v1521 = vsub.f32 %v474, %v1520
      %v1522 = vand.u32 %v1521, 4294901760
      %1523 = vmatmul.f32.gmra.mxu0 %v1522
      %v1524 = vpop.f32.mrf.mxu0
      %v1525 = vadd.f32 %v1419, %v1524
      %v1526 = vand.u32 %v477, 4294901760
      %v1527 = vsub.f32 %v477, %v1526
      %v1528 = vand.u32 %v1527, 4294901760
      %1529 = vmatmul.f32.gmra.mxu0 %v1528
      %v1530 = vpop.f32.mrf.mxu0
      %v1531 = vadd.f32 %v1424, %v1530
      %v1532 = vand.u32 %v480, 4294901760
      %v1533 = vsub.f32 %v480, %v1532
      %v1534 = vand.u32 %v1533, 4294901760
      %1535 = vmatmul.f32.gmra.mxu0 %v1534
      %v1536 = vpop.f32.mrf.mxu0
      %v1537 = vadd.f32 %v1429, %v1536
      %v1538 = vand.u32 %v483, 4294901760
      %v1539 = vsub.f32 %v483, %v1538
      %v1540 = vand.u32 %v1539, 4294901760
      %1541 = vmatmul.f32.gmra.mxu0 %v1540
      %v1542 = vpop.f32.mrf.mxu0
      %v1543 = vadd.f32 %v1434, %v1542
      %v1544 = vand.u32 %v486, 4294901760
      %v1545 = vsub.f32 %v486, %v1544
      %v1546 = vand.u32 %v1545, 4294901760
      %1547 = vmatmul.f32.gmra.mxu0 %v1546
      %v1548 = vpop.f32.mrf.mxu0
      %v1549 = vadd.f32 %v1439, %v1548
      %v1550 = vand.u32 %v489, 4294901760
      %v1551 = vsub.f32 %v489, %v1550
      %v1552 = vand.u32 %v1551, 4294901760
      %1553 = vmatmul.f32.gmra.mxu0 %v1552
      %v1554 = vpop.f32.mrf.mxu0
      %v1555 = vadd.f32 %v1444, %v1554
      %v1556 = vand.u32 %v492, 4294901760
      %v1557 = vsub.f32 %v492, %v1556
      %v1558 = vand.u32 %v1557, 4294901760
      %1559 = vmatmul.f32.gmra.mxu0 %v1558
      %v1560 = vpop.f32.mrf.mxu0
      %v1561 = vadd.f32 %v1449, %v1560
      %v1562 = vand.u32 %v495, 4294901760
      %v1563 = vsub.f32 %v495, %v1562
      %v1564 = vand.u32 %v1563, 4294901760
      %1565 = vmatmul.f32.gmra.mxu0 %v1564
      %v1566 = vpop.f32.mrf.mxu0
      %v1567 = vadd.f32 %v1454, %v1566
      %v1568 = vand.u32 %v498, 4294901760
      %v1569 = vsub.f32 %v498, %v1568
      %v1570 = vand.u32 %v1569, 4294901760
      %1571 = vmatmul.f32.gmra.mxu0 %v1570
      %v1572 = vpop.f32.mrf.mxu0
      %v1573 = vadd.f32 %v1459, %v1572
      %v1574 = vand.u32 %v501, 4294901760
      %v1575 = vsub.f32 %v501, %v1574
      %v1576 = vand.u32 %v1575, 4294901760
      %1577 = vmatmul.f32.gmra.mxu0 %v1576
      %v1578 = vpop.f32.mrf.mxu0
      %v1579 = vadd.f32 %v1464, %v1578
      %1580 = vdwg.mxu0
      %1581 = vmatpush.msra.mxu0 0.0
      %1582 = vmatpush.msra.mxu0 0.0
      %1583 = vmatpush.msra.mxu0 0.0
      %1584 = vmatpush.msra.mxu0 0.0
      %1585 = vmatpush.msra.mxu0 0.0
      %1586 = vmatpush.msra.mxu0 0.0
      %1587 = vmatpush.msra.mxu0 0.0
      %1588 = vmatpush.msra.mxu0 0.0
      %1589 = vmatpush.msra.mxu0 0.0
      %1590 = vmatpush.msra.mxu0 0.0
      %1591 = vmatpush.msra.mxu0 0.0
      %1592 = vmatpush.msra.mxu0 0.0
      %1593 = vmatpush.msra.mxu0 0.0
      %1594 = vmatpush.msra.mxu0 0.0
      %v1595 = vand.u32 %v357, 4294901760
      %v1596 = vsub.f32 %v357, %v1595
      %v1597 = vand.u32 %v1596, 4294901760
      %1598 = vmatpush.msra.mxu0 %v1597
      %v1599 = vand.u32 %v355, 4294901760
      %v1600 = vsub.f32 %v355, %v1599
      %v1601 = vand.u32 %v1600, 4294901760
      %1602 = vmatpush.msra.mxu0 %v1601
      %v1603 = vand.u32 %v456, 4294901760
      %1604 = vmatmul.f32.gmra.mxu0 %v1603
      %v1605 = vpop.f32.mrf.mxu0
      %v1606 = vadd.f32 %v1489, %v1605
      %v1607 = vand.u32 %v459, 4294901760
      %1608 = vmatmul.f32.gmra.mxu0 %v1607
      %v1609 = vpop.f32.mrf.mxu0
      %v1610 = vadd.f32 %v1495, %v1609
      %v1611 = vand.u32 %v462, 4294901760
      %1612 = vmatmul.f32.gmra.mxu0 %v1611
      %v1613 = vpop.f32.mrf.mxu0
      %v1614 = vadd.f32 %v1501, %v1613
      %v1615 = vand.u32 %v465, 4294901760
      %1616 = vmatmul.f32.gmra.mxu0 %v1615
      %v1617 = vpop.f32.mrf.mxu0
      %v1618 = vadd.f32 %v1507, %v1617
      %v1619 = vand.u32 %v468, 4294901760
      %1620 = vmatmul.f32.gmra.mxu0 %v1619
      %v1621 = vpop.f32.mrf.mxu0
      %v1622 = vadd.f32 %v1513, %v1621
      %v1623 = vand.u32 %v471, 4294901760
      %1624 = vmatmul.f32.gmra.mxu0 %v1623
      %v1625 = vpop.f32.mrf.mxu0
      %v1626 = vadd.f32 %v1519, %v1625
      %v1627 = vand.u32 %v474, 4294901760
      %1628 = vmatmul.f32.gmra.mxu0 %v1627
      %v1629 = vpop.f32.mrf.mxu0
      %v1630 = vadd.f32 %v1525, %v1629
      %v1631 = vand.u32 %v477, 4294901760
      %1632 = vmatmul.f32.gmra.mxu0 %v1631
      %v1633 = vpop.f32.mrf.mxu0
      %v1634 = vadd.f32 %v1531, %v1633
      %v1635 = vand.u32 %v480, 4294901760
      %1636 = vmatmul.f32.gmra.mxu0 %v1635
      %v1637 = vpop.f32.mrf.mxu0
      %v1638 = vadd.f32 %v1537, %v1637
      %v1639 = vand.u32 %v483, 4294901760
      %1640 = vmatmul.f32.gmra.mxu0 %v1639
      %v1641 = vpop.f32.mrf.mxu0
      %v1642 = vadd.f32 %v1543, %v1641
      %v1643 = vand.u32 %v486, 4294901760
      %1644 = vmatmul.f32.gmra.mxu0 %v1643
      %v1645 = vpop.f32.mrf.mxu0
      %v1646 = vadd.f32 %v1549, %v1645
      %v1647 = vand.u32 %v489, 4294901760
      %1648 = vmatmul.f32.gmra.mxu0 %v1647
      %v1649 = vpop.f32.mrf.mxu0
      %v1650 = vadd.f32 %v1555, %v1649
      %v1651 = vand.u32 %v492, 4294901760
      %1652 = vmatmul.f32.gmra.mxu0 %v1651
      %v1653 = vpop.f32.mrf.mxu0
      %v1654 = vadd.f32 %v1561, %v1653
      %v1655 = vand.u32 %v495, 4294901760
      %1656 = vmatmul.f32.gmra.mxu0 %v1655
      %v1657 = vpop.f32.mrf.mxu0
      %v1658 = vadd.f32 %v1567, %v1657
      %v1659 = vand.u32 %v498, 4294901760
      %1660 = vmatmul.f32.gmra.mxu0 %v1659
      %v1661 = vpop.f32.mrf.mxu0
      %v1662 = vadd.f32 %v1573, %v1661
      %v1663 = vand.u32 %v501, 4294901760
      %1664 = vmatmul.f32.gmra.mxu0 %v1663
      %v1665 = vpop.f32.mrf.mxu0
      %v1666 = vadd.f32 %v1579, %v1665
      %1667 = vdwg.mxu0
      %1668 = vmatpush.msra.mxu0 0.0
      %1669 = vmatpush.msra.mxu0 0.0
      %1670 = vmatpush.msra.mxu0 0.0
      %1671 = vmatpush.msra.mxu0 0.0
      %1672 = vmatpush.msra.mxu0 0.0
      %1673 = vmatpush.msra.mxu0 0.0
      %1674 = vmatpush.msra.mxu0 0.0
      %1675 = vmatpush.msra.mxu0 0.0
      %1676 = vmatpush.msra.mxu0 0.0
      %1677 = vmatpush.msra.mxu0 0.0
      %1678 = vmatpush.msra.mxu0 0.0
      %1679 = vmatpush.msra.mxu0 0.0
      %1680 = vmatpush.msra.mxu0 0.0
      %1681 = vmatpush.msra.mxu0 0.0
      %v1682 = vand.u32 %v357, 4294901760
      %1683 = vmatpush.msra.mxu0 %v1682
      %v1684 = vand.u32 %v355, 4294901760
      %1685 = vmatpush.msra.mxu0 %v1684
      %v1686 = vand.u32 %v456, 4294901760
      %1687 = vmatmul.f32.gmra.mxu0 %v1686
      %v1688 = vpop.f32.mrf.mxu0
      %v1689 = vadd.f32 %v1606, %v1688
      %v1690 = vand.u32 %v459, 4294901760
      %1691 = vmatmul.f32.gmra.mxu0 %v1690
      %v1692 = vpop.f32.mrf.mxu0
      %v1693 = vadd.f32 %v1610, %v1692
      %v1694 = vand.u32 %v462, 4294901760
      %1695 = vmatmul.f32.gmra.mxu0 %v1694
      %v1696 = vpop.f32.mrf.mxu0
      %v1697 = vadd.f32 %v1614, %v1696
      %v1698 = vand.u32 %v465, 4294901760
      %1699 = vmatmul.f32.gmra.mxu0 %v1698
      %v1700 = vpop.f32.mrf.mxu0
      %v1701 = vadd.f32 %v1618, %v1700
      %v1702 = vand.u32 %v468, 4294901760
      %1703 = vmatmul.f32.gmra.mxu0 %v1702
      %v1704 = vpop.f32.mrf.mxu0
      %v1705 = vadd.f32 %v1622, %v1704
      %v1706 = vand.u32 %v471, 4294901760
      %1707 = vmatmul.f32.gmra.mxu0 %v1706
      %v1708 = vpop.f32.mrf.mxu0
      %v1709 = vadd.f32 %v1626, %v1708
      %v1710 = vand.u32 %v474, 4294901760
      %1711 = vmatmul.f32.gmra.mxu0 %v1710
      %v1712 = vpop.f32.mrf.mxu0
      %v1713 = vadd.f32 %v1630, %v1712
      %v1714 = vand.u32 %v477, 4294901760
      %1715 = vmatmul.f32.gmra.mxu0 %v1714
      %v1716 = vpop.f32.mrf.mxu0
      %v1717 = vadd.f32 %v1634, %v1716
      %v1718 = vand.u32 %v480, 4294901760
      %1719 = vmatmul.f32.gmra.mxu0 %v1718
      %v1720 = vpop.f32.mrf.mxu0
      %v1721 = vadd.f32 %v1638, %v1720
      %v1722 = vand.u32 %v483, 4294901760
      %1723 = vmatmul.f32.gmra.mxu0 %v1722
      %v1724 = vpop.f32.mrf.mxu0
      %v1725 = vadd.f32 %v1642, %v1724
      %v1726 = vand.u32 %v486, 4294901760
      %1727 = vmatmul.f32.gmra.mxu0 %v1726
      %v1728 = vpop.f32.mrf.mxu0
      %v1729 = vadd.f32 %v1646, %v1728
      %v1730 = vand.u32 %v489, 4294901760
      %1731 = vmatmul.f32.gmra.mxu0 %v1730
      %v1732 = vpop.f32.mrf.mxu0
      %v1733 = vadd.f32 %v1650, %v1732
      %v1734 = vand.u32 %v492, 4294901760
      %1735 = vmatmul.f32.gmra.mxu0 %v1734
      %v1736 = vpop.f32.mrf.mxu0
      %v1737 = vadd.f32 %v1654, %v1736
      %v1738 = vand.u32 %v495, 4294901760
      %1739 = vmatmul.f32.gmra.mxu0 %v1738
      %v1740 = vpop.f32.mrf.mxu0
      %v1741 = vadd.f32 %v1658, %v1740
      %v1742 = vand.u32 %v498, 4294901760
      %1743 = vmatmul.f32.gmra.mxu0 %v1742
      %v1744 = vpop.f32.mrf.mxu0
      %v1745 = vadd.f32 %v1662, %v1744
      %v1746 = vand.u32 %v501, 4294901760
      %1747 = vmatmul.f32.gmra.mxu0 %v1746
      %v1748 = vpop.f32.mrf.mxu0
      %v1749 = vadd.f32 %v1666, %v1748
      %1750 = vdwg.mxu0
      %v1751 = vmul.f32 %v1065, 0.5
      %v1752 = vmul.f32 %v1689, 0.5
      %v1753 = vmul.f32 %v1069, 0.5
      %v1754 = vmul.f32 %v1693, 0.5
      %v1755 = vmul.f32 %v1073, 0.5
      %v1756 = vmul.f32 %v1697, 0.5
      %v1757 = vmul.f32 %v1077, 0.5
      %v1758 = vmul.f32 %v1701, 0.5
      %v1759 = vmul.f32 %v1081, 0.5
      %v1760 = vmul.f32 %v1705, 0.5
      %v1761 = vmul.f32 %v1085, 0.5
      %v1762 = vmul.f32 %v1709, 0.5
      %v1763 = vmul.f32 %v1089, 0.5
      %v1764 = vmul.f32 %v1713, 0.5
      %v1765 = vmul.f32 %v1093, 0.5
      %v1766 = vmul.f32 %v1717, 0.5
      %v1767 = vmul.f32 %v1097, 0.5
      %v1768 = vmul.f32 %v1721, 0.5
      %v1769 = vmul.f32 %v1101, 0.5
      %v1770 = vmul.f32 %v1725, 0.5
      %v1771 = vmul.f32 %v1105, 0.5
      %v1772 = vmul.f32 %v1729, 0.5
      %v1773 = vmul.f32 %v1109, 0.5
      %v1774 = vmul.f32 %v1733, 0.5
      %v1775 = vmul.f32 %v1113, 0.5
      %v1776 = vmul.f32 %v1737, 0.5
      %v1777 = vmul.f32 %v1117, 0.5
      %v1778 = vmul.f32 %v1741, 0.5
      %v1779 = vmul.f32 %v1121, 0.5
      %v1780 = vmul.f32 %v1745, 0.5
      %v1781 = vmul.f32 %v1125, 0.5
      %v1782 = vmul.f32 %v1749, 0.5
      %v1783 = vmul.f32 %v1065, 0.70710677
      %v1784 = vmul.f32 %v1689, 0.70710677
      %v1785 = vmul.f32 %v1069, 0.70710677
      %v1786 = vmul.f32 %v1693, 0.70710677
      %v1787 = vmul.f32 %v1073, 0.70710677
      %v1788 = vmul.f32 %v1697, 0.70710677
      %v1789 = vmul.f32 %v1077, 0.70710677
      %v1790 = vmul.f32 %v1701, 0.70710677
      %v1791 = vmul.f32 %v1081, 0.70710677
      %v1792 = vmul.f32 %v1705, 0.70710677
      %v1793 = vmul.f32 %v1085, 0.70710677
      %v1794 = vmul.f32 %v1709, 0.70710677
      %v1795 = vmul.f32 %v1089, 0.70710677
      %v1796 = vmul.f32 %v1713, 0.70710677
      %v1797 = vmul.f32 %v1093, 0.70710677
      %v1798 = vmul.f32 %v1717, 0.70710677
      %v1799 = vmul.f32 %v1097, 0.70710677
      %v1800 = vmul.f32 %v1721, 0.70710677
      %v1801 = vmul.f32 %v1101, 0.70710677
      %v1802 = vmul.f32 %v1725, 0.70710677
      %v1803 = vmul.f32 %v1105, 0.70710677
      %v1804 = vmul.f32 %v1729, 0.70710677
      %v1805 = vmul.f32 %v1109, 0.70710677
      %v1806 = vmul.f32 %v1733, 0.70710677
      %v1807 = vmul.f32 %v1113, 0.70710677
      %v1808 = vmul.f32 %v1737, 0.70710677
      %v1809 = vmul.f32 %v1117, 0.70710677
      %v1810 = vmul.f32 %v1741, 0.70710677
      %v1811 = vmul.f32 %v1121, 0.70710677
      %v1812 = vmul.f32 %v1745, 0.70710677
      %v1813 = vmul.f32 %v1125, 0.70710677
      %v1814 = vmul.f32 %v1749, 0.70710677
      %v1815 = vmul.f32 %v1783, %v1783
      %v1816 = vmin.f32 16.0, %v1815
      %v1817 = vmul.f32 %v1816, 2.1237322e-06
      %v1818 = vadd.f32 %v1817, 0.00028619796
      %v1819 = vmul.f32 %v1816, %v1818
      %v1820 = vadd.f32 %v1819, 0.0036580483
      %v1821 = vmul.f32 %v1816, %v1820
      %v1822 = vadd.f32 %v1821, 0.05243302
      %v1823 = vmul.f32 %v1816, %v1822
      %v1824 = vadd.f32 %v1823, 0.18741608
      %v1825 = vmul.f32 %v1816, %v1824
      %v1826 = vadd.f32 %v1825, 1.1283791
      %v1827 = vmul.f32 %v1783, %v1826
      %v1828 = vmul.f32 %v1816, 3.8918573e-05
      %v1829 = vadd.f32 %v1828, 0.001143296
      %v1830 = vmul.f32 %v1816, %v1829
      %v1831 = vadd.f32 %v1830, 0.014752088
      %v1832 = vmul.f32 %v1816, %v1831
      %v1833 = vadd.f32 %v1832, 0.112945676
      %v1834 = vmul.f32 %v1816, %v1833
      %v1835 = vadd.f32 %v1834, 0.4994258
      %v1836 = vmul.f32 %v1816, %v1835
      %v1837 = vadd.f32 %v1836, 1.0
      %v1838 = vrcp.pop %v1837
      %v1839 = vmul.f32 %v1837, %v1838
      %v1840 = vsub.f32 1.0, %v1839
      %v1841 = vmul.f32 %v1838, %v1840
      %v1842 = vadd.f32 %v1838, %v1841
      %vm1843 = vweird.f32 %v1837
      %vm1844 = vweird.f32 %v1838
      %vm1845 = vmor %vm1843, %vm1844
      %v1846 = vsel %vm1845, %v1838, %v1842
      %v1847 = vand.u32 2147483647, %v1837
      %vm1848 = vcmp.eq.f32.partialorder %v1847, 8.507059e+37
      %v1849 = vand.u32 %v1837, 2147483648
      %v1850 = vor.u32 1.1754944e-38, %v1849
      %v1851 = vsel %vm1848, %v1850, %v1846
      %v1852 = vmul.f32 %v1827, %v1851
      %v1853 = vmin.f32 %v1852, 1.0
      %v1854 = vmax.f32 %v1853, -1.0
      %v1855 = vmul.f32 %v1784, %v1784
      %v1856 = vmin.f32 16.0, %v1855
      %v1857 = vmul.f32 %v1856, 2.1237322e-06
      %v1858 = vadd.f32 %v1857, 0.00028619796
      %v1859 = vmul.f32 %v1856, %v1858
      %v1860 = vadd.f32 %v1859, 0.0036580483
      %v1861 = vmul.f32 %v1856, %v1860
      %v1862 = vadd.f32 %v1861, 0.05243302
      %v1863 = vmul.f32 %v1856, %v1862
      %v1864 = vadd.f32 %v1863, 0.18741608
      %v1865 = vmul.f32 %v1856, %v1864
      %v1866 = vadd.f32 %v1865, 1.1283791
      %v1867 = vmul.f32 %v1784, %v1866
      %v1868 = vmul.f32 %v1856, 3.8918573e-05
      %v1869 = vadd.f32 %v1868, 0.001143296
      %v1870 = vmul.f32 %v1856, %v1869
      %v1871 = vadd.f32 %v1870, 0.014752088
      %v1872 = vmul.f32 %v1856, %v1871
      %v1873 = vadd.f32 %v1872, 0.112945676
      %v1874 = vmul.f32 %v1856, %v1873
      %v1875 = vadd.f32 %v1874, 0.4994258
      %v1876 = vmul.f32 %v1856, %v1875
      %v1877 = vadd.f32 %v1876, 1.0
      %v1878 = vrcp.pop %v1877
      %v1879 = vmul.f32 %v1877, %v1878
      %v1880 = vsub.f32 1.0, %v1879
      %v1881 = vmul.f32 %v1878, %v1880
      %v1882 = vadd.f32 %v1878, %v1881
      %vm1883 = vweird.f32 %v1877
      %vm1884 = vweird.f32 %v1878
      %vm1885 = vmor %vm1883, %vm1884
      %v1886 = vsel %vm1885, %v1878, %v1882
      %v1887 = vand.u32 2147483647, %v1877
      %vm1888 = vcmp.eq.f32.partialorder %v1887, 8.507059e+37
      %v1889 = vand.u32 %v1877, 2147483648
      %v1890 = vor.u32 1.1754944e-38, %v1889
      %v1891 = vsel %vm1888, %v1890, %v1886
      %v1892 = vmul.f32 %v1867, %v1891
      %v1893 = vmin.f32 %v1892, 1.0
      %v1894 = vmax.f32 %v1893, -1.0
      %v1895 = vmul.f32 %v1785, %v1785
      %v1896 = vmin.f32 16.0, %v1895
      %v1897 = vmul.f32 %v1896, 2.1237322e-06
      %v1898 = vadd.f32 %v1897, 0.00028619796
      %v1899 = vmul.f32 %v1896, %v1898
      %v1900 = vadd.f32 %v1899, 0.0036580483
      %v1901 = vmul.f32 %v1896, %v1900
      %v1902 = vadd.f32 %v1901, 0.05243302
      %v1903 = vmul.f32 %v1896, %v1902
      %v1904 = vadd.f32 %v1903, 0.18741608
      %v1905 = vmul.f32 %v1896, %v1904
      %v1906 = vadd.f32 %v1905, 1.1283791
      %v1907 = vmul.f32 %v1785, %v1906
      %v1908 = vmul.f32 %v1896, 3.8918573e-05
      %v1909 = vadd.f32 %v1908, 0.001143296
      %v1910 = vmul.f32 %v1896, %v1909
      %v1911 = vadd.f32 %v1910, 0.014752088
      %v1912 = vmul.f32 %v1896, %v1911
      %v1913 = vadd.f32 %v1912, 0.112945676
      %v1914 = vmul.f32 %v1896, %v1913
      %v1915 = vadd.f32 %v1914, 0.4994258
      %v1916 = vmul.f32 %v1896, %v1915
      %v1917 = vadd.f32 %v1916, 1.0
      %v1918 = vrcp.pop %v1917
      %v1919 = vmul.f32 %v1917, %v1918
      %v1920 = vsub.f32 1.0, %v1919
      %v1921 = vmul.f32 %v1918, %v1920
      %v1922 = vadd.f32 %v1918, %v1921
      %vm1923 = vweird.f32 %v1917
      %vm1924 = vweird.f32 %v1918
      %vm1925 = vmor %vm1923, %vm1924
      %v1926 = vsel %vm1925, %v1918, %v1922
      %v1927 = vand.u32 2147483647, %v1917
      %vm1928 = vcmp.eq.f32.partialorder %v1927, 8.507059e+37
      %v1929 = vand.u32 %v1917, 2147483648
      %v1930 = vor.u32 1.1754944e-38, %v1929
      %v1931 = vsel %vm1928, %v1930, %v1926
      %v1932 = vmul.f32 %v1907, %v1931
      %v1933 = vmin.f32 %v1932, 1.0
      %v1934 = vmax.f32 %v1933, -1.0
      %v1935 = vmul.f32 %v1786, %v1786
      %v1936 = vmin.f32 16.0, %v1935
      %v1937 = vmul.f32 %v1936, 2.1237322e-06
      %v1938 = vadd.f32 %v1937, 0.00028619796
      %v1939 = vmul.f32 %v1936, %v1938
      %v1940 = vadd.f32 %v1939, 0.0036580483
      %v1941 = vmul.f32 %v1936, %v1940
      %v1942 = vadd.f32 %v1941, 0.05243302
      %v1943 = vmul.f32 %v1936, %v1942
      %v1944 = vadd.f32 %v1943, 0.18741608
      %v1945 = vmul.f32 %v1936, %v1944
      %v1946 = vadd.f32 %v1945, 1.1283791
      %v1947 = vmul.f32 %v1786, %v1946
      %v1948 = vmul.f32 %v1936, 3.8918573e-05
      %v1949 = vadd.f32 %v1948, 0.001143296
      %v1950 = vmul.f32 %v1936, %v1949
      %v1951 = vadd.f32 %v1950, 0.014752088
      %v1952 = vmul.f32 %v1936, %v1951
      %v1953 = vadd.f32 %v1952, 0.112945676
      %v1954 = vmul.f32 %v1936, %v1953
      %v1955 = vadd.f32 %v1954, 0.4994258
      %v1956 = vmul.f32 %v1936, %v1955
      %v1957 = vadd.f32 %v1956, 1.0
      %v1958 = vrcp.pop %v1957
      %v1959 = vmul.f32 %v1957, %v1958
      %v1960 = vsub.f32 1.0, %v1959
      %v1961 = vmul.f32 %v1958, %v1960
      %v1962 = vadd.f32 %v1958, %v1961
      %vm1963 = vweird.f32 %v1957
      %vm1964 = vweird.f32 %v1958
      %vm1965 = vmor %vm1963, %vm1964
      %v1966 = vsel %vm1965, %v1958, %v1962
      %v1967 = vand.u32 2147483647, %v1957
      %vm1968 = vcmp.eq.f32.partialorder %v1967, 8.507059e+37
      %v1969 = vand.u32 %v1957, 2147483648
      %v1970 = vor.u32 1.1754944e-38, %v1969
      %v1971 = vsel %vm1968, %v1970, %v1966
      %v1972 = vmul.f32 %v1947, %v1971
      %v1973 = vmin.f32 %v1972, 1.0
      %v1974 = vmax.f32 %v1973, -1.0
      %v1975 = vmul.f32 %v1787, %v1787
      %v1976 = vmin.f32 16.0, %v1975
      %v1977 = vmul.f32 %v1976, 2.1237322e-06
      %v1978 = vadd.f32 %v1977, 0.00028619796
      %v1979 = vmul.f32 %v1976, %v1978
      %v1980 = vadd.f32 %v1979, 0.0036580483
      %v1981 = vmul.f32 %v1976, %v1980
      %v1982 = vadd.f32 %v1981, 0.05243302
      %v1983 = vmul.f32 %v1976, %v1982
      %v1984 = vadd.f32 %v1983, 0.18741608
      %v1985 = vmul.f32 %v1976, %v1984
      %v1986 = vadd.f32 %v1985, 1.1283791
      %v1987 = vmul.f32 %v1787, %v1986
      %v1988 = vmul.f32 %v1976, 3.8918573e-05
      %v1989 = vadd.f32 %v1988, 0.001143296
      %v1990 = vmul.f32 %v1976, %v1989
      %v1991 = vadd.f32 %v1990, 0.014752088
      %v1992 = vmul.f32 %v1976, %v1991
      %v1993 = vadd.f32 %v1992, 0.112945676
      %v1994 = vmul.f32 %v1976, %v1993
      %v1995 = vadd.f32 %v1994, 0.4994258
      %v1996 = vmul.f32 %v1976, %v1995
      %v1997 = vadd.f32 %v1996, 1.0
      %v1998 = vrcp.pop %v1997
      %v1999 = vmul.f32 %v1997, %v1998
      %v2000 = vsub.f32 1.0, %v1999
      %v2001 = vmul.f32 %v1998, %v2000
      %v2002 = vadd.f32 %v1998, %v2001
      %vm2003 = vweird.f32 %v1997
      %vm2004 = vweird.f32 %v1998
      %vm2005 = vmor %vm2003, %vm2004
      %v2006 = vsel %vm2005, %v1998, %v2002
      %v2007 = vand.u32 2147483647, %v1997
      %vm2008 = vcmp.eq.f32.partialorder %v2007, 8.507059e+37
      %v2009 = vand.u32 %v1997, 2147483648
      %v2010 = vor.u32 1.1754944e-38, %v2009
      %v2011 = vsel %vm2008, %v2010, %v2006
      %v2012 = vmul.f32 %v1987, %v2011
      %v2013 = vmin.f32 %v2012, 1.0
      %v2014 = vmax.f32 %v2013, -1.0
      %v2015 = vmul.f32 %v1788, %v1788
      %v2016 = vmin.f32 16.0, %v2015
      %v2017 = vmul.f32 %v2016, 2.1237322e-06
      %v2018 = vadd.f32 %v2017, 0.00028619796
      %v2019 = vmul.f32 %v2016, %v2018
      %v2020 = vadd.f32 %v2019, 0.0036580483
      %v2021 = vmul.f32 %v2016, %v2020
      %v2022 = vadd.f32 %v2021, 0.05243302
      %v2023 = vmul.f32 %v2016, %v2022
      %v2024 = vadd.f32 %v2023, 0.18741608
      %v2025 = vmul.f32 %v2016, %v2024
      %v2026 = vadd.f32 %v2025, 1.1283791
      %v2027 = vmul.f32 %v1788, %v2026
      %v2028 = vmul.f32 %v2016, 3.8918573e-05
      %v2029 = vadd.f32 %v2028, 0.001143296
      %v2030 = vmul.f32 %v2016, %v2029
      %v2031 = vadd.f32 %v2030, 0.014752088
      %v2032 = vmul.f32 %v2016, %v2031
      %v2033 = vadd.f32 %v2032, 0.112945676
      %v2034 = vmul.f32 %v2016, %v2033
      %v2035 = vadd.f32 %v2034, 0.4994258
      %v2036 = vmul.f32 %v2016, %v2035
      %v2037 = vadd.f32 %v2036, 1.0
      %v2038 = vrcp.pop %v2037
      %v2039 = vmul.f32 %v2037, %v2038
      %v2040 = vsub.f32 1.0, %v2039
      %v2041 = vmul.f32 %v2038, %v2040
      %v2042 = vadd.f32 %v2038, %v2041
      %vm2043 = vweird.f32 %v2037
      %vm2044 = vweird.f32 %v2038
      %vm2045 = vmor %vm2043, %vm2044
      %v2046 = vsel %vm2045, %v2038, %v2042
      %v2047 = vand.u32 2147483647, %v2037
      %vm2048 = vcmp.eq.f32.partialorder %v2047, 8.507059e+37
      %v2049 = vand.u32 %v2037, 2147483648
      %v2050 = vor.u32 1.1754944e-38, %v2049
      %v2051 = vsel %vm2048, %v2050, %v2046
      %v2052 = vmul.f32 %v2027, %v2051
      %v2053 = vmin.f32 %v2052, 1.0
      %v2054 = vmax.f32 %v2053, -1.0
      %v2055 = vmul.f32 %v1789, %v1789
      %v2056 = vmin.f32 16.0, %v2055
      %v2057 = vmul.f32 %v2056, 2.1237322e-06
      %v2058 = vadd.f32 %v2057, 0.00028619796
      %v2059 = vmul.f32 %v2056, %v2058
      %v2060 = vadd.f32 %v2059, 0.0036580483
      %v2061 = vmul.f32 %v2056, %v2060
      %v2062 = vadd.f32 %v2061, 0.05243302
      %v2063 = vmul.f32 %v2056, %v2062
      %v2064 = vadd.f32 %v2063, 0.18741608
      %v2065 = vmul.f32 %v2056, %v2064
      %v2066 = vadd.f32 %v2065, 1.1283791
      %v2067 = vmul.f32 %v1789, %v2066
      %v2068 = vmul.f32 %v2056, 3.8918573e-05
      %v2069 = vadd.f32 %v2068, 0.001143296
      %v2070 = vmul.f32 %v2056, %v2069
      %v2071 = vadd.f32 %v2070, 0.014752088
      %v2072 = vmul.f32 %v2056, %v2071
      %v2073 = vadd.f32 %v2072, 0.112945676
      %v2074 = vmul.f32 %v2056, %v2073
      %v2075 = vadd.f32 %v2074, 0.4994258
      %v2076 = vmul.f32 %v2056, %v2075
      %v2077 = vadd.f32 %v2076, 1.0
      %v2078 = vrcp.pop %v2077
      %v2079 = vmul.f32 %v2077, %v2078
      %v2080 = vsub.f32 1.0, %v2079
      %v2081 = vmul.f32 %v2078, %v2080
      %v2082 = vadd.f32 %v2078, %v2081
      %vm2083 = vweird.f32 %v2077
      %vm2084 = vweird.f32 %v2078
      %vm2085 = vmor %vm2083, %vm2084
      %v2086 = vsel %vm2085, %v2078, %v2082
      %v2087 = vand.u32 2147483647, %v2077
      %vm2088 = vcmp.eq.f32.partialorder %v2087, 8.507059e+37
      %v2089 = vand.u32 %v2077, 2147483648
      %v2090 = vor.u32 1.1754944e-38, %v2089
      %v2091 = vsel %vm2088, %v2090, %v2086
      %v2092 = vmul.f32 %v2067, %v2091
      %v2093 = vmin.f32 %v2092, 1.0
      %v2094 = vmax.f32 %v2093, -1.0
      %v2095 = vmul.f32 %v1790, %v1790
      %v2096 = vmin.f32 16.0, %v2095
      %v2097 = vmul.f32 %v2096, 2.1237322e-06
      %v2098 = vadd.f32 %v2097, 0.00028619796
      %v2099 = vmul.f32 %v2096, %v2098
      %v2100 = vadd.f32 %v2099, 0.0036580483
      %v2101 = vmul.f32 %v2096, %v2100
      %v2102 = vadd.f32 %v2101, 0.05243302
      %v2103 = vmul.f32 %v2096, %v2102
      %v2104 = vadd.f32 %v2103, 0.18741608
      %v2105 = vmul.f32 %v2096, %v2104
      %v2106 = vadd.f32 %v2105, 1.1283791
      %v2107 = vmul.f32 %v1790, %v2106
      %v2108 = vmul.f32 %v2096, 3.8918573e-05
      %v2109 = vadd.f32 %v2108, 0.001143296
      %v2110 = vmul.f32 %v2096, %v2109
      %v2111 = vadd.f32 %v2110, 0.014752088
      %v2112 = vmul.f32 %v2096, %v2111
      %v2113 = vadd.f32 %v2112, 0.112945676
      %v2114 = vmul.f32 %v2096, %v2113
      %v2115 = vadd.f32 %v2114, 0.4994258
      %v2116 = vmul.f32 %v2096, %v2115
      %v2117 = vadd.f32 %v2116, 1.0
      %v2118 = vrcp.pop %v2117
      %v2119 = vmul.f32 %v2117, %v2118
      %v2120 = vsub.f32 1.0, %v2119
      %v2121 = vmul.f32 %v2118, %v2120
      %v2122 = vadd.f32 %v2118, %v2121
      %vm2123 = vweird.f32 %v2117
      %vm2124 = vweird.f32 %v2118
      %vm2125 = vmor %vm2123, %vm2124
      %v2126 = vsel %vm2125, %v2118, %v2122
      %v2127 = vand.u32 2147483647, %v2117
      %vm2128 = vcmp.eq.f32.partialorder %v2127, 8.507059e+37
      %v2129 = vand.u32 %v2117, 2147483648
      %v2130 = vor.u32 1.1754944e-38, %v2129
      %v2131 = vsel %vm2128, %v2130, %v2126
      %v2132 = vmul.f32 %v2107, %v2131
      %v2133 = vmin.f32 %v2132, 1.0
      %v2134 = vmax.f32 %v2133, -1.0
      %v2135 = vmul.f32 %v1791, %v1791
      %v2136 = vmin.f32 16.0, %v2135
      %v2137 = vmul.f32 %v2136, 2.1237322e-06
      %v2138 = vadd.f32 %v2137, 0.00028619796
      %v2139 = vmul.f32 %v2136, %v2138
      %v2140 = vadd.f32 %v2139, 0.0036580483
      %v2141 = vmul.f32 %v2136, %v2140
      %v2142 = vadd.f32 %v2141, 0.05243302
      %v2143 = vmul.f32 %v2136, %v2142
      %v2144 = vadd.f32 %v2143, 0.18741608
      %v2145 = vmul.f32 %v2136, %v2144
      %v2146 = vadd.f32 %v2145, 1.1283791
      %v2147 = vmul.f32 %v1791, %v2146
      %v2148 = vmul.f32 %v2136, 3.8918573e-05
      %v2149 = vadd.f32 %v2148, 0.001143296
      %v2150 = vmul.f32 %v2136, %v2149
      %v2151 = vadd.f32 %v2150, 0.014752088
      %v2152 = vmul.f32 %v2136, %v2151
      %v2153 = vadd.f32 %v2152, 0.112945676
      %v2154 = vmul.f32 %v2136, %v2153
      %v2155 = vadd.f32 %v2154, 0.4994258
      %v2156 = vmul.f32 %v2136, %v2155
      %v2157 = vadd.f32 %v2156, 1.0
      %v2158 = vrcp.pop %v2157
      %v2159 = vmul.f32 %v2157, %v2158
      %v2160 = vsub.f32 1.0, %v2159
      %v2161 = vmul.f32 %v2158, %v2160
      %v2162 = vadd.f32 %v2158, %v2161
      %vm2163 = vweird.f32 %v2157
      %vm2164 = vweird.f32 %v2158
      %vm2165 = vmor %vm2163, %vm2164
      %v2166 = vsel %vm2165, %v2158, %v2162
      %v2167 = vand.u32 2147483647, %v2157
      %vm2168 = vcmp.eq.f32.partialorder %v2167, 8.507059e+37
      %v2169 = vand.u32 %v2157, 2147483648
      %v2170 = vor.u32 1.1754944e-38, %v2169
      %v2171 = vsel %vm2168, %v2170, %v2166
      %v2172 = vmul.f32 %v2147, %v2171
      %v2173 = vmin.f32 %v2172, 1.0
      %v2174 = vmax.f32 %v2173, -1.0
      %v2175 = vmul.f32 %v1792, %v1792
      %v2176 = vmin.f32 16.0, %v2175
      %v2177 = vmul.f32 %v2176, 2.1237322e-06
      %v2178 = vadd.f32 %v2177, 0.00028619796
      %v2179 = vmul.f32 %v2176, %v2178
      %v2180 = vadd.f32 %v2179, 0.0036580483
      %v2181 = vmul.f32 %v2176, %v2180
      %v2182 = vadd.f32 %v2181, 0.05243302
      %v2183 = vmul.f32 %v2176, %v2182
      %v2184 = vadd.f32 %v2183, 0.18741608
      %v2185 = vmul.f32 %v2176, %v2184
      %v2186 = vadd.f32 %v2185, 1.1283791
      %v2187 = vmul.f32 %v1792, %v2186
      %v2188 = vmul.f32 %v2176, 3.8918573e-05
      %v2189 = vadd.f32 %v2188, 0.001143296
      %v2190 = vmul.f32 %v2176, %v2189
      %v2191 = vadd.f32 %v2190, 0.014752088
      %v2192 = vmul.f32 %v2176, %v2191
      %v2193 = vadd.f32 %v2192, 0.112945676
      %v2194 = vmul.f32 %v2176, %v2193
      %v2195 = vadd.f32 %v2194, 0.4994258
      %v2196 = vmul.f32 %v2176, %v2195
      %v2197 = vadd.f32 %v2196, 1.0
      %v2198 = vrcp.pop %v2197
      %v2199 = vmul.f32 %v2197, %v2198
      %v2200 = vsub.f32 1.0, %v2199
      %v2201 = vmul.f32 %v2198, %v2200
      %v2202 = vadd.f32 %v2198, %v2201
      %vm2203 = vweird.f32 %v2197
      %vm2204 = vweird.f32 %v2198
      %vm2205 = vmor %vm2203, %vm2204
      %v2206 = vsel %vm2205, %v2198, %v2202
      %v2207 = vand.u32 2147483647, %v2197
      %vm2208 = vcmp.eq.f32.partialorder %v2207, 8.507059e+37
      %v2209 = vand.u32 %v2197, 2147483648
      %v2210 = vor.u32 1.1754944e-38, %v2209
      %v2211 = vsel %vm2208, %v2210, %v2206
      %v2212 = vmul.f32 %v2187, %v2211
      %v2213 = vmin.f32 %v2212, 1.0
      %v2214 = vmax.f32 %v2213, -1.0
      %v2215 = vmul.f32 %v1793, %v1793
      %v2216 = vmin.f32 16.0, %v2215
      %v2217 = vmul.f32 %v2216, 2.1237322e-06
      %v2218 = vadd.f32 %v2217, 0.00028619796
      %v2219 = vmul.f32 %v2216, %v2218
      %v2220 = vadd.f32 %v2219, 0.0036580483
      %v2221 = vmul.f32 %v2216, %v2220
      %v2222 = vadd.f32 %v2221, 0.05243302
      %v2223 = vmul.f32 %v2216, %v2222
      %v2224 = vadd.f32 %v2223, 0.18741608
      %v2225 = vmul.f32 %v2216, %v2224
      %v2226 = vadd.f32 %v2225, 1.1283791
      %v2227 = vmul.f32 %v1793, %v2226
      %v2228 = vmul.f32 %v2216, 3.8918573e-05
      %v2229 = vadd.f32 %v2228, 0.001143296
      %v2230 = vmul.f32 %v2216, %v2229
      %v2231 = vadd.f32 %v2230, 0.014752088
      %v2232 = vmul.f32 %v2216, %v2231
      %v2233 = vadd.f32 %v2232, 0.112945676
      %v2234 = vmul.f32 %v2216, %v2233
      %v2235 = vadd.f32 %v2234, 0.4994258
      %v2236 = vmul.f32 %v2216, %v2235
      %v2237 = vadd.f32 %v2236, 1.0
      %v2238 = vrcp.pop %v2237
      %v2239 = vmul.f32 %v2237, %v2238
      %v2240 = vsub.f32 1.0, %v2239
      %v2241 = vmul.f32 %v2238, %v2240
      %v2242 = vadd.f32 %v2238, %v2241
      %vm2243 = vweird.f32 %v2237
      %vm2244 = vweird.f32 %v2238
      %vm2245 = vmor %vm2243, %vm2244
      %v2246 = vsel %vm2245, %v2238, %v2242
      %v2247 = vand.u32 2147483647, %v2237
      %vm2248 = vcmp.eq.f32.partialorder %v2247, 8.507059e+37
      %v2249 = vand.u32 %v2237, 2147483648
      %v2250 = vor.u32 1.1754944e-38, %v2249
      %v2251 = vsel %vm2248, %v2250, %v2246
      %v2252 = vmul.f32 %v2227, %v2251
      %v2253 = vmin.f32 %v2252, 1.0
      %v2254 = vmax.f32 %v2253, -1.0
      %v2255 = vmul.f32 %v1794, %v1794
      %v2256 = vmin.f32 16.0, %v2255
      %v2257 = vmul.f32 %v2256, 2.1237322e-06
      %v2258 = vadd.f32 %v2257, 0.00028619796
      %v2259 = vmul.f32 %v2256, %v2258
      %v2260 = vadd.f32 %v2259, 0.0036580483
      %v2261 = vmul.f32 %v2256, %v2260
      %v2262 = vadd.f32 %v2261, 0.05243302
      %v2263 = vmul.f32 %v2256, %v2262
      %v2264 = vadd.f32 %v2263, 0.18741608
      %v2265 = vmul.f32 %v2256, %v2264
      %v2266 = vadd.f32 %v2265, 1.1283791
      %v2267 = vmul.f32 %v1794, %v2266
      %v2268 = vmul.f32 %v2256, 3.8918573e-05
      %v2269 = vadd.f32 %v2268, 0.001143296
      %v2270 = vmul.f32 %v2256, %v2269
      %v2271 = vadd.f32 %v2270, 0.014752088
      %v2272 = vmul.f32 %v2256, %v2271
      %v2273 = vadd.f32 %v2272, 0.112945676
      %v2274 = vmul.f32 %v2256, %v2273
      %v2275 = vadd.f32 %v2274, 0.4994258
      %v2276 = vmul.f32 %v2256, %v2275
      %v2277 = vadd.f32 %v2276, 1.0
      %v2278 = vrcp.pop %v2277
      %v2279 = vmul.f32 %v2277, %v2278
      %v2280 = vsub.f32 1.0, %v2279
      %v2281 = vmul.f32 %v2278, %v2280
      %v2282 = vadd.f32 %v2278, %v2281
      %vm2283 = vweird.f32 %v2277
      %vm2284 = vweird.f32 %v2278
      %vm2285 = vmor %vm2283, %vm2284
      %v2286 = vsel %vm2285, %v2278, %v2282
      %v2287 = vand.u32 2147483647, %v2277
      %vm2288 = vcmp.eq.f32.partialorder %v2287, 8.507059e+37
      %v2289 = vand.u32 %v2277, 2147483648
      %v2290 = vor.u32 1.1754944e-38, %v2289
      %v2291 = vsel %vm2288, %v2290, %v2286
      %v2292 = vmul.f32 %v2267, %v2291
      %v2293 = vmin.f32 %v2292, 1.0
      %v2294 = vmax.f32 %v2293, -1.0
      %v2295 = vmul.f32 %v1795, %v1795
      %v2296 = vmin.f32 16.0, %v2295
      %v2297 = vmul.f32 %v2296, 2.1237322e-06
      %v2298 = vadd.f32 %v2297, 0.00028619796
      %v2299 = vmul.f32 %v2296, %v2298
      %v2300 = vadd.f32 %v2299, 0.0036580483
      %v2301 = vmul.f32 %v2296, %v2300
      %v2302 = vadd.f32 %v2301, 0.05243302
      %v2303 = vmul.f32 %v2296, %v2302
      %v2304 = vadd.f32 %v2303, 0.18741608
      %v2305 = vmul.f32 %v2296, %v2304
      %v2306 = vadd.f32 %v2305, 1.1283791
      %v2307 = vmul.f32 %v1795, %v2306
      %v2308 = vmul.f32 %v2296, 3.8918573e-05
      %v2309 = vadd.f32 %v2308, 0.001143296
      %v2310 = vmul.f32 %v2296, %v2309
      %v2311 = vadd.f32 %v2310, 0.014752088
      %v2312 = vmul.f32 %v2296, %v2311
      %v2313 = vadd.f32 %v2312, 0.112945676
      %v2314 = vmul.f32 %v2296, %v2313
      %v2315 = vadd.f32 %v2314, 0.4994258
      %v2316 = vmul.f32 %v2296, %v2315
      %v2317 = vadd.f32 %v2316, 1.0
      %v2318 = vrcp.pop %v2317
      %v2319 = vmul.f32 %v2317, %v2318
      %v2320 = vsub.f32 1.0, %v2319
      %v2321 = vmul.f32 %v2318, %v2320
      %v2322 = vadd.f32 %v2318, %v2321
      %vm2323 = vweird.f32 %v2317
      %vm2324 = vweird.f32 %v2318
      %vm2325 = vmor %vm2323, %vm2324
      %v2326 = vsel %vm2325, %v2318, %v2322
      %v2327 = vand.u32 2147483647, %v2317
      %vm2328 = vcmp.eq.f32.partialorder %v2327, 8.507059e+37
      %v2329 = vand.u32 %v2317, 2147483648
      %v2330 = vor.u32 1.1754944e-38, %v2329
      %v2331 = vsel %vm2328, %v2330, %v2326
      %v2332 = vmul.f32 %v2307, %v2331
      %v2333 = vmin.f32 %v2332, 1.0
      %v2334 = vmax.f32 %v2333, -1.0
      %v2335 = vmul.f32 %v1796, %v1796
      %v2336 = vmin.f32 16.0, %v2335
      %v2337 = vmul.f32 %v2336, 2.1237322e-06
      %v2338 = vadd.f32 %v2337, 0.00028619796
      %v2339 = vmul.f32 %v2336, %v2338
      %v2340 = vadd.f32 %v2339, 0.0036580483
      %v2341 = vmul.f32 %v2336, %v2340
      %v2342 = vadd.f32 %v2341, 0.05243302
      %v2343 = vmul.f32 %v2336, %v2342
      %v2344 = vadd.f32 %v2343, 0.18741608
      %v2345 = vmul.f32 %v2336, %v2344
      %v2346 = vadd.f32 %v2345, 1.1283791
      %v2347 = vmul.f32 %v1796, %v2346
      %v2348 = vmul.f32 %v2336, 3.8918573e-05
      %v2349 = vadd.f32 %v2348, 0.001143296
      %v2350 = vmul.f32 %v2336, %v2349
      %v2351 = vadd.f32 %v2350, 0.014752088
      %v2352 = vmul.f32 %v2336, %v2351
      %v2353 = vadd.f32 %v2352, 0.112945676
      %v2354 = vmul.f32 %v2336, %v2353
      %v2355 = vadd.f32 %v2354, 0.4994258
      %v2356 = vmul.f32 %v2336, %v2355
      %v2357 = vadd.f32 %v2356, 1.0
      %v2358 = vrcp.pop %v2357
      %v2359 = vmul.f32 %v2357, %v2358
      %v2360 = vsub.f32 1.0, %v2359
      %v2361 = vmul.f32 %v2358, %v2360
      %v2362 = vadd.f32 %v2358, %v2361
      %vm2363 = vweird.f32 %v2357
      %vm2364 = vweird.f32 %v2358
      %vm2365 = vmor %vm2363, %vm2364
      %v2366 = vsel %vm2365, %v2358, %v2362
      %v2367 = vand.u32 2147483647, %v2357
      %vm2368 = vcmp.eq.f32.partialorder %v2367, 8.507059e+37
      %v2369 = vand.u32 %v2357, 2147483648
      %v2370 = vor.u32 1.1754944e-38, %v2369
      %v2371 = vsel %vm2368, %v2370, %v2366
      %v2372 = vmul.f32 %v2347, %v2371
      %v2373 = vmin.f32 %v2372, 1.0
      %v2374 = vmax.f32 %v2373, -1.0
      %v2375 = vmul.f32 %v1797, %v1797
      %v2376 = vmin.f32 16.0, %v2375
      %v2377 = vmul.f32 %v2376, 2.1237322e-06
      %v2378 = vadd.f32 %v2377, 0.00028619796
      %v2379 = vmul.f32 %v2376, %v2378
      %v2380 = vadd.f32 %v2379, 0.0036580483
      %v2381 = vmul.f32 %v2376, %v2380
      %v2382 = vadd.f32 %v2381, 0.05243302
      %v2383 = vmul.f32 %v2376, %v2382
      %v2384 = vadd.f32 %v2383, 0.18741608
      %v2385 = vmul.f32 %v2376, %v2384
      %v2386 = vadd.f32 %v2385, 1.1283791
      %v2387 = vmul.f32 %v1797, %v2386
      %v2388 = vmul.f32 %v2376, 3.8918573e-05
      %v2389 = vadd.f32 %v2388, 0.001143296
      %v2390 = vmul.f32 %v2376, %v2389
      %v2391 = vadd.f32 %v2390, 0.014752088
      %v2392 = vmul.f32 %v2376, %v2391
      %v2393 = vadd.f32 %v2392, 0.112945676
      %v2394 = vmul.f32 %v2376, %v2393
      %v2395 = vadd.f32 %v2394, 0.4994258
      %v2396 = vmul.f32 %v2376, %v2395
      %v2397 = vadd.f32 %v2396, 1.0
      %v2398 = vrcp.pop %v2397
      %v2399 = vmul.f32 %v2397, %v2398
      %v2400 = vsub.f32 1.0, %v2399
      %v2401 = vmul.f32 %v2398, %v2400
      %v2402 = vadd.f32 %v2398, %v2401
      %vm2403 = vweird.f32 %v2397
      %vm2404 = vweird.f32 %v2398
      %vm2405 = vmor %vm2403, %vm2404
      %v2406 = vsel %vm2405, %v2398, %v2402
      %v2407 = vand.u32 2147483647, %v2397
      %vm2408 = vcmp.eq.f32.partialorder %v2407, 8.507059e+37
      %v2409 = vand.u32 %v2397, 2147483648
      %v2410 = vor.u32 1.1754944e-38, %v2409
      %v2411 = vsel %vm2408, %v2410, %v2406
      %v2412 = vmul.f32 %v2387, %v2411
      %v2413 = vmin.f32 %v2412, 1.0
      %v2414 = vmax.f32 %v2413, -1.0
      %v2415 = vmul.f32 %v1798, %v1798
      %v2416 = vmin.f32 16.0, %v2415
      %v2417 = vmul.f32 %v2416, 2.1237322e-06
      %v2418 = vadd.f32 %v2417, 0.00028619796
      %v2419 = vmul.f32 %v2416, %v2418
      %v2420 = vadd.f32 %v2419, 0.0036580483
      %v2421 = vmul.f32 %v2416, %v2420
      %v2422 = vadd.f32 %v2421, 0.05243302
      %v2423 = vmul.f32 %v2416, %v2422
      %v2424 = vadd.f32 %v2423, 0.18741608
      %v2425 = vmul.f32 %v2416, %v2424
      %v2426 = vadd.f32 %v2425, 1.1283791
      %v2427 = vmul.f32 %v1798, %v2426
      %v2428 = vmul.f32 %v2416, 3.8918573e-05
      %v2429 = vadd.f32 %v2428, 0.001143296
      %v2430 = vmul.f32 %v2416, %v2429
      %v2431 = vadd.f32 %v2430, 0.014752088
      %v2432 = vmul.f32 %v2416, %v2431
      %v2433 = vadd.f32 %v2432, 0.112945676
      %v2434 = vmul.f32 %v2416, %v2433
      %v2435 = vadd.f32 %v2434, 0.4994258
      %v2436 = vmul.f32 %v2416, %v2435
      %v2437 = vadd.f32 %v2436, 1.0
      %v2438 = vrcp.pop %v2437
      %v2439 = vmul.f32 %v2437, %v2438
      %v2440 = vsub.f32 1.0, %v2439
      %v2441 = vmul.f32 %v2438, %v2440
      %v2442 = vadd.f32 %v2438, %v2441
      %vm2443 = vweird.f32 %v2437
      %vm2444 = vweird.f32 %v2438
      %vm2445 = vmor %vm2443, %vm2444
      %v2446 = vsel %vm2445, %v2438, %v2442
      %v2447 = vand.u32 2147483647, %v2437
      %vm2448 = vcmp.eq.f32.partialorder %v2447, 8.507059e+37
      %v2449 = vand.u32 %v2437, 2147483648
      %v2450 = vor.u32 1.1754944e-38, %v2449
      %v2451 = vsel %vm2448, %v2450, %v2446
      %v2452 = vmul.f32 %v2427, %v2451
      %v2453 = vmin.f32 %v2452, 1.0
      %v2454 = vmax.f32 %v2453, -1.0
      %v2455 = vmul.f32 %v1799, %v1799
      %v2456 = vmin.f32 16.0, %v2455
      %v2457 = vmul.f32 %v2456, 2.1237322e-06
      %v2458 = vadd.f32 %v2457, 0.00028619796
      %v2459 = vmul.f32 %v2456, %v2458
      %v2460 = vadd.f32 %v2459, 0.0036580483
      %v2461 = vmul.f32 %v2456, %v2460
      %v2462 = vadd.f32 %v2461, 0.05243302
      %v2463 = vmul.f32 %v2456, %v2462
      %v2464 = vadd.f32 %v2463, 0.18741608
      %v2465 = vmul.f32 %v2456, %v2464
      %v2466 = vadd.f32 %v2465, 1.1283791
      %v2467 = vmul.f32 %v1799, %v2466
      %v2468 = vmul.f32 %v2456, 3.8918573e-05
      %v2469 = vadd.f32 %v2468, 0.001143296
      %v2470 = vmul.f32 %v2456, %v2469
      %v2471 = vadd.f32 %v2470, 0.014752088
      %v2472 = vmul.f32 %v2456, %v2471
      %v2473 = vadd.f32 %v2472, 0.112945676
      %v2474 = vmul.f32 %v2456, %v2473
      %v2475 = vadd.f32 %v2474, 0.4994258
      %v2476 = vmul.f32 %v2456, %v2475
      %v2477 = vadd.f32 %v2476, 1.0
      %v2478 = vrcp.pop %v2477
      %v2479 = vmul.f32 %v2477, %v2478
      %v2480 = vsub.f32 1.0, %v2479
      %v2481 = vmul.f32 %v2478, %v2480
      %v2482 = vadd.f32 %v2478, %v2481
      %vm2483 = vweird.f32 %v2477
      %vm2484 = vweird.f32 %v2478
      %vm2485 = vmor %vm2483, %vm2484
      %v2486 = vsel %vm2485, %v2478, %v2482
      %v2487 = vand.u32 2147483647, %v2477
      %vm2488 = vcmp.eq.f32.partialorder %v2487, 8.507059e+37
      %v2489 = vand.u32 %v2477, 2147483648
      %v2490 = vor.u32 1.1754944e-38, %v2489
      %v2491 = vsel %vm2488, %v2490, %v2486
      %v2492 = vmul.f32 %v2467, %v2491
      %v2493 = vmin.f32 %v2492, 1.0
      %v2494 = vmax.f32 %v2493, -1.0
      %v2495 = vmul.f32 %v1800, %v1800
      %v2496 = vmin.f32 16.0, %v2495
      %v2497 = vmul.f32 %v2496, 2.1237322e-06
      %v2498 = vadd.f32 %v2497, 0.00028619796
      %v2499 = vmul.f32 %v2496, %v2498
      %v2500 = vadd.f32 %v2499, 0.0036580483
      %v2501 = vmul.f32 %v2496, %v2500
      %v2502 = vadd.f32 %v2501, 0.05243302
      %v2503 = vmul.f32 %v2496, %v2502
      %v2504 = vadd.f32 %v2503, 0.18741608
      %v2505 = vmul.f32 %v2496, %v2504
      %v2506 = vadd.f32 %v2505, 1.1283791
      %v2507 = vmul.f32 %v1800, %v2506
      %v2508 = vmul.f32 %v2496, 3.8918573e-05
      %v2509 = vadd.f32 %v2508, 0.001143296
      %v2510 = vmul.f32 %v2496, %v2509
      %v2511 = vadd.f32 %v2510, 0.014752088
      %v2512 = vmul.f32 %v2496, %v2511
      %v2513 = vadd.f32 %v2512, 0.112945676
      %v2514 = vmul.f32 %v2496, %v2513
      %v2515 = vadd.f32 %v2514, 0.4994258
      %v2516 = vmul.f32 %v2496, %v2515
      %v2517 = vadd.f32 %v2516, 1.0
      %v2518 = vrcp.pop %v2517
      %v2519 = vmul.f32 %v2517, %v2518
      %v2520 = vsub.f32 1.0, %v2519
      %v2521 = vmul.f32 %v2518, %v2520
      %v2522 = vadd.f32 %v2518, %v2521
      %vm2523 = vweird.f32 %v2517
      %vm2524 = vweird.f32 %v2518
      %vm2525 = vmor %vm2523, %vm2524
      %v2526 = vsel %vm2525, %v2518, %v2522
      %v2527 = vand.u32 2147483647, %v2517
      %vm2528 = vcmp.eq.f32.partialorder %v2527, 8.507059e+37
      %v2529 = vand.u32 %v2517, 2147483648
      %v2530 = vor.u32 1.1754944e-38, %v2529
      %v2531 = vsel %vm2528, %v2530, %v2526
      %v2532 = vmul.f32 %v2507, %v2531
      %v2533 = vmin.f32 %v2532, 1.0
      %v2534 = vmax.f32 %v2533, -1.0
      %v2535 = vmul.f32 %v1801, %v1801
      %v2536 = vmin.f32 16.0, %v2535
      %v2537 = vmul.f32 %v2536, 2.1237322e-06
      %v2538 = vadd.f32 %v2537, 0.00028619796
      %v2539 = vmul.f32 %v2536, %v2538
      %v2540 = vadd.f32 %v2539, 0.0036580483
      %v2541 = vmul.f32 %v2536, %v2540
      %v2542 = vadd.f32 %v2541, 0.05243302
      %v2543 = vmul.f32 %v2536, %v2542
      %v2544 = vadd.f32 %v2543, 0.18741608
      %v2545 = vmul.f32 %v2536, %v2544
      %v2546 = vadd.f32 %v2545, 1.1283791
      %v2547 = vmul.f32 %v1801, %v2546
      %v2548 = vmul.f32 %v2536, 3.8918573e-05
      %v2549 = vadd.f32 %v2548, 0.001143296
      %v2550 = vmul.f32 %v2536, %v2549
      %v2551 = vadd.f32 %v2550, 0.014752088
      %v2552 = vmul.f32 %v2536, %v2551
      %v2553 = vadd.f32 %v2552, 0.112945676
      %v2554 = vmul.f32 %v2536, %v2553
      %v2555 = vadd.f32 %v2554, 0.4994258
      %v2556 = vmul.f32 %v2536, %v2555
      %v2557 = vadd.f32 %v2556, 1.0
      %v2558 = vrcp.pop %v2557
      %v2559 = vmul.f32 %v2557, %v2558
      %v2560 = vsub.f32 1.0, %v2559
      %v2561 = vmul.f32 %v2558, %v2560
      %v2562 = vadd.f32 %v2558, %v2561
      %vm2563 = vweird.f32 %v2557
      %vm2564 = vweird.f32 %v2558
      %vm2565 = vmor %vm2563, %vm2564
      %v2566 = vsel %vm2565, %v2558, %v2562
      %v2567 = vand.u32 2147483647, %v2557
      %vm2568 = vcmp.eq.f32.partialorder %v2567, 8.507059e+37
      %v2569 = vand.u32 %v2557, 2147483648
      %v2570 = vor.u32 1.1754944e-38, %v2569
      %v2571 = vsel %vm2568, %v2570, %v2566
      %v2572 = vmul.f32 %v2547, %v2571
      %v2573 = vmin.f32 %v2572, 1.0
      %v2574 = vmax.f32 %v2573, -1.0
      %v2575 = vmul.f32 %v1802, %v1802
      %v2576 = vmin.f32 16.0, %v2575
      %v2577 = vmul.f32 %v2576, 2.1237322e-06
      %v2578 = vadd.f32 %v2577, 0.00028619796
      %v2579 = vmul.f32 %v2576, %v2578
      %v2580 = vadd.f32 %v2579, 0.0036580483
      %v2581 = vmul.f32 %v2576, %v2580
      %v2582 = vadd.f32 %v2581, 0.05243302
      %v2583 = vmul.f32 %v2576, %v2582
      %v2584 = vadd.f32 %v2583, 0.18741608
      %v2585 = vmul.f32 %v2576, %v2584
      %v2586 = vadd.f32 %v2585, 1.1283791
      %v2587 = vmul.f32 %v1802, %v2586
      %v2588 = vmul.f32 %v2576, 3.8918573e-05
      %v2589 = vadd.f32 %v2588, 0.001143296
      %v2590 = vmul.f32 %v2576, %v2589
      %v2591 = vadd.f32 %v2590, 0.014752088
      %v2592 = vmul.f32 %v2576, %v2591
      %v2593 = vadd.f32 %v2592, 0.112945676
      %v2594 = vmul.f32 %v2576, %v2593
      %v2595 = vadd.f32 %v2594, 0.4994258
      %v2596 = vmul.f32 %v2576, %v2595
      %v2597 = vadd.f32 %v2596, 1.0
      %v2598 = vrcp.pop %v2597
      %v2599 = vmul.f32 %v2597, %v2598
      %v2600 = vsub.f32 1.0, %v2599
      %v2601 = vmul.f32 %v2598, %v2600
      %v2602 = vadd.f32 %v2598, %v2601
      %vm2603 = vweird.f32 %v2597
      %vm2604 = vweird.f32 %v2598
      %vm2605 = vmor %vm2603, %vm2604
      %v2606 = vsel %vm2605, %v2598, %v2602
      %v2607 = vand.u32 2147483647, %v2597
      %vm2608 = vcmp.eq.f32.partialorder %v2607, 8.507059e+37
      %v2609 = vand.u32 %v2597, 2147483648
      %v2610 = vor.u32 1.1754944e-38, %v2609
      %v2611 = vsel %vm2608, %v2610, %v2606
      %v2612 = vmul.f32 %v2587, %v2611
      %v2613 = vmin.f32 %v2612, 1.0
      %v2614 = vmax.f32 %v2613, -1.0
      %v2615 = vmul.f32 %v1803, %v1803
      %v2616 = vmin.f32 16.0, %v2615
      %v2617 = vmul.f32 %v2616, 2.1237322e-06
      %v2618 = vadd.f32 %v2617, 0.00028619796
      %v2619 = vmul.f32 %v2616, %v2618
      %v2620 = vadd.f32 %v2619, 0.0036580483
      %v2621 = vmul.f32 %v2616, %v2620
      %v2622 = vadd.f32 %v2621, 0.05243302
      %v2623 = vmul.f32 %v2616, %v2622
      %v2624 = vadd.f32 %v2623, 0.18741608
      %v2625 = vmul.f32 %v2616, %v2624
      %v2626 = vadd.f32 %v2625, 1.1283791
      %v2627 = vmul.f32 %v1803, %v2626
      %v2628 = vmul.f32 %v2616, 3.8918573e-05
      %v2629 = vadd.f32 %v2628, 0.001143296
      %v2630 = vmul.f32 %v2616, %v2629
      %v2631 = vadd.f32 %v2630, 0.014752088
      %v2632 = vmul.f32 %v2616, %v2631
      %v2633 = vadd.f32 %v2632, 0.112945676
      %v2634 = vmul.f32 %v2616, %v2633
      %v2635 = vadd.f32 %v2634, 0.4994258
      %v2636 = vmul.f32 %v2616, %v2635
      %v2637 = vadd.f32 %v2636, 1.0
      %v2638 = vrcp.pop %v2637
      %v2639 = vmul.f32 %v2637, %v2638
      %v2640 = vsub.f32 1.0, %v2639
      %v2641 = vmul.f32 %v2638, %v2640
      %v2642 = vadd.f32 %v2638, %v2641
      %vm2643 = vweird.f32 %v2637
      %vm2644 = vweird.f32 %v2638
      %vm2645 = vmor %vm2643, %vm2644
      %v2646 = vsel %vm2645, %v2638, %v2642
      %v2647 = vand.u32 2147483647, %v2637
      %vm2648 = vcmp.eq.f32.partialorder %v2647, 8.507059e+37
      %v2649 = vand.u32 %v2637, 2147483648
      %v2650 = vor.u32 1.1754944e-38, %v2649
      %v2651 = vsel %vm2648, %v2650, %v2646
      %v2652 = vmul.f32 %v2627, %v2651
      %v2653 = vmin.f32 %v2652, 1.0
      %v2654 = vmax.f32 %v2653, -1.0
      %v2655 = vmul.f32 %v1804, %v1804
      %v2656 = vmin.f32 16.0, %v2655
      %v2657 = vmul.f32 %v2656, 2.1237322e-06
      %v2658 = vadd.f32 %v2657, 0.00028619796
      %v2659 = vmul.f32 %v2656, %v2658
      %v2660 = vadd.f32 %v2659, 0.0036580483
      %v2661 = vmul.f32 %v2656, %v2660
      %v2662 = vadd.f32 %v2661, 0.05243302
      %v2663 = vmul.f32 %v2656, %v2662
      %v2664 = vadd.f32 %v2663, 0.18741608
      %v2665 = vmul.f32 %v2656, %v2664
      %v2666 = vadd.f32 %v2665, 1.1283791
      %v2667 = vmul.f32 %v1804, %v2666
      %v2668 = vmul.f32 %v2656, 3.8918573e-05
      %v2669 = vadd.f32 %v2668, 0.001143296
      %v2670 = vmul.f32 %v2656, %v2669
      %v2671 = vadd.f32 %v2670, 0.014752088
      %v2672 = vmul.f32 %v2656, %v2671
      %v2673 = vadd.f32 %v2672, 0.112945676
      %v2674 = vmul.f32 %v2656, %v2673
      %v2675 = vadd.f32 %v2674, 0.4994258
      %v2676 = vmul.f32 %v2656, %v2675
      %v2677 = vadd.f32 %v2676, 1.0
      %v2678 = vrcp.pop %v2677
      %v2679 = vmul.f32 %v2677, %v2678
      %v2680 = vsub.f32 1.0, %v2679
      %v2681 = vmul.f32 %v2678, %v2680
      %v2682 = vadd.f32 %v2678, %v2681
      %vm2683 = vweird.f32 %v2677
      %vm2684 = vweird.f32 %v2678
      %vm2685 = vmor %vm2683, %vm2684
      %v2686 = vsel %vm2685, %v2678, %v2682
      %v2687 = vand.u32 2147483647, %v2677
      %vm2688 = vcmp.eq.f32.partialorder %v2687, 8.507059e+37
      %v2689 = vand.u32 %v2677, 2147483648
      %v2690 = vor.u32 1.1754944e-38, %v2689
      %v2691 = vsel %vm2688, %v2690, %v2686
      %v2692 = vmul.f32 %v2667, %v2691
      %v2693 = vmin.f32 %v2692, 1.0
      %v2694 = vmax.f32 %v2693, -1.0
      %v2695 = vmul.f32 %v1805, %v1805
      %v2696 = vmin.f32 16.0, %v2695
      %v2697 = vmul.f32 %v2696, 2.1237322e-06
      %v2698 = vadd.f32 %v2697, 0.00028619796
      %v2699 = vmul.f32 %v2696, %v2698
      %v2700 = vadd.f32 %v2699, 0.0036580483
      %v2701 = vmul.f32 %v2696, %v2700
      %v2702 = vadd.f32 %v2701, 0.05243302
      %v2703 = vmul.f32 %v2696, %v2702
      %v2704 = vadd.f32 %v2703, 0.18741608
      %v2705 = vmul.f32 %v2696, %v2704
      %v2706 = vadd.f32 %v2705, 1.1283791
      %v2707 = vmul.f32 %v1805, %v2706
      %v2708 = vmul.f32 %v2696, 3.8918573e-05
      %v2709 = vadd.f32 %v2708, 0.001143296
      %v2710 = vmul.f32 %v2696, %v2709
      %v2711 = vadd.f32 %v2710, 0.014752088
      %v2712 = vmul.f32 %v2696, %v2711
      %v2713 = vadd.f32 %v2712, 0.112945676
      %v2714 = vmul.f32 %v2696, %v2713
      %v2715 = vadd.f32 %v2714, 0.4994258
      %v2716 = vmul.f32 %v2696, %v2715
      %v2717 = vadd.f32 %v2716, 1.0
      %v2718 = vrcp.pop %v2717
      %v2719 = vmul.f32 %v2717, %v2718
      %v2720 = vsub.f32 1.0, %v2719
      %v2721 = vmul.f32 %v2718, %v2720
      %v2722 = vadd.f32 %v2718, %v2721
      %vm2723 = vweird.f32 %v2717
      %vm2724 = vweird.f32 %v2718
      %vm2725 = vmor %vm2723, %vm2724
      %v2726 = vsel %vm2725, %v2718, %v2722
      %v2727 = vand.u32 2147483647, %v2717
      %vm2728 = vcmp.eq.f32.partialorder %v2727, 8.507059e+37
      %v2729 = vand.u32 %v2717, 2147483648
      %v2730 = vor.u32 1.1754944e-38, %v2729
      %v2731 = vsel %vm2728, %v2730, %v2726
      %v2732 = vmul.f32 %v2707, %v2731
      %v2733 = vmin.f32 %v2732, 1.0
      %v2734 = vmax.f32 %v2733, -1.0
      %v2735 = vmul.f32 %v1806, %v1806
      %v2736 = vmin.f32 16.0, %v2735
      %v2737 = vmul.f32 %v2736, 2.1237322e-06
      %v2738 = vadd.f32 %v2737, 0.00028619796
      %v2739 = vmul.f32 %v2736, %v2738
      %v2740 = vadd.f32 %v2739, 0.0036580483
      %v2741 = vmul.f32 %v2736, %v2740
      %v2742 = vadd.f32 %v2741, 0.05243302
      %v2743 = vmul.f32 %v2736, %v2742
      %v2744 = vadd.f32 %v2743, 0.18741608
      %v2745 = vmul.f32 %v2736, %v2744
      %v2746 = vadd.f32 %v2745, 1.1283791
      %v2747 = vmul.f32 %v1806, %v2746
      %v2748 = vmul.f32 %v2736, 3.8918573e-05
      %v2749 = vadd.f32 %v2748, 0.001143296
      %v2750 = vmul.f32 %v2736, %v2749
      %v2751 = vadd.f32 %v2750, 0.014752088
      %v2752 = vmul.f32 %v2736, %v2751
      %v2753 = vadd.f32 %v2752, 0.112945676
      %v2754 = vmul.f32 %v2736, %v2753
      %v2755 = vadd.f32 %v2754, 0.4994258
      %v2756 = vmul.f32 %v2736, %v2755
      %v2757 = vadd.f32 %v2756, 1.0
      %v2758 = vrcp.pop %v2757
      %v2759 = vmul.f32 %v2757, %v2758
      %v2760 = vsub.f32 1.0, %v2759
      %v2761 = vmul.f32 %v2758, %v2760
      %v2762 = vadd.f32 %v2758, %v2761
      %vm2763 = vweird.f32 %v2757
      %vm2764 = vweird.f32 %v2758
      %vm2765 = vmor %vm2763, %vm2764
      %v2766 = vsel %vm2765, %v2758, %v2762
      %v2767 = vand.u32 2147483647, %v2757
      %vm2768 = vcmp.eq.f32.partialorder %v2767, 8.507059e+37
      %v2769 = vand.u32 %v2757, 2147483648
      %v2770 = vor.u32 1.1754944e-38, %v2769
      %v2771 = vsel %vm2768, %v2770, %v2766
      %v2772 = vmul.f32 %v2747, %v2771
      %v2773 = vmin.f32 %v2772, 1.0
      %v2774 = vmax.f32 %v2773, -1.0
      %v2775 = vmul.f32 %v1807, %v1807
      %v2776 = vmin.f32 16.0, %v2775
      %v2777 = vmul.f32 %v2776, 2.1237322e-06
      %v2778 = vadd.f32 %v2777, 0.00028619796
      %v2779 = vmul.f32 %v2776, %v2778
      %v2780 = vadd.f32 %v2779, 0.0036580483
      %v2781 = vmul.f32 %v2776, %v2780
      %v2782 = vadd.f32 %v2781, 0.05243302
      %v2783 = vmul.f32 %v2776, %v2782
      %v2784 = vadd.f32 %v2783, 0.18741608
      %v2785 = vmul.f32 %v2776, %v2784
      %v2786 = vadd.f32 %v2785, 1.1283791
      %v2787 = vmul.f32 %v1807, %v2786
      %v2788 = vmul.f32 %v2776, 3.8918573e-05
      %v2789 = vadd.f32 %v2788, 0.001143296
      %v2790 = vmul.f32 %v2776, %v2789
      %v2791 = vadd.f32 %v2790, 0.014752088
      %v2792 = vmul.f32 %v2776, %v2791
      %v2793 = vadd.f32 %v2792, 0.112945676
      %v2794 = vmul.f32 %v2776, %v2793
      %v2795 = vadd.f32 %v2794, 0.4994258
      %v2796 = vmul.f32 %v2776, %v2795
      %v2797 = vadd.f32 %v2796, 1.0
      %v2798 = vrcp.pop %v2797
      %v2799 = vmul.f32 %v2797, %v2798
      %v2800 = vsub.f32 1.0, %v2799
      %v2801 = vmul.f32 %v2798, %v2800
      %v2802 = vadd.f32 %v2798, %v2801
      %vm2803 = vweird.f32 %v2797
      %vm2804 = vweird.f32 %v2798
      %vm2805 = vmor %vm2803, %vm2804
      %v2806 = vsel %vm2805, %v2798, %v2802
      %v2807 = vand.u32 2147483647, %v2797
      %vm2808 = vcmp.eq.f32.partialorder %v2807, 8.507059e+37
      %v2809 = vand.u32 %v2797, 2147483648
      %v2810 = vor.u32 1.1754944e-38, %v2809
      %v2811 = vsel %vm2808, %v2810, %v2806
      %v2812 = vmul.f32 %v2787, %v2811
      %v2813 = vmin.f32 %v2812, 1.0
      %v2814 = vmax.f32 %v2813, -1.0
      %v2815 = vmul.f32 %v1808, %v1808
      %v2816 = vmin.f32 16.0, %v2815
      %v2817 = vmul.f32 %v2816, 2.1237322e-06
      %v2818 = vadd.f32 %v2817, 0.00028619796
      %v2819 = vmul.f32 %v2816, %v2818
      %v2820 = vadd.f32 %v2819, 0.0036580483
      %v2821 = vmul.f32 %v2816, %v2820
      %v2822 = vadd.f32 %v2821, 0.05243302
      %v2823 = vmul.f32 %v2816, %v2822
      %v2824 = vadd.f32 %v2823, 0.18741608
      %v2825 = vmul.f32 %v2816, %v2824
      %v2826 = vadd.f32 %v2825, 1.1283791
      %v2827 = vmul.f32 %v1808, %v2826
      %v2828 = vmul.f32 %v2816, 3.8918573e-05
      %v2829 = vadd.f32 %v2828, 0.001143296
      %v2830 = vmul.f32 %v2816, %v2829
      %v2831 = vadd.f32 %v2830, 0.014752088
      %v2832 = vmul.f32 %v2816, %v2831
      %v2833 = vadd.f32 %v2832, 0.112945676
      %v2834 = vmul.f32 %v2816, %v2833
      %v2835 = vadd.f32 %v2834, 0.4994258
      %v2836 = vmul.f32 %v2816, %v2835
      %v2837 = vadd.f32 %v2836, 1.0
      %v2838 = vrcp.pop %v2837
      %v2839 = vmul.f32 %v2837, %v2838
      %v2840 = vsub.f32 1.0, %v2839
      %v2841 = vmul.f32 %v2838, %v2840
      %v2842 = vadd.f32 %v2838, %v2841
      %vm2843 = vweird.f32 %v2837
      %vm2844 = vweird.f32 %v2838
      %vm2845 = vmor %vm2843, %vm2844
      %v2846 = vsel %vm2845, %v2838, %v2842
      %v2847 = vand.u32 2147483647, %v2837
      %vm2848 = vcmp.eq.f32.partialorder %v2847, 8.507059e+37
      %v2849 = vand.u32 %v2837, 2147483648
      %v2850 = vor.u32 1.1754944e-38, %v2849
      %v2851 = vsel %vm2848, %v2850, %v2846
      %v2852 = vmul.f32 %v2827, %v2851
      %v2853 = vmin.f32 %v2852, 1.0
      %v2854 = vmax.f32 %v2853, -1.0
      %v2855 = vmul.f32 %v1809, %v1809
      %v2856 = vmin.f32 16.0, %v2855
      %v2857 = vmul.f32 %v2856, 2.1237322e-06
      %v2858 = vadd.f32 %v2857, 0.00028619796
      %v2859 = vmul.f32 %v2856, %v2858
      %v2860 = vadd.f32 %v2859, 0.0036580483
      %v2861 = vmul.f32 %v2856, %v2860
      %v2862 = vadd.f32 %v2861, 0.05243302
      %v2863 = vmul.f32 %v2856, %v2862
      %v2864 = vadd.f32 %v2863, 0.18741608
      %v2865 = vmul.f32 %v2856, %v2864
      %v2866 = vadd.f32 %v2865, 1.1283791
      %v2867 = vmul.f32 %v1809, %v2866
      %v2868 = vmul.f32 %v2856, 3.8918573e-05
      %v2869 = vadd.f32 %v2868, 0.001143296
      %v2870 = vmul.f32 %v2856, %v2869
      %v2871 = vadd.f32 %v2870, 0.014752088
      %v2872 = vmul.f32 %v2856, %v2871
      %v2873 = vadd.f32 %v2872, 0.112945676
      %v2874 = vmul.f32 %v2856, %v2873
      %v2875 = vadd.f32 %v2874, 0.4994258
      %v2876 = vmul.f32 %v2856, %v2875
      %v2877 = vadd.f32 %v2876, 1.0
      %v2878 = vrcp.pop %v2877
      %v2879 = vmul.f32 %v2877, %v2878
      %v2880 = vsub.f32 1.0, %v2879
      %v2881 = vmul.f32 %v2878, %v2880
      %v2882 = vadd.f32 %v2878, %v2881
      %vm2883 = vweird.f32 %v2877
      %vm2884 = vweird.f32 %v2878
      %vm2885 = vmor %vm2883, %vm2884
      %v2886 = vsel %vm2885, %v2878, %v2882
      %v2887 = vand.u32 2147483647, %v2877
      %vm2888 = vcmp.eq.f32.partialorder %v2887, 8.507059e+37
      %v2889 = vand.u32 %v2877, 2147483648
      %v2890 = vor.u32 1.1754944e-38, %v2889
      %v2891 = vsel %vm2888, %v2890, %v2886
      %v2892 = vmul.f32 %v2867, %v2891
      %v2893 = vmin.f32 %v2892, 1.0
      %v2894 = vmax.f32 %v2893, -1.0
      %v2895 = vmul.f32 %v1810, %v1810
      %v2896 = vmin.f32 16.0, %v2895
      %v2897 = vmul.f32 %v2896, 2.1237322e-06
      %v2898 = vadd.f32 %v2897, 0.00028619796
      %v2899 = vmul.f32 %v2896, %v2898
      %v2900 = vadd.f32 %v2899, 0.0036580483
      %v2901 = vmul.f32 %v2896, %v2900
      %v2902 = vadd.f32 %v2901, 0.05243302
      %v2903 = vmul.f32 %v2896, %v2902
      %v2904 = vadd.f32 %v2903, 0.18741608
      %v2905 = vmul.f32 %v2896, %v2904
      %v2906 = vadd.f32 %v2905, 1.1283791
      %v2907 = vmul.f32 %v1810, %v2906
      %v2908 = vmul.f32 %v2896, 3.8918573e-05
      %v2909 = vadd.f32 %v2908, 0.001143296
      %v2910 = vmul.f32 %v2896, %v2909
      %v2911 = vadd.f32 %v2910, 0.014752088
      %v2912 = vmul.f32 %v2896, %v2911
      %v2913 = vadd.f32 %v2912, 0.112945676
      %v2914 = vmul.f32 %v2896, %v2913
      %v2915 = vadd.f32 %v2914, 0.4994258
      %v2916 = vmul.f32 %v2896, %v2915
      %v2917 = vadd.f32 %v2916, 1.0
      %v2918 = vrcp.pop %v2917
      %v2919 = vmul.f32 %v2917, %v2918
      %v2920 = vsub.f32 1.0, %v2919
      %v2921 = vmul.f32 %v2918, %v2920
      %v2922 = vadd.f32 %v2918, %v2921
      %vm2923 = vweird.f32 %v2917
      %vm2924 = vweird.f32 %v2918
      %vm2925 = vmor %vm2923, %vm2924
      %v2926 = vsel %vm2925, %v2918, %v2922
      %v2927 = vand.u32 2147483647, %v2917
      %vm2928 = vcmp.eq.f32.partialorder %v2927, 8.507059e+37
      %v2929 = vand.u32 %v2917, 2147483648
      %v2930 = vor.u32 1.1754944e-38, %v2929
      %v2931 = vsel %vm2928, %v2930, %v2926
      %v2932 = vmul.f32 %v2907, %v2931
      %v2933 = vmin.f32 %v2932, 1.0
      %v2934 = vmax.f32 %v2933, -1.0
      %v2935 = vmul.f32 %v1811, %v1811
      %v2936 = vmin.f32 16.0, %v2935
      %v2937 = vmul.f32 %v2936, 2.1237322e-06
      %v2938 = vadd.f32 %v2937, 0.00028619796
      %v2939 = vmul.f32 %v2936, %v2938
      %v2940 = vadd.f32 %v2939, 0.0036580483
      %v2941 = vmul.f32 %v2936, %v2940
      %v2942 = vadd.f32 %v2941, 0.05243302
      %v2943 = vmul.f32 %v2936, %v2942
      %v2944 = vadd.f32 %v2943, 0.18741608
      %v2945 = vmul.f32 %v2936, %v2944
      %v2946 = vadd.f32 %v2945, 1.1283791
      %v2947 = vmul.f32 %v1811, %v2946
      %v2948 = vmul.f32 %v2936, 3.8918573e-05
      %v2949 = vadd.f32 %v2948, 0.001143296
      %v2950 = vmul.f32 %v2936, %v2949
      %v2951 = vadd.f32 %v2950, 0.014752088
      %v2952 = vmul.f32 %v2936, %v2951
      %v2953 = vadd.f32 %v2952, 0.112945676
      %v2954 = vmul.f32 %v2936, %v2953
      %v2955 = vadd.f32 %v2954, 0.4994258
      %v2956 = vmul.f32 %v2936, %v2955
      %v2957 = vadd.f32 %v2956, 1.0
      %v2958 = vrcp.pop %v2957
      %v2959 = vmul.f32 %v2957, %v2958
      %v2960 = vsub.f32 1.0, %v2959
      %v2961 = vmul.f32 %v2958, %v2960
      %v2962 = vadd.f32 %v2958, %v2961
      %vm2963 = vweird.f32 %v2957
      %vm2964 = vweird.f32 %v2958
      %vm2965 = vmor %vm2963, %vm2964
      %v2966 = vsel %vm2965, %v2958, %v2962
      %v2967 = vand.u32 2147483647, %v2957
      %vm2968 = vcmp.eq.f32.partialorder %v2967, 8.507059e+37
      %v2969 = vand.u32 %v2957, 2147483648
      %v2970 = vor.u32 1.1754944e-38, %v2969
      %v2971 = vsel %vm2968, %v2970, %v2966
      %v2972 = vmul.f32 %v2947, %v2971
      %v2973 = vmin.f32 %v2972, 1.0
      %v2974 = vmax.f32 %v2973, -1.0
      %v2975 = vmul.f32 %v1812, %v1812
      %v2976 = vmin.f32 16.0, %v2975
      %v2977 = vmul.f32 %v2976, 2.1237322e-06
      %v2978 = vadd.f32 %v2977, 0.00028619796
      %v2979 = vmul.f32 %v2976, %v2978
      %v2980 = vadd.f32 %v2979, 0.0036580483
      %v2981 = vmul.f32 %v2976, %v2980
      %v2982 = vadd.f32 %v2981, 0.05243302
      %v2983 = vmul.f32 %v2976, %v2982
      %v2984 = vadd.f32 %v2983, 0.18741608
      %v2985 = vmul.f32 %v2976, %v2984
      %v2986 = vadd.f32 %v2985, 1.1283791
      %v2987 = vmul.f32 %v1812, %v2986
      %v2988 = vmul.f32 %v2976, 3.8918573e-05
      %v2989 = vadd.f32 %v2988, 0.001143296
      %v2990 = vmul.f32 %v2976, %v2989
      %v2991 = vadd.f32 %v2990, 0.014752088
      %v2992 = vmul.f32 %v2976, %v2991
      %v2993 = vadd.f32 %v2992, 0.112945676
      %v2994 = vmul.f32 %v2976, %v2993
      %v2995 = vadd.f32 %v2994, 0.4994258
      %v2996 = vmul.f32 %v2976, %v2995
      %v2997 = vadd.f32 %v2996, 1.0
      %v2998 = vrcp.pop %v2997
      %v2999 = vmul.f32 %v2997, %v2998
      %v3000 = vsub.f32 1.0, %v2999
      %v3001 = vmul.f32 %v2998, %v3000
      %v3002 = vadd.f32 %v2998, %v3001
      %vm3003 = vweird.f32 %v2997
      %vm3004 = vweird.f32 %v2998
      %vm3005 = vmor %vm3003, %vm3004
      %v3006 = vsel %vm3005, %v2998, %v3002
      %v3007 = vand.u32 2147483647, %v2997
      %vm3008 = vcmp.eq.f32.partialorder %v3007, 8.507059e+37
      %v3009 = vand.u32 %v2997, 2147483648
      %v3010 = vor.u32 1.1754944e-38, %v3009
      %v3011 = vsel %vm3008, %v3010, %v3006
      %v3012 = vmul.f32 %v2987, %v3011
      %v3013 = vmin.f32 %v3012, 1.0
      %v3014 = vmax.f32 %v3013, -1.0
      %v3015 = vmul.f32 %v1813, %v1813
      %v3016 = vmin.f32 16.0, %v3015
      %v3017 = vmul.f32 %v3016, 2.1237322e-06
      %v3018 = vadd.f32 %v3017, 0.00028619796
      %v3019 = vmul.f32 %v3016, %v3018
      %v3020 = vadd.f32 %v3019, 0.0036580483
      %v3021 = vmul.f32 %v3016, %v3020
      %v3022 = vadd.f32 %v3021, 0.05243302
      %v3023 = vmul.f32 %v3016, %v3022
      %v3024 = vadd.f32 %v3023, 0.18741608
      %v3025 = vmul.f32 %v3016, %v3024
      %v3026 = vadd.f32 %v3025, 1.1283791
      %v3027 = vmul.f32 %v1813, %v3026
      %v3028 = vmul.f32 %v3016, 3.8918573e-05
      %v3029 = vadd.f32 %v3028, 0.001143296
      %v3030 = vmul.f32 %v3016, %v3029
      %v3031 = vadd.f32 %v3030, 0.014752088
      %v3032 = vmul.f32 %v3016, %v3031
      %v3033 = vadd.f32 %v3032, 0.112945676
      %v3034 = vmul.f32 %v3016, %v3033
      %v3035 = vadd.f32 %v3034, 0.4994258
      %v3036 = vmul.f32 %v3016, %v3035
      %v3037 = vadd.f32 %v3036, 1.0
      %v3038 = vrcp.pop %v3037
      %v3039 = vmul.f32 %v3037, %v3038
      %v3040 = vsub.f32 1.0, %v3039
      %v3041 = vmul.f32 %v3038, %v3040
      %v3042 = vadd.f32 %v3038, %v3041
      %vm3043 = vweird.f32 %v3037
      %vm3044 = vweird.f32 %v3038
      %vm3045 = vmor %vm3043, %vm3044
      %v3046 = vsel %vm3045, %v3038, %v3042
      %v3047 = vand.u32 2147483647, %v3037
      %vm3048 = vcmp.eq.f32.partialorder %v3047, 8.507059e+37
      %v3049 = vand.u32 %v3037, 2147483648
      %v3050 = vor.u32 1.1754944e-38, %v3049
      %v3051 = vsel %vm3048, %v3050, %v3046
      %v3052 = vmul.f32 %v3027, %v3051
      %v3053 = vmin.f32 %v3052, 1.0
      %v3054 = vmax.f32 %v3053, -1.0
      %v3055 = vmul.f32 %v1814, %v1814
      %v3056 = vmin.f32 16.0, %v3055
      %v3057 = vmul.f32 %v3056, 2.1237322e-06
      %v3058 = vadd.f32 %v3057, 0.00028619796
      %v3059 = vmul.f32 %v3056, %v3058
      %v3060 = vadd.f32 %v3059, 0.0036580483
      %v3061 = vmul.f32 %v3056, %v3060
      %v3062 = vadd.f32 %v3061, 0.05243302
      %v3063 = vmul.f32 %v3056, %v3062
      %v3064 = vadd.f32 %v3063, 0.18741608
      %v3065 = vmul.f32 %v3056, %v3064
      %v3066 = vadd.f32 %v3065, 1.1283791
      %v3067 = vmul.f32 %v1814, %v3066
      %v3068 = vmul.f32 %v3056, 3.8918573e-05
      %v3069 = vadd.f32 %v3068, 0.001143296
      %v3070 = vmul.f32 %v3056, %v3069
      %v3071 = vadd.f32 %v3070, 0.014752088
      %v3072 = vmul.f32 %v3056, %v3071
      %v3073 = vadd.f32 %v3072, 0.112945676
      %v3074 = vmul.f32 %v3056, %v3073
      %v3075 = vadd.f32 %v3074, 0.4994258
      %v3076 = vmul.f32 %v3056, %v3075
      %v3077 = vadd.f32 %v3076, 1.0
      %v3078 = vrcp.pop %v3077
      %v3079 = vmul.f32 %v3077, %v3078
      %v3080 = vsub.f32 1.0, %v3079
      %v3081 = vmul.f32 %v3078, %v3080
      %v3082 = vadd.f32 %v3078, %v3081
      %vm3083 = vweird.f32 %v3077
      %vm3084 = vweird.f32 %v3078
      %vm3085 = vmor %vm3083, %vm3084
      %v3086 = vsel %vm3085, %v3078, %v3082
      %v3087 = vand.u32 2147483647, %v3077
      %vm3088 = vcmp.eq.f32.partialorder %v3087, 8.507059e+37
      %v3089 = vand.u32 %v3077, 2147483648
      %v3090 = vor.u32 1.1754944e-38, %v3089
      %v3091 = vsel %vm3088, %v3090, %v3086
      %v3092 = vmul.f32 %v3067, %v3091
      %v3093 = vmin.f32 %v3092, 1.0
      %v3094 = vmax.f32 %v3093, -1.0
      %v3095 = vadd.f32 %v1854, 1.0
      %v3096 = vadd.f32 %v1894, 1.0
      %v3097 = vadd.f32 %v1934, 1.0
      %v3098 = vadd.f32 %v1974, 1.0
      %v3099 = vadd.f32 %v2014, 1.0
      %v3100 = vadd.f32 %v2054, 1.0
      %v3101 = vadd.f32 %v2094, 1.0
      %v3102 = vadd.f32 %v2134, 1.0
      %v3103 = vadd.f32 %v2174, 1.0
      %v3104 = vadd.f32 %v2214, 1.0
      %v3105 = vadd.f32 %v2254, 1.0
      %v3106 = vadd.f32 %v2294, 1.0
      %v3107 = vadd.f32 %v2334, 1.0
      %v3108 = vadd.f32 %v2374, 1.0
      %v3109 = vadd.f32 %v2414, 1.0
      %v3110 = vadd.f32 %v2454, 1.0
      %v3111 = vadd.f32 %v2494, 1.0
      %v3112 = vadd.f32 %v2534, 1.0
      %v3113 = vadd.f32 %v2574, 1.0
      %v3114 = vadd.f32 %v2614, 1.0
      %v3115 = vadd.f32 %v2654, 1.0
      %v3116 = vadd.f32 %v2694, 1.0
      %v3117 = vadd.f32 %v2734, 1.0
      %v3118 = vadd.f32 %v2774, 1.0
      %v3119 = vadd.f32 %v2814, 1.0
      %v3120 = vadd.f32 %v2854, 1.0
      %v3121 = vadd.f32 %v2894, 1.0
      %v3122 = vadd.f32 %v2934, 1.0
      %v3123 = vadd.f32 %v2974, 1.0
      %v3124 = vadd.f32 %v3014, 1.0
      %v3125 = vadd.f32 %v3054, 1.0
      %v3126 = vadd.f32 %v3094, 1.0
      %v3127 = vmul.f32 %v1751, %v3095
      %v3128 = vmul.f32 %v1752, %v3096
      %v3129 = vmul.f32 %v1753, %v3097
      %v3130 = vmul.f32 %v1754, %v3098
      %v3131 = vmul.f32 %v1755, %v3099
      %v3132 = vmul.f32 %v1756, %v3100
      %v3133 = vmul.f32 %v1757, %v3101
      %v3134 = vmul.f32 %v1758, %v3102
      %v3135 = vmul.f32 %v1759, %v3103
      %v3136 = vmul.f32 %v1760, %v3104
      %v3137 = vmul.f32 %v1761, %v3105
      %v3138 = vmul.f32 %v1762, %v3106
      %v3139 = vmul.f32 %v1763, %v3107
      %v3140 = vmul.f32 %v1764, %v3108
      %v3141 = vmul.f32 %v1765, %v3109
      %v3142 = vmul.f32 %v1766, %v3110
      %v3143 = vmul.f32 %v1767, %v3111
      %v3144 = vmul.f32 %v1768, %v3112
      %v3145 = vmul.f32 %v1769, %v3113
      %v3146 = vmul.f32 %v1770, %v3114
      %v3147 = vmul.f32 %v1771, %v3115
      %v3148 = vmul.f32 %v1772, %v3116
      %v3149 = vmul.f32 %v1773, %v3117
      %v3150 = vmul.f32 %v1774, %v3118
      %v3151 = vmul.f32 %v1775, %v3119
      %v3152 = vmul.f32 %v1776, %v3120
      %v3153 = vmul.f32 %v1777, %v3121
      %v3154 = vmul.f32 %v1778, %v3122
      %v3155 = vmul.f32 %v1779, %v3123
      %v3156 = vmul.f32 %v1780, %v3124
      %v3157 = vmul.f32 %v1781, %v3125
      %v3158 = vmul.f32 %v1782, %v3126
      %3159 = vst [vmem:[%s316] sm:$0xff] %v3127
      %3160 = vst [vmem:[%s316 + $0x8] sm:$0xff] %v3128
      %3161 = vst [vmem:[%s316 + $0x10] sm:$0xff] %v3129
      %3162 = vst [vmem:[%s316 + $0x18] sm:$0xff] %v3130
      %3163 = vst [vmem:[%s316 + $0x20] sm:$0xff] %v3131
      %3164 = vst [vmem:[%s316 + $0x28] sm:$0xff] %v3132
      %3165 = vst [vmem:[%s316 + $0x30] sm:$0xff] %v3133
      %3166 = vst [vmem:[%s316 + $0x38] sm:$0xff] %v3134
      %3167 = vst [vmem:[%s316 + $0x40] sm:$0xff] %v3135
      %3168 = vst [vmem:[%s316 + $0x48] sm:$0xff] %v3136
      %3169 = vst [vmem:[%s316 + $0x50] sm:$0xff] %v3137
      %3170 = vst [vmem:[%s316 + $0x58] sm:$0xff] %v3138
      %3171 = vst [vmem:[%s316 + $0x60] sm:$0xff] %v3139
      %3172 = vst [vmem:[%s316 + $0x68] sm:$0xff] %v3140
      %3173 = vst [vmem:[%s316 + $0x70] sm:$0xff] %v3141
      %3174 = vst [vmem:[%s316 + $0x78] sm:$0xff] %v3142
      %3175 = vst [vmem:[%s316 + $0x80] sm:$0xff] %v3143
      %3176 = vst [vmem:[%s316 + $0x88] sm:$0xff] %v3144
      %3177 = vst [vmem:[%s316 + $0x90] sm:$0xff] %v3145
      %3178 = vst [vmem:[%s316 + $0x98] sm:$0xff] %v3146
      %3179 = vst [vmem:[%s316 + $0xa0] sm:$0xff] %v3147
      %3180 = vst [vmem:[%s316 + $0xa8] sm:$0xff] %v3148
      %3181 = vst [vmem:[%s316 + $0xb0] sm:$0xff] %v3149
      %3182 = vst [vmem:[%s316 + $0xb8] sm:$0xff] %v3150
      %3183 = vst [vmem:[%s316 + $0xc0] sm:$0xff] %v3151
      %3184 = vst [vmem:[%s316 + $0xc8] sm:$0xff] %v3152
      %3185 = vst [vmem:[%s316 + $0xd0] sm:$0xff] %v3153
      %3186 = vst [vmem:[%s316 + $0xd8] sm:$0xff] %v3154
      %3187 = vst [vmem:[%s316 + $0xe0] sm:$0xff] %v3155
      %3188 = vst [vmem:[%s316 + $0xe8] sm:$0xff] %v3156
      %3189 = vst [vmem:[%s316 + $0xf0] sm:$0xff] %v3157
      %3190 = vst [vmem:[%s316 + $0xf8] sm:$0xff] %v3158
      %v3191 = vld [vmem:[%s3] sm:$0xff]
      %v3192 = vld [vmem:[%s3 + $0x8] sm:$0xff]
      %v3193 = vld [vmem:[%s3 + $0x10] sm:$0xff]
      %v3194 = vld [vmem:[%s3 + $0x18] sm:$0xff]
      %v3195 = vand.u32 %v3157, 4294901760
      %3196 = vmatpush.msra.mxu0 %v3195
      %v3197 = vand.u32 %v3155, 4294901760
      %3198 = vmatpush.msra.mxu0 %v3197
      %v3199 = vand.u32 %v3153, 4294901760
      %3200 = vmatpush.msra.mxu0 %v3199
      %v3201 = vand.u32 %v3151, 4294901760
      %3202 = vmatpush.msra.mxu0 %v3201
      %v3203 = vand.u32 %v3149, 4294901760
      %3204 = vmatpush.msra.mxu0 %v3203
      %v3205 = vand.u32 %v3147, 4294901760
      %3206 = vmatpush.msra.mxu0 %v3205
      %v3207 = vand.u32 %v3145, 4294901760
      %3208 = vmatpush.msra.mxu0 %v3207
      %v3209 = vand.u32 %v3143, 4294901760
      %3210 = vmatpush.msra.mxu0 %v3209
      %v3211 = vand.u32 %v3141, 4294901760
      %3212 = vmatpush.msra.mxu0 %v3211
      %v3213 = vand.u32 %v3139, 4294901760
      %3214 = vmatpush.msra.mxu0 %v3213
      %v3215 = vand.u32 %v3137, 4294901760
      %3216 = vmatpush.msra.mxu0 %v3215
      %v3217 = vand.u32 %v3135, 4294901760
      %3218 = vmatpush.msra.mxu0 %v3217
      %v3219 = vand.u32 %v3133, 4294901760
      %3220 = vmatpush.msra.mxu0 %v3219
      %v3221 = vand.u32 %v3131, 4294901760
      %3222 = vmatpush.msra.mxu0 %v3221
      %v3223 = vand.u32 %v3129, 4294901760
      %3224 = vmatpush.msra.mxu0 %v3223
      %v3225 = vand.u32 %v3127, 4294901760
      %3226 = vmatpush.msra.mxu0 %v3225
      %v3227 = vand.u32 %v3191, 4294901760
      %v3228 = vsub.f32 %v3191, %v3227
      %v3229 = vand.u32 %v3228, 4294901760
      %v3230 = vsub.f32 %v3228, %v3229
      %v3231 = vand.u32 %v3230, 4294901760
      %3232 = vmatmul.f32.gmra.mxu0 %v3231
      %v3233 = vpop.f32.mrf.mxu0
      %v3234 = vadd.f32 0.0, %v3233
      %v3235 = vand.u32 %v3192, 4294901760
      %v3236 = vsub.f32 %v3192, %v3235
      %v3237 = vand.u32 %v3236, 4294901760
      %v3238 = vsub.f32 %v3236, %v3237
      %v3239 = vand.u32 %v3238, 4294901760
      %3240 = vmatmul.f32.gmra.mxu0 %v3239
      %v3241 = vpop.f32.mrf.mxu0
      %v3242 = vadd.f32 0.0, %v3241
      %v3243 = vand.u32 %v3193, 4294901760
      %v3244 = vsub.f32 %v3193, %v3243
      %v3245 = vand.u32 %v3244, 4294901760
      %v3246 = vsub.f32 %v3244, %v3245
      %v3247 = vand.u32 %v3246, 4294901760
      %3248 = vmatmul.f32.gmra.mxu0 %v3247
      %v3249 = vpop.f32.mrf.mxu0
      %v3250 = vadd.f32 0.0, %v3249
      %v3251 = vand.u32 %v3194, 4294901760
      %v3252 = vsub.f32 %v3194, %v3251
      %v3253 = vand.u32 %v3252, 4294901760
      %v3254 = vsub.f32 %v3252, %v3253
      %v3255 = vand.u32 %v3254, 4294901760
      %3256 = vmatmul.f32.gmra.mxu0 %v3255
      %v3257 = vpop.f32.mrf.mxu0
      %v3258 = vadd.f32 0.0, %v3257
      %3259 = vdwg.mxu0
      %v3260 = vand.u32 %v3157, 4294901760
      %v3261 = vsub.f32 %v3157, %v3260
      %v3262 = vand.u32 %v3261, 4294901760
      %v3263 = vsub.f32 %v3261, %v3262
      %v3264 = vand.u32 %v3263, 4294901760
      %3265 = vmatpush.msra.mxu0 %v3264
      %v3266 = vand.u32 %v3155, 4294901760
      %v3267 = vsub.f32 %v3155, %v3266
      %v3268 = vand.u32 %v3267, 4294901760
      %v3269 = vsub.f32 %v3267, %v3268
      %v3270 = vand.u32 %v3269, 4294901760
      %3271 = vmatpush.msra.mxu0 %v3270
      %v3272 = vand.u32 %v3153, 4294901760
      %v3273 = vsub.f32 %v3153, %v3272
      %v3274 = vand.u32 %v3273, 4294901760
      %v3275 = vsub.f32 %v3273, %v3274
      %v3276 = vand.u32 %v3275, 4294901760
      %3277 = vmatpush.msra.mxu0 %v3276
      %v3278 = vand.u32 %v3151, 4294901760
      %v3279 = vsub.f32 %v3151, %v3278
      %v3280 = vand.u32 %v3279, 4294901760
      %v3281 = vsub.f32 %v3279, %v3280
      %v3282 = vand.u32 %v3281, 4294901760
      %3283 = vmatpush.msra.mxu0 %v3282
      %v3284 = vand.u32 %v3149, 4294901760
      %v3285 = vsub.f32 %v3149, %v3284
      %v3286 = vand.u32 %v3285, 4294901760
      %v3287 = vsub.f32 %v3285, %v3286
      %v3288 = vand.u32 %v3287, 4294901760
      %3289 = vmatpush.msra.mxu0 %v3288
      %v3290 = vand.u32 %v3147, 4294901760
      %v3291 = vsub.f32 %v3147, %v3290
      %v3292 = vand.u32 %v3291, 4294901760
      %v3293 = vsub.f32 %v3291, %v3292
      %v3294 = vand.u32 %v3293, 4294901760
      %3295 = vmatpush.msra.mxu0 %v3294
      %v3296 = vand.u32 %v3145, 4294901760
      %v3297 = vsub.f32 %v3145, %v3296
      %v3298 = vand.u32 %v3297, 4294901760
      %v3299 = vsub.f32 %v3297, %v3298
      %v3300 = vand.u32 %v3299, 4294901760
      %3301 = vmatpush.msra.mxu0 %v3300
      %v3302 = vand.u32 %v3143, 4294901760
      %v3303 = vsub.f32 %v3143, %v3302
      %v3304 = vand.u32 %v3303, 4294901760
      %v3305 = vsub.f32 %v3303, %v3304
      %v3306 = vand.u32 %v3305, 4294901760
      %3307 = vmatpush.msra.mxu0 %v3306
      %v3308 = vand.u32 %v3141, 4294901760
      %v3309 = vsub.f32 %v3141, %v3308
      %v3310 = vand.u32 %v3309, 4294901760
      %v3311 = vsub.f32 %v3309, %v3310
      %v3312 = vand.u32 %v3311, 4294901760
      %3313 = vmatpush.msra.mxu0 %v3312
      %v3314 = vand.u32 %v3139, 4294901760
      %v3315 = vsub.f32 %v3139, %v3314
      %v3316 = vand.u32 %v3315, 4294901760
      %v3317 = vsub.f32 %v3315, %v3316
      %v3318 = vand.u32 %v3317, 4294901760
      %3319 = vmatpush.msra.mxu0 %v3318
      %v3320 = vand.u32 %v3137, 4294901760
      %v3321 = vsub.f32 %v3137, %v3320
      %v3322 = vand.u32 %v3321, 4294901760
      %v3323 = vsub.f32 %v3321, %v3322
      %v3324 = vand.u32 %v3323, 4294901760
      %3325 = vmatpush.msra.mxu0 %v3324
      %v3326 = vand.u32 %v3135, 4294901760
      %v3327 = vsub.f32 %v3135, %v3326
      %v3328 = vand.u32 %v3327, 4294901760
      %v3329 = vsub.f32 %v3327, %v3328
      %v3330 = vand.u32 %v3329, 4294901760
      %3331 = vmatpush.msra.mxu0 %v3330
      %v3332 = vand.u32 %v3133, 4294901760
      %v3333 = vsub.f32 %v3133, %v3332
      %v3334 = vand.u32 %v3333, 4294901760
      %v3335 = vsub.f32 %v3333, %v3334
      %v3336 = vand.u32 %v3335, 4294901760
      %3337 = vmatpush.msra.mxu0 %v3336
      %v3338 = vand.u32 %v3131, 4294901760
      %v3339 = vsub.f32 %v3131, %v3338
      %v3340 = vand.u32 %v3339, 4294901760
      %v3341 = vsub.f32 %v3339, %v3340
      %v3342 = vand.u32 %v3341, 4294901760
      %3343 = vmatpush.msra.mxu0 %v3342
      %v3344 = vand.u32 %v3129, 4294901760
      %v3345 = vsub.f32 %v3129, %v3344
      %v3346 = vand.u32 %v3345, 4294901760
      %v3347 = vsub.f32 %v3345, %v3346
      %v3348 = vand.u32 %v3347, 4294901760
      %3349 = vmatpush.msra.mxu0 %v3348
      %v3350 = vand.u32 %v3127, 4294901760
      %v3351 = vsub.f32 %v3127, %v3350
      %v3352 = vand.u32 %v3351, 4294901760
      %v3353 = vsub.f32 %v3351, %v3352
      %v3354 = vand.u32 %v3353, 4294901760
      %3355 = vmatpush.msra.mxu0 %v3354
      %v3356 = vand.u32 %v3191, 4294901760
      %3357 = vmatmul.f32.gmra.mxu0 %v3356
      %v3358 = vpop.f32.mrf.mxu0
      %v3359 = vadd.f32 %v3234, %v3358
      %v3360 = vand.u32 %v3192, 4294901760
      %3361 = vmatmul.f32.gmra.mxu0 %v3360
      %v3362 = vpop.f32.mrf.mxu0
      %v3363 = vadd.f32 %v3242, %v3362
      %v3364 = vand.u32 %v3193, 4294901760
      %3365 = vmatmul.f32.gmra.mxu0 %v3364
      %v3366 = vpop.f32.mrf.mxu0
      %v3367 = vadd.f32 %v3250, %v3366
      %v3368 = vand.u32 %v3194, 4294901760
      %3369 = vmatmul.f32.gmra.mxu0 %v3368
      %v3370 = vpop.f32.mrf.mxu0
      %v3371 = vadd.f32 %v3258, %v3370
      %3372 = vdwg.mxu0
      %v3373 = vand.u32 %v3157, 4294901760
      %v3374 = vsub.f32 %v3157, %v3373
      %3375 = vmatpush.msra.mxu0 %v3374
      %v3376 = vand.u32 %v3155, 4294901760
      %v3377 = vsub.f32 %v3155, %v3376
      %3378 = vmatpush.msra.mxu0 %v3377
      %v3379 = vand.u32 %v3153, 4294901760
      %v3380 = vsub.f32 %v3153, %v3379
      %3381 = vmatpush.msra.mxu0 %v3380
      %v3382 = vand.u32 %v3151, 4294901760
      %v3383 = vsub.f32 %v3151, %v3382
      %3384 = vmatpush.msra.mxu0 %v3383
      %v3385 = vand.u32 %v3149, 4294901760
      %v3386 = vsub.f32 %v3149, %v3385
      %3387 = vmatpush.msra.mxu0 %v3386
      %v3388 = vand.u32 %v3147, 4294901760
      %v3389 = vsub.f32 %v3147, %v3388
      %3390 = vmatpush.msra.mxu0 %v3389
      %v3391 = vand.u32 %v3145, 4294901760
      %v3392 = vsub.f32 %v3145, %v3391
      %3393 = vmatpush.msra.mxu0 %v3392
      %v3394 = vand.u32 %v3143, 4294901760
      %v3395 = vsub.f32 %v3143, %v3394
      %3396 = vmatpush.msra.mxu0 %v3395
      %v3397 = vand.u32 %v3141, 4294901760
      %v3398 = vsub.f32 %v3141, %v3397
      %3399 = vmatpush.msra.mxu0 %v3398
      %v3400 = vand.u32 %v3139, 4294901760
      %v3401 = vsub.f32 %v3139, %v3400
      %3402 = vmatpush.msra.mxu0 %v3401
      %v3403 = vand.u32 %v3137, 4294901760
      %v3404 = vsub.f32 %v3137, %v3403
      %3405 = vmatpush.msra.mxu0 %v3404
      %v3406 = vand.u32 %v3135, 4294901760
      %v3407 = vsub.f32 %v3135, %v3406
      %3408 = vmatpush.msra.mxu0 %v3407
      %v3409 = vand.u32 %v3133, 4294901760
      %v3410 = vsub.f32 %v3133, %v3409
      %3411 = vmatpush.msra.mxu0 %v3410
      %v3412 = vand.u32 %v3131, 4294901760
      %v3413 = vsub.f32 %v3131, %v3412
      %3414 = vmatpush.msra.mxu0 %v3413
      %v3415 = vand.u32 %v3129, 4294901760
      %v3416 = vsub.f32 %v3129, %v3415
      %3417 = vmatpush.msra.mxu0 %v3416
      %v3418 = vand.u32 %v3127, 4294901760
      %v3419 = vsub.f32 %v3127, %v3418
      %3420 = vmatpush.msra.mxu0 %v3419
      %v3421 = vand.u32 %v3191, 4294901760
      %v3422 = vsub.f32 %v3191, %v3421
      %3423 = vmatmul.f32.gmra.mxu0 %v3422
      %v3424 = vpop.f32.mrf.mxu0
      %v3425 = vadd.f32 %v3359, %v3424
      %v3426 = vand.u32 %v3192, 4294901760
      %v3427 = vsub.f32 %v3192, %v3426
      %3428 = vmatmul.f32.gmra.mxu0 %v3427
      %v3429 = vpop.f32.mrf.mxu0
      %v3430 = vadd.f32 %v3363, %v3429
      %v3431 = vand.u32 %v3193, 4294901760
      %v3432 = vsub.f32 %v3193, %v3431
      %3433 = vmatmul.f32.gmra.mxu0 %v3432
      %v3434 = vpop.f32.mrf.mxu0
      %v3435 = vadd.f32 %v3367, %v3434
      %v3436 = vand.u32 %v3194, 4294901760
      %v3437 = vsub.f32 %v3194, %v3436
      %3438 = vmatmul.f32.gmra.mxu0 %v3437
      %v3439 = vpop.f32.mrf.mxu0
      %v3440 = vadd.f32 %v3371, %v3439
      %3441 = vdwg.mxu0
      %v3442 = vand.u32 %v3157, 4294901760
      %3443 = vmatpush.msra.mxu0 %v3442
      %v3444 = vand.u32 %v3155, 4294901760
      %3445 = vmatpush.msra.mxu0 %v3444
      %v3446 = vand.u32 %v3153, 4294901760
      %3447 = vmatpush.msra.mxu0 %v3446
      %v3448 = vand.u32 %v3151, 4294901760
      %3449 = vmatpush.msra.mxu0 %v3448
      %v3450 = vand.u32 %v3149, 4294901760
      %3451 = vmatpush.msra.mxu0 %v3450
      %v3452 = vand.u32 %v3147, 4294901760
      %3453 = vmatpush.msra.mxu0 %v3452
      %v3454 = vand.u32 %v3145, 4294901760
      %3455 = vmatpush.msra.mxu0 %v3454
      %v3456 = vand.u32 %v3143, 4294901760
      %3457 = vmatpush.msra.mxu0 %v3456
      %v3458 = vand.u32 %v3141, 4294901760
      %3459 = vmatpush.msra.mxu0 %v3458
      %v3460 = vand.u32 %v3139, 4294901760
      %3461 = vmatpush.msra.mxu0 %v3460
      %v3462 = vand.u32 %v3137, 4294901760
      %3463 = vmatpush.msra.mxu0 %v3462
      %v3464 = vand.u32 %v3135, 4294901760
      %3465 = vmatpush.msra.mxu0 %v3464
      %v3466 = vand.u32 %v3133, 4294901760
      %3467 = vmatpush.msra.mxu0 %v3466
      %v3468 = vand.u32 %v3131, 4294901760
      %3469 = vmatpush.msra.mxu0 %v3468
      %v3470 = vand.u32 %v3129, 4294901760
      %3471 = vmatpush.msra.mxu0 %v3470
      %v3472 = vand.u32 %v3127, 4294901760
      %3473 = vmatpush.msra.mxu0 %v3472
      %v3474 = vand.u32 %v3191, 4294901760
      %v3475 = vsub.f32 %v3191, %v3474
      %v3476 = vand.u32 %v3475, 4294901760
      %3477 = vmatmul.f32.gmra.mxu0 %v3476
      %v3478 = vpop.f32.mrf.mxu0
      %v3479 = vadd.f32 %v3425, %v3478
      %v3480 = vand.u32 %v3192, 4294901760
      %v3481 = vsub.f32 %v3192, %v3480
      %v3482 = vand.u32 %v3481, 4294901760
      %3483 = vmatmul.f32.gmra.mxu0 %v3482
      %v3484 = vpop.f32.mrf.mxu0
      %v3485 = vadd.f32 %v3430, %v3484
      %v3486 = vand.u32 %v3193, 4294901760
      %v3487 = vsub.f32 %v3193, %v3486
      %v3488 = vand.u32 %v3487, 4294901760
      %3489 = vmatmul.f32.gmra.mxu0 %v3488
      %v3490 = vpop.f32.mrf.mxu0
      %v3491 = vadd.f32 %v3435, %v3490
      %v3492 = vand.u32 %v3194, 4294901760
      %v3493 = vsub.f32 %v3194, %v3492
      %v3494 = vand.u32 %v3493, 4294901760
      %3495 = vmatmul.f32.gmra.mxu0 %v3494
      %v3496 = vpop.f32.mrf.mxu0
      %v3497 = vadd.f32 %v3440, %v3496
      %3498 = vdwg.mxu0
      %v3499 = vand.u32 %v3157, 4294901760
      %v3500 = vsub.f32 %v3157, %v3499
      %v3501 = vand.u32 %v3500, 4294901760
      %3502 = vmatpush.msra.mxu0 %v3501
      %v3503 = vand.u32 %v3155, 4294901760
      %v3504 = vsub.f32 %v3155, %v3503
      %v3505 = vand.u32 %v3504, 4294901760
      %3506 = vmatpush.msra.mxu0 %v3505
      %v3507 = vand.u32 %v3153, 4294901760
      %v3508 = vsub.f32 %v3153, %v3507
      %v3509 = vand.u32 %v3508, 4294901760
      %3510 = vmatpush.msra.mxu0 %v3509
      %v3511 = vand.u32 %v3151, 4294901760
      %v3512 = vsub.f32 %v3151, %v3511
      %v3513 = vand.u32 %v3512, 4294901760
      %3514 = vmatpush.msra.mxu0 %v3513
      %v3515 = vand.u32 %v3149, 4294901760
      %v3516 = vsub.f32 %v3149, %v3515
      %v3517 = vand.u32 %v3516, 4294901760
      %3518 = vmatpush.msra.mxu0 %v3517
      %v3519 = vand.u32 %v3147, 4294901760
      %v3520 = vsub.f32 %v3147, %v3519
      %v3521 = vand.u32 %v3520, 4294901760
      %3522 = vmatpush.msra.mxu0 %v3521
      %v3523 = vand.u32 %v3145, 4294901760
      %v3524 = vsub.f32 %v3145, %v3523
      %v3525 = vand.u32 %v3524, 4294901760
      %3526 = vmatpush.msra.mxu0 %v3525
      %v3527 = vand.u32 %v3143, 4294901760
      %v3528 = vsub.f32 %v3143, %v3527
      %v3529 = vand.u32 %v3528, 4294901760
      %3530 = vmatpush.msra.mxu0 %v3529
      %v3531 = vand.u32 %v3141, 4294901760
      %v3532 = vsub.f32 %v3141, %v3531
      %v3533 = vand.u32 %v3532, 4294901760
      %3534 = vmatpush.msra.mxu0 %v3533
      %v3535 = vand.u32 %v3139, 4294901760
      %v3536 = vsub.f32 %v3139, %v3535
      %v3537 = vand.u32 %v3536, 4294901760
      %3538 = vmatpush.msra.mxu0 %v3537
      %v3539 = vand.u32 %v3137, 4294901760
      %v3540 = vsub.f32 %v3137, %v3539
      %v3541 = vand.u32 %v3540, 4294901760
      %3542 = vmatpush.msra.mxu0 %v3541
      %v3543 = vand.u32 %v3135, 4294901760
      %v3544 = vsub.f32 %v3135, %v3543
      %v3545 = vand.u32 %v3544, 4294901760
      %3546 = vmatpush.msra.mxu0 %v3545
      %v3547 = vand.u32 %v3133, 4294901760
      %v3548 = vsub.f32 %v3133, %v3547
      %v3549 = vand.u32 %v3548, 4294901760
      %3550 = vmatpush.msra.mxu0 %v3549
      %v3551 = vand.u32 %v3131, 4294901760
      %v3552 = vsub.f32 %v3131, %v3551
      %v3553 = vand.u32 %v3552, 4294901760
      %3554 = vmatpush.msra.mxu0 %v3553
      %v3555 = vand.u32 %v3129, 4294901760
      %v3556 = vsub.f32 %v3129, %v3555
      %v3557 = vand.u32 %v3556, 4294901760
      %3558 = vmatpush.msra.mxu0 %v3557
      %v3559 = vand.u32 %v3127, 4294901760
      %v3560 = vsub.f32 %v3127, %v3559
      %v3561 = vand.u32 %v3560, 4294901760
      %3562 = vmatpush.msra.mxu0 %v3561
      %v3563 = vand.u32 %v3191, 4294901760
      %3564 = vmatmul.f32.gmra.mxu0 %v3563
      %v3565 = vpop.f32.mrf.mxu0
      %v3566 = vadd.f32 %v3479, %v3565
      %v3567 = vand.u32 %v3192, 4294901760
      %3568 = vmatmul.f32.gmra.mxu0 %v3567
      %v3569 = vpop.f32.mrf.mxu0
      %v3570 = vadd.f32 %v3485, %v3569
      %v3571 = vand.u32 %v3193, 4294901760
      %3572 = vmatmul.f32.gmra.mxu0 %v3571
      %v3573 = vpop.f32.mrf.mxu0
      %v3574 = vadd.f32 %v3491, %v3573
      %v3575 = vand.u32 %v3194, 4294901760
      %3576 = vmatmul.f32.gmra.mxu0 %v3575
      %v3577 = vpop.f32.mrf.mxu0
      %v3578 = vadd.f32 %v3497, %v3577
      %3579 = vdwg.mxu0
      %v3580 = vand.u32 %v3157, 4294901760
      %3581 = vmatpush.msra.mxu0 %v3580
      %v3582 = vand.u32 %v3155, 4294901760
      %3583 = vmatpush.msra.mxu0 %v3582
      %v3584 = vand.u32 %v3153, 4294901760
      %3585 = vmatpush.msra.mxu0 %v3584
      %v3586 = vand.u32 %v3151, 4294901760
      %3587 = vmatpush.msra.mxu0 %v3586
      %v3588 = vand.u32 %v3149, 4294901760
      %3589 = vmatpush.msra.mxu0 %v3588
      %v3590 = vand.u32 %v3147, 4294901760
      %3591 = vmatpush.msra.mxu0 %v3590
      %v3592 = vand.u32 %v3145, 4294901760
      %3593 = vmatpush.msra.mxu0 %v3592
      %v3594 = vand.u32 %v3143, 4294901760
      %3595 = vmatpush.msra.mxu0 %v3594
      %v3596 = vand.u32 %v3141, 4294901760
      %3597 = vmatpush.msra.mxu0 %v3596
      %v3598 = vand.u32 %v3139, 4294901760
      %3599 = vmatpush.msra.mxu0 %v3598
      %v3600 = vand.u32 %v3137, 4294901760
      %3601 = vmatpush.msra.mxu0 %v3600
      %v3602 = vand.u32 %v3135, 4294901760
      %3603 = vmatpush.msra.mxu0 %v3602
      %v3604 = vand.u32 %v3133, 4294901760
      %3605 = vmatpush.msra.mxu0 %v3604
      %v3606 = vand.u32 %v3131, 4294901760
      %3607 = vmatpush.msra.mxu0 %v3606
      %v3608 = vand.u32 %v3129, 4294901760
      %3609 = vmatpush.msra.mxu0 %v3608
      %v3610 = vand.u32 %v3127, 4294901760
      %3611 = vmatpush.msra.mxu0 %v3610
      %v3612 = vand.u32 %v3191, 4294901760
      %3613 = vmatmul.f32.gmra.mxu0 %v3612
      %v3614 = vpop.f32.mrf.mxu0
      %v3615 = vadd.f32 %v3566, %v3614
      %v3616 = vand.u32 %v3192, 4294901760
      %3617 = vmatmul.f32.gmra.mxu0 %v3616
      %v3618 = vpop.f32.mrf.mxu0
      %v3619 = vadd.f32 %v3570, %v3618
      %v3620 = vand.u32 %v3193, 4294901760
      %3621 = vmatmul.f32.gmra.mxu0 %v3620
      %v3622 = vpop.f32.mrf.mxu0
      %v3623 = vadd.f32 %v3574, %v3622
      %v3624 = vand.u32 %v3194, 4294901760
      %3625 = vmatmul.f32.gmra.mxu0 %v3624
      %v3626 = vpop.f32.mrf.mxu0
      %v3627 = vadd.f32 %v3578, %v3626
      %3628 = vdwg.mxu0
      %v3629 = vand.u32 %v3158, 4294901760
      %3630 = vmatpush.msra.mxu0 %v3629
      %v3631 = vand.u32 %v3156, 4294901760
      %3632 = vmatpush.msra.mxu0 %v3631
      %v3633 = vand.u32 %v3154, 4294901760
      %3634 = vmatpush.msra.mxu0 %v3633
      %v3635 = vand.u32 %v3152, 4294901760
      %3636 = vmatpush.msra.mxu0 %v3635
      %v3637 = vand.u32 %v3150, 4294901760
      %3638 = vmatpush.msra.mxu0 %v3637
      %v3639 = vand.u32 %v3148, 4294901760
      %3640 = vmatpush.msra.mxu0 %v3639
      %v3641 = vand.u32 %v3146, 4294901760
      %3642 = vmatpush.msra.mxu0 %v3641
      %v3643 = vand.u32 %v3144, 4294901760
      %3644 = vmatpush.msra.mxu0 %v3643
      %v3645 = vand.u32 %v3142, 4294901760
      %3646 = vmatpush.msra.mxu0 %v3645
      %v3647 = vand.u32 %v3140, 4294901760
      %3648 = vmatpush.msra.mxu0 %v3647
      %v3649 = vand.u32 %v3138, 4294901760
      %3650 = vmatpush.msra.mxu0 %v3649
      %v3651 = vand.u32 %v3136, 4294901760
      %3652 = vmatpush.msra.mxu0 %v3651
      %v3653 = vand.u32 %v3134, 4294901760
      %3654 = vmatpush.msra.mxu0 %v3653
      %v3655 = vand.u32 %v3132, 4294901760
      %3656 = vmatpush.msra.mxu0 %v3655
      %v3657 = vand.u32 %v3130, 4294901760
      %3658 = vmatpush.msra.mxu0 %v3657
      %v3659 = vand.u32 %v3128, 4294901760
      %3660 = vmatpush.msra.mxu0 %v3659
      %v3661 = vand.u32 %v3191, 4294901760
      %v3662 = vsub.f32 %v3191, %v3661
      %v3663 = vand.u32 %v3662, 4294901760
      %v3664 = vsub.f32 %v3662, %v3663
      %v3665 = vand.u32 %v3664, 4294901760
      %3666 = vmatmul.f32.gmra.mxu0 %v3665
      %v3667 = vpop.f32.mrf.mxu0
      %v3668 = vadd.f32 0.0, %v3667
      %v3669 = vand.u32 %v3192, 4294901760
      %v3670 = vsub.f32 %v3192, %v3669
      %v3671 = vand.u32 %v3670, 4294901760
      %v3672 = vsub.f32 %v3670, %v3671
      %v3673 = vand.u32 %v3672, 4294901760
      %3674 = vmatmul.f32.gmra.mxu0 %v3673
      %v3675 = vpop.f32.mrf.mxu0
      %v3676 = vadd.f32 0.0, %v3675
      %v3677 = vand.u32 %v3193, 4294901760
      %v3678 = vsub.f32 %v3193, %v3677
      %v3679 = vand.u32 %v3678, 4294901760
      %v3680 = vsub.f32 %v3678, %v3679
      %v3681 = vand.u32 %v3680, 4294901760
      %3682 = vmatmul.f32.gmra.mxu0 %v3681
      %v3683 = vpop.f32.mrf.mxu0
      %v3684 = vadd.f32 0.0, %v3683
      %v3685 = vand.u32 %v3194, 4294901760
      %v3686 = vsub.f32 %v3194, %v3685
      %v3687 = vand.u32 %v3686, 4294901760
      %v3688 = vsub.f32 %v3686, %v3687
      %v3689 = vand.u32 %v3688, 4294901760
      %3690 = vmatmul.f32.gmra.mxu0 %v3689
      %v3691 = vpop.f32.mrf.mxu0
      %v3692 = vadd.f32 0.0, %v3691
      %3693 = vdwg.mxu0
      %v3694 = vand.u32 %v3158, 4294901760
      %v3695 = vsub.f32 %v3158, %v3694
      %v3696 = vand.u32 %v3695, 4294901760
      %v3697 = vsub.f32 %v3695, %v3696
      %v3698 = vand.u32 %v3697, 4294901760
      %3699 = vmatpush.msra.mxu0 %v3698
      %v3700 = vand.u32 %v3156, 4294901760
      %v3701 = vsub.f32 %v3156, %v3700
      %v3702 = vand.u32 %v3701, 4294901760
      %v3703 = vsub.f32 %v3701, %v3702
      %v3704 = vand.u32 %v3703, 4294901760
      %3705 = vmatpush.msra.mxu0 %v3704
      %v3706 = vand.u32 %v3154, 4294901760
      %v3707 = vsub.f32 %v3154, %v3706
      %v3708 = vand.u32 %v3707, 4294901760
      %v3709 = vsub.f32 %v3707, %v3708
      %v3710 = vand.u32 %v3709, 4294901760
      %3711 = vmatpush.msra.mxu0 %v3710
      %v3712 = vand.u32 %v3152, 4294901760
      %v3713 = vsub.f32 %v3152, %v3712
      %v3714 = vand.u32 %v3713, 4294901760
      %v3715 = vsub.f32 %v3713, %v3714
      %v3716 = vand.u32 %v3715, 4294901760
      %3717 = vmatpush.msra.mxu0 %v3716
      %v3718 = vand.u32 %v3150, 4294901760
      %v3719 = vsub.f32 %v3150, %v3718
      %v3720 = vand.u32 %v3719, 4294901760
      %v3721 = vsub.f32 %v3719, %v3720
      %v3722 = vand.u32 %v3721, 4294901760
      %3723 = vmatpush.msra.mxu0 %v3722
      %v3724 = vand.u32 %v3148, 4294901760
      %v3725 = vsub.f32 %v3148, %v3724
      %v3726 = vand.u32 %v3725, 4294901760
      %v3727 = vsub.f32 %v3725, %v3726
      %v3728 = vand.u32 %v3727, 4294901760
      %3729 = vmatpush.msra.mxu0 %v3728
      %v3730 = vand.u32 %v3146, 4294901760
      %v3731 = vsub.f32 %v3146, %v3730
      %v3732 = vand.u32 %v3731, 4294901760
      %v3733 = vsub.f32 %v3731, %v3732
      %v3734 = vand.u32 %v3733, 4294901760
      %3735 = vmatpush.msra.mxu0 %v3734
      %v3736 = vand.u32 %v3144, 4294901760
      %v3737 = vsub.f32 %v3144, %v3736
      %v3738 = vand.u32 %v3737, 4294901760
      %v3739 = vsub.f32 %v3737, %v3738
      %v3740 = vand.u32 %v3739, 4294901760
      %3741 = vmatpush.msra.mxu0 %v3740
      %v3742 = vand.u32 %v3142, 4294901760
      %v3743 = vsub.f32 %v3142, %v3742
      %v3744 = vand.u32 %v3743, 4294901760
      %v3745 = vsub.f32 %v3743, %v3744
      %v3746 = vand.u32 %v3745, 4294901760
      %3747 = vmatpush.msra.mxu0 %v3746
      %v3748 = vand.u32 %v3140, 4294901760
      %v3749 = vsub.f32 %v3140, %v3748
      %v3750 = vand.u32 %v3749, 4294901760
      %v3751 = vsub.f32 %v3749, %v3750
      %v3752 = vand.u32 %v3751, 4294901760
      %3753 = vmatpush.msra.mxu0 %v3752
      %v3754 = vand.u32 %v3138, 4294901760
      %v3755 = vsub.f32 %v3138, %v3754
      %v3756 = vand.u32 %v3755, 4294901760
      %v3757 = vsub.f32 %v3755, %v3756
      %v3758 = vand.u32 %v3757, 4294901760
      %3759 = vmatpush.msra.mxu0 %v3758
      %v3760 = vand.u32 %v3136, 4294901760
      %v3761 = vsub.f32 %v3136, %v3760
      %v3762 = vand.u32 %v3761, 4294901760
      %v3763 = vsub.f32 %v3761, %v3762
      %v3764 = vand.u32 %v3763, 4294901760
      %3765 = vmatpush.msra.mxu0 %v3764
      %v3766 = vand.u32 %v3134, 4294901760
      %v3767 = vsub.f32 %v3134, %v3766
      %v3768 = vand.u32 %v3767, 4294901760
      %v3769 = vsub.f32 %v3767, %v3768
      %v3770 = vand.u32 %v3769, 4294901760
      %3771 = vmatpush.msra.mxu0 %v3770
      %v3772 = vand.u32 %v3132, 4294901760
      %v3773 = vsub.f32 %v3132, %v3772
      %v3774 = vand.u32 %v3773, 4294901760
      %v3775 = vsub.f32 %v3773, %v3774
      %v3776 = vand.u32 %v3775, 4294901760
      %3777 = vmatpush.msra.mxu0 %v3776
      %v3778 = vand.u32 %v3130, 4294901760
      %v3779 = vsub.f32 %v3130, %v3778
      %v3780 = vand.u32 %v3779, 4294901760
      %v3781 = vsub.f32 %v3779, %v3780
      %v3782 = vand.u32 %v3781, 4294901760
      %3783 = vmatpush.msra.mxu0 %v3782
      %v3784 = vand.u32 %v3128, 4294901760
      %v3785 = vsub.f32 %v3128, %v3784
      %v3786 = vand.u32 %v3785, 4294901760
      %v3787 = vsub.f32 %v3785, %v3786
      %v3788 = vand.u32 %v3787, 4294901760
      %3789 = vmatpush.msra.mxu0 %v3788
      %v3790 = vand.u32 %v3191, 4294901760
      %3791 = vmatmul.f32.gmra.mxu0 %v3790
      %v3792 = vpop.f32.mrf.mxu0
      %v3793 = vadd.f32 %v3668, %v3792
      %v3794 = vand.u32 %v3192, 4294901760
      %3795 = vmatmul.f32.gmra.mxu0 %v3794
      %v3796 = vpop.f32.mrf.mxu0
      %v3797 = vadd.f32 %v3676, %v3796
      %v3798 = vand.u32 %v3193, 4294901760
      %3799 = vmatmul.f32.gmra.mxu0 %v3798
      %v3800 = vpop.f32.mrf.mxu0
      %v3801 = vadd.f32 %v3684, %v3800
      %v3802 = vand.u32 %v3194, 4294901760
      %3803 = vmatmul.f32.gmra.mxu0 %v3802
      %v3804 = vpop.f32.mrf.mxu0
      %v3805 = vadd.f32 %v3692, %v3804
      %3806 = vdwg.mxu0
      %v3807 = vand.u32 %v3158, 4294901760
      %v3808 = vsub.f32 %v3158, %v3807
      %3809 = vmatpush.msra.mxu0 %v3808
      %v3810 = vand.u32 %v3156, 4294901760
      %v3811 = vsub.f32 %v3156, %v3810
      %3812 = vmatpush.msra.mxu0 %v3811
      %v3813 = vand.u32 %v3154, 4294901760
      %v3814 = vsub.f32 %v3154, %v3813
      %3815 = vmatpush.msra.mxu0 %v3814
      %v3816 = vand.u32 %v3152, 4294901760
      %v3817 = vsub.f32 %v3152, %v3816
      %3818 = vmatpush.msra.mxu0 %v3817
      %v3819 = vand.u32 %v3150, 4294901760
      %v3820 = vsub.f32 %v3150, %v3819
      %3821 = vmatpush.msra.mxu0 %v3820
      %v3822 = vand.u32 %v3148, 4294901760
      %v3823 = vsub.f32 %v3148, %v3822
      %3824 = vmatpush.msra.mxu0 %v3823
      %v3825 = vand.u32 %v3146, 4294901760
      %v3826 = vsub.f32 %v3146, %v3825
      %3827 = vmatpush.msra.mxu0 %v3826
      %v3828 = vand.u32 %v3144, 4294901760
      %v3829 = vsub.f32 %v3144, %v3828
      %3830 = vmatpush.msra.mxu0 %v3829
      %v3831 = vand.u32 %v3142, 4294901760
      %v3832 = vsub.f32 %v3142, %v3831
      %3833 = vmatpush.msra.mxu0 %v3832
      %v3834 = vand.u32 %v3140, 4294901760
      %v3835 = vsub.f32 %v3140, %v3834
      %3836 = vmatpush.msra.mxu0 %v3835
      %v3837 = vand.u32 %v3138, 4294901760
      %v3838 = vsub.f32 %v3138, %v3837
      %3839 = vmatpush.msra.mxu0 %v3838
      %v3840 = vand.u32 %v3136, 4294901760
      %v3841 = vsub.f32 %v3136, %v3840
      %3842 = vmatpush.msra.mxu0 %v3841
      %v3843 = vand.u32 %v3134, 4294901760
      %v3844 = vsub.f32 %v3134, %v3843
      %3845 = vmatpush.msra.mxu0 %v3844
      %v3846 = vand.u32 %v3132, 4294901760
      %v3847 = vsub.f32 %v3132, %v3846
      %3848 = vmatpush.msra.mxu0 %v3847
      %v3849 = vand.u32 %v3130, 4294901760
      %v3850 = vsub.f32 %v3130, %v3849
      %3851 = vmatpush.msra.mxu0 %v3850
      %v3852 = vand.u32 %v3128, 4294901760
      %v3853 = vsub.f32 %v3128, %v3852
      %3854 = vmatpush.msra.mxu0 %v3853
      %v3855 = vand.u32 %v3191, 4294901760
      %v3856 = vsub.f32 %v3191, %v3855
      %3857 = vmatmul.f32.gmra.mxu0 %v3856
      %v3858 = vpop.f32.mrf.mxu0
      %v3859 = vadd.f32 %v3793, %v3858
      %v3860 = vand.u32 %v3192, 4294901760
      %v3861 = vsub.f32 %v3192, %v3860
      %3862 = vmatmul.f32.gmra.mxu0 %v3861
      %v3863 = vpop.f32.mrf.mxu0
      %v3864 = vadd.f32 %v3797, %v3863
      %v3865 = vand.u32 %v3193, 4294901760
      %v3866 = vsub.f32 %v3193, %v3865
      %3867 = vmatmul.f32.gmra.mxu0 %v3866
      %v3868 = vpop.f32.mrf.mxu0
      %v3869 = vadd.f32 %v3801, %v3868
      %v3870 = vand.u32 %v3194, 4294901760
      %v3871 = vsub.f32 %v3194, %v3870
      %3872 = vmatmul.f32.gmra.mxu0 %v3871
      %v3873 = vpop.f32.mrf.mxu0
      %v3874 = vadd.f32 %v3805, %v3873
      %3875 = vdwg.mxu0
      %v3876 = vand.u32 %v3158, 4294901760
      %3877 = vmatpush.msra.mxu0 %v3876
      %v3878 = vand.u32 %v3156, 4294901760
      %3879 = vmatpush.msra.mxu0 %v3878
      %v3880 = vand.u32 %v3154, 4294901760
      %3881 = vmatpush.msra.mxu0 %v3880
      %v3882 = vand.u32 %v3152, 4294901760
      %3883 = vmatpush.msra.mxu0 %v3882
      %v3884 = vand.u32 %v3150, 4294901760
      %3885 = vmatpush.msra.mxu0 %v3884
      %v3886 = vand.u32 %v3148, 4294901760
      %3887 = vmatpush.msra.mxu0 %v3886
      %v3888 = vand.u32 %v3146, 4294901760
      %3889 = vmatpush.msra.mxu0 %v3888
      %v3890 = vand.u32 %v3144, 4294901760
      %3891 = vmatpush.msra.mxu0 %v3890
      %v3892 = vand.u32 %v3142, 4294901760
      %3893 = vmatpush.msra.mxu0 %v3892
      %v3894 = vand.u32 %v3140, 4294901760
      %3895 = vmatpush.msra.mxu0 %v3894
      %v3896 = vand.u32 %v3138, 4294901760
      %3897 = vmatpush.msra.mxu0 %v3896
      %v3898 = vand.u32 %v3136, 4294901760
      %3899 = vmatpush.msra.mxu0 %v3898
      %v3900 = vand.u32 %v3134, 4294901760
      %3901 = vmatpush.msra.mxu0 %v3900
      %v3902 = vand.u32 %v3132, 4294901760
      %3903 = vmatpush.msra.mxu0 %v3902
      %v3904 = vand.u32 %v3130, 4294901760
      %3905 = vmatpush.msra.mxu0 %v3904
      %v3906 = vand.u32 %v3128, 4294901760
      %3907 = vmatpush.msra.mxu0 %v3906
      %v3908 = vand.u32 %v3191, 4294901760
      %v3909 = vsub.f32 %v3191, %v3908
      %v3910 = vand.u32 %v3909, 4294901760
      %3911 = vmatmul.f32.gmra.mxu0 %v3910
      %v3912 = vpop.f32.mrf.mxu0
      %v3913 = vadd.f32 %v3859, %v3912
      %v3914 = vand.u32 %v3192, 4294901760
      %v3915 = vsub.f32 %v3192, %v3914
      %v3916 = vand.u32 %v3915, 4294901760
      %3917 = vmatmul.f32.gmra.mxu0 %v3916
      %v3918 = vpop.f32.mrf.mxu0
      %v3919 = vadd.f32 %v3864, %v3918
      %v3920 = vand.u32 %v3193, 4294901760
      %v3921 = vsub.f32 %v3193, %v3920
      %v3922 = vand.u32 %v3921, 4294901760
      %3923 = vmatmul.f32.gmra.mxu0 %v3922
      %v3924 = vpop.f32.mrf.mxu0
      %v3925 = vadd.f32 %v3869, %v3924
      %v3926 = vand.u32 %v3194, 4294901760
      %v3927 = vsub.f32 %v3194, %v3926
      %v3928 = vand.u32 %v3927, 4294901760
      %3929 = vmatmul.f32.gmra.mxu0 %v3928
      %v3930 = vpop.f32.mrf.mxu0
      %v3931 = vadd.f32 %v3874, %v3930
      %3932 = vdwg.mxu0
      %v3933 = vand.u32 %v3158, 4294901760
      %v3934 = vsub.f32 %v3158, %v3933
      %v3935 = vand.u32 %v3934, 4294901760
      %3936 = vmatpush.msra.mxu0 %v3935
      %v3937 = vand.u32 %v3156, 4294901760
      %v3938 = vsub.f32 %v3156, %v3937
      %v3939 = vand.u32 %v3938, 4294901760
      %3940 = vmatpush.msra.mxu0 %v3939
      %v3941 = vand.u32 %v3154, 4294901760
      %v3942 = vsub.f32 %v3154, %v3941
      %v3943 = vand.u32 %v3942, 4294901760
      %3944 = vmatpush.msra.mxu0 %v3943
      %v3945 = vand.u32 %v3152, 4294901760
      %v3946 = vsub.f32 %v3152, %v3945
      %v3947 = vand.u32 %v3946, 4294901760
      %3948 = vmatpush.msra.mxu0 %v3947
      %v3949 = vand.u32 %v3150, 4294901760
      %v3950 = vsub.f32 %v3150, %v3949
      %v3951 = vand.u32 %v3950, 4294901760
      %3952 = vmatpush.msra.mxu0 %v3951
      %v3953 = vand.u32 %v3148, 4294901760
      %v3954 = vsub.f32 %v3148, %v3953
      %v3955 = vand.u32 %v3954, 4294901760
      %3956 = vmatpush.msra.mxu0 %v3955
      %v3957 = vand.u32 %v3146, 4294901760
      %v3958 = vsub.f32 %v3146, %v3957
      %v3959 = vand.u32 %v3958, 4294901760
      %3960 = vmatpush.msra.mxu0 %v3959
      %v3961 = vand.u32 %v3144, 4294901760
      %v3962 = vsub.f32 %v3144, %v3961
      %v3963 = vand.u32 %v3962, 4294901760
      %3964 = vmatpush.msra.mxu0 %v3963
      %v3965 = vand.u32 %v3142, 4294901760
      %v3966 = vsub.f32 %v3142, %v3965
      %v3967 = vand.u32 %v3966, 4294901760
      %3968 = vmatpush.msra.mxu0 %v3967
      %v3969 = vand.u32 %v3140, 4294901760
      %v3970 = vsub.f32 %v3140, %v3969
      %v3971 = vand.u32 %v3970, 4294901760
      %3972 = vmatpush.msra.mxu0 %v3971
      %v3973 = vand.u32 %v3138, 4294901760
      %v3974 = vsub.f32 %v3138, %v3973
      %v3975 = vand.u32 %v3974, 4294901760
      %3976 = vmatpush.msra.mxu0 %v3975
      %v3977 = vand.u32 %v3136, 4294901760
      %v3978 = vsub.f32 %v3136, %v3977
      %v3979 = vand.u32 %v3978, 4294901760
      %3980 = vmatpush.msra.mxu0 %v3979
      %v3981 = vand.u32 %v3134, 4294901760
      %v3982 = vsub.f32 %v3134, %v3981
      %v3983 = vand.u32 %v3982, 4294901760
      %3984 = vmatpush.msra.mxu0 %v3983
      %v3985 = vand.u32 %v3132, 4294901760
      %v3986 = vsub.f32 %v3132, %v3985
      %v3987 = vand.u32 %v3986, 4294901760
      %3988 = vmatpush.msra.mxu0 %v3987
      %v3989 = vand.u32 %v3130, 4294901760
      %v3990 = vsub.f32 %v3130, %v3989
      %v3991 = vand.u32 %v3990, 4294901760
      %3992 = vmatpush.msra.mxu0 %v3991
      %v3993 = vand.u32 %v3128, 4294901760
      %v3994 = vsub.f32 %v3128, %v3993
      %v3995 = vand.u32 %v3994, 4294901760
      %3996 = vmatpush.msra.mxu0 %v3995
      %v3997 = vand.u32 %v3191, 4294901760
      %3998 = vmatmul.f32.gmra.mxu0 %v3997
      %v3999 = vpop.f32.mrf.mxu0
      %v4000 = vadd.f32 %v3913, %v3999
      %v4001 = vand.u32 %v3192, 4294901760
      %4002 = vmatmul.f32.gmra.mxu0 %v4001
      %v4003 = vpop.f32.mrf.mxu0
      %v4004 = vadd.f32 %v3919, %v4003
      %v4005 = vand.u32 %v3193, 4294901760
      %4006 = vmatmul.f32.gmra.mxu0 %v4005
      %v4007 = vpop.f32.mrf.mxu0
      %v4008 = vadd.f32 %v3925, %v4007
      %v4009 = vand.u32 %v3194, 4294901760
      %4010 = vmatmul.f32.gmra.mxu0 %v4009
      %v4011 = vpop.f32.mrf.mxu0
      %v4012 = vadd.f32 %v3931, %v4011
      %4013 = vdwg.mxu0
      %v4014 = vand.u32 %v3158, 4294901760
      %4015 = vmatpush.msra.mxu0 %v4014
      %v4016 = vand.u32 %v3156, 4294901760
      %4017 = vmatpush.msra.mxu0 %v4016
      %v4018 = vand.u32 %v3154, 4294901760
      %4019 = vmatpush.msra.mxu0 %v4018
      %v4020 = vand.u32 %v3152, 4294901760
      %4021 = vmatpush.msra.mxu0 %v4020
      %v4022 = vand.u32 %v3150, 4294901760
      %4023 = vmatpush.msra.mxu0 %v4022
      %v4024 = vand.u32 %v3148, 4294901760
      %4025 = vmatpush.msra.mxu0 %v4024
      %v4026 = vand.u32 %v3146, 4294901760
      %4027 = vmatpush.msra.mxu0 %v4026
      %v4028 = vand.u32 %v3144, 4294901760
      %4029 = vmatpush.msra.mxu0 %v4028
      %v4030 = vand.u32 %v3142, 4294901760
      %4031 = vmatpush.msra.mxu0 %v4030
      %v4032 = vand.u32 %v3140, 4294901760
      %4033 = vmatpush.msra.mxu0 %v4032
      %v4034 = vand.u32 %v3138, 4294901760
      %4035 = vmatpush.msra.mxu0 %v4034
      %v4036 = vand.u32 %v3136, 4294901760
      %4037 = vmatpush.msra.mxu0 %v4036
      %v4038 = vand.u32 %v3134, 4294901760
      %4039 = vmatpush.msra.mxu0 %v4038
      %v4040 = vand.u32 %v3132, 4294901760
      %4041 = vmatpush.msra.mxu0 %v4040
      %v4042 = vand.u32 %v3130, 4294901760
      %4043 = vmatpush.msra.mxu0 %v4042
      %v4044 = vand.u32 %v3128, 4294901760
      %4045 = vmatpush.msra.mxu0 %v4044
      %v4046 = vand.u32 %v3191, 4294901760
      %4047 = vmatmul.f32.gmra.mxu0 %v4046
      %v4048 = vpop.f32.mrf.mxu0
      %v4049 = vadd.f32 %v4000, %v4048
      %v4050 = vand.u32 %v3192, 4294901760
      %4051 = vmatmul.f32.gmra.mxu0 %v4050
      %v4052 = vpop.f32.mrf.mxu0
      %v4053 = vadd.f32 %v4004, %v4052
      %v4054 = vand.u32 %v3193, 4294901760
      %4055 = vmatmul.f32.gmra.mxu0 %v4054
      %v4056 = vpop.f32.mrf.mxu0
      %v4057 = vadd.f32 %v4008, %v4056
      %v4058 = vand.u32 %v3194, 4294901760
      %4059 = vmatmul.f32.gmra.mxu0 %v4058
      %v4060 = vpop.f32.mrf.mxu0
      %v4061 = vadd.f32 %v4012, %v4060
      %4062 = vdwg.mxu0
      %4063 = vst [vmem:[%s326] sm:$0xff] %v3615
      %4064 = vst [vmem:[%s326 + $0x8] sm:$0xff] %v4049
      %4065 = vst [vmem:[%s326 + $0x10] sm:$0xff] %v3619
      %4066 = vst [vmem:[%s326 + $0x18] sm:$0xff] %v4053
      %4067 = vst [vmem:[%s326 + $0x20] sm:$0xff] %v3623
      %4068 = vst [vmem:[%s326 + $0x28] sm:$0xff] %v4057
      %4069 = vst [vmem:[%s326 + $0x30] sm:$0xff] %v3627
      %4070 = vst [vmem:[%s326 + $0x38] sm:$0xff] %v4061
      %v4071 = vadd.f32 %v3615, %v3619
      %v4072 = vadd.f32 %v4071, %v3623
      %v4073 = vadd.f32 %v4072, %v3627
      %v4074 = vrot.slane %v4073, 4
      %v4075 = vadd.f32 %v4073, %v4074
      %v4076 = vrot.slane %v4075, 2
      %v4077 = vadd.f32 %v4075, %v4076
      %v4078 = vrot.slane %v4077, 1
      %v4079 = vadd.f32 %v4077, %v4078
      %v4080 = vadd.f32 %v4049, %v4053
      %v4081 = vadd.f32 %v4080, %v4057
      %v4082 = vadd.f32 %v4081, %v4061
      %v4083 = vrot.slane %v4082, 4
      %v4084 = vadd.f32 %v4082, %v4083
      %v4085 = vrot.slane %v4084, 2
      %v4086 = vadd.f32 %v4084, %v4085
      %v4087 = vrot.slane %v4086, 1
      %v4088 = vadd.f32 %v4086, %v4087
      %v4089 = vrcp.pop 32.0
      %v4090 = vmul.f32 32.0, %v4089
      %v4091 = vsub.f32 1.0, %v4090
      %v4092 = vmul.f32 %v4089, %v4091
      %v4093 = vadd.f32 %v4089, %v4092
      %vm4094 = vweird.f32 %v4089
      %v4095 = vsel %vm4094, %v4089, %v4093
      %v4096 = vmul.f32 %v4079, %v4095
      %v4097 = vmul.f32 %v4088, %v4095
      %v4098 = vsub.f32 %v3615, %v4096
      %v4099 = vsub.f32 %v4049, %v4097
      %v4100 = vsub.f32 %v3619, %v4096
      %v4101 = vsub.f32 %v4053, %v4097
      %v4102 = vsub.f32 %v3623, %v4096
      %v4103 = vsub.f32 %v4057, %v4097
      %v4104 = vsub.f32 %v3627, %v4096
      %v4105 = vsub.f32 %v4061, %v4097
      %v4106 = vmul.f32 %v4098, %v4098
      %v4107 = vmul.f32 %v4099, %v4099
      %v4108 = vmul.f32 %v4100, %v4100
      %v4109 = vmul.f32 %v4101, %v4101
      %v4110 = vmul.f32 %v4102, %v4102
      %v4111 = vmul.f32 %v4103, %v4103
      %v4112 = vmul.f32 %v4104, %v4104
      %v4113 = vmul.f32 %v4105, %v4105
      %v4114 = vadd.f32 %v4106, %v4108
      %v4115 = vadd.f32 %v4114, %v4110
      %v4116 = vadd.f32 %v4115, %v4112
      %v4117 = vrot.slane %v4116, 4
      %v4118 = vadd.f32 %v4116, %v4117
      %v4119 = vrot.slane %v4118, 2
      %v4120 = vadd.f32 %v4118, %v4119
      %v4121 = vrot.slane %v4120, 1
      %v4122 = vadd.f32 %v4120, %v4121
      %v4123 = vadd.f32 %v4107, %v4109
      %v4124 = vadd.f32 %v4123, %v4111
      %v4125 = vadd.f32 %v4124, %v4113
      %v4126 = vrot.slane %v4125, 4
      %v4127 = vadd.f32 %v4125, %v4126
      %v4128 = vrot.slane %v4127, 2
      %v4129 = vadd.f32 %v4127, %v4128
      %v4130 = vrot.slane %v4129, 1
      %v4131 = vadd.f32 %v4129, %v4130
      %v4132 = vmul.f32 %v4122, 0.032258064
      %v4133 = vmul.f32 %v4131, 0.032258064
      %vm4134 = vcmask 1040384
      %v4135 = vsel %vm4134, %v4096, %v4132
      %v4136 = vsel %vm4134, %v4097, %v4133
      %v4139 = vrot.slane %v4136, 6
      %vm4140 = vcmask 1041408
      %v4141 = vsel %vm4140, %v4135, %v4139
      %4143 = vst [vmem:[%s336] sm:$0xf] %v4141
      %s4144 = smul.u32 2, %s23
      %p4145 = scmp.lt.s32.totalorder %s22, 1
      %s4146 = scalar_select %p4145, %s22, 1
      %p4147 = scmp.lt.s32.totalorder %s4144, 1
      %s4148 = scalar_select %p4147, %s4144, 1
      %s4149 = smul.addr %s4146, 32
      %s4150 = sadd.s32 %s4148, %s4149
      %s4151 = smul.addr %s4150, 8
      %s4152 = scalar_lea.vmem %s4, %s4151
      %s4153 = smul.u32 2, %s23
      %p4154 = scmp.lt.s32.totalorder %s22, 1
      %s4155 = scalar_select %p4154, %s22, 1
      %p4156 = scmp.lt.s32.totalorder %s4153, 1
      %s4157 = scalar_select %p4156, %s4153, 1
      %s4158 = smul.addr %s4155, 8
      %s4159 = sadd.s32 %s4157, %s4158
      %s4160 = smul.addr %s4159, 8
      %s4161 = scalar_lea.vmem %s5, %s4160
      %s4162 = smul.u32 2, %s23
      %p4163 = scmp.lt.s32.totalorder %s22, 1
      %s4164 = scalar_select %p4163, %s22, 1
      %p4165 = scmp.lt.s32.totalorder %s4162, 1
      %s4166 = scalar_select %p4165, %s4162, 1
      %s4167 = smul.addr %s4164, 2
      %s4168 = sadd.s32 %s4166, %s4167
      %s4169 = smul.addr %s4168, 2
      %s4170 = scalar_lea.vmem %s6, %s4169
      // Predicated region
      $region37: #{diverse_fno2d_forward.11} parent=35 // pred_check
        %p4171 = pneg %p141
      $region38: #{diverse_fno2d_forward.11} parent=35 // pred_check_branch
        %4173 = sbr.rel (%p4171) target = $region40
      $region39: #{diverse_fno2d_forward.11} parent=35 // pred_region
        %s4174 = smul.u32 2, %s23
      $region40: #{diverse_fno2d_forward.11} parent=35 // pred_fallthru
        _
      // Predicated region
      $region41: #{diverse_fno2d_forward.11} parent=35 // pred_check
        %p4175 = pneg %p169
      $region42: #{diverse_fno2d_forward.11} parent=35 // pred_check_branch
        %4177 = sbr.rel (%p4175) target = $region44
      $region43: #{diverse_fno2d_forward.11} parent=35 // pred_region
        %s4178 = smul.u32 2, %s23
      $region44: #{diverse_fno2d_forward.11} parent=35 // pred_fallthru
        _
      // Predicated region
      $region45: #{diverse_fno2d_forward.11} parent=35 // pred_check
        %p4179 = pneg %p197
      $region46: #{diverse_fno2d_forward.11} parent=35 // pred_check_branch
        %4181 = sbr.rel (%p4179) target = $region48
      $region47: #{diverse_fno2d_forward.11} parent=35 // pred_region
        %s4182 = smul.u32 2, %s23
      $region48: #{diverse_fno2d_forward.11} parent=35 // pred_fallthru
        _
    $region36: #{diverse_fno2d_forward.11} parent=5 // pred_fallthru
      _
    %p4183 = scmp.le.s32.totalorder 2, %s13
    // Predicated region
    $region49: #{diverse_fno2d_forward.11} parent=5 // pred_check
      %p4184 = pneg %p4183
    $region50: #{diverse_fno2d_forward.11} parent=5 // pred_check_branch
      %4186 = sbr.rel (%p4184) target = $region52
    $region51: #{diverse_fno2d_forward.11} parent=5 // pred_region
      %s4187 = ssub.s32 %s13, 2
      // Predicated region
      $region53: #{diverse_fno2d_forward.11} parent=51 // pred_check
        %p4188 = pneg %p147
      $region54: #{diverse_fno2d_forward.11} parent=51 // pred_check_branch
        %4190 = sbr.rel (%p4188) target = $region56
      $region55: #{diverse_fno2d_forward.11} parent=51 // pred_region
        %s4191 = smul.u32 2, %s25
        %p4192 = scmp.lt.s32.totalorder %s24, 1
        %s4193 = scalar_select %p4192, %s24, 1
        %p4194 = scmp.lt.s32.totalorder %s4191, 1
        %s4195 = scalar_select %p4194, %s4191, 1
        %s4196 = smul.addr %s4193, 32
        %s4197 = sadd.s32 %s4195, %s4196
        %s4198 = smul.addr %s4197, 8
        %s4199 = scalar_lea.vmem %s4, %s4198
      $region56: #{diverse_fno2d_forward.11} parent=51 // pred_fallthru
        _
      // Predicated region
      $region57: #{diverse_fno2d_forward.11} parent=51 // pred_check
        %p4200 = pneg %p175
      $region58: #{diverse_fno2d_forward.11} parent=51 // pred_check_branch
        %4202 = sbr.rel (%p4200) target = $region60
      $region59: #{diverse_fno2d_forward.11} parent=51 // pred_region
        %s4203 = smul.u32 2, %s25
        %p4204 = scmp.lt.s32.totalorder %s24, 1
        %s4205 = scalar_select %p4204, %s24, 1
        %p4206 = scmp.lt.s32.totalorder %s4203, 1
        %s4207 = scalar_select %p4206, %s4203, 1
        %s4208 = smul.addr %s4205, 8
        %s4209 = sadd.s32 %s4207, %s4208
        %s4210 = smul.addr %s4209, 8
        %s4211 = scalar_lea.vmem %s5, %s4210
      $region60: #{diverse_fno2d_forward.11} parent=51 // pred_fallthru
        _
      // Predicated region
      $region61: #{diverse_fno2d_forward.11} parent=51 // pred_check
        %p4212 = pneg %p203
      $region62: #{diverse_fno2d_forward.11} parent=51 // pred_check_branch
        %4214 = sbr.rel (%p4212) target = $region64
      $region63: #{diverse_fno2d_forward.11} parent=51 // pred_region
        %s4215 = smul.u32 2, %s25
        %p4216 = scmp.lt.s32.totalorder %s24, 1
        %s4217 = scalar_select %p4216, %s24, 1
        %p4218 = scmp.lt.s32.totalorder %s4215, 1
        %s4219 = scalar_select %p4218, %s4215, 1
        %s4220 = smul.addr %s4217, 2
        %s4221 = sadd.s32 %s4219, %s4220
        %s4222 = smul.addr %s4221, 2
        %s4223 = scalar_lea.vmem %s6, %s4222
      $region64: #{diverse_fno2d_forward.11} parent=51 // pred_fallthru
        _
    $region52: #{diverse_fno2d_forward.11} parent=5 // pred_fallthru
      _
  $region6: #{diverse_fno2d_forward.11} parent=0 // loop_footer
    %s17 = sadd.s32 1, %s13
  $region7: #{diverse_fno2d_forward.11} parent=0 // loop_footer_branch
    %12 = sbr.rel target = $region3
  $region8: #{diverse_fno2d_forward.11} parent=0 // loop_exit
    _

</llo_original>
